<compile_context>
chip_gen: v6e
topology: v6e:2x2x1
jax: 0.10.0
libtpu: 0.0.40
codegen_flags: <defaults>
</compile_context>

<pallas_src>
import functools

import jax
import jax.numpy as jnp
from jax.experimental import pallas as pl
from jax.experimental.pallas import tpu as pltpu

_COMPUTE_DT = jnp.bfloat16   # MXU operand dtype (accumulate in f32)
_MAX_ROW_TILE = 256          # cap on row tiles (keeps v7x 64 MiB VMEM happy)
_MAX_EDGE_CHUNK = 256        # node-kernel per-step edge chunk
_LN_EPS = 1e-5               # torch.nn.LayerNorm default


def _round_up(x, m):
    return ((x + m - 1) // m) * m


def _cdiv(a, b):
    return -(-a // b)


def _row_tile16(n):
    # Row tile that is a multiple of 16 (legal bf16 second-minor block dim)
    # and gives >= 2 tiles whenever possible (feeds both v7x TensorCores).
    if n <= 16:
        return n
    return min(_MAX_ROW_TILE, _round_up(_cdiv(n, 2), 16))


def _onehot(cond):
    # bool -> f32 -> bf16: exact at {0,1}; bf16 keeps the MXU on its native
    # path (f32xf32 matmul is emulated as multiple bf16 passes).
    return cond.astype(jnp.float32).astype(_COMPUTE_DT)


# -----------------------------------------------------------------------------
# Shared in-kernel MLP tail (layers 1..L-1 + LayerNorm); layer 0 is a single
# wide matmul over a VMEM-assembled concat inside each kernel.
# -----------------------------------------------------------------------------
def _finish_mlp_ln(h, rest_wb, gamma, beta, num_linear, eps=_LN_EPS):
    if num_linear > 1:                       # ReLU after layer 0 (hidden)
        h = jnp.maximum(h, 0.0)
    for li, (w, b) in enumerate(rest_wb):    # layers 1..L-1
        h = jnp.dot(h.astype(w.dtype), w,
                    preferred_element_type=jnp.float32) + b
        if li < len(rest_wb) - 1:            # ReLU on hidden layers only
            h = jnp.maximum(h, 0.0)
    # LayerNorm (biased variance, eps inside rsqrt) in f32
    mean = jnp.mean(h, axis=-1, keepdims=True)
    var = jnp.mean(jnp.square(h - mean), axis=-1, keepdims=True)
    h = (h - mean) * jax.lax.rsqrt(var + eps)
    return h * gamma + beta


def _mlp_param_specs(p, zero_map):
    specs, args = [], []
    for w, b in zip(p["w"], p["b"]):
        specs.append(pl.BlockSpec(w.shape, zero_map))
        specs.append(pl.BlockSpec(b.shape, zero_map))
        args += [w, b]
    specs.append(pl.BlockSpec(p["gamma"].shape, zero_map))
    specs.append(pl.BlockSpec(p["beta"].shape, zero_map))
    args += [p["gamma"], p["beta"]]
    return specs, args


# -----------------------------------------------------------------------------
# Kernel 1: fused mm / mo / om edge update (grid axis 0 = edge type)
# -----------------------------------------------------------------------------
def _make_reg_edge_kernel(num_linear, eps=_LN_EPS):
    def kernel(sidx_ref, ridx_ref, e_ref, ntab_ref, *refs):
        upd_ref, res_ref = refs[-2], refs[-1]
        gamma = refs[-4][0]
        beta = refs[-3][0]
        wb = refs[:-4]

        e = e_ref[0].astype(jnp.float32)                      # (T, De)
        ntab = ntab_ref[...]                                  # (Nt, Dn) bf16
        tile, n_tab = e.shape[0], ntab.shape[0]

        # In-kernel gather: one-hot(idx) @ node_table (bf16 MXU).
        # -1 padded edges produce an all-zero one-hot row -> zero gather.
        iota = jax.lax.broadcasted_iota(jnp.int32, (tile, n_tab), 1)
        oh_s = _onehot(sidx_ref[0] == iota)
        oh_r = _onehot(ridx_ref[0] == iota)
        v_s = jnp.dot(oh_s, ntab, preferred_element_type=jnp.float32)
        v_r = jnp.dot(oh_r, ntab, preferred_element_type=jnp.float32)

        # Single wide layer-0 matmul over cat([e, sender, receiver]).
        x0 = jnp.concatenate([e, v_s, v_r], axis=-1).astype(_COMPUTE_DT)
        w0 = wb[0][0]
        b0 = wb[1][0]
        h = jnp.dot(x0, w0, preferred_element_type=jnp.float32) + b0
        rest = [(wb[2 * l][0], wb[2 * l + 1][0]) for l in range(1, num_linear)]
        upd = _finish_mlp_ln(h, rest, gamma, beta, num_linear, eps)
        upd_ref[0] = upd.astype(upd_ref.dtype)                # bf16 -> scatter
        res_ref[0] = (e + upd).astype(res_ref.dtype)          # fused residual
    return kernel


def _reg_edge_call(p, e_stack, s_idx, r_idx, node_tab_bf16):
    n_types, e_pad, d_e = e_stack.shape
    n_tab, d_n = node_tab_bf16.shape
    d_out = p["w"][-1].shape[-1]
    num_linear = len(p["w"])
    tile_e = _row_tile16(e_pad)

    in_specs = [
        pl.BlockSpec((1, tile_e, 1), lambda t, i: (t, i, 0)),
        pl.BlockSpec((1, tile_e, 1), lambda t, i: (t, i, 0)),
        pl.BlockSpec((1, tile_e, d_e), lambda t, i: (t, i, 0)),
        pl.BlockSpec((n_tab, d_n), lambda t, i: (0, 0)),
    ]
    args = [s_idx, r_idx, e_stack, node_tab_bf16]
    for w, b in zip(p["w"], p["b"]):
        in_specs.append(pl.BlockSpec((1,) + w.shape[1:], lambda t, i: (t, 0, 0)))
        in_specs.append(pl.BlockSpec((1,) + b.shape[1:], lambda t, i: (t, 0, 0)))
        args += [w, b]
    in_specs.append(
        pl.BlockSpec((1,) + p["gamma"].shape[1:], lambda t, i: (t, 0, 0)))
    in_specs.append(
        pl.BlockSpec((1,) + p["beta"].shape[1:], lambda t, i: (t, 0, 0)))
    args += [p["gamma"], p["beta"]]

    out_shape = (jax.ShapeDtypeStruct((n_types, e_pad, d_out), _COMPUTE_DT),
                 jax.ShapeDtypeStruct((n_types, e_pad, d_out), jnp.float32))
    out_specs = (pl.BlockSpec((1, tile_e, d_out), lambda t, i: (t, i, 0)),
                 pl.BlockSpec((1, tile_e, d_out), lambda t, i: (t, i, 0)))

    return pl.pallas_call(
        _make_reg_edge_kernel(num_linear),
        grid=(n_types, _cdiv(e_pad, tile_e)),
        in_specs=in_specs, out_specs=out_specs, out_shape=out_shape,
        compiler_params=pltpu.CompilerParams(
            dimension_semantics=("parallel", "parallel")),
    )(*args)


# -----------------------------------------------------------------------------
# Kernel 2: face-face edge update
# -----------------------------------------------------------------------------
def _make_ff_edge_kernel(num_linear, eps=_LN_EPS):
    def kernel(sidx_ref, ridx_ref, eff_ref, ntab_ref, *refs):
        upd_ref, res_ref = refs[-2], refs[-1]
        gamma = refs[-4][...]
        beta = refs[-3][...]
        wb = refs[:-4]

        eff = eff_ref[...].astype(jnp.float32)                # (T, 3*Df)
        ntab = ntab_ref[...]                                  # (Nt, Dn) bf16
        tile, n_tab = eff.shape[0], ntab.shape[0]
        d_f = eff.shape[1] // 3
        iota = jax.lax.broadcasted_iota(jnp.int32, (tile, n_tab), 1)

        pieces = []
        for k in range(3):
            oh_s = _onehot(sidx_ref[:, k:k + 1] == iota)
            oh_r = _onehot(ridx_ref[:, k:k + 1] == iota)
            v_s = jnp.dot(oh_s, ntab, preferred_element_type=jnp.float32)
            v_r = jnp.dot(oh_r, ntab, preferred_element_type=jnp.float32)
            pieces += [eff[:, k * d_f:(k + 1) * d_f], v_s, v_r]
        # One wide layer-0 matmul (K = 3*(Df + 2*Dn)) instead of 9 small dots.
        x0 = jnp.concatenate(pieces, axis=-1).astype(_COMPUTE_DT)
        w0 = wb[0][...]
        b0 = wb[1][...]
        h = jnp.dot(x0, w0, preferred_element_type=jnp.float32) + b0
        rest = [(wb[2 * l][...], wb[2 * l + 1][...])
                for l in range(1, num_linear)]
        upd = _finish_mlp_ln(h, rest, gamma, beta, num_linear, eps)
        upd_ref[...] = upd.astype(upd_ref.dtype)              # bf16 -> scatter
        res_ref[...] = (eff + upd).astype(res_ref.dtype)      # fused residual
    return kernel


def _ff_edge_call(p, eff_flat, ffs, ffr, node_tab_bf16):
    nf_pad, d3f = eff_flat.shape
    n_tab, d_n = node_tab_bf16.shape
    d_out = p["w"][-1].shape[-1]
    num_linear = len(p["w"])
    tile_f = _row_tile16(nf_pad)

    in_specs = [
        pl.BlockSpec((tile_f, 3), lambda i: (i, 0)),
        pl.BlockSpec((tile_f, 3), lambda i: (i, 0)),
        pl.BlockSpec((tile_f, d3f), lambda i: (i, 0)),
        pl.BlockSpec((n_tab, d_n), lambda i: (0, 0)),
    ]
    args = [ffs, ffr, eff_flat, node_tab_bf16]
    p_specs, p_args = _mlp_param_specs(p, lambda i: (0, 0))
    in_specs += p_specs
    args += p_args

    out_shape = (jax.ShapeDtypeStruct((nf_pad, d_out), _COMPUTE_DT),
                 jax.ShapeDtypeStruct((nf_pad, d_out), jnp.float32))
    out_specs = (pl.BlockSpec((tile_f, d_out), lambda i: (i, 0)),
                 pl.BlockSpec((tile_f, d_out), lambda i: (i, 0)))
    return pl.pallas_call(
        _make_ff_edge_kernel(num_linear),
        grid=(_cdiv(nf_pad, tile_f),),
        in_specs=in_specs, out_specs=out_specs, out_shape=out_shape,
        compiler_params=pltpu.CompilerParams(
            dimension_semantics=("parallel",)),
    )(*args)


# -----------------------------------------------------------------------------
# Kernel 3: merged mesh + object node update.
#   grid = (node tiles over the unified padded node table, edge chunks)
#   Edge chunks stream through VMEM; aggregations accumulate in scratch.
# -----------------------------------------------------------------------------
def _make_node_kernel(n_mesh_tiles, num_linear_mesh, num_linear_obj,
                      eps=_LN_EPS):
    def kernel(node_ref, regupd_ref, regrecv_ref, ffupd_ref, ffrecv_ref,
               *refs):
        acc_a, acc_b, acc_ff = refs[-3:]          # VMEM scratch accumulators
        out_ref = refs[-4]
        params = refs[:-4]
        nm = 2 * num_linear_mesh + 2
        mesh_p = params[:nm]
        obj_p = params[nm:]

        i = pl.program_id(0)
        j = pl.program_id(1)
        n_chunks = pl.num_programs(1)
        is_mesh = i < n_mesh_tiles
        is_obj = jnp.logical_not(is_mesh)
        is_last = j == n_chunks - 1

        tile_n = node_ref.shape[0]
        chunk_e = regupd_ref.shape[1]
        chunk_f = ffupd_ref.shape[0]
        d_f = ffupd_ref.shape[1] // 3
        row0 = i * tile_n

        @pl.when(j == 0)
        def _():
            acc_a[...] = jnp.zeros_like(acc_a)
            acc_b[...] = jnp.zeros_like(acc_b)
            acc_ff[...] = jnp.zeros_like(acc_ff)

        rows_e = row0 + jax.lax.broadcasted_iota(jnp.int32,
                                                 (tile_n, chunk_e), 0)
        recv = regrecv_ref[0]                     # (3, chunk_e) int32

        # Scatter-sum as one-hot(recv == node-row) @ edge_update (bf16 MXU);
        # -1 padded edges contribute nothing.
        @pl.when(is_mesh)
        def _():
            oh_mm = _onehot(rows_e == recv[0:1, :])       # type 0 = mm
            oh_om = _onehot(rows_e == recv[2:3, :])       # type 2 = om
            acc_a[...] += jnp.dot(oh_mm, regupd_ref[0],
                                  preferred_element_type=jnp.float32)
            acc_b[...] += jnp.dot(oh_om, regupd_ref[2],
                                  preferred_element_type=jnp.float32)
            rows_f = row0 + jax.lax.broadcasted_iota(jnp.int32,
                                                     (tile_n, chunk_f), 0)
            frecv = ffrecv_ref[0]                 # (3, chunk_f)
            ffupd = ffupd_ref[...]                # (chunk_f, 3*Df) bf16
            agg = jnp.zeros((tile_n, d_f), jnp.float32)
            for k in range(3):
                oh_k = _onehot(rows_f == frecv[k:k + 1, :])
                agg = agg + jnp.dot(oh_k, ffupd[:, k * d_f:(k + 1) * d_f],
                                    preferred_element_type=jnp.float32)
            acc_ff[...] += agg

        @pl.when(is_obj)
        def _():
            oh_mo = _onehot(rows_e == recv[1:2, :])       # type 1 = mo
            acc_a[...] += jnp.dot(oh_mo, regupd_ref[1],
                                  preferred_element_type=jnp.float32)

        # Finalize: per-tile MLP (mesh or object) + LayerNorm + residual.
        @pl.when(jnp.logical_and(is_last, is_mesh))
        def _():
            node = node_ref[...].astype(jnp.float32)
            # torch.cat([mesh_n, aggr_om, aggr_mm, aggr_ff]) ordering.
            x0 = jnp.concatenate(
                [node, acc_b[...], acc_a[...], acc_ff[...]],
                axis=-1).astype(_COMPUTE_DT)
            h = jnp.dot(x0, mesh_p[0][...],
                        preferred_element_type=jnp.float32) + mesh_p[1][...]
            rest = [(mesh_p[2 * l][...], mesh_p[2 * l + 1][...])
                    for l in range(1, num_linear_mesh)]
            upd = _finish_mlp_ln(h, rest, mesh_p[-2][...], mesh_p[-1][...],
                                 num_linear_mesh, eps)
            out_ref[...] = (node + upd).astype(out_ref.dtype)

        @pl.when(jnp.logical_and(is_last, is_obj))
        def _():
            node = node_ref[...].astype(jnp.float32)
            # torch.cat([obj_n, aggr_mo]) ordering.
            x0 = jnp.concatenate([node, acc_a[...]],
                                 axis=-1).astype(_COMPUTE_DT)
            h = jnp.dot(x0, obj_p[0][...],
                        preferred_element_type=jnp.float32) + obj_p[1][...]
            rest = [(obj_p[2 * l][...], obj_p[2 * l + 1][...])
                    for l in range(1, num_linear_obj)]
            upd = _finish_mlp_ln(h, rest, obj_p[-2][...], obj_p[-1][...],
                                 num_linear_obj, eps)
            out_ref[...] = (node + upd).astype(out_ref.dtype)
    return kernel


def _node_call(p_mesh, p_obj, node_all, reg_upd, recv_sc, ff_upd, ffrecv_sc,
               n_mesh_tiles, tile_n):
    n_tot, d_n = node_all.shape
    n_types, e_pad, d_e = reg_upd.shape
    n_chunks, _, chunk_e = recv_sc.shape
    nf_pad, d3f = ff_upd.shape
    chunk_f = ffrecv_sc.shape[2]
    d_f = d3f // 3
    num_linear_mesh = len(p_mesh["w"])
    num_linear_obj = len(p_obj["w"])

    in_specs = [
        pl.BlockSpec((tile_n, d_n), lambda i, j: (i, 0)),
        pl.BlockSpec((n_types, chunk_e, d_e), lambda i, j: (0, j, 0)),
        pl.BlockSpec((1, 3, chunk_e), lambda i, j: (j, 0, 0)),
        pl.BlockSpec((chunk_f, d3f), lambda i, j: (j, 0)),
        pl.BlockSpec((1, 3, chunk_f), lambda i, j: (j, 0, 0)),
    ]
    args = [node_all, reg_upd, recv_sc, ff_upd, ffrecv_sc]
    zmap = lambda i, j: (0, 0)
    for p in (p_mesh, p_obj):
        specs, pargs = _mlp_param_specs(p, zmap)
        in_specs += specs
        args += pargs

    return pl.pallas_call(
        _make_node_kernel(n_mesh_tiles, num_linear_mesh, num_linear_obj),
        grid=(n_tot // tile_n, n_chunks),
        in_specs=in_specs,
        out_specs=pl.BlockSpec((tile_n, d_n), lambda i, j: (i, 0)),
        out_shape=jax.ShapeDtypeStruct((n_tot, d_n), node_all.dtype),
        scratch_shapes=[pltpu.VMEM((tile_n, d_e), jnp.float32),
                        pltpu.VMEM((tile_n, d_e), jnp.float32),
                        pltpu.VMEM((tile_n, d_f), jnp.float32)],
        compiler_params=pltpu.CompilerParams(
            dimension_semantics=("parallel", "arbitrary")),
    )(*args)


# -----------------------------------------------------------------------------
# Parameters (PyTorch nn.Linear-style uniform init; weights bf16 for the MXU)
# -----------------------------------------------------------------------------
def init_mlp_ln(key, in_dim, hidden_dim, nmlp_layers, out_dim):
    sizes = [in_dim] + [hidden_dim] * nmlp_layers + [out_dim]
    weights, biases = [], []
    for i in range(len(sizes) - 1):
        key, kw, kb = jax.random.split(key, 3)
        bound = 1.0 / float(sizes[i]) ** 0.5
        weights.append(jax.random.uniform(
            kw, (sizes[i], sizes[i + 1]), jnp.float32, -bound, bound
        ).astype(_COMPUTE_DT))
        biases.append(jax.random.uniform(
            kb, (sizes[i + 1],), jnp.float32, -bound, bound))
    return {"weights": weights, "biases": biases,
            "gamma": jnp.ones((sizes[-1],), jnp.float32),
            "beta": jnp.zeros((sizes[-1],), jnp.float32)}


def _pack_mlp(p):
    return {"w": list(p["weights"]),
            "b": [b.reshape(1, -1) for b in p["biases"]],
            "gamma": p["gamma"].reshape(1, -1),
            "beta": p["beta"].reshape(1, -1)}


def _pack_stacked(ps):   # ps = [mm, mo, om] param dicts with identical shapes
    nl = len(ps[0]["weights"])
    return {
        "w": [jnp.stack([p["weights"][l] for p in ps]) for l in range(nl)],
        "b": [jnp.stack([p["biases"][l] for p in ps])[:, None, :]
              for l in range(nl)],
        "gamma": jnp.stack([p["gamma"] for p in ps])[:, None, :],
        "beta": jnp.stack([p["beta"] for p in ps])[:, None, :],
    }


def init_interaction_network(key, nnode_in, nnode_out, nedge_in, nedge_out,
                             fedge_in, fedge_out, nmlp_layers, mlp_hidden_dim,
                             leave_out_mm=False):
    if leave_out_mm:
        # TODO(synk): leave_out_mm=True is not supported in this kernel path.
        raise NotImplementedError("leave_out_mm=True is not supported")
    keys = jax.random.split(key, 6)
    mesh_in = nnode_in + 2 * nedge_in + fedge_in
    params = {
        "mesh_node_fn": _pack_mlp(init_mlp_ln(
            keys[0], mesh_in, mlp_hidden_dim, nmlp_layers, nnode_out)),
        "obj_node_fn": _pack_mlp(init_mlp_ln(
            keys[1], nnode_in + nedge_in, mlp_hidden_dim, nmlp_layers,
            nnode_out)),
        "ff_edge_fn": _pack_mlp(init_mlp_ln(
            keys[5], 3 * (2 * nnode_in + fedge_in), mlp_hidden_dim,
            nmlp_layers, 3 * fedge_out)),
    }
    reg = [init_mlp_ln(keys[2 + t], 2 * nnode_in + nedge_in, mlp_hidden_dim,
                       nmlp_layers, nedge_out) for t in range(3)]  # mm, mo, om
    params["reg_edge_fn"] = _pack_stacked(reg)
    return params


# -----------------------------------------------------------------------------
# Forward pass
# -----------------------------------------------------------------------------
def interaction_network_forward(params, mesh_n, obj_n, mm_index, mo_index,
                                om_index, ff_index, e_mm, e_mo, e_om, e_ff):
    n_mesh, d_n = mesh_n.shape
    n_obj = obj_n.shape[0]
    nf, _, d_f = e_ff.shape

    # --- node tiling / unified padded node numbering (mesh rows first) ----
    tile_n = min(_MAX_ROW_TILE, _round_up(max(n_mesh, n_obj), 8))
    n_mesh_pad = _round_up(n_mesh, tile_n)
    n_obj_pad = _round_up(n_obj, tile_n)
    n_mesh_tiles = n_mesh_pad // tile_n
    n_tot = n_mesh_pad + n_obj_pad

    node_all = jnp.concatenate(
        [jnp.pad(mesh_n, ((0, n_mesh_pad - n_mesh), (0, 0))),
         jnp.pad(obj_n, ((0, n_obj_pad - n_obj), (0, 0)))], axis=0)
    node_all_bf16 = node_all.astype(_COMPUTE_DT)    # gather table (MXU dtype)

    # --- edge padding / chunking (shared edge-chunk axis for node kernel) -
    e_list = (e_mm, e_mo, e_om)
    counts = tuple(int(e.shape[0]) for e in e_list)
    e_max = max(1, max(counts))
    nf_count = max(1, int(nf))
    n_chunks = max(_cdiv(e_max, _MAX_EDGE_CHUNK),
                   _cdiv(nf_count, _MAX_EDGE_CHUNK))
    chunk_e = _round_up(_cdiv(e_max, n_chunks), 16)     # bf16 sublane tile
    e_pad = n_chunks * chunk_e
    chunk_f = _round_up(_cdiv(nf_count, n_chunks), 16)
    nf_pad = n_chunks * chunk_f

    def pad_rows(x, n):
        return jnp.pad(x, ((0, n - x.shape[0]), (0, 0)))

    def pad_idx(v, n):
        return jnp.pad(v, (0, n - v.shape[0]), constant_values=-1)

    # Regular edges stacked + padded -> one fused pallas_call over 3 types.
    e_stack = jnp.stack([pad_rows(e, e_pad) for e in e_list])   # (3, Ep, De)
    # Unified-numbered indices (obj rows offset by n_mesh_pad); -1 = padding.
    s_uni = jnp.stack([pad_idx(mm_index[0], e_pad),
                       pad_idx(mo_index[0], e_pad),
                       pad_idx(om_index[0] + n_mesh_pad, e_pad)])
    r_uni = jnp.stack([pad_idx(mm_index[1], e_pad),
                       pad_idx(mo_index[1] + n_mesh_pad, e_pad),
                       pad_idx(om_index[1], e_pad)])

    reg_upd, reg_res = _reg_edge_call(
        params["reg_edge_fn"], e_stack, s_uni[..., None], r_uni[..., None],
        node_all_bf16)

    # Face-face edges.
    eff_flat = jnp.pad(e_ff.reshape(nf, 3 * d_f), ((0, nf_pad - nf), (0, 0)))
    ffs = jnp.pad(ff_index[0], ((0, nf_pad - nf), (0, 0)), constant_values=-1)
    ffr = jnp.pad(ff_index[1], ((0, nf_pad - nf), (0, 0)), constant_values=-1)
    ff_upd, ff_res = _ff_edge_call(params["ff_edge_fn"], eff_flat, ffs, ffr,
                                   node_all_bf16)

    # Receiver ids laid out per edge chunk: (n_chunks, 3, chunk).
    recv_sc = r_uni.reshape(3, n_chunks, chunk_e).transpose(1, 0, 2)
    ffr_sc = ffr.T.reshape(3, n_chunks, chunk_f).transpose(1, 0, 2)

    node_out = _node_call(params["mesh_node_fn"], params["obj_node_fn"],
                          node_all, reg_upd, recv_sc, ff_upd, ffr_sc,
                          n_mesh_tiles, tile_n)
    mesh_out = node_out[:n_mesh]
    obj_out = node_out[n_mesh_pad:n_mesh_pad + n_obj]

    return (mesh_out, obj_out,
            reg_res[0, :counts[0]],
            reg_res[1, :counts[1]],
            reg_res[2, :counts[2]],
            ff_res[:nf].reshape(nf, 3, d_f))


# -----------------------------------------------------------------------------
if __name__ == "__main__":
    # Residual-compatible config: nnode_in == nnode_out, nedge_in == nedge_out,
    # fedge_in == fedge_out (required by the reference module's "+" residuals).
    # Edge counts chosen so the node kernel exercises >1 edge chunk and every
    # kernel has a multi-tile parallel grid axis.
    D_N, D_E, D_F = 32, 32, 16
    HIDDEN, NMLP = 64, 2
    NUM_MESH, NUM_OBJ = 32, 16
    NUM_MM, NUM_MO, NUM_OM, NUM_FF = 300, 80, 96, 40

    key = jax.random.PRNGKey(0)
    (kp, k1, k2, k3, k4, k5, k6, k7, k8, k9, k10, k11) = jax.random.split(key, 12)

    params = init_interaction_network(
        kp, nnode_in=D_N, nnode_out=D_N, nedge_in=D_E, nedge_out=D_E,
        fedge_in=D_F, fedge_out=D_F, nmlp_layers=NMLP,
        mlp_hidden_dim=HIDDEN, leave_out_mm=False)

    mesh_n = jax.random.normal(k1, (NUM_MESH, D_N), jnp.float32)
    obj_n = jax.random.normal(k2, (NUM_OBJ, D_N), jnp.float32)
    e_mm = jax.random.normal(k3, (NUM_MM, D_E), jnp.float32)
    e_mo = jax.random.normal(k4, (NUM_MO, D_E), jnp.float32)
    e_om = jax.random.normal(k5, (NUM_OM, D_E), jnp.float32)
    e_ff = jax.random.normal(k6, (NUM_FF, 3, D_F), jnp.float32)

    mm_index = jax.random.randint(k7, (2, NUM_MM), 0, NUM_MESH, jnp.int32)
    # mo: sender = mesh node, receiver = object node
    mo_index = jnp.stack([
        jax.random.randint(k8, (NUM_MO,), 0, NUM_MESH, jnp.int32),
        jax.random.randint(k9, (NUM_MO,), 0, NUM_OBJ, jnp.int32)], axis=0)
    # om: sender = object node, receiver = mesh node
    om_index = jnp.stack([
        jax.random.randint(k10, (NUM_OM,), 0, NUM_OBJ, jnp.int32),
        jax.random.randint(k11, (NUM_OM,), 0, NUM_MESH, jnp.int32)], axis=0)
    ff_index = jax.random.randint(jax.random.fold_in(k11, 7),
                                  (2, NUM_FF, 3), 0, NUM_MESH, jnp.int32)

    fwd = jax.jit(functools.partial(interaction_network_forward, params))
    outs = fwd(mesh_n, obj_n, mm_index, mo_index, om_index, ff_index,
               e_mm, e_mo, e_om, e_ff)
    outs = jax.block_until_ready(outs)

    expected_shapes = [(NUM_MESH, D_N), (NUM_OBJ, D_N), (NUM_MM, D_E),
                       (NUM_MO, D_E), (NUM_OM, D_E), (NUM_FF, 3, D_F)]
    assert all(o.shape == s for o, s in zip(outs, expected_shapes)), \
        [o.shape for o in outs]
    assert all(bool(jnp.all(jnp.isfinite(o.astype(jnp.float32))))
               for o in outs)
    print("KERNEL_OK")
</pallas_src>

<mosaic_0001>
module attributes {stable_mosaic.version = 11 : i64} {
  func.func @kernel(%arg0: i32, %arg1: i32, %arg2: memref<1x160x1xi32, #tpu.memory_space<vmem>>, %arg3: memref<1x160x1xi32, #tpu.memory_space<vmem>>, %arg4: memref<1x160x32xf32, #tpu.memory_space<vmem>>, %arg5: memref<64x32xbf16, #tpu.memory_space<vmem>>, %arg6: memref<1x96x64xbf16, #tpu.memory_space<vmem>>, %arg7: memref<1x1x64xf32, #tpu.memory_space<vmem>>, %arg8: memref<1x64x64xbf16, #tpu.memory_space<vmem>>, %arg9: memref<1x1x64xf32, #tpu.memory_space<vmem>>, %arg10: memref<1x64x32xbf16, #tpu.memory_space<vmem>>, %arg11: memref<1x1x32xf32, #tpu.memory_space<vmem>>, %arg12: memref<1x1x32xf32, #tpu.memory_space<vmem>>, %arg13: memref<1x1x32xf32, #tpu.memory_space<vmem>>, %arg14: memref<1x160x32xbf16, #tpu.memory_space<vmem>>, %arg15: memref<1x160x32xf32, #tpu.memory_space<vmem>>) attributes {dimension_semantics = [#tpu.dimension_semantics<parallel>, #tpu.dimension_semantics<parallel>], iteration_bounds = array<i64: 3, 2>, scalar_prefetch = 0 : i64, scratch_operands = 0 : i64, tpu.core_type = #tpu.core_type<tc>, window_params = [{transform_indices = @transform_0, window_bounds = array<i64: 1, 160, 1>}, {transform_indices = @transform_1, window_bounds = array<i64: 1, 160, 1>}, {transform_indices = @transform_2, window_bounds = array<i64: 1, 160, 32>}, {pipeline_mode = #tpu.pipeline_mode<synchronous>, transform_indices = @transform_3, window_bounds = array<i64: 64, 32>}, {transform_indices = @transform_4, window_bounds = array<i64: 1, 96, 64>}, {transform_indices = @transform_5, window_bounds = array<i64: 1, 1, 64>}, {transform_indices = @transform_6, window_bounds = array<i64: 1, 64, 64>}, {transform_indices = @transform_7, window_bounds = array<i64: 1, 1, 64>}, {transform_indices = @transform_8, window_bounds = array<i64: 1, 64, 32>}, {transform_indices = @transform_9, window_bounds = array<i64: 1, 1, 32>}, {transform_indices = @transform_10, window_bounds = array<i64: 1, 1, 32>}, {transform_indices = @transform_11, window_bounds = array<i64: 1, 1, 32>}, {transform_indices = @transform_12, window_bounds = array<i64: 1, 160, 32>}, {transform_indices = @transform_13, window_bounds = array<i64: 1, 160, 32>}]} {
    %c0 = arith.constant 0 : index
    %c0_0 = arith.constant 0 : index
    %c0_1 = arith.constant 0 : index
    %0 = vector.load %arg12[%c0, %c0_0, %c0_1] : memref<1x1x32xf32, #tpu.memory_space<vmem>>, vector<1x1x32xf32>
    %1 = vector.shape_cast %0 : vector<1x1x32xf32> to vector<1x32xf32>
    %c0_2 = arith.constant 0 : index
    %c0_3 = arith.constant 0 : index
    %c0_4 = arith.constant 0 : index
    %2 = vector.load %arg13[%c0_2, %c0_3, %c0_4] : memref<1x1x32xf32, #tpu.memory_space<vmem>>, vector<1x1x32xf32>
    %3 = vector.shape_cast %2 : vector<1x1x32xf32> to vector<1x32xf32>
    %c0_5 = arith.constant 0 : index
    %c0_6 = arith.constant 0 : index
    %c0_7 = arith.constant 0 : index
    %4 = vector.load %arg4[%c0_5, %c0_6, %c0_7] : memref<1x160x32xf32, #tpu.memory_space<vmem>>, vector<1x160x32xf32>
    %5 = vector.shape_cast %4 : vector<1x160x32xf32> to vector<160x32xf32>
    %c0_8 = arith.constant 0 : index
    %c0_9 = arith.constant 0 : index
    %6 = vector.load %arg5[%c0_8, %c0_9] : memref<64x32xbf16, #tpu.memory_space<vmem>>, vector<64x32xbf16>
    %7 = tpu.iota {dimensions = array<i32: 1>} : vector<160x64xi32>
    %c0_10 = arith.constant 0 : index
    %c0_11 = arith.constant 0 : index
    %c0_12 = arith.constant 0 : index
    %8 = vector.load %arg2[%c0_10, %c0_11, %c0_12] : memref<1x160x1xi32, #tpu.memory_space<vmem>>, vector<1x160x1xi32>
    %9 = vector.shape_cast %8 : vector<1x160x1xi32> to vector<160x1xi32>
    %10 = vector.broadcast %9 : vector<160x1xi32> to vector<160x64xi32>
    %11 = arith.cmpi eq, %10, %7 : vector<160x64xi32>
    %12 = arith.extui %11 : vector<160x64xi1> to vector<160x64xi32>
    %13 = arith.sitofp %12 : vector<160x64xi32> to vector<160x64xf32>
    %14 = arith.truncf %13 : vector<160x64xf32> to vector<160x64xbf16>
    %c0_13 = arith.constant 0 : index
    %c0_14 = arith.constant 0 : index
    %c0_15 = arith.constant 0 : index
    %15 = vector.load %arg3[%c0_13, %c0_14, %c0_15] : memref<1x160x1xi32, #tpu.memory_space<vmem>>, vector<1x160x1xi32>
    %16 = vector.shape_cast %15 : vector<1x160x1xi32> to vector<160x1xi32>
    %17 = vector.broadcast %16 : vector<160x1xi32> to vector<160x64xi32>
    %18 = arith.cmpi eq, %17, %7 : vector<160x64xi32>
    %19 = arith.extui %18 : vector<160x64xi1> to vector<160x64xi32>
    %20 = arith.sitofp %19 : vector<160x64xi32> to vector<160x64xf32>
    %21 = arith.truncf %20 : vector<160x64xf32> to vector<160x64xbf16>
    %cst = arith.constant dense<0.000000e+00> : vector<160x32xf32>
    %22 = tpu.matmul %14, %6, %cst {dimension_numbers = #tpu.dot_dimension_numbers<[1], [0], [0], [1], [0, 0, 1, 1], [], []>} : vector<160x64xbf16>, vector<64x32xbf16>, vector<160x32xf32> -> vector<160x32xf32>
    %cst_16 = arith.constant dense<0.000000e+00> : vector<160x32xf32>
    %23 = tpu.matmul %21, %6, %cst_16 {dimension_numbers = #tpu.dot_dimension_numbers<[1], [0], [0], [1], [0, 0, 1, 1], [], []>} : vector<160x64xbf16>, vector<64x32xbf16>, vector<160x32xf32> -> vector<160x32xf32>
    %24 = tpu.concatenate %5, %22, %23 in 1 : vector<160x32xf32>, vector<160x32xf32>, vector<160x32xf32> -> vector<160x96xf32>
    %25 = arith.truncf %24 : vector<160x96xf32> to vector<160x96xbf16>
    %c0_17 = arith.constant 0 : index
    %c0_18 = arith.constant 0 : index
    %c0_19 = arith.constant 0 : index
    %26 = vector.load %arg6[%c0_17, %c0_18, %c0_19] : memref<1x96x64xbf16, #tpu.memory_space<vmem>>, vector<1x96x64xbf16>
    %27 = vector.shape_cast %26 : vector<1x96x64xbf16> to vector<96x64xbf16>
    %c0_20 = arith.constant 0 : index
    %c0_21 = arith.constant 0 : index
    %c0_22 = arith.constant 0 : index
    %28 = vector.load %arg7[%c0_20, %c0_21, %c0_22] : memref<1x1x64xf32, #tpu.memory_space<vmem>>, vector<1x1x64xf32>
    %29 = vector.shape_cast %28 : vector<1x1x64xf32> to vector<1x64xf32>
    %cst_23 = arith.constant dense<0.000000e+00> : vector<160x64xf32>
    %30 = tpu.matmul %25, %27, %cst_23 {dimension_numbers = #tpu.dot_dimension_numbers<[1], [0], [0], [1], [0, 0, 1, 1], [], []>} : vector<160x96xbf16>, vector<96x64xbf16>, vector<160x64xf32> -> vector<160x64xf32>
    %31 = vector.broadcast %29 : vector<1x64xf32> to vector<160x64xf32>
    %32 = arith.addf %30, %31 : vector<160x64xf32>
    %c0_24 = arith.constant 0 : index
    %c0_25 = arith.constant 0 : index
    %c0_26 = arith.constant 0 : index
    %33 = vector.load %arg8[%c0_24, %c0_25, %c0_26] : memref<1x64x64xbf16, #tpu.memory_space<vmem>>, vector<1x64x64xbf16>
    %34 = vector.shape_cast %33 : vector<1x64x64xbf16> to vector<64x64xbf16>
    %c0_27 = arith.constant 0 : index
    %c0_28 = arith.constant 0 : index
    %c0_29 = arith.constant 0 : index
    %35 = vector.load %arg9[%c0_27, %c0_28, %c0_29] : memref<1x1x64xf32, #tpu.memory_space<vmem>>, vector<1x1x64xf32>
    %36 = vector.shape_cast %35 : vector<1x1x64xf32> to vector<1x64xf32>
    %c0_30 = arith.constant 0 : index
    %c0_31 = arith.constant 0 : index
    %c0_32 = arith.constant 0 : index
    %37 = vector.load %arg10[%c0_30, %c0_31, %c0_32] : memref<1x64x32xbf16, #tpu.memory_space<vmem>>, vector<1x64x32xbf16>
    %38 = vector.shape_cast %37 : vector<1x64x32xbf16> to vector<64x32xbf16>
    %c0_33 = arith.constant 0 : index
    %c0_34 = arith.constant 0 : index
    %c0_35 = arith.constant 0 : index
    %39 = vector.load %arg11[%c0_33, %c0_34, %c0_35] : memref<1x1x32xf32, #tpu.memory_space<vmem>>, vector<1x1x32xf32>
    %40 = vector.shape_cast %39 : vector<1x1x32xf32> to vector<1x32xf32>
    %cst_36 = arith.constant 0.000000e+00 : f32
    %41 = vector.broadcast %cst_36 : f32 to vector<160x64xf32>
    %42 = arith.maximumf %32, %41 : vector<160x64xf32>
    %43 = arith.truncf %42 : vector<160x64xf32> to vector<160x64xbf16>
    %cst_37 = arith.constant dense<0.000000e+00> : vector<160x64xf32>
    %44 = tpu.matmul %43, %34, %cst_37 {dimension_numbers = #tpu.dot_dimension_numbers<[1], [0], [0], [1], [0, 0, 1, 1], [], []>} : vector<160x64xbf16>, vector<64x64xbf16>, vector<160x64xf32> -> vector<160x64xf32>
    %45 = vector.broadcast %36 : vector<1x64xf32> to vector<160x64xf32>
    %46 = arith.addf %44, %45 : vector<160x64xf32>
    %cst_38 = arith.constant 0.000000e+00 : f32
    %47 = vector.broadcast %cst_38 : f32 to vector<160x64xf32>
    %48 = arith.maximumf %46, %47 : vector<160x64xf32>
    %49 = arith.truncf %48 : vector<160x64xf32> to vector<160x64xbf16>
    %cst_39 = arith.constant dense<0.000000e+00> : vector<160x32xf32>
    %50 = tpu.matmul %49, %38, %cst_39 {dimension_numbers = #tpu.dot_dimension_numbers<[1], [0], [0], [1], [0, 0, 1, 1], [], []>} : vector<160x64xbf16>, vector<64x32xbf16>, vector<160x32xf32> -> vector<160x32xf32>
    %51 = vector.broadcast %40 : vector<1x32xf32> to vector<160x32xf32>
    %52 = arith.addf %50, %51 : vector<160x32xf32>
    %cst_40 = arith.constant dense<0.000000e+00> : vector<160xf32>
    %53 = vector.multi_reduction <add>, %52, %cst_40 [1] : vector<160x32xf32> to vector<160xf32>
    %54 = vector.shape_cast %53 : vector<160xf32> to vector<160x1xf32>
    %cst_41 = arith.constant 3.200000e+01 : f32
    %55 = vector.broadcast %cst_41 : f32 to vector<160x1xf32>
    %56 = arith.divf %54, %55 : vector<160x1xf32>
    %57 = vector.broadcast %56 : vector<160x1xf32> to vector<160x32xf32>
    %58 = arith.subf %52, %57 : vector<160x32xf32>
    %59 = arith.mulf %58, %58 : vector<160x32xf32>
    %cst_42 = arith.constant dense<0.000000e+00> : vector<160xf32>
    %60 = vector.multi_reduction <add>, %59, %cst_42 [1] : vector<160x32xf32> to vector<160xf32>
    %61 = vector.shape_cast %60 : vector<160xf32> to vector<160x1xf32>
    %cst_43 = arith.constant 3.200000e+01 : f32
    %62 = vector.broadcast %cst_43 : f32 to vector<160x1xf32>
    %63 = arith.divf %61, %62 : vector<160x1xf32>
    %64 = vector.broadcast %56 : vector<160x1xf32> to vector<160x32xf32>
    %65 = arith.subf %52, %64 : vector<160x32xf32>
    %cst_44 = arith.constant 9.99999974E-6 : f32
    %66 = vector.broadcast %cst_44 : f32 to vector<160x1xf32>
    %67 = arith.addf %63, %66 : vector<160x1xf32>
    %68 = math.rsqrt %67 : vector<160x1xf32>
    %69 = vector.broadcast %68 : vector<160x1xf32> to vector<160x32xf32>
    %70 = arith.mulf %65, %69 : vector<160x32xf32>
    %71 = vector.broadcast %1 : vector<1x32xf32> to vector<160x32xf32>
    %72 = arith.mulf %70, %71 : vector<160x32xf32>
    %73 = vector.broadcast %3 : vector<1x32xf32> to vector<160x32xf32>
    %74 = arith.addf %72, %73 : vector<160x32xf32>
    %75 = arith.truncf %74 : vector<160x32xf32> to vector<160x32xbf16>
    %c0_45 = arith.constant 0 : index
    %c0_46 = arith.constant 0 : index
    %c0_47 = arith.constant 0 : index
    %76 = vector.load %arg14[%c0_45, %c0_46, %c0_47] : memref<1x160x32xbf16, #tpu.memory_space<vmem>>, vector<1x160x32xbf16>
    %77 = vector.shape_cast %76 : vector<1x160x32xbf16> to vector<160x32xbf16>
    %78 = vector.shape_cast %75 : vector<160x32xbf16> to vector<1x160x32xbf16>
    tpu.vector_store %arg14[%c0_45, %c0_46, %c0_47], %78 {strides = array<i32>} : memref<1x160x32xbf16, #tpu.memory_space<vmem>>, vector<1x160x32xbf16>,
    %79 = arith.addf %5, %74 : vector<160x32xf32>
    %c0_48 = arith.constant 0 : index
    %c0_49 = arith.constant 0 : index
    %c0_50 = arith.constant 0 : index
    %80 = vector.load %arg15[%c0_48, %c0_49, %c0_50] : memref<1x160x32xf32, #tpu.memory_space<vmem>>, vector<1x160x32xf32>
    %81 = vector.shape_cast %80 : vector<1x160x32xf32> to vector<160x32xf32>
    %82 = vector.shape_cast %79 : vector<160x32xf32> to vector<1x160x32xf32>
    tpu.vector_store %arg15[%c0_48, %c0_49, %c0_50], %82 {strides = array<i32>} : memref<1x160x32xf32, #tpu.memory_space<vmem>>, vector<1x160x32xf32>,
    return
  }
  func.func @transform_0(%arg0: i32, %arg1: i32) -> (i32, i32, i32) {
    %c0_i32 = arith.constant 0 : i32
    %c0_i32_0 = arith.constant 0 : i32
    return %arg0, %arg1, %c0_i32 : i32, i32, i32
  }
  func.func @transform_1(%arg0: i32, %arg1: i32) -> (i32, i32, i32) {
    %c0_i32 = arith.constant 0 : i32
    %c0_i32_0 = arith.constant 0 : i32
    return %arg0, %arg1, %c0_i32 : i32, i32, i32
  }
  func.func @transform_2(%arg0: i32, %arg1: i32) -> (i32, i32, i32) {
    %c0_i32 = arith.constant 0 : i32
    %c0_i32_0 = arith.constant 0 : i32
    return %arg0, %arg1, %c0_i32 : i32, i32, i32
  }
  func.func @transform_3(%arg0: i32, %arg1: i32) -> (i32, i32) {
    %c0_i32 = arith.constant 0 : i32
    %c0_i32_0 = arith.constant 0 : i32
    %c0_i32_1 = arith.constant 0 : i32
    return %c0_i32, %c0_i32_0 : i32, i32
  }
  func.func @transform_4(%arg0: i32, %arg1: i32) -> (i32, i32, i32) {
    %c0_i32 = arith.constant 0 : i32
    %c0_i32_0 = arith.constant 0 : i32
    %c0_i32_1 = arith.constant 0 : i32
    return %arg0, %c0_i32, %c0_i32_0 : i32, i32, i32
  }
  func.func @transform_5(%arg0: i32, %arg1: i32) -> (i32, i32, i32) {
    %c0_i32 = arith.constant 0 : i32
    %c0_i32_0 = arith.constant 0 : i32
    %c0_i32_1 = arith.constant 0 : i32
    return %arg0, %c0_i32, %c0_i32_0 : i32, i32, i32
  }
  func.func @transform_6(%arg0: i32, %arg1: i32) -> (i32, i32, i32) {
    %c0_i32 = arith.constant 0 : i32
    %c0_i32_0 = arith.constant 0 : i32
    %c0_i32_1 = arith.constant 0 : i32
    return %arg0, %c0_i32, %c0_i32_0 : i32, i32, i32
  }
  func.func @transform_7(%arg0: i32, %arg1: i32) -> (i32, i32, i32) {
    %c0_i32 = arith.constant 0 : i32
    %c0_i32_0 = arith.constant 0 : i32
    %c0_i32_1 = arith.constant 0 : i32
    return %arg0, %c0_i32, %c0_i32_0 : i32, i32, i32
  }
  func.func @transform_8(%arg0: i32, %arg1: i32) -> (i32, i32, i32) {
    %c0_i32 = arith.constant 0 : i32
    %c0_i32_0 = arith.constant 0 : i32
    %c0_i32_1 = arith.constant 0 : i32
    return %arg0, %c0_i32, %c0_i32_0 : i32, i32, i32
  }
  func.func @transform_9(%arg0: i32, %arg1: i32) -> (i32, i32, i32) {
    %c0_i32 = arith.constant 0 : i32
    %c0_i32_0 = arith.constant 0 : i32
    %c0_i32_1 = arith.constant 0 : i32
    return %arg0, %c0_i32, %c0_i32_0 : i32, i32, i32
  }
  func.func @transform_10(%arg0: i32, %arg1: i32) -> (i32, i32, i32) {
    %c0_i32 = arith.constant 0 : i32
    %c0_i32_0 = arith.constant 0 : i32
    %c0_i32_1 = arith.constant 0 : i32
    return %arg0, %c0_i32, %c0_i32_0 : i32, i32, i32
  }
  func.func @transform_11(%arg0: i32, %arg1: i32) -> (i32, i32, i32) {
    %c0_i32 = arith.constant 0 : i32
    %c0_i32_0 = arith.constant 0 : i32
    %c0_i32_1 = arith.constant 0 : i32
    return %arg0, %c0_i32, %c0_i32_0 : i32, i32, i32
  }
  func.func @transform_12(%arg0: i32, %arg1: i32) -> (i32, i32, i32) {
    %c0_i32 = arith.constant 0 : i32
    %c0_i32_0 = arith.constant 0 : i32
    return %arg0, %arg1, %c0_i32 : i32, i32, i32
  }
  func.func @transform_13(%arg0: i32, %arg1: i32) -> (i32, i32, i32) {
    %c0_i32 = arith.constant 0 : i32
    %c0_i32_0 = arith.constant 0 : i32
    return %arg0, %arg1, %c0_i32 : i32, i32, i32
  }
}

module attributes {stable_mosaic.version = 11 : i64} {
  func.func @kernel(%arg0: i32, %arg1: memref<32x3xi32, #tpu.memory_space<vmem>>, %arg2: memref<32x3xi32, #tpu.memory_space<vmem>>, %arg3: memref<32x48xf32, #tpu.memory_space<vmem>>, %arg4: memref<64x32xbf16, #tpu.memory_space<vmem>>, %arg5: memref<240x64xbf16, #tpu.memory_space<vmem>>, %arg6: memref<1x64xf32, #tpu.memory_space<vmem>>, %arg7: memref<64x64xbf16, #tpu.memory_space<vmem>>, %arg8: memref<1x64xf32, #tpu.memory_space<vmem>>, %arg9: memref<64x48xbf16, #tpu.memory_space<vmem>>, %arg10: memref<1x48xf32, #tpu.memory_space<vmem>>, %arg11: memref<1x48xf32, #tpu.memory_space<vmem>>, %arg12: memref<1x48xf32, #tpu.memory_space<vmem>>, %arg13: memref<32x48xbf16, #tpu.memory_space<vmem>>, %arg14: memref<32x48xf32, #tpu.memory_space<vmem>>) attributes {dimension_semantics = [#tpu.dimension_semantics<parallel>], iteration_bounds = array<i64: 2>, scalar_prefetch = 0 : i64, scratch_operands = 0 : i64, tpu.core_type = #tpu.core_type<tc>, window_params = [{transform_indices = @transform_0, window_bounds = array<i64: 32, 3>}, {transform_indices = @transform_1, window_bounds = array<i64: 32, 3>}, {transform_indices = @transform_2, window_bounds = array<i64: 32, 48>}, {pipeline_mode = #tpu.pipeline_mode<synchronous>, transform_indices = @transform_3, window_bounds = array<i64: 64, 32>}, {pipeline_mode = #tpu.pipeline_mode<synchronous>, transform_indices = @transform_4, window_bounds = array<i64: 240, 64>}, {pipeline_mode = #tpu.pipeline_mode<synchronous>, transform_indices = @transform_5, window_bounds = array<i64: 1, 64>}, {pipeline_mode = #tpu.pipeline_mode<synchronous>, transform_indices = @transform_6, window_bounds = array<i64: 64, 64>}, {pipeline_mode = #tpu.pipeline_mode<synchronous>, transform_indices = @transform_7, window_bounds = array<i64: 1, 64>}, {pipeline_mode = #tpu.pipeline_mode<synchronous>, transform_indices = @transform_8, window_bounds = array<i64: 64, 48>}, {pipeline_mode = #tpu.pipeline_mode<synchronous>, transform_indices = @transform_9, window_bounds = array<i64: 1, 48>}, {pipeline_mode = #tpu.pipeline_mode<synchronous>, transform_indices = @transform_10, window_bounds = array<i64: 1, 48>}, {pipeline_mode = #tpu.pipeline_mode<synchronous>, transform_indices = @transform_11, window_bounds = array<i64: 1, 48>}, {transform_indices = @transform_12, window_bounds = array<i64: 32, 48>}, {transform_indices = @transform_13, window_bounds = array<i64: 32, 48>}]} {
    %c0 = arith.constant 0 : index
    %c0_0 = arith.constant 0 : index
    %0 = vector.load %arg11[%c0, %c0_0] : memref<1x48xf32, #tpu.memory_space<vmem>>, vector<1x48xf32>
    %c0_1 = arith.constant 0 : index
    %c0_2 = arith.constant 0 : index
    %1 = vector.load %arg12[%c0_1, %c0_2] : memref<1x48xf32, #tpu.memory_space<vmem>>, vector<1x48xf32>
    %c0_3 = arith.constant 0 : index
    %c0_4 = arith.constant 0 : index
    %2 = vector.load %arg3[%c0_3, %c0_4] : memref<32x48xf32, #tpu.memory_space<vmem>>, vector<32x48xf32>
    %c0_5 = arith.constant 0 : index
    %c0_6 = arith.constant 0 : index
    %3 = vector.load %arg4[%c0_5, %c0_6] : memref<64x32xbf16, #tpu.memory_space<vmem>>, vector<64x32xbf16>
    %4 = tpu.iota {dimensions = array<i32: 1>} : vector<32x64xi32>
    %c0_7 = arith.constant 0 : index
    %c0_8 = arith.constant 0 : index
    %5 = vector.load %arg1[%c0_7, %c0_8] : memref<32x3xi32, #tpu.memory_space<vmem>>, vector<32x1xi32>
    %6 = vector.broadcast %5 : vector<32x1xi32> to vector<32x64xi32>
    %7 = arith.cmpi eq, %6, %4 : vector<32x64xi32>
    %8 = arith.extui %7 : vector<32x64xi1> to vector<32x64xi32>
    %9 = arith.sitofp %8 : vector<32x64xi32> to vector<32x64xf32>
    %10 = arith.truncf %9 : vector<32x64xf32> to vector<32x64xbf16>
    %c0_9 = arith.constant 0 : index
    %c0_10 = arith.constant 0 : index
    %11 = vector.load %arg2[%c0_9, %c0_10] : memref<32x3xi32, #tpu.memory_space<vmem>>, vector<32x1xi32>
    %12 = vector.broadcast %11 : vector<32x1xi32> to vector<32x64xi32>
    %13 = arith.cmpi eq, %12, %4 : vector<32x64xi32>
    %14 = arith.extui %13 : vector<32x64xi1> to vector<32x64xi32>
    %15 = arith.sitofp %14 : vector<32x64xi32> to vector<32x64xf32>
    %16 = arith.truncf %15 : vector<32x64xf32> to vector<32x64xbf16>
    %cst = arith.constant dense<0.000000e+00> : vector<32x32xf32>
    %17 = tpu.matmul %10, %3, %cst {dimension_numbers = #tpu.dot_dimension_numbers<[1], [0], [0], [1], [0, 0, 1, 1], [], []>} : vector<32x64xbf16>, vector<64x32xbf16>, vector<32x32xf32> -> vector<32x32xf32>
    %cst_11 = arith.constant dense<0.000000e+00> : vector<32x32xf32>
    %18 = tpu.matmul %16, %3, %cst_11 {dimension_numbers = #tpu.dot_dimension_numbers<[1], [0], [0], [1], [0, 0, 1, 1], [], []>} : vector<32x64xbf16>, vector<64x32xbf16>, vector<32x32xf32> -> vector<32x32xf32>
    %19 = vector.extract_strided_slice %2 {offsets = [0, 0], sizes = [32, 16], strides = [1, 1]} : vector<32x48xf32> to vector<32x16xf32>
    %c0_12 = arith.constant 0 : index
    %c1 = arith.constant 1 : index
    %20 = vector.load %arg1[%c0_12, %c1] : memref<32x3xi32, #tpu.memory_space<vmem>>, vector<32x1xi32>
    %21 = vector.broadcast %20 : vector<32x1xi32> to vector<32x64xi32>
    %22 = arith.cmpi eq, %21, %4 : vector<32x64xi32>
    %23 = arith.extui %22 : vector<32x64xi1> to vector<32x64xi32>
    %24 = arith.sitofp %23 : vector<32x64xi32> to vector<32x64xf32>
    %25 = arith.truncf %24 : vector<32x64xf32> to vector<32x64xbf16>
    %c0_13 = arith.constant 0 : index
    %c1_14 = arith.constant 1 : index
    %26 = vector.load %arg2[%c0_13, %c1_14] : memref<32x3xi32, #tpu.memory_space<vmem>>, vector<32x1xi32>
    %27 = vector.broadcast %26 : vector<32x1xi32> to vector<32x64xi32>
    %28 = arith.cmpi eq, %27, %4 : vector<32x64xi32>
    %29 = arith.extui %28 : vector<32x64xi1> to vector<32x64xi32>
    %30 = arith.sitofp %29 : vector<32x64xi32> to vector<32x64xf32>
    %31 = arith.truncf %30 : vector<32x64xf32> to vector<32x64xbf16>
    %cst_15 = arith.constant dense<0.000000e+00> : vector<32x32xf32>
    %32 = tpu.matmul %25, %3, %cst_15 {dimension_numbers = #tpu.dot_dimension_numbers<[1], [0], [0], [1], [0, 0, 1, 1], [], []>} : vector<32x64xbf16>, vector<64x32xbf16>, vector<32x32xf32> -> vector<32x32xf32>
    %cst_16 = arith.constant dense<0.000000e+00> : vector<32x32xf32>
    %33 = tpu.matmul %31, %3, %cst_16 {dimension_numbers = #tpu.dot_dimension_numbers<[1], [0], [0], [1], [0, 0, 1, 1], [], []>} : vector<32x64xbf16>, vector<64x32xbf16>, vector<32x32xf32> -> vector<32x32xf32>
    %34 = vector.extract_strided_slice %2 {offsets = [0, 16], sizes = [32, 16], strides = [1, 1]} : vector<32x48xf32> to vector<32x16xf32>
    %c0_17 = arith.constant 0 : index
    %c2 = arith.constant 2 : index
    %35 = vector.load %arg1[%c0_17, %c2] : memref<32x3xi32, #tpu.memory_space<vmem>>, vector<32x1xi32>
    %36 = vector.broadcast %35 : vector<32x1xi32> to vector<32x64xi32>
    %37 = arith.cmpi eq, %36, %4 : vector<32x64xi32>
    %38 = arith.extui %37 : vector<32x64xi1> to vector<32x64xi32>
    %39 = arith.sitofp %38 : vector<32x64xi32> to vector<32x64xf32>
    %40 = arith.truncf %39 : vector<32x64xf32> to vector<32x64xbf16>
    %c0_18 = arith.constant 0 : index
    %c2_19 = arith.constant 2 : index
    %41 = vector.load %arg2[%c0_18, %c2_19] : memref<32x3xi32, #tpu.memory_space<vmem>>, vector<32x1xi32>
    %42 = vector.broadcast %41 : vector<32x1xi32> to vector<32x64xi32>
    %43 = arith.cmpi eq, %42, %4 : vector<32x64xi32>
    %44 = arith.extui %43 : vector<32x64xi1> to vector<32x64xi32>
    %45 = arith.sitofp %44 : vector<32x64xi32> to vector<32x64xf32>
    %46 = arith.truncf %45 : vector<32x64xf32> to vector<32x64xbf16>
    %cst_20 = arith.constant dense<0.000000e+00> : vector<32x32xf32>
    %47 = tpu.matmul %40, %3, %cst_20 {dimension_numbers = #tpu.dot_dimension_numbers<[1], [0], [0], [1], [0, 0, 1, 1], [], []>} : vector<32x64xbf16>, vector<64x32xbf16>, vector<32x32xf32> -> vector<32x32xf32>
    %cst_21 = arith.constant dense<0.000000e+00> : vector<32x32xf32>
    %48 = tpu.matmul %46, %3, %cst_21 {dimension_numbers = #tpu.dot_dimension_numbers<[1], [0], [0], [1], [0, 0, 1, 1], [], []>} : vector<32x64xbf16>, vector<64x32xbf16>, vector<32x32xf32> -> vector<32x32xf32>
    %49 = vector.extract_strided_slice %2 {offsets = [0, 32], sizes = [32, 16], strides = [1, 1]} : vector<32x48xf32> to vector<32x16xf32>
    %50 = tpu.concatenate %19, %17, %18, %34, %32, %33, %49, %47, %48 in 1 : vector<32x16xf32>, vector<32x32xf32>, vector<32x32xf32>, vector<32x16xf32>, vector<32x32xf32>, vector<32x32xf32>, vector<32x16xf32>, vector<32x32xf32>, vector<32x32xf32> -> vector<32x240xf32>
    %51 = arith.truncf %50 : vector<32x240xf32> to vector<32x240xbf16>
    %c0_22 = arith.constant 0 : index
    %c0_23 = arith.constant 0 : index
    %52 = vector.load %arg5[%c0_22, %c0_23] : memref<240x64xbf16, #tpu.memory_space<vmem>>, vector<240x64xbf16>
    %c0_24 = arith.constant 0 : index
    %c0_25 = arith.constant 0 : index
    %53 = vector.load %arg6[%c0_24, %c0_25] : memref<1x64xf32, #tpu.memory_space<vmem>>, vector<1x64xf32>
    %cst_26 = arith.constant dense<0.000000e+00> : vector<32x64xf32>
    %54 = tpu.matmul %51, %52, %cst_26 {dimension_numbers = #tpu.dot_dimension_numbers<[1], [0], [0], [1], [0, 0, 1, 1], [], []>} : vector<32x240xbf16>, vector<240x64xbf16>, vector<32x64xf32> -> vector<32x64xf32>
    %55 = vector.broadcast %53 : vector<1x64xf32> to vector<32x64xf32>
    %56 = arith.addf %54, %55 : vector<32x64xf32>
    %c0_27 = arith.constant 0 : index
    %c0_28 = arith.constant 0 : index
    %57 = vector.load %arg7[%c0_27, %c0_28] : memref<64x64xbf16, #tpu.memory_space<vmem>>, vector<64x64xbf16>
    %c0_29 = arith.constant 0 : index
    %c0_30 = arith.constant 0 : index
    %58 = vector.load %arg8[%c0_29, %c0_30] : memref<1x64xf32, #tpu.memory_space<vmem>>, vector<1x64xf32>
    %c0_31 = arith.constant 0 : index
    %c0_32 = arith.constant 0 : index
    %59 = vector.load %arg9[%c0_31, %c0_32] : memref<64x48xbf16, #tpu.memory_space<vmem>>, vector<64x48xbf16>
    %c0_33 = arith.constant 0 : index
    %c0_34 = arith.constant 0 : index
    %60 = vector.load %arg10[%c0_33, %c0_34] : memref<1x48xf32, #tpu.memory_space<vmem>>, vector<1x48xf32>
    %cst_35 = arith.constant 0.000000e+00 : f32
    %61 = vector.broadcast %cst_35 : f32 to vector<32x64xf32>
    %62 = arith.maximumf %56, %61 : vector<32x64xf32>
    %63 = arith.truncf %62 : vector<32x64xf32> to vector<32x64xbf16>
    %cst_36 = arith.constant dense<0.000000e+00> : vector<32x64xf32>
    %64 = tpu.matmul %63, %57, %cst_36 {dimension_numbers = #tpu.dot_dimension_numbers<[1], [0], [0], [1], [0, 0, 1, 1], [], []>} : vector<32x64xbf16>, vector<64x64xbf16>, vector<32x64xf32> -> vector<32x64xf32>
    %65 = vector.broadcast %58 : vector<1x64xf32> to vector<32x64xf32>
    %66 = arith.addf %64, %65 : vector<32x64xf32>
    %cst_37 = arith.constant 0.000000e+00 : f32
    %67 = vector.broadcast %cst_37 : f32 to vector<32x64xf32>
    %68 = arith.maximumf %66, %67 : vector<32x64xf32>
    %69 = arith.truncf %68 : vector<32x64xf32> to vector<32x64xbf16>
    %cst_38 = arith.constant dense<0.000000e+00> : vector<32x48xf32>
    %70 = tpu.matmul %69, %59, %cst_38 {dimension_numbers = #tpu.dot_dimension_numbers<[1], [0], [0], [1], [0, 0, 1, 1], [], []>} : vector<32x64xbf16>, vector<64x48xbf16>, vector<32x48xf32> -> vector<32x48xf32>
    %71 = vector.broadcast %60 : vector<1x48xf32> to vector<32x48xf32>
    %72 = arith.addf %70, %71 : vector<32x48xf32>
    %cst_39 = arith.constant dense<0.000000e+00> : vector<32xf32>
    %73 = vector.multi_reduction <add>, %72, %cst_39 [1] : vector<32x48xf32> to vector<32xf32>
    %74 = vector.shape_cast %73 : vector<32xf32> to vector<32x1xf32>
    %cst_40 = arith.constant 4.800000e+01 : f32
    %75 = vector.broadcast %cst_40 : f32 to vector<32x1xf32>
    %76 = arith.divf %74, %75 : vector<32x1xf32>
    %77 = vector.broadcast %76 : vector<32x1xf32> to vector<32x48xf32>
    %78 = arith.subf %72, %77 : vector<32x48xf32>
    %79 = arith.mulf %78, %78 : vector<32x48xf32>
    %cst_41 = arith.constant dense<0.000000e+00> : vector<32xf32>
    %80 = vector.multi_reduction <add>, %79, %cst_41 [1] : vector<32x48xf32> to vector<32xf32>
    %81 = vector.shape_cast %80 : vector<32xf32> to vector<32x1xf32>
    %cst_42 = arith.constant 4.800000e+01 : f32
    %82 = vector.broadcast %cst_42 : f32 to vector<32x1xf32>
    %83 = arith.divf %81, %82 : vector<32x1xf32>
    %84 = vector.broadcast %76 : vector<32x1xf32> to vector<32x48xf32>
    %85 = arith.subf %72, %84 : vector<32x48xf32>
    %cst_43 = arith.constant 9.99999974E-6 : f32
    %86 = vector.broadcast %cst_43 : f32 to vector<32x1xf32>
    %87 = arith.addf %83, %86 : vector<32x1xf32>
    %88 = math.rsqrt %87 : vector<32x1xf32>
    %89 = vector.broadcast %88 : vector<32x1xf32> to vector<32x48xf32>
    %90 = arith.mulf %85, %89 : vector<32x48xf32>
    %91 = vector.broadcast %0 : vector<1x48xf32> to vector<32x48xf32>
    %92 = arith.mulf %90, %91 : vector<32x48xf32>
    %93 = vector.broadcast %1 : vector<1x48xf32> to vector<32x48xf32>
    %94 = arith.addf %92, %93 : vector<32x48xf32>
    %95 = arith.truncf %94 : vector<32x48xf32> to vector<32x48xbf16>
    %c0_44 = arith.constant 0 : index
    %c0_45 = arith.constant 0 : index
    %96 = vector.load %arg13[%c0_44, %c0_45] : memref<32x48xbf16, #tpu.memory_space<vmem>>, vector<32x48xbf16>
    tpu.vector_store %arg13[%c0_44, %c0_45], %95 {strides = array<i32>} : memref<32x48xbf16, #tpu.memory_space<vmem>>, vector<32x48xbf16>,
    %97 = arith.addf %2, %94 : vector<32x48xf32>
    %c0_46 = arith.constant 0 : index
    %c0_47 = arith.constant 0 : index
    %98 = vector.load %arg14[%c0_46, %c0_47] : memref<32x48xf32, #tpu.memory_space<vmem>>, vector<32x48xf32>
    tpu.vector_store %arg14[%c0_46, %c0_47], %97 {strides = array<i32>} : memref<32x48xf32, #tpu.memory_space<vmem>>, vector<32x48xf32>,
    return
  }
  func.func @transform_0(%arg0: i32) -> (i32, i32) {
    %c0_i32 = arith.constant 0 : i32
    %c0_i32_0 = arith.constant 0 : i32
    return %arg0, %c0_i32 : i32, i32
  }
  func.func @transform_1(%arg0: i32) -> (i32, i32) {
    %c0_i32 = arith.constant 0 : i32
    %c0_i32_0 = arith.constant 0 : i32
    return %arg0, %c0_i32 : i32, i32
  }
  func.func @transform_2(%arg0: i32) -> (i32, i32) {
    %c0_i32 = arith.constant 0 : i32
    %c0_i32_0 = arith.constant 0 : i32
    return %arg0, %c0_i32 : i32, i32
  }
  func.func @transform_3(%arg0: i32) -> (i32, i32) {
    %c0_i32 = arith.constant 0 : i32
    %c0_i32_0 = arith.constant 0 : i32
    %c0_i32_1 = arith.constant 0 : i32
    return %c0_i32, %c0_i32_0 : i32, i32
  }
  func.func @transform_4(%arg0: i32) -> (i32, i32) {
    %c0_i32 = arith.constant 0 : i32
    %c0_i32_0 = arith.constant 0 : i32
    %c0_i32_1 = arith.constant 0 : i32
    return %c0_i32, %c0_i32_0 : i32, i32
  }
  func.func @transform_5(%arg0: i32) -> (i32, i32) {
    %c0_i32 = arith.constant 0 : i32
    %c0_i32_0 = arith.constant 0 : i32
    %c0_i32_1 = arith.constant 0 : i32
    return %c0_i32, %c0_i32_0 : i32, i32
  }
  func.func @transform_6(%arg0: i32) -> (i32, i32) {
    %c0_i32 = arith.constant 0 : i32
    %c0_i32_0 = arith.constant 0 : i32
    %c0_i32_1 = arith.constant 0 : i32
    return %c0_i32, %c0_i32_0 : i32, i32
  }
  func.func @transform_7(%arg0: i32) -> (i32, i32) {
    %c0_i32 = arith.constant 0 : i32
    %c0_i32_0 = arith.constant 0 : i32
    %c0_i32_1 = arith.constant 0 : i32
    return %c0_i32, %c0_i32_0 : i32, i32
  }
  func.func @transform_8(%arg0: i32) -> (i32, i32) {
    %c0_i32 = arith.constant 0 : i32
    %c0_i32_0 = arith.constant 0 : i32
    %c0_i32_1 = arith.constant 0 : i32
    return %c0_i32, %c0_i32_0 : i32, i32
  }
  func.func @transform_9(%arg0: i32) -> (i32, i32) {
    %c0_i32 = arith.constant 0 : i32
    %c0_i32_0 = arith.constant 0 : i32
    %c0_i32_1 = arith.constant 0 : i32
    return %c0_i32, %c0_i32_0 : i32, i32
  }
  func.func @transform_10(%arg0: i32) -> (i32, i32) {
    %c0_i32 = arith.constant 0 : i32
    %c0_i32_0 = arith.constant 0 : i32
    %c0_i32_1 = arith.constant 0 : i32
    return %c0_i32, %c0_i32_0 : i32, i32
  }
  func.func @transform_11(%arg0: i32) -> (i32, i32) {
    %c0_i32 = arith.constant 0 : i32
    %c0_i32_0 = arith.constant 0 : i32
    %c0_i32_1 = arith.constant 0 : i32
    return %c0_i32, %c0_i32_0 : i32, i32
  }
  func.func @transform_12(%arg0: i32) -> (i32, i32) {
    %c0_i32 = arith.constant 0 : i32
    %c0_i32_0 = arith.constant 0 : i32
    return %arg0, %c0_i32 : i32, i32
  }
  func.func @transform_13(%arg0: i32) -> (i32, i32) {
    %c0_i32 = arith.constant 0 : i32
    %c0_i32_0 = arith.constant 0 : i32
    return %arg0, %c0_i32 : i32, i32
  }
}

module attributes {stable_mosaic.version = 11 : i64} {
  func.func @kernel(%arg0: i32, %arg1: i32, %arg2: memref<32x32xf32, #tpu.memory_space<vmem>>, %arg3: memref<3x160x32xbf16, #tpu.memory_space<vmem>>, %arg4: memref<1x3x160xi32, #tpu.memory_space<vmem>>, %arg5: memref<32x48xbf16, #tpu.memory_space<vmem>>, %arg6: memref<1x3x32xi32, #tpu.memory_space<vmem>>, %arg7: memref<112x64xbf16, #tpu.memory_space<vmem>>, %arg8: memref<1x64xf32, #tpu.memory_space<vmem>>, %arg9: memref<64x64xbf16, #tpu.memory_space<vmem>>, %arg10: memref<1x64xf32, #tpu.memory_space<vmem>>, %arg11: memref<64x32xbf16, #tpu.memory_space<vmem>>, %arg12: memref<1x32xf32, #tpu.memory_space<vmem>>, %arg13: memref<1x32xf32, #tpu.memory_space<vmem>>, %arg14: memref<1x32xf32, #tpu.memory_space<vmem>>, %arg15: memref<64x64xbf16, #tpu.memory_space<vmem>>, %arg16: memref<1x64xf32, #tpu.memory_space<vmem>>, %arg17: memref<64x64xbf16, #tpu.memory_space<vmem>>, %arg18: memref<1x64xf32, #tpu.memory_space<vmem>>, %arg19: memref<64x32xbf16, #tpu.memory_space<vmem>>, %arg20: memref<1x32xf32, #tpu.memory_space<vmem>>, %arg21: memref<1x32xf32, #tpu.memory_space<vmem>>, %arg22: memref<1x32xf32, #tpu.memory_space<vmem>>, %arg23: memref<32x32xf32, #tpu.memory_space<vmem>>, %arg24: memref<32x32xf32, #tpu.memory_space<vmem>>, %arg25: memref<32x32xf32, #tpu.memory_space<vmem>>, %arg26: memref<32x16xf32, #tpu.memory_space<vmem>>) attributes {dimension_semantics = [#tpu.dimension_semantics<parallel>, #tpu.dimension_semantics<arbitrary>], iteration_bounds = array<i64: 2, 2>, scalar_prefetch = 0 : i64, scratch_operands = 3 : i64, tpu.core_type = #tpu.core_type<tc>, window_params = [{transform_indices = @transform_0, window_bounds = array<i64: 32, 32>}, {transform_indices = @transform_1, window_bounds = array<i64: 3, 160, 32>}, {transform_indices = @transform_2, window_bounds = array<i64: 1, 3, 160>}, {transform_indices = @transform_3, window_bounds = array<i64: 32, 48>}, {transform_indices = @transform_4, window_bounds = array<i64: 1, 3, 32>}, {pipeline_mode = #tpu.pipeline_mode<synchronous>, transform_indices = @transform_5, window_bounds = array<i64: 112, 64>}, {pipeline_mode = #tpu.pipeline_mode<synchronous>, transform_indices = @transform_6, window_bounds = array<i64: 1, 64>}, {pipeline_mode = #tpu.pipeline_mode<synchronous>, transform_indices = @transform_7, window_bounds = array<i64: 64, 64>}, {pipeline_mode = #tpu.pipeline_mode<synchronous>, transform_indices = @transform_8, window_bounds = array<i64: 1, 64>}, {pipeline_mode = #tpu.pipeline_mode<synchronous>, transform_indices = @transform_9, window_bounds = array<i64: 64, 32>}, {pipeline_mode = #tpu.pipeline_mode<synchronous>, transform_indices = @transform_10, window_bounds = array<i64: 1, 32>}, {pipeline_mode = #tpu.pipeline_mode<synchronous>, transform_indices = @transform_11, window_bounds = array<i64: 1, 32>}, {pipeline_mode = #tpu.pipeline_mode<synchronous>, transform_indices = @transform_12, window_bounds = array<i64: 1, 32>}, {pipeline_mode = #tpu.pipeline_mode<synchronous>, transform_indices = @transform_13, window_bounds = array<i64: 64, 64>}, {pipeline_mode = #tpu.pipeline_mode<synchronous>, transform_indices = @transform_14, window_bounds = array<i64: 1, 64>}, {pipeline_mode = #tpu.pipeline_mode<synchronous>, transform_indices = @transform_15, window_bounds = array<i64: 64, 64>}, {pipeline_mode = #tpu.pipeline_mode<synchronous>, transform_indices = @transform_16, window_bounds = array<i64: 1, 64>}, {pipeline_mode = #tpu.pipeline_mode<synchronous>, transform_indices = @transform_17, window_bounds = array<i64: 64, 32>}, {pipeline_mode = #tpu.pipeline_mode<synchronous>, transform_indices = @transform_18, window_bounds = array<i64: 1, 32>}, {pipeline_mode = #tpu.pipeline_mode<synchronous>, transform_indices = @transform_19, window_bounds = array<i64: 1, 32>}, {pipeline_mode = #tpu.pipeline_mode<synchronous>, transform_indices = @transform_20, window_bounds = array<i64: 1, 32>}, {transform_indices = @transform_21, window_bounds = array<i64: 32, 32>}]} {
    %c1_i32 = arith.constant 1 : i32
    %0 = arith.cmpi slt, %arg0, %c1_i32 : i32
    %true = arith.constant true
    %1 = arith.xori %0, %true : i1
    %c1_i32_0 = arith.constant 1 : i32
    %2 = arith.cmpi eq, %arg1, %c1_i32_0 : i32
    %c32_i32 = arith.constant 32 : i32
    %3 = arith.muli %arg0, %c32_i32 : i32
    %c0_i32 = arith.constant 0 : i32
    %4 = arith.cmpi eq, %arg1, %c0_i32 : i32
    %5 = arith.extui %4 : i1 to i32
    %c0_i32_1 = arith.constant 0 : i32
    %6 = arith.cmpi ne, %5, %c0_i32_1 : i32
    scf.if %6 {
      %cst = arith.constant 0.000000e+00 : f32
      %22 = vector.broadcast %cst : f32 to vector<32x32xf32>
      %c0_8 = arith.constant 0 : index
      %c0_9 = arith.constant 0 : index
      %23 = vector.load %arg24[%c0_8, %c0_9] : memref<32x32xf32, #tpu.memory_space<vmem>>, vector<32x32xf32>
      tpu.vector_store %arg24[%c0_8, %c0_9], %22 {strides = array<i32>} : memref<32x32xf32, #tpu.memory_space<vmem>>, vector<32x32xf32>,
      %cst_10 = arith.constant 0.000000e+00 : f32
      %24 = vector.broadcast %cst_10 : f32 to vector<32x32xf32>
      %c0_11 = arith.constant 0 : index
      %c0_12 = arith.constant 0 : index
      %25 = vector.load %arg25[%c0_11, %c0_12] : memref<32x32xf32, #tpu.memory_space<vmem>>, vector<32x32xf32>
      tpu.vector_store %arg25[%c0_11, %c0_12], %24 {strides = array<i32>} : memref<32x32xf32, #tpu.memory_space<vmem>>, vector<32x32xf32>,
      %cst_13 = arith.constant 0.000000e+00 : f32
      %26 = vector.broadcast %cst_13 : f32 to vector<32x16xf32>
      %c0_14 = arith.constant 0 : index
      %c0_15 = arith.constant 0 : index
      %27 = vector.load %arg26[%c0_14, %c0_15] : memref<32x16xf32, #tpu.memory_space<vmem>>, vector<32x16xf32>
      tpu.vector_store %arg26[%c0_14, %c0_15], %26 {strides = array<i32>} : memref<32x16xf32, #tpu.memory_space<vmem>>, vector<32x16xf32>,
    } else {
    }
    %7 = tpu.iota {dimensions = array<i32: 0>} : vector<32x160xi32>
    %8 = vector.broadcast %3 : i32 to vector<32x160xi32>
    %9 = arith.addi %8, %7 : vector<32x160xi32>
    %c0 = arith.constant 0 : index
    %c0_2 = arith.constant 0 : index
    %c0_3 = arith.constant 0 : index
    %10 = vector.load %arg4[%c0, %c0_2, %c0_3] : memref<1x3x160xi32, #tpu.memory_space<vmem>>, vector<1x3x160xi32>
    %11 = vector.shape_cast %10 : vector<1x3x160xi32> to vector<3x160xi32>
    %12 = arith.extui %0 : i1 to i32
    %c0_i32_4 = arith.constant 0 : i32
    %13 = arith.cmpi ne, %12, %c0_i32_4 : i32
    scf.if %13 {
      %22 = vector.extract_strided_slice %11 {offsets = [0, 0], sizes = [1, 160], strides = [1, 1]} : vector<3x160xi32> to vector<1x160xi32>
      %23 = vector.broadcast %22 : vector<1x160xi32> to vector<32x160xi32>
      %24 = arith.cmpi eq, %9, %23 : vector<32x160xi32>
      %25 = arith.extui %24 : vector<32x160xi1> to vector<32x160xi32>
      %26 = arith.sitofp %25 : vector<32x160xi32> to vector<32x160xf32>
      %27 = arith.truncf %26 : vector<32x160xf32> to vector<32x160xbf16>
      %28 = vector.extract_strided_slice %11 {offsets = [2, 0], sizes = [1, 160], strides = [1, 1]} : vector<3x160xi32> to vector<1x160xi32>
      %29 = vector.broadcast %28 : vector<1x160xi32> to vector<32x160xi32>
      %30 = arith.cmpi eq, %9, %29 : vector<32x160xi32>
      %31 = arith.extui %30 : vector<32x160xi1> to vector<32x160xi32>
      %32 = arith.sitofp %31 : vector<32x160xi32> to vector<32x160xf32>
      %33 = arith.truncf %32 : vector<32x160xf32> to vector<32x160xbf16>
      %c0_8 = arith.constant 0 : index
      %c0_9 = arith.constant 0 : index
      %34 = vector.load %arg24[%c0_8, %c0_9] : memref<32x32xf32, #tpu.memory_space<vmem>>, vector<32x32xf32>
      %c0_10 = arith.constant 0 : index
      %c0_11 = arith.constant 0 : index
      %c0_12 = arith.constant 0 : index
      %35 = vector.load %arg3[%c0_10, %c0_11, %c0_12] : memref<3x160x32xbf16, #tpu.memory_space<vmem>>, vector<1x160x32xbf16>
      %36 = vector.shape_cast %35 : vector<1x160x32xbf16> to vector<160x32xbf16>
      %cst = arith.constant dense<0.000000e+00> : vector<32x32xf32>
      %37 = tpu.matmul %27, %36, %cst {dimension_numbers = #tpu.dot_dimension_numbers<[1], [0], [0], [1], [0, 0, 1, 1], [], []>} : vector<32x160xbf16>, vector<160x32xbf16>, vector<32x32xf32> -> vector<32x32xf32>
      %38 = arith.addf %34, %37 : vector<32x32xf32>
      %c0_13 = arith.constant 0 : index
      %c0_14 = arith.constant 0 : index
      %39 = vector.load %arg24[%c0_13, %c0_14] : memref<32x32xf32, #tpu.memory_space<vmem>>, vector<32x32xf32>
      tpu.vector_store %arg24[%c0_13, %c0_14], %38 {strides = array<i32>} : memref<32x32xf32, #tpu.memory_space<vmem>>, vector<32x32xf32>,
      %c0_15 = arith.constant 0 : index
      %c0_16 = arith.constant 0 : index
      %40 = vector.load %arg25[%c0_15, %c0_16] : memref<32x32xf32, #tpu.memory_space<vmem>>, vector<32x32xf32>
      %c2 = arith.constant 2 : index
      %c0_17 = arith.constant 0 : index
      %c0_18 = arith.constant 0 : index
      %41 = vector.load %arg3[%c2, %c0_17, %c0_18] : memref<3x160x32xbf16, #tpu.memory_space<vmem>>, vector<1x160x32xbf16>
      %42 = vector.shape_cast %41 : vector<1x160x32xbf16> to vector<160x32xbf16>
      %cst_19 = arith.constant dense<0.000000e+00> : vector<32x32xf32>
      %43 = tpu.matmul %33, %42, %cst_19 {dimension_numbers = #tpu.dot_dimension_numbers<[1], [0], [0], [1], [0, 0, 1, 1], [], []>} : vector<32x160xbf16>, vector<160x32xbf16>, vector<32x32xf32> -> vector<32x32xf32>
      %44 = arith.addf %40, %43 : vector<32x32xf32>
      %c0_20 = arith.constant 0 : index
      %c0_21 = arith.constant 0 : index
      %45 = vector.load %arg25[%c0_20, %c0_21] : memref<32x32xf32, #tpu.memory_space<vmem>>, vector<32x32xf32>
      tpu.vector_store %arg25[%c0_20, %c0_21], %44 {strides = array<i32>} : memref<32x32xf32, #tpu.memory_space<vmem>>, vector<32x32xf32>,
      %46 = tpu.iota {dimensions = array<i32: 0>} : vector<32x32xi32>
      %47 = vector.broadcast %3 : i32 to vector<32x32xi32>
      %48 = arith.addi %47, %46 : vector<32x32xi32>
      %c0_22 = arith.constant 0 : index
      %c0_23 = arith.constant 0 : index
      %c0_24 = arith.constant 0 : index
      %49 = vector.load %arg6[%c0_22, %c0_23, %c0_24] : memref<1x3x32xi32, #tpu.memory_space<vmem>>, vector<1x3x32xi32>
      %50 = vector.shape_cast %49 : vector<1x3x32xi32> to vector<3x32xi32>
      %c0_25 = arith.constant 0 : index
      %c0_26 = arith.constant 0 : index
      %51 = vector.load %arg5[%c0_25, %c0_26] : memref<32x48xbf16, #tpu.memory_space<vmem>>, vector<32x48xbf16>
      %cst_27 = arith.constant 0.000000e+00 : f32
      %52 = vector.broadcast %cst_27 : f32 to vector<32x16xf32>
      %53 = vector.extract_strided_slice %50 {offsets = [0, 0], sizes = [1, 32], strides = [1, 1]} : vector<3x32xi32> to vector<1x32xi32>
      %54 = vector.broadcast %53 : vector<1x32xi32> to vector<32x32xi32>
      %55 = arith.cmpi eq, %48, %54 : vector<32x32xi32>
      %56 = arith.extui %55 : vector<32x32xi1> to vector<32x32xi32>
      %57 = arith.sitofp %56 : vector<32x32xi32> to vector<32x32xf32>
      %58 = arith.truncf %57 : vector<32x32xf32> to vector<32x32xbf16>
      %59 = vector.extract_strided_slice %51 {offsets = [0, 0], sizes = [32, 16], strides = [1, 1]} : vector<32x48xbf16> to vector<32x16xbf16>
      %cst_28 = arith.constant dense<0.000000e+00> : vector<32x16xf32>
      %60 = tpu.matmul %58, %59, %cst_28 {dimension_numbers = #tpu.dot_dimension_numbers<[1], [0], [0], [1], [0, 0, 1, 1], [], []>} : vector<32x32xbf16>, vector<32x16xbf16>, vector<32x16xf32> -> vector<32x16xf32>
      %61 = arith.addf %52, %60 : vector<32x16xf32>
      %62 = vector.extract_strided_slice %50 {offsets = [1, 0], sizes = [1, 32], strides = [1, 1]} : vector<3x32xi32> to vector<1x32xi32>
      %63 = vector.broadcast %62 : vector<1x32xi32> to vector<32x32xi32>
      %64 = arith.cmpi eq, %48, %63 : vector<32x32xi32>
      %65 = arith.extui %64 : vector<32x32xi1> to vector<32x32xi32>
      %66 = arith.sitofp %65 : vector<32x32xi32> to vector<32x32xf32>
      %67 = arith.truncf %66 : vector<32x32xf32> to vector<32x32xbf16>
      %68 = vector.extract_strided_slice %51 {offsets = [0, 16], sizes = [32, 16], strides = [1, 1]} : vector<32x48xbf16> to vector<32x16xbf16>
      %cst_29 = arith.constant dense<0.000000e+00> : vector<32x16xf32>
      %69 = tpu.matmul %67, %68, %cst_29 {dimension_numbers = #tpu.dot_dimension_numbers<[1], [0], [0], [1], [0, 0, 1, 1], [], []>} : vector<32x32xbf16>, vector<32x16xbf16>, vector<32x16xf32> -> vector<32x16xf32>
      %70 = arith.addf %61, %69 : vector<32x16xf32>
      %71 = vector.extract_strided_slice %50 {offsets = [2, 0], sizes = [1, 32], strides = [1, 1]} : vector<3x32xi32> to vector<1x32xi32>
      %72 = vector.broadcast %71 : vector<1x32xi32> to vector<32x32xi32>
      %73 = arith.cmpi eq, %48, %72 : vector<32x32xi32>
      %74 = arith.extui %73 : vector<32x32xi1> to vector<32x32xi32>
      %75 = arith.sitofp %74 : vector<32x32xi32> to vector<32x32xf32>
      %76 = arith.truncf %75 : vector<32x32xf32> to vector<32x32xbf16>
      %77 = vector.extract_strided_slice %51 {offsets = [0, 32], sizes = [32, 16], strides = [1, 1]} : vector<32x48xbf16> to vector<32x16xbf16>
      %cst_30 = arith.constant dense<0.000000e+00> : vector<32x16xf32>
      %78 = tpu.matmul %76, %77, %cst_30 {dimension_numbers = #tpu.dot_dimension_numbers<[1], [0], [0], [1], [0, 0, 1, 1], [], []>} : vector<32x32xbf16>, vector<32x16xbf16>, vector<32x16xf32> -> vector<32x16xf32>
      %79 = arith.addf %70, %78 : vector<32x16xf32>
      %c0_31 = arith.constant 0 : index
      %c0_32 = arith.constant 0 : index
      %80 = vector.load %arg26[%c0_31, %c0_32] : memref<32x16xf32, #tpu.memory_space<vmem>>, vector<32x16xf32>
      %81 = arith.addf %80, %79 : vector<32x16xf32>
      %c0_33 = arith.constant 0 : index
      %c0_34 = arith.constant 0 : index
      %82 = vector.load %arg26[%c0_33, %c0_34] : memref<32x16xf32, #tpu.memory_space<vmem>>, vector<32x16xf32>
      tpu.vector_store %arg26[%c0_33, %c0_34], %81 {strides = array<i32>} : memref<32x16xf32, #tpu.memory_space<vmem>>, vector<32x16xf32>,
    } else {
    }
    %14 = arith.extui %1 : i1 to i32
    %c0_i32_5 = arith.constant 0 : i32
    %15 = arith.cmpi ne, %14, %c0_i32_5 : i32
    scf.if %15 {
      %22 = vector.extract_strided_slice %11 {offsets = [1, 0], sizes = [1, 160], strides = [1, 1]} : vector<3x160xi32> to vector<1x160xi32>
      %23 = vector.broadcast %22 : vector<1x160xi32> to vector<32x160xi32>
      %24 = arith.cmpi eq, %9, %23 : vector<32x160xi32>
      %25 = arith.extui %24 : vector<32x160xi1> to vector<32x160xi32>
      %26 = arith.sitofp %25 : vector<32x160xi32> to vector<32x160xf32>
      %27 = arith.truncf %26 : vector<32x160xf32> to vector<32x160xbf16>
      %c0_8 = arith.constant 0 : index
      %c0_9 = arith.constant 0 : index
      %28 = vector.load %arg24[%c0_8, %c0_9] : memref<32x32xf32, #tpu.memory_space<vmem>>, vector<32x32xf32>
      %c1 = arith.constant 1 : index
      %c0_10 = arith.constant 0 : index
      %c0_11 = arith.constant 0 : index
      %29 = vector.load %arg3[%c1, %c0_10, %c0_11] : memref<3x160x32xbf16, #tpu.memory_space<vmem>>, vector<1x160x32xbf16>
      %30 = vector.shape_cast %29 : vector<1x160x32xbf16> to vector<160x32xbf16>
      %cst = arith.constant dense<0.000000e+00> : vector<32x32xf32>
      %31 = tpu.matmul %27, %30, %cst {dimension_numbers = #tpu.dot_dimension_numbers<[1], [0], [0], [1], [0, 0, 1, 1], [], []>} : vector<32x160xbf16>, vector<160x32xbf16>, vector<32x32xf32> -> vector<32x32xf32>
      %32 = arith.addf %28, %31 : vector<32x32xf32>
      %c0_12 = arith.constant 0 : index
      %c0_13 = arith.constant 0 : index
      %33 = vector.load %arg24[%c0_12, %c0_13] : memref<32x32xf32, #tpu.memory_space<vmem>>, vector<32x32xf32>
      tpu.vector_store %arg24[%c0_12, %c0_13], %32 {strides = array<i32>} : memref<32x32xf32, #tpu.memory_space<vmem>>, vector<32x32xf32>,
    } else {
    }
    %16 = arith.andi %2, %0 : i1
    %17 = arith.extui %16 : i1 to i32
    %c0_i32_6 = arith.constant 0 : i32
    %18 = arith.cmpi ne, %17, %c0_i32_6 : i32
    scf.if %18 {
      %c0_8 = arith.constant 0 : index
      %c0_9 = arith.constant 0 : index
      %22 = vector.load %arg2[%c0_8, %c0_9] : memref<32x32xf32, #tpu.memory_space<vmem>>, vector<32x32xf32>
      %c0_10 = arith.constant 0 : index
      %c0_11 = arith.constant 0 : index
      %23 = vector.load %arg25[%c0_10, %c0_11] : memref<32x32xf32, #tpu.memory_space<vmem>>, vector<32x32xf32>
      %c0_12 = arith.constant 0 : index
      %c0_13 = arith.constant 0 : index
      %24 = vector.load %arg24[%c0_12, %c0_13] : memref<32x32xf32, #tpu.memory_space<vmem>>, vector<32x32xf32>
      %c0_14 = arith.constant 0 : index
      %c0_15 = arith.constant 0 : index
      %25 = vector.load %arg26[%c0_14, %c0_15] : memref<32x16xf32, #tpu.memory_space<vmem>>, vector<32x16xf32>
      %26 = tpu.concatenate %22, %23, %24, %25 in 1 : vector<32x32xf32>, vector<32x32xf32>, vector<32x32xf32>, vector<32x16xf32> -> vector<32x112xf32>
      %27 = arith.truncf %26 : vector<32x112xf32> to vector<32x112xbf16>
      %c0_16 = arith.constant 0 : index
      %c0_17 = arith.constant 0 : index
      %28 = vector.load %arg7[%c0_16, %c0_17] : memref<112x64xbf16, #tpu.memory_space<vmem>>, vector<112x64xbf16>
      %cst = arith.constant dense<0.000000e+00> : vector<32x64xf32>
      %29 = tpu.matmul %27, %28, %cst {dimension_numbers = #tpu.dot_dimension_numbers<[1], [0], [0], [1], [0, 0, 1, 1], [], []>} : vector<32x112xbf16>, vector<112x64xbf16>, vector<32x64xf32> -> vector<32x64xf32>
      %c0_18 = arith.constant 0 : index
      %c0_19 = arith.constant 0 : index
      %30 = vector.load %arg8[%c0_18, %c0_19] : memref<1x64xf32, #tpu.memory_space<vmem>>, vector<1x64xf32>
      %31 = vector.broadcast %30 : vector<1x64xf32> to vector<32x64xf32>
      %32 = arith.addf %29, %31 : vector<32x64xf32>
      %c0_20 = arith.constant 0 : index
      %c0_21 = arith.constant 0 : index
      %33 = vector.load %arg9[%c0_20, %c0_21] : memref<64x64xbf16, #tpu.memory_space<vmem>>, vector<64x64xbf16>
      %c0_22 = arith.constant 0 : index
      %c0_23 = arith.constant 0 : index
      %34 = vector.load %arg10[%c0_22, %c0_23] : memref<1x64xf32, #tpu.memory_space<vmem>>, vector<1x64xf32>
      %c0_24 = arith.constant 0 : index
      %c0_25 = arith.constant 0 : index
      %35 = vector.load %arg11[%c0_24, %c0_25] : memref<64x32xbf16, #tpu.memory_space<vmem>>, vector<64x32xbf16>
      %c0_26 = arith.constant 0 : index
      %c0_27 = arith.constant 0 : index
      %36 = vector.load %arg12[%c0_26, %c0_27] : memref<1x32xf32, #tpu.memory_space<vmem>>, vector<1x32xf32>
      %c0_28 = arith.constant 0 : index
      %c0_29 = arith.constant 0 : index
      %37 = vector.load %arg13[%c0_28, %c0_29] : memref<1x32xf32, #tpu.memory_space<vmem>>, vector<1x32xf32>
      %c0_30 = arith.constant 0 : index
      %c0_31 = arith.constant 0 : index
      %38 = vector.load %arg14[%c0_30, %c0_31] : memref<1x32xf32, #tpu.memory_space<vmem>>, vector<1x32xf32>
      %cst_32 = arith.constant 0.000000e+00 : f32
      %39 = vector.broadcast %cst_32 : f32 to vector<32x64xf32>
      %40 = arith.maximumf %32, %39 : vector<32x64xf32>
      %41 = arith.truncf %40 : vector<32x64xf32> to vector<32x64xbf16>
      %cst_33 = arith.constant dense<0.000000e+00> : vector<32x64xf32>
      %42 = tpu.matmul %41, %33, %cst_33 {dimension_numbers = #tpu.dot_dimension_numbers<[1], [0], [0], [1], [0, 0, 1, 1], [], []>} : vector<32x64xbf16>, vector<64x64xbf16>, vector<32x64xf32> -> vector<32x64xf32>
      %43 = vector.broadcast %34 : vector<1x64xf32> to vector<32x64xf32>
      %44 = arith.addf %42, %43 : vector<32x64xf32>
      %cst_34 = arith.constant 0.000000e+00 : f32
      %45 = vector.broadcast %cst_34 : f32 to vector<32x64xf32>
      %46 = arith.maximumf %44, %45 : vector<32x64xf32>
      %47 = arith.truncf %46 : vector<32x64xf32> to vector<32x64xbf16>
      %cst_35 = arith.constant dense<0.000000e+00> : vector<32x32xf32>
      %48 = tpu.matmul %47, %35, %cst_35 {dimension_numbers = #tpu.dot_dimension_numbers<[1], [0], [0], [1], [0, 0, 1, 1], [], []>} : vector<32x64xbf16>, vector<64x32xbf16>, vector<32x32xf32> -> vector<32x32xf32>
      %49 = vector.broadcast %36 : vector<1x32xf32> to vector<32x32xf32>
      %50 = arith.addf %48, %49 : vector<32x32xf32>
      %cst_36 = arith.constant dense<0.000000e+00> : vector<32xf32>
      %51 = vector.multi_reduction <add>, %50, %cst_36 [1] : vector<32x32xf32> to vector<32xf32>
      %52 = vector.shape_cast %51 : vector<32xf32> to vector<32x1xf32>
      %cst_37 = arith.constant 3.200000e+01 : f32
      %53 = vector.broadcast %cst_37 : f32 to vector<32x1xf32>
      %54 = arith.divf %52, %53 : vector<32x1xf32>
      %55 = vector.broadcast %54 : vector<32x1xf32> to vector<32x32xf32>
      %56 = arith.subf %50, %55 : vector<32x32xf32>
      %57 = arith.mulf %56, %56 : vector<32x32xf32>
      %cst_38 = arith.constant dense<0.000000e+00> : vector<32xf32>
      %58 = vector.multi_reduction <add>, %57, %cst_38 [1] : vector<32x32xf32> to vector<32xf32>
      %59 = vector.shape_cast %58 : vector<32xf32> to vector<32x1xf32>
      %cst_39 = arith.constant 3.200000e+01 : f32
      %60 = vector.broadcast %cst_39 : f32 to vector<32x1xf32>
      %61 = arith.divf %59, %60 : vector<32x1xf32>
      %62 = vector.broadcast %54 : vector<32x1xf32> to vector<32x32xf32>
      %63 = arith.subf %50, %62 : vector<32x32xf32>
      %cst_40 = arith.constant 9.99999974E-6 : f32
      %64 = vector.broadcast %cst_40 : f32 to vector<32x1xf32>
      %65 = arith.addf %61, %64 : vector<32x1xf32>
      %66 = math.rsqrt %65 : vector<32x1xf32>
      %67 = vector.broadcast %66 : vector<32x1xf32> to vector<32x32xf32>
      %68 = arith.mulf %63, %67 : vector<32x32xf32>
      %69 = vector.broadcast %37 : vector<1x32xf32> to vector<32x32xf32>
      %70 = arith.mulf %68, %69 : vector<32x32xf32>
      %71 = vector.broadcast %38 : vector<1x32xf32> to vector<32x32xf32>
      %72 = arith.addf %70, %71 : vector<32x32xf32>
      %73 = arith.addf %22, %72 : vector<32x32xf32>
      %c0_41 = arith.constant 0 : index
      %c0_42 = arith.constant 0 : index
      %74 = vector.load %arg23[%c0_41, %c0_42] : memref<32x32xf32, #tpu.memory_space<vmem>>, vector<32x32xf32>
      tpu.vector_store %arg23[%c0_41, %c0_42], %73 {strides = array<i32>} : memref<32x32xf32, #tpu.memory_space<vmem>>, vector<32x32xf32>,
    } else {
    }
    %19 = arith.andi %2, %1 : i1
    %20 = arith.extui %19 : i1 to i32
    %c0_i32_7 = arith.constant 0 : i32
    %21 = arith.cmpi ne, %20, %c0_i32_7 : i32
    scf.if %21 {
      %c0_8 = arith.constant 0 : index
      %c0_9 = arith.constant 0 : index
      %22 = vector.load %arg2[%c0_8, %c0_9] : memref<32x32xf32, #tpu.memory_space<vmem>>, vector<32x32xf32>
      %c0_10 = arith.constant 0 : index
      %c0_11 = arith.constant 0 : index
      %23 = vector.load %arg24[%c0_10, %c0_11] : memref<32x32xf32, #tpu.memory_space<vmem>>, vector<32x32xf32>
      %24 = tpu.concatenate %22, %23 in 1 : vector<32x32xf32>, vector<32x32xf32> -> vector<32x64xf32>
      %25 = arith.truncf %24 : vector<32x64xf32> to vector<32x64xbf16>
      %c0_12 = arith.constant 0 : index
      %c0_13 = arith.constant 0 : index
      %26 = vector.load %arg15[%c0_12, %c0_13] : memref<64x64xbf16, #tpu.memory_space<vmem>>, vector<64x64xbf16>
      %cst = arith.constant dense<0.000000e+00> : vector<32x64xf32>
      %27 = tpu.matmul %25, %26, %cst {dimension_numbers = #tpu.dot_dimension_numbers<[1], [0], [0], [1], [0, 0, 1, 1], [], []>} : vector<32x64xbf16>, vector<64x64xbf16>, vector<32x64xf32> -> vector<32x64xf32>
      %c0_14 = arith.constant 0 : index
      %c0_15 = arith.constant 0 : index
      %28 = vector.load %arg16[%c0_14, %c0_15] : memref<1x64xf32, #tpu.memory_space<vmem>>, vector<1x64xf32>
      %29 = vector.broadcast %28 : vector<1x64xf32> to vector<32x64xf32>
      %30 = arith.addf %27, %29 : vector<32x64xf32>
      %c0_16 = arith.constant 0 : index
      %c0_17 = arith.constant 0 : index
      %31 = vector.load %arg17[%c0_16, %c0_17] : memref<64x64xbf16, #tpu.memory_space<vmem>>, vector<64x64xbf16>
      %c0_18 = arith.constant 0 : index
      %c0_19 = arith.constant 0 : index
      %32 = vector.load %arg18[%c0_18, %c0_19] : memref<1x64xf32, #tpu.memory_space<vmem>>, vector<1x64xf32>
      %c0_20 = arith.constant 0 : index
      %c0_21 = arith.constant 0 : index
      %33 = vector.load %arg19[%c0_20, %c0_21] : memref<64x32xbf16, #tpu.memory_space<vmem>>, vector<64x32xbf16>
      %c0_22 = arith.constant 0 : index
      %c0_23 = arith.constant 0 : index
      %34 = vector.load %arg20[%c0_22, %c0_23] : memref<1x32xf32, #tpu.memory_space<vmem>>, vector<1x32xf32>
      %c0_24 = arith.constant 0 : index
      %c0_25 = arith.constant 0 : index
      %35 = vector.load %arg21[%c0_24, %c0_25] : memref<1x32xf32, #tpu.memory_space<vmem>>, vector<1x32xf32>
      %c0_26 = arith.constant 0 : index
      %c0_27 = arith.constant 0 : index
      %36 = vector.load %arg22[%c0_26, %c0_27] : memref<1x32xf32, #tpu.memory_space<vmem>>, vector<1x32xf32>
      %cst_28 = arith.constant 0.000000e+00 : f32
      %37 = vector.broadcast %cst_28 : f32 to vector<32x64xf32>
      %38 = arith.maximumf %30, %37 : vector<32x64xf32>
      %39 = arith.truncf %38 : vector<32x64xf32> to vector<32x64xbf16>
      %cst_29 = arith.constant dense<0.000000e+00> : vector<32x64xf32>
      %40 = tpu.matmul %39, %31, %cst_29 {dimension_numbers = #tpu.dot_dimension_numbers<[1], [0], [0], [1], [0, 0, 1, 1], [], []>} : vector<32x64xbf16>, vector<64x64xbf16>, vector<32x64xf32> -> vector<32x64xf32>
      %41 = vector.broadcast %32 : vector<1x64xf32> to vector<32x64xf32>
      %42 = arith.addf %40, %41 : vector<32x64xf32>
      %cst_30 = arith.constant 0.000000e+00 : f32
      %43 = vector.broadcast %cst_30 : f32 to vector<32x64xf32>
      %44 = arith.maximumf %42, %43 : vector<32x64xf32>
      %45 = arith.truncf %44 : vector<32x64xf32> to vector<32x64xbf16>
      %cst_31 = arith.constant dense<0.000000e+00> : vector<32x32xf32>
      %46 = tpu.matmul %45, %33, %cst_31 {dimension_numbers = #tpu.dot_dimension_numbers<[1], [0], [0], [1], [0, 0, 1, 1], [], []>} : vector<32x64xbf16>, vector<64x32xbf16>, vector<32x32xf32> -> vector<32x32xf32>
      %47 = vector.broadcast %34 : vector<1x32xf32> to vector<32x32xf32>
      %48 = arith.addf %46, %47 : vector<32x32xf32>
      %cst_32 = arith.constant dense<0.000000e+00> : vector<32xf32>
      %49 = vector.multi_reduction <add>, %48, %cst_32 [1] : vector<32x32xf32> to vector<32xf32>
      %50 = vector.shape_cast %49 : vector<32xf32> to vector<32x1xf32>
      %cst_33 = arith.constant 3.200000e+01 : f32
      %51 = vector.broadcast %cst_33 : f32 to vector<32x1xf32>
      %52 = arith.divf %50, %51 : vector<32x1xf32>
      %53 = vector.broadcast %52 : vector<32x1xf32> to vector<32x32xf32>
      %54 = arith.subf %48, %53 : vector<32x32xf32>
      %55 = arith.mulf %54, %54 : vector<32x32xf32>
      %cst_34 = arith.constant dense<0.000000e+00> : vector<32xf32>
      %56 = vector.multi_reduction <add>, %55, %cst_34 [1] : vector<32x32xf32> to vector<32xf32>
      %57 = vector.shape_cast %56 : vector<32xf32> to vector<32x1xf32>
      %cst_35 = arith.constant 3.200000e+01 : f32
      %58 = vector.broadcast %cst_35 : f32 to vector<32x1xf32>
      %59 = arith.divf %57, %58 : vector<32x1xf32>
      %60 = vector.broadcast %52 : vector<32x1xf32> to vector<32x32xf32>
      %61 = arith.subf %48, %60 : vector<32x32xf32>
      %cst_36 = arith.constant 9.99999974E-6 : f32
      %62 = vector.broadcast %cst_36 : f32 to vector<32x1xf32>
      %63 = arith.addf %59, %62 : vector<32x1xf32>
      %64 = math.rsqrt %63 : vector<32x1xf32>
      %65 = vector.broadcast %64 : vector<32x1xf32> to vector<32x32xf32>
      %66 = arith.mulf %61, %65 : vector<32x32xf32>
      %67 = vector.broadcast %35 : vector<1x32xf32> to vector<32x32xf32>
      %68 = arith.mulf %66, %67 : vector<32x32xf32>
      %69 = vector.broadcast %36 : vector<1x32xf32> to vector<32x32xf32>
      %70 = arith.addf %68, %69 : vector<32x32xf32>
      %71 = arith.addf %22, %70 : vector<32x32xf32>
      %c0_37 = arith.constant 0 : index
      %c0_38 = arith.constant 0 : index
      %72 = vector.load %arg23[%c0_37, %c0_38] : memref<32x32xf32, #tpu.memory_space<vmem>>, vector<32x32xf32>
      tpu.vector_store %arg23[%c0_37, %c0_38], %71 {strides = array<i32>} : memref<32x32xf32, #tpu.memory_space<vmem>>, vector<32x32xf32>,
    } else {
    }
    return
  }
  func.func @transform_0(%arg0: i32, %arg1: i32) -> (i32, i32) {
    %c0_i32 = arith.constant 0 : i32
    %c0_i32_0 = arith.constant 0 : i32
    return %arg0, %c0_i32 : i32, i32
  }
  func.func @transform_1(%arg0: i32, %arg1: i32) -> (i32, i32, i32) {
    %c0_i32 = arith.constant 0 : i32
    %c0_i32_0 = arith.constant 0 : i32
    %c0_i32_1 = arith.constant 0 : i32
    return %c0_i32, %arg1, %c0_i32_0 : i32, i32, i32
  }
  func.func @transform_2(%arg0: i32, %arg1: i32) -> (i32, i32, i32) {
    %c0_i32 = arith.constant 0 : i32
    %c0_i32_0 = arith.constant 0 : i32
    %c0_i32_1 = arith.constant 0 : i32
    return %arg1, %c0_i32, %c0_i32_0 : i32, i32, i32
  }
  func.func @transform_3(%arg0: i32, %arg1: i32) -> (i32, i32) {
    %c0_i32 = arith.constant 0 : i32
    %c0_i32_0 = arith.constant 0 : i32
    return %arg1, %c0_i32 : i32, i32
  }
  func.func @transform_4(%arg0: i32, %arg1: i32) -> (i32, i32, i32) {
    %c0_i32 = arith.constant 0 : i32
    %c0_i32_0 = arith.constant 0 : i32
    %c0_i32_1 = arith.constant 0 : i32
    return %arg1, %c0_i32, %c0_i32_0 : i32, i32, i32
  }
  func.func @transform_5(%arg0: i32, %arg1: i32) -> (i32, i32) {
    %c0_i32 = arith.constant 0 : i32
    %c0_i32_0 = arith.constant 0 : i32
    %c0_i32_1 = arith.constant 0 : i32
    return %c0_i32, %c0_i32_0 : i32, i32
  }
  func.func @transform_6(%arg0: i32, %arg1: i32) -> (i32, i32) {
    %c0_i32 = arith.constant 0 : i32
    %c0_i32_0 = arith.constant 0 : i32
    %c0_i32_1 = arith.constant 0 : i32
    return %c0_i32, %c0_i32_0 : i32, i32
  }
  func.func @transform_7(%arg0: i32, %arg1: i32) -> (i32, i32) {
    %c0_i32 = arith.constant 0 : i32
    %c0_i32_0 = arith.constant 0 : i32
    %c0_i32_1 = arith.constant 0 : i32
    return %c0_i32, %c0_i32_0 : i32, i32
  }
  func.func @transform_8(%arg0: i32, %arg1: i32) -> (i32, i32) {
    %c0_i32 = arith.constant 0 : i32
    %c0_i32_0 = arith.constant 0 : i32
    %c0_i32_1 = arith.constant 0 : i32
    return %c0_i32, %c0_i32_0 : i32, i32
  }
  func.func @transform_9(%arg0: i32, %arg1: i32) -> (i32, i32) {
    %c0_i32 = arith.constant 0 : i32
    %c0_i32_0 = arith.constant 0 : i32
    %c0_i32_1 = arith.constant 0 : i32
    return %c0_i32, %c0_i32_0 : i32, i32
  }
  func.func @transform_10(%arg0: i32, %arg1: i32) -> (i32, i32) {
    %c0_i32 = arith.constant 0 : i32
    %c0_i32_0 = arith.constant 0 : i32
    %c0_i32_1 = arith.constant 0 : i32
    return %c0_i32, %c0_i32_0 : i32, i32
  }
  func.func @transform_11(%arg0: i32, %arg1: i32) -> (i32, i32) {
    %c0_i32 = arith.constant 0 : i32
    %c0_i32_0 = arith.constant 0 : i32
    %c0_i32_1 = arith.constant 0 : i32
    return %c0_i32, %c0_i32_0 : i32, i32
  }
  func.func @transform_12(%arg0: i32, %arg1: i32) -> (i32, i32) {
    %c0_i32 = arith.constant 0 : i32
    %c0_i32_0 = arith.constant 0 : i32
    %c0_i32_1 = arith.constant 0 : i32
    return %c0_i32, %c0_i32_0 : i32, i32
  }
  func.func @transform_13(%arg0: i32, %arg1: i32) -> (i32, i32) {
    %c0_i32 = arith.constant 0 : i32
    %c0_i32_0 = arith.constant 0 : i32
    %c0_i32_1 = arith.constant 0 : i32
    return %c0_i32, %c0_i32_0 : i32, i32
  }
  func.func @transform_14(%arg0: i32, %arg1: i32) -> (i32, i32) {
    %c0_i32 = arith.constant 0 : i32
    %c0_i32_0 = arith.constant 0 : i32
    %c0_i32_1 = arith.constant 0 : i32
    return %c0_i32, %c0_i32_0 : i32, i32
  }
  func.func @transform_15(%arg0: i32, %arg1: i32) -> (i32, i32) {
    %c0_i32 = arith.constant 0 : i32
    %c0_i32_0 = arith.constant 0 : i32
    %c0_i32_1 = arith.constant 0 : i32
    return %c0_i32, %c0_i32_0 : i32, i32
  }
  func.func @transform_16(%arg0: i32, %arg1: i32) -> (i32, i32) {
    %c0_i32 = arith.constant 0 : i32
    %c0_i32_0 = arith.constant 0 : i32
    %c0_i32_1 = arith.constant 0 : i32
    return %c0_i32, %c0_i32_0 : i32, i32
  }
  func.func @transform_17(%arg0: i32, %arg1: i32) -> (i32, i32) {
    %c0_i32 = arith.constant 0 : i32
    %c0_i32_0 = arith.constant 0 : i32
    %c0_i32_1 = arith.constant 0 : i32
    return %c0_i32, %c0_i32_0 : i32, i32
  }
  func.func @transform_18(%arg0: i32, %arg1: i32) -> (i32, i32) {
    %c0_i32 = arith.constant 0 : i32
    %c0_i32_0 = arith.constant 0 : i32
    %c0_i32_1 = arith.constant 0 : i32
    return %c0_i32, %c0_i32_0 : i32, i32
  }
  func.func @transform_19(%arg0: i32, %arg1: i32) -> (i32, i32) {
    %c0_i32 = arith.constant 0 : i32
    %c0_i32_0 = arith.constant 0 : i32
    %c0_i32_1 = arith.constant 0 : i32
    return %c0_i32, %c0_i32_0 : i32, i32
  }
  func.func @transform_20(%arg0: i32, %arg1: i32) -> (i32, i32) {
    %c0_i32 = arith.constant 0 : i32
    %c0_i32_0 = arith.constant 0 : i32
    %c0_i32_1 = arith.constant 0 : i32
    return %c0_i32, %c0_i32_0 : i32, i32
  }
  func.func @transform_21(%arg0: i32, %arg1: i32) -> (i32, i32) {
    %c0_i32 = arith.constant 0 : i32
    %c0_i32_0 = arith.constant 0 : i32
    return %arg0, %c0_i32 : i32, i32
  }
}

</mosaic_0001>

<llo_original>
// kernel: interaction_network_forward.4
$region0: #{interaction_network_forward.4}
  #allocation0 [shape = 'u32[]', space=smem, size = 0x4, offset = 0x4, fixed_abs, tag = 'smem constant byte address 0x4 - core index']
  #allocation1 [shape = 'u32[144,128]{1,0:T(1,128)}', space=vmem, size = 0x12000, scoped, tag = 'internal scratch']
  %s0 = inlined_call_operand.vmem [shape: s32[64,3], index: 0, kind: input, shape index: {}]
  %s1 = inlined_call_operand.vmem [shape: s32[64,3], index: 1, kind: input, shape index: {}]
  %s2 = inlined_call_operand.vmem [shape: f32[64,48], index: 2, kind: input, shape index: {}]
  %s3 = inlined_call_operand.vmem [shape: bf16[64,32], index: 3, kind: input, shape index: {}]
  %s4 = inlined_call_operand.vmem [shape: bf16[240,64], index: 4, kind: input, shape index: {}]
  %s5 = inlined_call_operand.vmem [shape: f32[1,64], index: 5, kind: input, shape index: {}]
  %s6 = inlined_call_operand.vmem [shape: bf16[64,64], index: 6, kind: input, shape index: {}]
  %s7 = inlined_call_operand.vmem [shape: f32[1,64], index: 7, kind: input, shape index: {}]
  %s8 = inlined_call_operand.vmem [shape: bf16[64,48], index: 8, kind: input, shape index: {}]
  %s9 = inlined_call_operand.vmem [shape: f32[1,48], index: 9, kind: input, shape index: {}]
  %s10 = inlined_call_operand.vmem [shape: f32[1,48], index: 10, kind: input, shape index: {}]
  %s11 = inlined_call_operand.vmem [shape: f32[1,48], index: 11, kind: input, shape index: {}]
  %s12 = inlined_call_operand.vmem [shape: bf16[64,48], index: 12, kind: output, shape index: {0}]
  %s13 = inlined_call_operand.vmem [shape: f32[64,48], index: 13, kind: output, shape index: {1}]
  %14 = xla_tuple %s12, %s13
  %s15 = sld [smem:[#allocation0]]
  $region89: #{interaction_network_forward.4} parent=0
    _
  %s17 = ssub.s32 1, %s15
  %s18 = scalar_select 0, %s17, %s15
  loop: start=0, step=1, limit=4
  $region2: #{interaction_network_forward.4} parent=0 // loop_pre_header
    _
  $region3: #{interaction_network_forward.4} parent=0 // loop_header
    %s20 = sphi 0, %s24
    %p21 = scmp.ge.s32.totalorder %s20, 4
    %s30 = sphi 0, %s32
    %s33 = sphi 0, %s30
    %s34 = sphi 0, %s33
    %s50 = sphi 0, %s34
    %s56 = sphi 0, %s58
    %s59 = sphi 0, %s56
    %s60 = sphi 0, %s59
    %s76 = sphi 0, %s60
    %s82 = sphi 0, %s84
    %s85 = sphi 0, %s82
    %s86 = sphi 0, %s85
    %s102 = sphi 0, %s86
    %s106 = sphi 0, %s106
    %s108 = sphi 0, %s106
    %s109 = sphi 0, %s108
    %s123 = sphi 0, %s109
    %s127 = sphi 0, %s127
    %s129 = sphi 0, %s127
    %s130 = sphi 0, %s129
    %s144 = sphi 0, %s130
    %s148 = sphi 0, %s148
    %s150 = sphi 0, %s148
    %s151 = sphi 0, %s150
    %s165 = sphi 0, %s151
    %s169 = sphi 0, %s169
    %s171 = sphi 0, %s169
    %s172 = sphi 0, %s171
    %s186 = sphi 0, %s172
    %s190 = sphi 0, %s190
    %s192 = sphi 0, %s190
    %s193 = sphi 0, %s192
    %s207 = sphi 0, %s193
    %s211 = sphi 0, %s211
    %s213 = sphi 0, %s211
    %s214 = sphi 0, %s213
    %s228 = sphi 0, %s214
    %s232 = sphi 0, %s232
    %s234 = sphi 0, %s232
    %s235 = sphi 0, %s234
    %s249 = sphi 0, %s235
    %s253 = sphi 0, %s253
    %s255 = sphi 0, %s253
    %s256 = sphi 0, %s255
    %s270 = sphi 0, %s256
    %s274 = sphi 0, %s274
    %s276 = sphi 0, %s274
    %s277 = sphi 0, %s276
    %s291 = sphi 0, %s277
    %s297 = sphi 0, %s299
    %s300 = sphi 0, %s297
    %s301 = sphi 0, %s300
    %s317 = sphi 0, %s301
    %s323 = sphi 0, %s325
    %s326 = sphi 0, %s323
    %s327 = sphi 0, %s326
    %s343 = sphi 0, %s327
  $region4: #{interaction_network_forward.4} parent=0 // loop_header_branch
    %23 = sbr.rel (%p21) target = $region8
  $region5: #{interaction_network_forward.4} parent=0 // loop_body
    %s25 = ssub.s32 %s20, 1
    %s26 = ssub.s32 %s20, 2
    %s27 = sadd.s32 %s20, 1
    %s28 = ssub.s32 %s20, %s27
    %p29 = scmp.eq.s32.totalorder %s28, 0
    %s31 = sadd.s32 %s30, 1
    %s32 = scalar_select %p29, %s30, %s31
    %p35 = pneg %p29
    %p36 = scmp.eq.s32.totalorder %s20, 1
    %p37 = por %p35, %p36
    %p38 = scmp.ne.s32.totalorder %s30, %s33
    %p39 = scmp.eq.s32.totalorder %s20, 0
    %p40 = por %p38, %p39
    %p41 = scmp.ne.s32.totalorder %s30, %s33
    %p42 = scmp.eq.s32.totalorder %s25, 1
    %p43 = por %p41, %p42
    %p44 = scmp.ne.s32.totalorder %s33, %s34
    %p45 = scmp.eq.s32.totalorder %s25, 0
    %p46 = por %p44, %p45
    %p47 = scmp.ne.s32.totalorder %s33, %s34
    %p48 = scmp.eq.s32.totalorder %s26, 1
    %p49 = por %p47, %p48
    %p51 = scmp.ne.s32.totalorder %s34, %s50
    %p52 = scmp.eq.s32.totalorder %s26, 0
    %p53 = por %p51, %p52
    %s54 = ssub.s32 %s20, %s27
    %p55 = scmp.eq.s32.totalorder %s54, 0
    %s57 = sadd.s32 %s56, 1
    %s58 = scalar_select %p55, %s56, %s57
    %p61 = pneg %p55
    %p62 = scmp.eq.s32.totalorder %s20, 1
    %p63 = por %p61, %p62
    %p64 = scmp.ne.s32.totalorder %s56, %s59
    %p65 = scmp.eq.s32.totalorder %s20, 0
    %p66 = por %p64, %p65
    %p67 = scmp.ne.s32.totalorder %s56, %s59
    %p68 = scmp.eq.s32.totalorder %s25, 1
    %p69 = por %p67, %p68
    %p70 = scmp.ne.s32.totalorder %s59, %s60
    %p71 = scmp.eq.s32.totalorder %s25, 0
    %p72 = por %p70, %p71
    %p73 = scmp.ne.s32.totalorder %s59, %s60
    %p74 = scmp.eq.s32.totalorder %s26, 1
    %p75 = por %p73, %p74
    %p77 = scmp.ne.s32.totalorder %s60, %s76
    %p78 = scmp.eq.s32.totalorder %s26, 0
    %p79 = por %p77, %p78
    %s80 = ssub.s32 %s20, %s27
    %p81 = scmp.eq.s32.totalorder %s80, 0
    %s83 = sadd.s32 %s82, 1
    %s84 = scalar_select %p81, %s82, %s83
    %p87 = pneg %p81
    %p88 = scmp.eq.s32.totalorder %s20, 1
    %p89 = por %p87, %p88
    %p90 = scmp.ne.s32.totalorder %s82, %s85
    %p91 = scmp.eq.s32.totalorder %s20, 0
    %p92 = por %p90, %p91
    %p93 = scmp.ne.s32.totalorder %s82, %s85
    %p94 = scmp.eq.s32.totalorder %s25, 1
    %p95 = por %p93, %p94
    %p96 = scmp.ne.s32.totalorder %s85, %s86
    %p97 = scmp.eq.s32.totalorder %s25, 0
    %p98 = por %p96, %p97
    %p99 = scmp.ne.s32.totalorder %s85, %s86
    %p100 = scmp.eq.s32.totalorder %s26, 1
    %p101 = por %p99, %p100
    %p103 = scmp.ne.s32.totalorder %s86, %s102
    %p104 = scmp.eq.s32.totalorder %s26, 0
    %p105 = por %p103, %p104
    %s107 = sadd.s32 %s106, 1
    %p110 = scmp.eq.s32.totalorder %s20, 1
    %p111 = scmp.ne.s32.totalorder %s106, %s108
    %p112 = scmp.eq.s32.totalorder %s20, 0
    %p113 = por %p111, %p112
    %p114 = scmp.ne.s32.totalorder %s106, %s108
    %p115 = scmp.eq.s32.totalorder %s25, 1
    %p116 = por %p114, %p115
    %p117 = scmp.ne.s32.totalorder %s108, %s109
    %p118 = scmp.eq.s32.totalorder %s25, 0
    %p119 = por %p117, %p118
    %p120 = scmp.ne.s32.totalorder %s108, %s109
    %p121 = scmp.eq.s32.totalorder %s26, 1
    %p122 = por %p120, %p121
    %p124 = scmp.ne.s32.totalorder %s109, %s123
    %p125 = scmp.eq.s32.totalorder %s26, 0
    %p126 = por %p124, %p125
    %s128 = sadd.s32 %s127, 1
    %p131 = scmp.eq.s32.totalorder %s20, 1
    %p132 = scmp.ne.s32.totalorder %s127, %s129
    %p133 = scmp.eq.s32.totalorder %s20, 0
    %p134 = por %p132, %p133
    %p135 = scmp.ne.s32.totalorder %s127, %s129
    %p136 = scmp.eq.s32.totalorder %s25, 1
    %p137 = por %p135, %p136
    %p138 = scmp.ne.s32.totalorder %s129, %s130
    %p139 = scmp.eq.s32.totalorder %s25, 0
    %p140 = por %p138, %p139
    %p141 = scmp.ne.s32.totalorder %s129, %s130
    %p142 = scmp.eq.s32.totalorder %s26, 1
    %p143 = por %p141, %p142
    %p145 = scmp.ne.s32.totalorder %s130, %s144
    %p146 = scmp.eq.s32.totalorder %s26, 0
    %p147 = por %p145, %p146
    %s149 = sadd.s32 %s148, 1
    %p152 = scmp.eq.s32.totalorder %s20, 1
    %p153 = scmp.ne.s32.totalorder %s148, %s150
    %p154 = scmp.eq.s32.totalorder %s20, 0
    %p155 = por %p153, %p154
    %p156 = scmp.ne.s32.totalorder %s148, %s150
    %p157 = scmp.eq.s32.totalorder %s25, 1
    %p158 = por %p156, %p157
    %p159 = scmp.ne.s32.totalorder %s150, %s151
    %p160 = scmp.eq.s32.totalorder %s25, 0
    %p161 = por %p159, %p160
    %p162 = scmp.ne.s32.totalorder %s150, %s151
    %p163 = scmp.eq.s32.totalorder %s26, 1
    %p164 = por %p162, %p163
    %p166 = scmp.ne.s32.totalorder %s151, %s165
    %p167 = scmp.eq.s32.totalorder %s26, 0
    %p168 = por %p166, %p167
    %s170 = sadd.s32 %s169, 1
    %p173 = scmp.eq.s32.totalorder %s20, 1
    %p174 = scmp.ne.s32.totalorder %s169, %s171
    %p175 = scmp.eq.s32.totalorder %s20, 0
    %p176 = por %p174, %p175
    %p177 = scmp.ne.s32.totalorder %s169, %s171
    %p178 = scmp.eq.s32.totalorder %s25, 1
    %p179 = por %p177, %p178
    %p180 = scmp.ne.s32.totalorder %s171, %s172
    %p181 = scmp.eq.s32.totalorder %s25, 0
    %p182 = por %p180, %p181
    %p183 = scmp.ne.s32.totalorder %s171, %s172
    %p184 = scmp.eq.s32.totalorder %s26, 1
    %p185 = por %p183, %p184
    %p187 = scmp.ne.s32.totalorder %s172, %s186
    %p188 = scmp.eq.s32.totalorder %s26, 0
    %p189 = por %p187, %p188
    %s191 = sadd.s32 %s190, 1
    %p194 = scmp.eq.s32.totalorder %s20, 1
    %p195 = scmp.ne.s32.totalorder %s190, %s192
    %p196 = scmp.eq.s32.totalorder %s20, 0
    %p197 = por %p195, %p196
    %p198 = scmp.ne.s32.totalorder %s190, %s192
    %p199 = scmp.eq.s32.totalorder %s25, 1
    %p200 = por %p198, %p199
    %p201 = scmp.ne.s32.totalorder %s192, %s193
    %p202 = scmp.eq.s32.totalorder %s25, 0
    %p203 = por %p201, %p202
    %p204 = scmp.ne.s32.totalorder %s192, %s193
    %p205 = scmp.eq.s32.totalorder %s26, 1
    %p206 = por %p204, %p205
    %p208 = scmp.ne.s32.totalorder %s193, %s207
    %p209 = scmp.eq.s32.totalorder %s26, 0
    %p210 = por %p208, %p209
    %s212 = sadd.s32 %s211, 1
    %p215 = scmp.eq.s32.totalorder %s20, 1
    %p216 = scmp.ne.s32.totalorder %s211, %s213
    %p217 = scmp.eq.s32.totalorder %s20, 0
    %p218 = por %p216, %p217
    %p219 = scmp.ne.s32.totalorder %s211, %s213
    %p220 = scmp.eq.s32.totalorder %s25, 1
    %p221 = por %p219, %p220
    %p222 = scmp.ne.s32.totalorder %s213, %s214
    %p223 = scmp.eq.s32.totalorder %s25, 0
    %p224 = por %p222, %p223
    %p225 = scmp.ne.s32.totalorder %s213, %s214
    %p226 = scmp.eq.s32.totalorder %s26, 1
    %p227 = por %p225, %p226
    %p229 = scmp.ne.s32.totalorder %s214, %s228
    %p230 = scmp.eq.s32.totalorder %s26, 0
    %p231 = por %p229, %p230
    %s233 = sadd.s32 %s232, 1
    %p236 = scmp.eq.s32.totalorder %s20, 1
    %p237 = scmp.ne.s32.totalorder %s232, %s234
    %p238 = scmp.eq.s32.totalorder %s20, 0
    %p239 = por %p237, %p238
    %p240 = scmp.ne.s32.totalorder %s232, %s234
    %p241 = scmp.eq.s32.totalorder %s25, 1
    %p242 = por %p240, %p241
    %p243 = scmp.ne.s32.totalorder %s234, %s235
    %p244 = scmp.eq.s32.totalorder %s25, 0
    %p245 = por %p243, %p244
    %p246 = scmp.ne.s32.totalorder %s234, %s235
    %p247 = scmp.eq.s32.totalorder %s26, 1
    %p248 = por %p246, %p247
    %p250 = scmp.ne.s32.totalorder %s235, %s249
    %p251 = scmp.eq.s32.totalorder %s26, 0
    %p252 = por %p250, %p251
    %s254 = sadd.s32 %s253, 1
    %p257 = scmp.eq.s32.totalorder %s20, 1
    %p258 = scmp.ne.s32.totalorder %s253, %s255
    %p259 = scmp.eq.s32.totalorder %s20, 0
    %p260 = por %p258, %p259
    %p261 = scmp.ne.s32.totalorder %s253, %s255
    %p262 = scmp.eq.s32.totalorder %s25, 1
    %p263 = por %p261, %p262
    %p264 = scmp.ne.s32.totalorder %s255, %s256
    %p265 = scmp.eq.s32.totalorder %s25, 0
    %p266 = por %p264, %p265
    %p267 = scmp.ne.s32.totalorder %s255, %s256
    %p268 = scmp.eq.s32.totalorder %s26, 1
    %p269 = por %p267, %p268
    %p271 = scmp.ne.s32.totalorder %s256, %s270
    %p272 = scmp.eq.s32.totalorder %s26, 0
    %p273 = por %p271, %p272
    %s275 = sadd.s32 %s274, 1
    %p278 = scmp.eq.s32.totalorder %s20, 1
    %p279 = scmp.ne.s32.totalorder %s274, %s276
    %p280 = scmp.eq.s32.totalorder %s20, 0
    %p281 = por %p279, %p280
    %p282 = scmp.ne.s32.totalorder %s274, %s276
    %p283 = scmp.eq.s32.totalorder %s25, 1
    %p284 = por %p282, %p283
    %p285 = scmp.ne.s32.totalorder %s276, %s277
    %p286 = scmp.eq.s32.totalorder %s25, 0
    %p287 = por %p285, %p286
    %p288 = scmp.ne.s32.totalorder %s276, %s277
    %p289 = scmp.eq.s32.totalorder %s26, 1
    %p290 = por %p288, %p289
    %p292 = scmp.ne.s32.totalorder %s277, %s291
    %p293 = scmp.eq.s32.totalorder %s26, 0
    %p294 = por %p292, %p293
    %s295 = ssub.s32 %s20, %s27
    %p296 = scmp.eq.s32.totalorder %s295, 0
    %s298 = sadd.s32 %s297, 1
    %s299 = scalar_select %p296, %s297, %s298
    %p302 = pneg %p296
    %p303 = scmp.eq.s32.totalorder %s20, 1
    %p304 = por %p302, %p303
    %p305 = scmp.ne.s32.totalorder %s297, %s300
    %p306 = scmp.eq.s32.totalorder %s20, 0
    %p307 = por %p305, %p306
    %p308 = scmp.ne.s32.totalorder %s297, %s300
    %p309 = scmp.eq.s32.totalorder %s25, 1
    %p310 = por %p308, %p309
    %p311 = scmp.ne.s32.totalorder %s300, %s301
    %p312 = scmp.eq.s32.totalorder %s25, 0
    %p313 = por %p311, %p312
    %p314 = scmp.ne.s32.totalorder %s300, %s301
    %p315 = scmp.eq.s32.totalorder %s26, 1
    %p316 = por %p314, %p315
    %p318 = scmp.ne.s32.totalorder %s301, %s317
    %p319 = scmp.eq.s32.totalorder %s26, 0
    %p320 = por %p318, %p319
    %s321 = ssub.s32 %s20, %s27
    %p322 = scmp.eq.s32.totalorder %s321, 0
    %s324 = sadd.s32 %s323, 1
    %s325 = scalar_select %p322, %s323, %s324
    %p328 = pneg %p322
    %p329 = scmp.eq.s32.totalorder %s20, 1
    %p330 = por %p328, %p329
    %p331 = scmp.ne.s32.totalorder %s323, %s326
    %p332 = scmp.eq.s32.totalorder %s20, 0
    %p333 = por %p331, %p332
    %p334 = scmp.ne.s32.totalorder %s323, %s326
    %p335 = scmp.eq.s32.totalorder %s25, 1
    %p336 = por %p334, %p335
    %p337 = scmp.ne.s32.totalorder %s326, %s327
    %p338 = scmp.eq.s32.totalorder %s25, 0
    %p339 = por %p337, %p338
    %p340 = scmp.ne.s32.totalorder %s326, %s327
    %p341 = scmp.eq.s32.totalorder %s26, 1
    %p342 = por %p340, %p341
    %p344 = scmp.ne.s32.totalorder %s327, %s343
    %p345 = scmp.eq.s32.totalorder %s26, 0
    %p346 = por %p344, %p345
    %p347 = scmp.le.s32.totalorder 1, %s20
    %p348 = scmp.lt.s32.totalorder %s20, 3
    %p349 = pnand %p347, %p348
    %p350 = pneg %p349
    // Predicated region
    $region9: #{interaction_network_forward.4} parent=5 // pred_check
      _
    $region10: #{interaction_network_forward.4} parent=5 // pred_check_branch
      %352 = sbr.rel (%p349) target = $region12
    $region11: #{interaction_network_forward.4} parent=5 // pred_region
      %s353 = ssub.s32 %s20, 1
      // Predicated region
      $region13: #{interaction_network_forward.4} parent=11 // pred_check
        %p354 = pneg %p119
      $region14: #{interaction_network_forward.4} parent=11 // pred_check_branch
        %356 = sbr.rel (%p354) target = $region16
      $region15: #{interaction_network_forward.4} parent=11 // pred_region
        _
      $region16: #{interaction_network_forward.4} parent=11 // pred_fallthru
        _
      // Predicated region
      $region17: #{interaction_network_forward.4} parent=11 // pred_check
        %p357 = pneg %p140
      $region18: #{interaction_network_forward.4} parent=11 // pred_check_branch
        %359 = sbr.rel (%p357) target = $region20
      $region19: #{interaction_network_forward.4} parent=11 // pred_region
        _
      $region20: #{interaction_network_forward.4} parent=11 // pred_fallthru
        _
      // Predicated region
      $region21: #{interaction_network_forward.4} parent=11 // pred_check
        %p360 = pneg %p161
      $region22: #{interaction_network_forward.4} parent=11 // pred_check_branch
        %362 = sbr.rel (%p360) target = $region24
      $region23: #{interaction_network_forward.4} parent=11 // pred_region
        _
      $region24: #{interaction_network_forward.4} parent=11 // pred_fallthru
        _
      // Predicated region
      $region25: #{interaction_network_forward.4} parent=11 // pred_check
        %p363 = pneg %p182
      $region26: #{interaction_network_forward.4} parent=11 // pred_check_branch
        %365 = sbr.rel (%p363) target = $region28
      $region27: #{interaction_network_forward.4} parent=11 // pred_region
        _
      $region28: #{interaction_network_forward.4} parent=11 // pred_fallthru
        _
      // Predicated region
      $region29: #{interaction_network_forward.4} parent=11 // pred_check
        %p366 = pneg %p203
      $region30: #{interaction_network_forward.4} parent=11 // pred_check_branch
        %368 = sbr.rel (%p366) target = $region32
      $region31: #{interaction_network_forward.4} parent=11 // pred_region
        _
      $region32: #{interaction_network_forward.4} parent=11 // pred_fallthru
        _
      // Predicated region
      $region33: #{interaction_network_forward.4} parent=11 // pred_check
        %p369 = pneg %p224
      $region34: #{interaction_network_forward.4} parent=11 // pred_check_branch
        %371 = sbr.rel (%p369) target = $region36
      $region35: #{interaction_network_forward.4} parent=11 // pred_region
        _
      $region36: #{interaction_network_forward.4} parent=11 // pred_fallthru
        _
      // Predicated region
      $region37: #{interaction_network_forward.4} parent=11 // pred_check
        %p372 = pneg %p245
      $region38: #{interaction_network_forward.4} parent=11 // pred_check_branch
        %374 = sbr.rel (%p372) target = $region40
      $region39: #{interaction_network_forward.4} parent=11 // pred_region
        _
      $region40: #{interaction_network_forward.4} parent=11 // pred_fallthru
        _
      // Predicated region
      $region41: #{interaction_network_forward.4} parent=11 // pred_check
        %p375 = pneg %p266
      $region42: #{interaction_network_forward.4} parent=11 // pred_check_branch
        %377 = sbr.rel (%p375) target = $region44
      $region43: #{interaction_network_forward.4} parent=11 // pred_region
        _
      $region44: #{interaction_network_forward.4} parent=11 // pred_fallthru
        _
      // Predicated region
      $region45: #{interaction_network_forward.4} parent=11 // pred_check
        %p378 = pneg %p287
      $region46: #{interaction_network_forward.4} parent=11 // pred_check_branch
        %380 = sbr.rel (%p378) target = $region48
      $region47: #{interaction_network_forward.4} parent=11 // pred_region
        _
      $region48: #{interaction_network_forward.4} parent=11 // pred_fallthru
        _
    $region12: #{interaction_network_forward.4} parent=5 // pred_fallthru
      _
    %p381 = scmp.lt.s32.totalorder %s20, 2
    // Predicated region
    $region49: #{interaction_network_forward.4} parent=5 // pred_check
      %p382 = pneg %p381
    $region50: #{interaction_network_forward.4} parent=5 // pred_check_branch
      %384 = sbr.rel (%p382) target = $region52
    $region51: #{interaction_network_forward.4} parent=5 // pred_region
      // Predicated region
      $region53: #{interaction_network_forward.4} parent=51 // pred_check
        %p385 = pneg %p40
      $region54: #{interaction_network_forward.4} parent=51 // pred_check_branch
        %387 = sbr.rel (%p385) target = $region56
      $region55: #{interaction_network_forward.4} parent=51 // pred_region
        %s388 = smul.u32 4, %s20
        %p389 = scmp.lt.s32.totalorder %s388, 7
        %s390 = scalar_select %p389, %s388, 7
        %s391 = smul.addr %s390, 8
        %s392 = scalar_lea.vmem %s0, %s391
        %s393 = smul.u32 4, %s20
      $region56: #{interaction_network_forward.4} parent=51 // pred_fallthru
        _
      // Predicated region
      $region57: #{interaction_network_forward.4} parent=51 // pred_check
        %p394 = pneg %p66
      $region58: #{interaction_network_forward.4} parent=51 // pred_check_branch
        %396 = sbr.rel (%p394) target = $region60
      $region59: #{interaction_network_forward.4} parent=51 // pred_region
        %s397 = smul.u32 4, %s20
        %p398 = scmp.lt.s32.totalorder %s397, 7
        %s399 = scalar_select %p398, %s397, 7
        %s400 = smul.addr %s399, 8
        %s401 = scalar_lea.vmem %s1, %s400
        %s402 = smul.u32 4, %s20
      $region60: #{interaction_network_forward.4} parent=51 // pred_fallthru
        _
      // Predicated region
      $region61: #{interaction_network_forward.4} parent=51 // pred_check
        %p403 = pneg %p92
      $region62: #{interaction_network_forward.4} parent=51 // pred_check_branch
        %405 = sbr.rel (%p403) target = $region64
      $region63: #{interaction_network_forward.4} parent=51 // pred_region
        %s406 = smul.u32 4, %s20
        %p407 = scmp.lt.s32.totalorder %s406, 7
        %s408 = scalar_select %p407, %s406, 7
        %s409 = smul.addr %s408, 8
        %s410 = scalar_lea.vmem %s2, %s409
        %s411 = smul.u32 4, %s20
      $region64: #{interaction_network_forward.4} parent=51 // pred_fallthru
        _
    $region52: #{interaction_network_forward.4} parent=5 // pred_fallthru
      _
    %p412 = scmp.le.s32.totalorder 1, %s20
    %p413 = scmp.lt.s32.totalorder %s20, 3
    %p414 = pnand %p412, %p413
    %p415 = pneg %p414
    // Predicated region
    $region65: #{interaction_network_forward.4} parent=5 // pred_check
      _
    $region66: #{interaction_network_forward.4} parent=5 // pred_check_branch
      %417 = sbr.rel (%p414) target = $region68
    $region67: #{interaction_network_forward.4} parent=5 // pred_region
      %s418 = ssub.s32 %s20, 1
      %s419 = smul.u32 4, %s25
      %p420 = scmp.lt.s32.totalorder %s419, 7
      %s421 = scalar_select %p420, %s419, 7
      %s422 = smul.addr %s421, 8
      %s423 = scalar_lea.vmem %s0, %s422
      %p424 = pneg %p46
      %p425 = pneg %p43
      %s426 = smul.u32 4, %s25
      %p427 = scmp.lt.s32.totalorder %s426, 7
      %s428 = scalar_select %p427, %s426, 7
      %s429 = smul.addr %s428, 8
      %s430 = scalar_lea.vmem %s1, %s429
      %p431 = pneg %p72
      %p432 = pneg %p69
      %s433 = smul.u32 4, %s25
      %p434 = scmp.lt.s32.totalorder %s433, 7
      %s435 = scalar_select %p434, %s433, 7
      %s436 = smul.addr %s435, 8
      %s437 = scalar_lea.vmem %s2, %s436
      %p438 = pneg %p98
      %p439 = pneg %p95
      %p440 = pneg %p119
      %p441 = pneg %p116
      %p442 = pneg %p140
      %p443 = pneg %p137
      %p444 = pneg %p161
      %p445 = pneg %p158
      %p446 = pneg %p182
      %p447 = pneg %p179
      %p448 = pneg %p203
      %p449 = pneg %p200
      %p450 = pneg %p224
      %p451 = pneg %p221
      %p452 = pneg %p245
      %p453 = pneg %p242
      %p454 = pneg %p266
      %p455 = pneg %p263
      %p456 = pneg %p287
      %p457 = pneg %p284
      %p458 = pneg %p313
      %p459 = pneg %p310
      %s460 = smul.u32 4, %s25
      %p461 = scmp.lt.s32.totalorder %s460, 7
      %s462 = scalar_select %p461, %s460, 7
      %s463 = smul.addr %s462, 4
      %s464 = scalar_lea.vmem %s12, %s463
      %p465 = pneg %p339
      %p466 = pneg %p336
      %s467 = smul.u32 4, %s25
      %p468 = scmp.lt.s32.totalorder %s467, 7
      %s469 = scalar_select %p468, %s467, 7
      %s470 = smul.addr %s469, 8
      %s471 = scalar_lea.vmem %s13, %s470
      %s472 = smul.u32 4, %s25
      %p473 = scmp.lt.s32.totalorder %s472, 7
      %s474 = scalar_select %p473, %s472, 7
      %s475 = smul.addr %s474, 8
      %s476 = scalar_lea.vmem %s0, %s475
      %s477 = smul.u32 4, %s25
      %s478 = smul.u32 4, %s25
      %p479 = scmp.lt.s32.totalorder %s478, 7
      %s480 = scalar_select %p479, %s478, 7
      %s481 = smul.addr %s480, 8
      %s482 = scalar_lea.vmem %s1, %s481
      %s483 = smul.u32 4, %s25
      %s484 = smul.u32 4, %s25
      %p485 = scmp.lt.s32.totalorder %s484, 7
      %s486 = scalar_select %p485, %s484, 7
      %s487 = smul.addr %s486, 8
      %s488 = scalar_lea.vmem %s2, %s487
      %s489 = smul.u32 4, %s25
      %s490 = smul.u32 4, %s25
      %p491 = scmp.lt.s32.totalorder %s490, 7
      %s492 = scalar_select %p491, %s490, 7
      %s493 = smul.addr %s492, 4
      %s494 = scalar_lea.vmem %s12, %s493
      %s495 = smul.u32 4, %s25
      %s496 = smul.u32 4, %s25
      %p497 = scmp.lt.s32.totalorder %s496, 7
      %s498 = scalar_select %p497, %s496, 7
      %s499 = smul.addr %s498, 8
      %s500 = scalar_lea.vmem %s13, %s499
      %s501 = smul.u32 4, %s25
      %v503 = vld [vmem:[%s10] sm:$0x1]
      %v504 = vld [vmem:[%s11] sm:$0x1]
      %v505 = vld [vmem:[%s488] sm:$0xff]
      %v506 = vld [vmem:[%s488 + $0x8] sm:$0xff]
      %v507 = vld [vmem:[%s488 + $0x10] sm:$0xff]
      %v508 = vld [vmem:[%s488 + $0x18] sm:$0xff]
      %v509 = vld [vmem:[%s3] sm:$0xf]
      %v510 = vld [vmem:[%s3 + $0x4] sm:$0xf]
      %v511 = vld [vmem:[%s3 + $0x8] sm:$0xf]
      %v512 = vld [vmem:[%s3 + $0xc] sm:$0xf]
      %v513 = vld [vmem:[%s3 + $0x10] sm:$0xf]
      %v514 = vld [vmem:[%s3 + $0x14] sm:$0xf]
      %v515 = vld [vmem:[%s3 + $0x18] sm:$0xf]
      %v516 = vld [vmem:[%s3 + $0x1c] sm:$0xf]
      %v517 = vlaneseq
      %v518 = vand.u32 %v517, 127
      %v519 = vld [vmem:[%s476] sm:$0xff]
      %v520 = vld [vmem:[%s476 + $0x8] sm:$0xff]
      %v521 = vld [vmem:[%s476 + $0x10] sm:$0xff]
      %v522 = vld [vmem:[%s476 + $0x18] sm:$0xff]
      %523 = vset.pattern.permute.xlu0 0
      %524 = vperm.xlu0 %523, %v519
      %v525 = vpop.permute.xlu0 %524
      %526 = vset.pattern.permute.xlu0 0
      %527 = vperm.xlu0 %526, %v520
      %v528 = vpop.permute.xlu0 %527
      %529 = vset.pattern.permute.xlu0 0
      %530 = vperm.xlu0 %529, %v521
      %v531 = vpop.permute.xlu0 %530
      %532 = vset.pattern.permute.xlu0 0
      %533 = vperm.xlu0 %532, %v522
      %v534 = vpop.permute.xlu0 %533
      %vm535 = vcmp.eq.s32.totalorder %v525, %v518
      %vm536 = vcmp.eq.s32.totalorder %v528, %v518
      %vm537 = vcmp.eq.s32.totalorder %v531, %v518
      %vm538 = vcmp.eq.s32.totalorder %v534, %v518
      %v539 = vsel %vm535, 1, 0
      %v540 = vsel %vm536, 1, 0
      %v541 = vsel %vm537, 1, 0
      %v542 = vsel %vm538, 1, 0
      %v543 = vcvt.s32.f32 %v539
      %v544 = vcvt.s32.f32 %v540
      %v545 = vcvt.s32.f32 %v541
      %v546 = vcvt.s32.f32 %v542
      %v547 = vpack.c.bf16 %v544, %v543
      %v548 = vpack.c.bf16 %v546, %v545
      %v549 = vld [vmem:[%s482] sm:$0xff]
      %v550 = vld [vmem:[%s482 + $0x8] sm:$0xff]
      %v551 = vld [vmem:[%s482 + $0x10] sm:$0xff]
      %v552 = vld [vmem:[%s482 + $0x18] sm:$0xff]
      %553 = vset.pattern.permute.xlu0 0
      %554 = vperm.xlu0 %553, %v549
      %v555 = vpop.permute.xlu0 %554
      %556 = vset.pattern.permute.xlu0 0
      %557 = vperm.xlu0 %556, %v550
      %v558 = vpop.permute.xlu0 %557
      %559 = vset.pattern.permute.xlu0 0
      %560 = vperm.xlu0 %559, %v551
      %v561 = vpop.permute.xlu0 %560
      %562 = vset.pattern.permute.xlu0 0
      %563 = vperm.xlu0 %562, %v552
      %v564 = vpop.permute.xlu0 %563
      %vm565 = vcmp.eq.s32.totalorder %v555, %v518
      %vm566 = vcmp.eq.s32.totalorder %v558, %v518
      %vm567 = vcmp.eq.s32.totalorder %v561, %v518
      %vm568 = vcmp.eq.s32.totalorder %v564, %v518
      %v569 = vsel %vm565, 1, 0
      %v570 = vsel %vm566, 1, 0
      %v571 = vsel %vm567, 1, 0
      %v572 = vsel %vm568, 1, 0
      %v573 = vcvt.s32.f32 %v569
      %v574 = vcvt.s32.f32 %v570
      %v575 = vcvt.s32.f32 %v571
      %v576 = vcvt.s32.f32 %v572
      %v577 = vpack.c.bf16 %v574, %v573
      %v578 = vpack.c.bf16 %v576, %v575
      %v587 = vunpack.c.l.b16 %v509
      %v588 = vunpack.c.l.b16 %v510
      %v589 = vunpack.c.l.b16 %v511
      %v590 = vunpack.c.l.b16 %v512
      %v591 = vunpack.c.l.b16 %v513
      %v592 = vunpack.c.l.b16 %v514
      %v593 = vunpack.c.l.b16 %v515
      %v594 = vunpack.c.l.b16 %v516
      %v595 = vpack.c.b16 %v588, %v587
      %v596 = vpack.c.b16 %v590, %v589
      %v597 = vpack.c.b16 %v592, %v591
      %v598 = vpack.c.b16 %v594, %v593
      %vm603 = vcmask 523264
      %v605 = vsel %vm603, %v547, 0
      %v608 = vsel %vm603, %v548, 0
      %610 = vmatprep.subr.bf16.mxu0 0
      %611 = vmatpush1.bf16.msra.mxu0 0
      %612 = vmatprep.subr.bf16.mxu0 0
      %613 = vmatpush1.bf16.msra.mxu0 0
      %614 = vmatprep.subr.bf16.mxu0 0
      %615 = vmatpush1.bf16.msra.mxu0 0
      %616 = vmatprep.subr.bf16.mxu0 0
      %617 = vmatpush1.bf16.msra.mxu0 0
      %618 = vmatprep.subr.bf16.mxu0 0
      %619 = vmatpush1.bf16.msra.mxu0 %v598
      %620 = vmatprep.subr.bf16.mxu0 0
      %621 = vmatpush1.bf16.msra.mxu0 %v597
      %622 = vmatprep.subr.bf16.mxu0 0
      %623 = vmatpush1.bf16.msra.mxu0 %v596
      %624 = vmatprep.subr.bf16.mxu0 0
      %625 = vmatpush1.bf16.msra.mxu0 %v595
      %626 = vmatprep.subr.bf16.mxu0 0
      %627 = vmatpush2.bf16.msra.mxu0 0
      %628 = vmatprep.subr.bf16.mxu0 0
      %629 = vmatpush2.bf16.msra.mxu0 0
      %630 = vmatprep.subr.bf16.mxu0 0
      %631 = vmatpush2.bf16.msra.mxu0 0
      %632 = vmatprep.subr.bf16.mxu0 0
      %633 = vmatpush2.bf16.msra.mxu0 0
      %634 = vmatprep.subr.bf16.mxu0 0
      %635 = vmatpush2.bf16.msra.mxu0 0
      %636 = vmatprep.subr.bf16.mxu0 0
      %637 = vmatpush2.bf16.msra.mxu0 0
      %638 = vmatprep.subr.bf16.mxu0 0
      %639 = vmatpush2.bf16.msra.mxu0 0
      %640 = vmatprep.subr.bf16.mxu0 0
      %641 = vmatpush2.bf16.msra.mxu0 0
      %642 = vmatprep.mubr.bf16.mxu0 0
      %643 = vmatmul.mubr.bf16.gmra.mxu0 %v605
      %v644 = vpop.f32.mrf.mxu0
      %v645 = vadd.f32 0.0, %v644
      %v646 = vpop.f32.mrf.mxu0
      %v647 = vpop.f32.mrf.mxu0
      %v648 = vadd.f32 0.0, %v647
      %v649 = vpop.f32.mrf.mxu0
      %650 = vmatprep.mubr.bf16.mxu0 0
      %651 = vmatmul.mubr.bf16.gmra.mxu0 %v608
      %v652 = vpop.f32.mrf.mxu0
      %v653 = vadd.f32 0.0, %v652
      %v654 = vpop.f32.mrf.mxu0
      %v655 = vpop.f32.mrf.mxu0
      %v656 = vadd.f32 0.0, %v655
      %v657 = vpop.f32.mrf.mxu0
      %658 = vdwg.mxu0
      %v660 = vsel %vm603, %v577, 0
      %v663 = vsel %vm603, %v578, 0
      %665 = vmatprep.subr.bf16.mxu0 0
      %666 = vmatpush1.bf16.msra.mxu0 0
      %667 = vmatprep.subr.bf16.mxu0 0
      %668 = vmatpush1.bf16.msra.mxu0 0
      %669 = vmatprep.subr.bf16.mxu0 0
      %670 = vmatpush1.bf16.msra.mxu0 0
      %671 = vmatprep.subr.bf16.mxu0 0
      %672 = vmatpush1.bf16.msra.mxu0 0
      %673 = vmatprep.subr.bf16.mxu0 0
      %674 = vmatpush1.bf16.msra.mxu0 %v598
      %675 = vmatprep.subr.bf16.mxu0 0
      %676 = vmatpush1.bf16.msra.mxu0 %v597
      %677 = vmatprep.subr.bf16.mxu0 0
      %678 = vmatpush1.bf16.msra.mxu0 %v596
      %679 = vmatprep.subr.bf16.mxu0 0
      %680 = vmatpush1.bf16.msra.mxu0 %v595
      %681 = vmatprep.subr.bf16.mxu0 0
      %682 = vmatpush2.bf16.msra.mxu0 0
      %683 = vmatprep.subr.bf16.mxu0 0
      %684 = vmatpush2.bf16.msra.mxu0 0
      %685 = vmatprep.subr.bf16.mxu0 0
      %686 = vmatpush2.bf16.msra.mxu0 0
      %687 = vmatprep.subr.bf16.mxu0 0
      %688 = vmatpush2.bf16.msra.mxu0 0
      %689 = vmatprep.subr.bf16.mxu0 0
      %690 = vmatpush2.bf16.msra.mxu0 0
      %691 = vmatprep.subr.bf16.mxu0 0
      %692 = vmatpush2.bf16.msra.mxu0 0
      %693 = vmatprep.subr.bf16.mxu0 0
      %694 = vmatpush2.bf16.msra.mxu0 0
      %695 = vmatprep.subr.bf16.mxu0 0
      %696 = vmatpush2.bf16.msra.mxu0 0
      %697 = vmatprep.mubr.bf16.mxu0 0
      %698 = vmatmul.mubr.bf16.gmra.mxu0 %v660
      %v699 = vpop.f32.mrf.mxu0
      %v700 = vadd.f32 0.0, %v699
      %v701 = vpop.f32.mrf.mxu0
      %v702 = vpop.f32.mrf.mxu0
      %v703 = vadd.f32 0.0, %v702
      %v704 = vpop.f32.mrf.mxu0
      %705 = vmatprep.mubr.bf16.mxu0 0
      %706 = vmatmul.mubr.bf16.gmra.mxu0 %v663
      %v707 = vpop.f32.mrf.mxu0
      %v708 = vadd.f32 0.0, %v707
      %v709 = vpop.f32.mrf.mxu0
      %v710 = vpop.f32.mrf.mxu0
      %v711 = vadd.f32 0.0, %v710
      %v712 = vpop.f32.mrf.mxu0
      %713 = vdwg.mxu0
      %714 = vset.pattern.permute.xlu0 1
      %715 = vperm.xlu0 %714, %v519
      %v716 = vpop.permute.xlu0 %715
      %717 = vset.pattern.permute.xlu0 1
      %718 = vperm.xlu0 %717, %v520
      %v719 = vpop.permute.xlu0 %718
      %720 = vset.pattern.permute.xlu0 1
      %721 = vperm.xlu0 %720, %v521
      %v722 = vpop.permute.xlu0 %721
      %723 = vset.pattern.permute.xlu0 1
      %724 = vperm.xlu0 %723, %v522
      %v725 = vpop.permute.xlu0 %724
      %vm726 = vcmp.eq.s32.totalorder %v716, %v518
      %vm727 = vcmp.eq.s32.totalorder %v719, %v518
      %vm728 = vcmp.eq.s32.totalorder %v722, %v518
      %vm729 = vcmp.eq.s32.totalorder %v725, %v518
      %v730 = vsel %vm726, 1, 0
      %v731 = vsel %vm727, 1, 0
      %v732 = vsel %vm728, 1, 0
      %v733 = vsel %vm729, 1, 0
      %v734 = vcvt.s32.f32 %v730
      %v735 = vcvt.s32.f32 %v731
      %v736 = vcvt.s32.f32 %v732
      %v737 = vcvt.s32.f32 %v733
      %v738 = vpack.c.bf16 %v735, %v734
      %v739 = vpack.c.bf16 %v737, %v736
      %740 = vset.pattern.permute.xlu0 1
      %741 = vperm.xlu0 %740, %v549
      %v742 = vpop.permute.xlu0 %741
      %743 = vset.pattern.permute.xlu0 1
      %744 = vperm.xlu0 %743, %v550
      %v745 = vpop.permute.xlu0 %744
      %746 = vset.pattern.permute.xlu0 1
      %747 = vperm.xlu0 %746, %v551
      %v748 = vpop.permute.xlu0 %747
      %749 = vset.pattern.permute.xlu0 1
      %750 = vperm.xlu0 %749, %v552
      %v751 = vpop.permute.xlu0 %750
      %vm752 = vcmp.eq.s32.totalorder %v742, %v518
      %vm753 = vcmp.eq.s32.totalorder %v745, %v518
      %vm754 = vcmp.eq.s32.totalorder %v748, %v518
      %vm755 = vcmp.eq.s32.totalorder %v751, %v518
      %v756 = vsel %vm752, 1, 0
      %v757 = vsel %vm753, 1, 0
      %v758 = vsel %vm754, 1, 0
      %v759 = vsel %vm755, 1, 0
      %v760 = vcvt.s32.f32 %v756
      %v761 = vcvt.s32.f32 %v757
      %v762 = vcvt.s32.f32 %v758
      %v763 = vcvt.s32.f32 %v759
      %v764 = vpack.c.bf16 %v761, %v760
      %v765 = vpack.c.bf16 %v763, %v762
      %v767 = vsel %vm603, %v738, 0
      %v770 = vsel %vm603, %v739, 0
      %772 = vmatprep.subr.bf16.mxu0 0
      %773 = vmatpush1.bf16.msra.mxu0 0
      %774 = vmatprep.subr.bf16.mxu0 0
      %775 = vmatpush1.bf16.msra.mxu0 0
      %776 = vmatprep.subr.bf16.mxu0 0
      %777 = vmatpush1.bf16.msra.mxu0 0
      %778 = vmatprep.subr.bf16.mxu0 0
      %779 = vmatpush1.bf16.msra.mxu0 0
      %780 = vmatprep.subr.bf16.mxu0 0
      %781 = vmatpush1.bf16.msra.mxu0 %v598
      %782 = vmatprep.subr.bf16.mxu0 0
      %783 = vmatpush1.bf16.msra.mxu0 %v597
      %784 = vmatprep.subr.bf16.mxu0 0
      %785 = vmatpush1.bf16.msra.mxu0 %v596
      %786 = vmatprep.subr.bf16.mxu0 0
      %787 = vmatpush1.bf16.msra.mxu0 %v595
      %788 = vmatprep.subr.bf16.mxu0 0
      %789 = vmatpush2.bf16.msra.mxu0 0
      %790 = vmatprep.subr.bf16.mxu0 0
      %791 = vmatpush2.bf16.msra.mxu0 0
      %792 = vmatprep.subr.bf16.mxu0 0
      %793 = vmatpush2.bf16.msra.mxu0 0
      %794 = vmatprep.subr.bf16.mxu0 0
      %795 = vmatpush2.bf16.msra.mxu0 0
      %796 = vmatprep.subr.bf16.mxu0 0
      %797 = vmatpush2.bf16.msra.mxu0 0
      %798 = vmatprep.subr.bf16.mxu0 0
      %799 = vmatpush2.bf16.msra.mxu0 0
      %800 = vmatprep.subr.bf16.mxu0 0
      %801 = vmatpush2.bf16.msra.mxu0 0
      %802 = vmatprep.subr.bf16.mxu0 0
      %803 = vmatpush2.bf16.msra.mxu0 0
      %804 = vmatprep.mubr.bf16.mxu0 0
      %805 = vmatmul.mubr.bf16.gmra.mxu0 %v767
      %v806 = vpop.f32.mrf.mxu0
      %v807 = vadd.f32 0.0, %v806
      %v808 = vpop.f32.mrf.mxu0
      %v809 = vpop.f32.mrf.mxu0
      %v810 = vadd.f32 0.0, %v809
      %v811 = vpop.f32.mrf.mxu0
      %812 = vmatprep.mubr.bf16.mxu0 0
      %813 = vmatmul.mubr.bf16.gmra.mxu0 %v770
      %v814 = vpop.f32.mrf.mxu0
      %v815 = vadd.f32 0.0, %v814
      %v816 = vpop.f32.mrf.mxu0
      %v817 = vpop.f32.mrf.mxu0
      %v818 = vadd.f32 0.0, %v817
      %v819 = vpop.f32.mrf.mxu0
      %820 = vdwg.mxu0
      %v822 = vsel %vm603, %v764, 0
      %v825 = vsel %vm603, %v765, 0
      %827 = vmatprep.subr.bf16.mxu0 0
      %828 = vmatpush1.bf16.msra.mxu0 0
      %829 = vmatprep.subr.bf16.mxu0 0
      %830 = vmatpush1.bf16.msra.mxu0 0
      %831 = vmatprep.subr.bf16.mxu0 0
      %832 = vmatpush1.bf16.msra.mxu0 0
      %833 = vmatprep.subr.bf16.mxu0 0
      %834 = vmatpush1.bf16.msra.mxu0 0
      %835 = vmatprep.subr.bf16.mxu0 0
      %836 = vmatpush1.bf16.msra.mxu0 %v598
      %837 = vmatprep.subr.bf16.mxu0 0
      %838 = vmatpush1.bf16.msra.mxu0 %v597
      %839 = vmatprep.subr.bf16.mxu0 0
      %840 = vmatpush1.bf16.msra.mxu0 %v596
      %841 = vmatprep.subr.bf16.mxu0 0
      %842 = vmatpush1.bf16.msra.mxu0 %v595
      %843 = vmatprep.subr.bf16.mxu0 0
      %844 = vmatpush2.bf16.msra.mxu0 0
      %845 = vmatprep.subr.bf16.mxu0 0
      %846 = vmatpush2.bf16.msra.mxu0 0
      %847 = vmatprep.subr.bf16.mxu0 0
      %848 = vmatpush2.bf16.msra.mxu0 0
      %849 = vmatprep.subr.bf16.mxu0 0
      %850 = vmatpush2.bf16.msra.mxu0 0
      %851 = vmatprep.subr.bf16.mxu0 0
      %852 = vmatpush2.bf16.msra.mxu0 0
      %853 = vmatprep.subr.bf16.mxu0 0
      %854 = vmatpush2.bf16.msra.mxu0 0
      %855 = vmatprep.subr.bf16.mxu0 0
      %856 = vmatpush2.bf16.msra.mxu0 0
      %857 = vmatprep.subr.bf16.mxu0 0
      %858 = vmatpush2.bf16.msra.mxu0 0
      %859 = vmatprep.mubr.bf16.mxu0 0
      %860 = vmatmul.mubr.bf16.gmra.mxu0 %v822
      %v861 = vpop.f32.mrf.mxu0
      %v862 = vadd.f32 0.0, %v861
      %v863 = vpop.f32.mrf.mxu0
      %v864 = vpop.f32.mrf.mxu0
      %v865 = vadd.f32 0.0, %v864
      %v866 = vpop.f32.mrf.mxu0
      %867 = vmatprep.mubr.bf16.mxu0 0
      %868 = vmatmul.mubr.bf16.gmra.mxu0 %v825
      %v869 = vpop.f32.mrf.mxu0
      %v870 = vadd.f32 0.0, %v869
      %v871 = vpop.f32.mrf.mxu0
      %v872 = vpop.f32.mrf.mxu0
      %v873 = vadd.f32 0.0, %v872
      %v874 = vpop.f32.mrf.mxu0
      %875 = vdwg.mxu0
      %876 = vset.pattern.permute.xlu0 2
      %877 = vperm.xlu0 %876, %v519
      %v878 = vpop.permute.xlu0 %877
      %879 = vset.pattern.permute.xlu0 2
      %880 = vperm.xlu0 %879, %v520
      %v881 = vpop.permute.xlu0 %880
      %882 = vset.pattern.permute.xlu0 2
      %883 = vperm.xlu0 %882, %v521
      %v884 = vpop.permute.xlu0 %883
      %885 = vset.pattern.permute.xlu0 2
      %886 = vperm.xlu0 %885, %v522
      %v887 = vpop.permute.xlu0 %886
      %vm888 = vcmp.eq.s32.totalorder %v878, %v518
      %vm889 = vcmp.eq.s32.totalorder %v881, %v518
      %vm890 = vcmp.eq.s32.totalorder %v884, %v518
      %vm891 = vcmp.eq.s32.totalorder %v887, %v518
      %v892 = vsel %vm888, 1, 0
      %v893 = vsel %vm889, 1, 0
      %v894 = vsel %vm890, 1, 0
      %v895 = vsel %vm891, 1, 0
      %v896 = vcvt.s32.f32 %v892
      %v897 = vcvt.s32.f32 %v893
      %v898 = vcvt.s32.f32 %v894
      %v899 = vcvt.s32.f32 %v895
      %v900 = vpack.c.bf16 %v897, %v896
      %v901 = vpack.c.bf16 %v899, %v898
      %902 = vset.pattern.permute.xlu0 2
      %903 = vperm.xlu0 %902, %v549
      %v904 = vpop.permute.xlu0 %903
      %905 = vset.pattern.permute.xlu0 2
      %906 = vperm.xlu0 %905, %v550
      %v907 = vpop.permute.xlu0 %906
      %908 = vset.pattern.permute.xlu0 2
      %909 = vperm.xlu0 %908, %v551
      %v910 = vpop.permute.xlu0 %909
      %911 = vset.pattern.permute.xlu0 2
      %912 = vperm.xlu0 %911, %v552
      %v913 = vpop.permute.xlu0 %912
      %vm914 = vcmp.eq.s32.totalorder %v904, %v518
      %vm915 = vcmp.eq.s32.totalorder %v907, %v518
      %vm916 = vcmp.eq.s32.totalorder %v910, %v518
      %vm917 = vcmp.eq.s32.totalorder %v913, %v518
      %v918 = vsel %vm914, 1, 0
      %v919 = vsel %vm915, 1, 0
      %v920 = vsel %vm916, 1, 0
      %v921 = vsel %vm917, 1, 0
      %v922 = vcvt.s32.f32 %v918
      %v923 = vcvt.s32.f32 %v919
      %v924 = vcvt.s32.f32 %v920
      %v925 = vcvt.s32.f32 %v921
      %v926 = vpack.c.bf16 %v923, %v922
      %v927 = vpack.c.bf16 %v925, %v924
      %v929 = vsel %vm603, %v900, 0
      %v932 = vsel %vm603, %v901, 0
      %934 = vmatprep.subr.bf16.mxu0 0
      %935 = vmatpush1.bf16.msra.mxu0 0
      %936 = vmatprep.subr.bf16.mxu0 0
      %937 = vmatpush1.bf16.msra.mxu0 0
      %938 = vmatprep.subr.bf16.mxu0 0
      %939 = vmatpush1.bf16.msra.mxu0 0
      %940 = vmatprep.subr.bf16.mxu0 0
      %941 = vmatpush1.bf16.msra.mxu0 0
      %942 = vmatprep.subr.bf16.mxu0 0
      %943 = vmatpush1.bf16.msra.mxu0 %v598
      %944 = vmatprep.subr.bf16.mxu0 0
      %945 = vmatpush1.bf16.msra.mxu0 %v597
      %946 = vmatprep.subr.bf16.mxu0 0
      %947 = vmatpush1.bf16.msra.mxu0 %v596
      %948 = vmatprep.subr.bf16.mxu0 0
      %949 = vmatpush1.bf16.msra.mxu0 %v595
      %950 = vmatprep.subr.bf16.mxu0 0
      %951 = vmatpush2.bf16.msra.mxu0 0
      %952 = vmatprep.subr.bf16.mxu0 0
      %953 = vmatpush2.bf16.msra.mxu0 0
      %954 = vmatprep.subr.bf16.mxu0 0
      %955 = vmatpush2.bf16.msra.mxu0 0
      %956 = vmatprep.subr.bf16.mxu0 0
      %957 = vmatpush2.bf16.msra.mxu0 0
      %958 = vmatprep.subr.bf16.mxu0 0
      %959 = vmatpush2.bf16.msra.mxu0 0
      %960 = vmatprep.subr.bf16.mxu0 0
      %961 = vmatpush2.bf16.msra.mxu0 0
      %962 = vmatprep.subr.bf16.mxu0 0
      %963 = vmatpush2.bf16.msra.mxu0 0
      %964 = vmatprep.subr.bf16.mxu0 0
      %965 = vmatpush2.bf16.msra.mxu0 0
      %966 = vmatprep.mubr.bf16.mxu0 0
      %967 = vmatmul.mubr.bf16.gmra.mxu0 %v929
      %v968 = vpop.f32.mrf.mxu0
      %v969 = vadd.f32 0.0, %v968
      %v970 = vpop.f32.mrf.mxu0
      %v971 = vpop.f32.mrf.mxu0
      %v972 = vadd.f32 0.0, %v971
      %v973 = vpop.f32.mrf.mxu0
      %974 = vmatprep.mubr.bf16.mxu0 0
      %975 = vmatmul.mubr.bf16.gmra.mxu0 %v932
      %v976 = vpop.f32.mrf.mxu0
      %v977 = vadd.f32 0.0, %v976
      %v978 = vpop.f32.mrf.mxu0
      %v979 = vpop.f32.mrf.mxu0
      %v980 = vadd.f32 0.0, %v979
      %v981 = vpop.f32.mrf.mxu0
      %982 = vdwg.mxu0
      %v984 = vsel %vm603, %v926, 0
      %v987 = vsel %vm603, %v927, 0
      %989 = vmatprep.subr.bf16.mxu0 0
      %990 = vmatpush1.bf16.msra.mxu0 0
      %991 = vmatprep.subr.bf16.mxu0 0
      %992 = vmatpush1.bf16.msra.mxu0 0
      %993 = vmatprep.subr.bf16.mxu0 0
      %994 = vmatpush1.bf16.msra.mxu0 0
      %995 = vmatprep.subr.bf16.mxu0 0
      %996 = vmatpush1.bf16.msra.mxu0 0
      %997 = vmatprep.subr.bf16.mxu0 0
      %998 = vmatpush1.bf16.msra.mxu0 %v598
      %999 = vmatprep.subr.bf16.mxu0 0
      %1000 = vmatpush1.bf16.msra.mxu0 %v597
      %1001 = vmatprep.subr.bf16.mxu0 0
      %1002 = vmatpush1.bf16.msra.mxu0 %v596
      %1003 = vmatprep.subr.bf16.mxu0 0
      %1004 = vmatpush1.bf16.msra.mxu0 %v595
      %1005 = vmatprep.subr.bf16.mxu0 0
      %1006 = vmatpush2.bf16.msra.mxu0 0
      %1007 = vmatprep.subr.bf16.mxu0 0
      %1008 = vmatpush2.bf16.msra.mxu0 0
      %1009 = vmatprep.subr.bf16.mxu0 0
      %1010 = vmatpush2.bf16.msra.mxu0 0
      %1011 = vmatprep.subr.bf16.mxu0 0
      %1012 = vmatpush2.bf16.msra.mxu0 0
      %1013 = vmatprep.subr.bf16.mxu0 0
      %1014 = vmatpush2.bf16.msra.mxu0 0
      %1015 = vmatprep.subr.bf16.mxu0 0
      %1016 = vmatpush2.bf16.msra.mxu0 0
      %1017 = vmatprep.subr.bf16.mxu0 0
      %1018 = vmatpush2.bf16.msra.mxu0 0
      %1019 = vmatprep.subr.bf16.mxu0 0
      %1020 = vmatpush2.bf16.msra.mxu0 0
      %1021 = vmatprep.mubr.bf16.mxu0 0
      %1022 = vmatmul.mubr.bf16.gmra.mxu0 %v984
      %v1023 = vpop.f32.mrf.mxu0
      %v1024 = vadd.f32 0.0, %v1023
      %v1025 = vpop.f32.mrf.mxu0
      %v1026 = vpop.f32.mrf.mxu0
      %v1027 = vadd.f32 0.0, %v1026
      %v1028 = vpop.f32.mrf.mxu0
      %1029 = vmatprep.mubr.bf16.mxu0 0
      %1030 = vmatmul.mubr.bf16.gmra.mxu0 %v987
      %v1031 = vpop.f32.mrf.mxu0
      %v1032 = vadd.f32 0.0, %v1031
      %v1033 = vpop.f32.mrf.mxu0
      %v1034 = vpop.f32.mrf.mxu0
      %v1035 = vadd.f32 0.0, %v1034
      %v1036 = vpop.f32.mrf.mxu0
      %1037 = vdwg.mxu0
      %1042 = vrot.lane.b32.xlu0 %v645, 16
      %v1043 = vpop.permute.xlu0 %1042
      %1044 = vrot.lane.b32.xlu0 %v648, 16
      %v1045 = vpop.permute.xlu0 %1044
      %1046 = vrot.lane.b32.xlu0 %v653, 16
      %v1047 = vpop.permute.xlu0 %1046
      %1048 = vrot.lane.b32.xlu0 %v656, 16
      %v1049 = vpop.permute.xlu0 %1048
      %1058 = vrot.lane.b32.xlu0 %v700, 48
      %v1059 = vpop.permute.xlu0 %1058
      %1060 = vrot.lane.b32.xlu0 %v703, 48
      %v1061 = vpop.permute.xlu0 %1060
      %1062 = vrot.lane.b32.xlu0 %v708, 48
      %v1063 = vpop.permute.xlu0 %1062
      %1064 = vrot.lane.b32.xlu0 %v711, 48
      %v1065 = vpop.permute.xlu0 %1064
      %1074 = vrot.lane.b32.xlu0 %v505, 64
      %v1075 = vpop.permute.xlu0 %1074
      %1076 = vrot.lane.b32.xlu0 %v506, 64
      %v1077 = vpop.permute.xlu0 %1076
      %1078 = vrot.lane.b32.xlu0 %v507, 64
      %v1079 = vpop.permute.xlu0 %1078
      %1080 = vrot.lane.b32.xlu0 %v508, 64
      %v1081 = vpop.permute.xlu0 %1080
      %1090 = vrot.lane.b32.xlu0 %v807, 96
      %v1091 = vpop.permute.xlu0 %1090
      %1092 = vrot.lane.b32.xlu0 %v810, 96
      %v1093 = vpop.permute.xlu0 %1092
      %1094 = vrot.lane.b32.xlu0 %v815, 96
      %v1095 = vpop.permute.xlu0 %1094
      %1096 = vrot.lane.b32.xlu0 %v818, 96
      %v1097 = vpop.permute.xlu0 %1096
      %1106 = vrot.lane.b32.xlu0 %v969, 48
      %v1107 = vpop.permute.xlu0 %1106
      %1108 = vrot.lane.b32.xlu0 %v972, 48
      %v1109 = vpop.permute.xlu0 %1108
      %1110 = vrot.lane.b32.xlu0 %v977, 48
      %v1111 = vpop.permute.xlu0 %1110
      %1112 = vrot.lane.b32.xlu0 %v980, 48
      %v1113 = vpop.permute.xlu0 %1112
      %1122 = vrot.lane.b32.xlu0 %v1024, 80
      %v1123 = vpop.permute.xlu0 %1122
      %1124 = vrot.lane.b32.xlu0 %v1027, 80
      %v1125 = vpop.permute.xlu0 %1124
      %1126 = vrot.lane.b32.xlu0 %v1032, 80
      %v1127 = vpop.permute.xlu0 %1126
      %1128 = vrot.lane.b32.xlu0 %v1035, 80
      %v1129 = vpop.permute.xlu0 %1128
      %vm1134 = vcmask 130048
      %v1135 = vsel %vm1134, %v505, %v1043
      %v1136 = vsel %vm1134, %v506, %v1045
      %v1137 = vsel %vm1134, %v507, %v1047
      %v1138 = vsel %vm1134, %v508, %v1049
      %vm1139 = vcmask 392192
      %v1140 = vsel %vm1139, %v1135, %v1059
      %v1141 = vsel %vm1139, %v1136, %v1061
      %v1142 = vsel %vm1139, %v1137, %v1063
      %v1143 = vsel %vm1139, %v1138, %v1065
      %vm1144 = vcmask 654336
      %v1145 = vsel %vm1144, %v1140, %v1075
      %v1146 = vsel %vm1144, %v1141, %v1077
      %v1147 = vsel %vm1144, %v1142, %v1079
      %v1148 = vsel %vm1144, %v1143, %v1081
      %vm1149 = vcmask 785408
      %v1150 = vsel %vm1149, %v1145, %v1091
      %v1151 = vsel %vm1149, %v1146, %v1093
      %v1152 = vsel %vm1149, %v1147, %v1095
      %v1153 = vsel %vm1149, %v1148, %v1097
      %vm1154 = vcmask 261120
      %v1155 = vsel %vm1154, %v862, %v505
      %v1156 = vsel %vm1154, %v865, %v506
      %v1157 = vsel %vm1154, %v870, %v507
      %v1158 = vsel %vm1154, %v873, %v508
      %v1159 = vsel %vm1139, %v1155, %v1107
      %v1160 = vsel %vm1139, %v1156, %v1109
      %v1161 = vsel %vm1139, %v1157, %v1111
      %v1162 = vsel %vm1139, %v1158, %v1113
      %v1163 = vsel %vm1144, %v1159, %v1123
      %v1164 = vsel %vm1144, %v1160, %v1125
      %v1165 = vsel %vm1144, %v1161, %v1127
      %v1166 = vsel %vm1144, %v1162, %v1129
      %v1167 = vpack.c.bf16 %v1151, %v1150
      %v1168 = vpack.c.bf16 %v1164, %v1163
      %v1169 = vpack.c.bf16 %v1153, %v1152
      %v1170 = vpack.c.bf16 %v1166, %v1165
      %v1171 = vld [vmem:[%s4] sm:$0xf]
      %v1172 = vld [vmem:[%s4 + $0x4] sm:$0xf]
      %v1173 = vld [vmem:[%s4 + $0x8] sm:$0xf]
      %v1174 = vld [vmem:[%s4 + $0xc] sm:$0xf]
      %v1175 = vld [vmem:[%s4 + $0x10] sm:$0xf]
      %v1176 = vld [vmem:[%s4 + $0x14] sm:$0xf]
      %v1177 = vld [vmem:[%s4 + $0x18] sm:$0xf]
      %v1178 = vld [vmem:[%s4 + $0x1c] sm:$0xf]
      %v1179 = vld [vmem:[%s4 + $0x20] sm:$0xf]
      %v1180 = vld [vmem:[%s4 + $0x24] sm:$0xf]
      %v1181 = vld [vmem:[%s4 + $0x28] sm:$0xf]
      %v1182 = vld [vmem:[%s4 + $0x2c] sm:$0xf]
      %v1183 = vld [vmem:[%s4 + $0x30] sm:$0xf]
      %v1184 = vld [vmem:[%s4 + $0x34] sm:$0xf]
      %v1185 = vld [vmem:[%s4 + $0x38] sm:$0xf]
      %v1186 = vld [vmem:[%s4 + $0x3c] sm:$0xf]
      %v1187 = vld [vmem:[%s4 + $0x40] sm:$0xf]
      %v1188 = vld [vmem:[%s4 + $0x44] sm:$0xf]
      %v1189 = vld [vmem:[%s4 + $0x48] sm:$0xf]
      %v1190 = vld [vmem:[%s4 + $0x4c] sm:$0xf]
      %v1191 = vld [vmem:[%s4 + $0x50] sm:$0xf]
      %v1192 = vld [vmem:[%s4 + $0x54] sm:$0xf]
      %v1193 = vld [vmem:[%s4 + $0x58] sm:$0xf]
      %v1194 = vld [vmem:[%s4 + $0x5c] sm:$0xf]
      %v1195 = vld [vmem:[%s4 + $0x60] sm:$0xf]
      %v1196 = vld [vmem:[%s4 + $0x64] sm:$0xf]
      %v1197 = vld [vmem:[%s4 + $0x68] sm:$0xf]
      %v1198 = vld [vmem:[%s4 + $0x6c] sm:$0xf]
      %v1199 = vld [vmem:[%s4 + $0x70] sm:$0xf]
      %v1200 = vld [vmem:[%s4 + $0x74] sm:$0xf]
      %v1201 = vld [vmem:[%s5] sm:$0x1]
      %v1203 = vlaneseq
      %v1204 = vshrl.u32 %v1203, 7
      %v1205 = vsub.s32 0, %v1204
      %v1206 = vrot.slane %v1201, %v1205
      %v1238 = vunpack.c.l.b16 %v1171
      %v1239 = vunpack.c.l.b16 %v1172
      %v1240 = vunpack.c.l.b16 %v1173
      %v1241 = vunpack.c.l.b16 %v1174
      %v1242 = vunpack.c.l.b16 %v1175
      %v1243 = vunpack.c.l.b16 %v1176
      %v1244 = vunpack.c.l.b16 %v1177
      %v1245 = vunpack.c.l.b16 %v1178
      %v1246 = vunpack.c.l.b16 %v1179
      %v1247 = vunpack.c.l.b16 %v1180
      %v1248 = vunpack.c.l.b16 %v1181
      %v1249 = vunpack.c.l.b16 %v1182
      %v1250 = vunpack.c.l.b16 %v1183
      %v1251 = vunpack.c.l.b16 %v1184
      %v1252 = vunpack.c.l.b16 %v1185
      %v1253 = vunpack.c.l.b16 %v1186
      %v1254 = vunpack.c.l.b16 %v1187
      %v1255 = vunpack.c.l.b16 %v1188
      %v1256 = vunpack.c.l.b16 %v1189
      %v1257 = vunpack.c.l.b16 %v1190
      %v1258 = vunpack.c.l.b16 %v1191
      %v1259 = vunpack.c.l.b16 %v1192
      %v1260 = vunpack.c.l.b16 %v1193
      %v1261 = vunpack.c.l.b16 %v1194
      %v1262 = vunpack.c.l.b16 %v1195
      %v1263 = vunpack.c.l.b16 %v1196
      %v1264 = vunpack.c.l.b16 %v1197
      %v1265 = vunpack.c.l.b16 %v1198
      %v1266 = vunpack.c.l.b16 %v1199
      %v1267 = vunpack.c.l.b16 %v1200
      %v1268 = vpack.c.b16 %v1239, %v1238
      %v1269 = vpack.c.b16 %v1241, %v1240
      %v1270 = vpack.c.b16 %v1243, %v1242
      %v1271 = vpack.c.b16 %v1245, %v1244
      %v1272 = vpack.c.b16 %v1247, %v1246
      %v1273 = vpack.c.b16 %v1249, %v1248
      %v1274 = vpack.c.b16 %v1251, %v1250
      %v1275 = vpack.c.b16 %v1253, %v1252
      %v1276 = vpack.c.b16 %v1255, %v1254
      %v1277 = vpack.c.b16 %v1257, %v1256
      %v1278 = vpack.c.b16 %v1259, %v1258
      %v1279 = vpack.c.b16 %v1261, %v1260
      %v1280 = vpack.c.b16 %v1263, %v1262
      %v1281 = vpack.c.b16 %v1265, %v1264
      %v1282 = vpack.c.b16 %v1267, %v1266
      %vm1298 = vcmask 916480
      %v1300 = vsel %vm1298, %v1168, 0
      %v1303 = vsel %vm1298, %v1170, 0
      %1305 = vmatprep.subr.bf16.mxu0 0
      %1306 = vmatpush1.bf16.msra.mxu0 %v1275
      %1307 = vmatprep.subr.bf16.mxu0 0
      %1308 = vmatpush1.bf16.msra.mxu0 %v1274
      %1309 = vmatprep.subr.bf16.mxu0 0
      %1310 = vmatpush1.bf16.msra.mxu0 %v1273
      %1311 = vmatprep.subr.bf16.mxu0 0
      %1312 = vmatpush1.bf16.msra.mxu0 %v1272
      %1313 = vmatprep.subr.bf16.mxu0 0
      %1314 = vmatpush1.bf16.msra.mxu0 %v1271
      %1315 = vmatprep.subr.bf16.mxu0 0
      %1316 = vmatpush1.bf16.msra.mxu0 %v1270
      %1317 = vmatprep.subr.bf16.mxu0 0
      %1318 = vmatpush1.bf16.msra.mxu0 %v1269
      %1319 = vmatprep.subr.bf16.mxu0 0
      %1320 = vmatpush1.bf16.msra.mxu0 %v1268
      %1321 = vmatprep.subr.bf16.mxu0 0
      %1322 = vmatpush2.bf16.msra.mxu0 0
      %1323 = vmatprep.subr.bf16.mxu0 0
      %1324 = vmatpush2.bf16.msra.mxu0 %v1282
      %1325 = vmatprep.subr.bf16.mxu0 0
      %1326 = vmatpush2.bf16.msra.mxu0 %v1281
      %1327 = vmatprep.subr.bf16.mxu0 0
      %1328 = vmatpush2.bf16.msra.mxu0 %v1280
      %1329 = vmatprep.subr.bf16.mxu0 0
      %1330 = vmatpush2.bf16.msra.mxu0 %v1279
      %1331 = vmatprep.subr.bf16.mxu0 0
      %1332 = vmatpush2.bf16.msra.mxu0 %v1278
      %1333 = vmatprep.subr.bf16.mxu0 0
      %1334 = vmatpush2.bf16.msra.mxu0 %v1277
      %1335 = vmatprep.subr.bf16.mxu0 0
      %1336 = vmatpush2.bf16.msra.mxu0 %v1276
      %1337 = vmatprep.mubr.bf16.mxu0 %v1300
      %1338 = vmatmul.mubr.bf16.gmra.mxu0 %v1167
      %v1339 = vpop.f32.mrf.mxu0
      %v1340 = vadd.f32 %v1206, %v1339
      %v1341 = vpop.f32.mrf.mxu0
      %v1342 = vpop.f32.mrf.mxu0
      %v1343 = vadd.f32 %v1206, %v1342
      %v1344 = vpop.f32.mrf.mxu0
      %1345 = vmatprep.mubr.bf16.mxu0 %v1303
      %1346 = vmatmul.mubr.bf16.gmra.mxu0 %v1169
      %v1347 = vpop.f32.mrf.mxu0
      %v1348 = vadd.f32 %v1206, %v1347
      %v1349 = vpop.f32.mrf.mxu0
      %v1350 = vpop.f32.mrf.mxu0
      %v1351 = vadd.f32 %v1206, %v1350
      %v1352 = vpop.f32.mrf.mxu0
      %1353 = vdwg.mxu0
      %v1354 = vld [vmem:[%s6] sm:$0xf]
      %v1355 = vld [vmem:[%s6 + $0x4] sm:$0xf]
      %v1356 = vld [vmem:[%s6 + $0x8] sm:$0xf]
      %v1357 = vld [vmem:[%s6 + $0xc] sm:$0xf]
      %v1358 = vld [vmem:[%s6 + $0x10] sm:$0xf]
      %v1359 = vld [vmem:[%s6 + $0x14] sm:$0xf]
      %v1360 = vld [vmem:[%s6 + $0x18] sm:$0xf]
      %v1361 = vld [vmem:[%s6 + $0x1c] sm:$0xf]
      %v1362 = vld [vmem:[%s7] sm:$0x1]
      %v1363 = vld [vmem:[%s8] sm:$0xf]
      %v1364 = vld [vmem:[%s8 + $0x4] sm:$0xf]
      %v1365 = vld [vmem:[%s8 + $0x8] sm:$0xf]
      %v1366 = vld [vmem:[%s8 + $0xc] sm:$0xf]
      %v1367 = vld [vmem:[%s8 + $0x10] sm:$0xf]
      %v1368 = vld [vmem:[%s8 + $0x14] sm:$0xf]
      %v1369 = vld [vmem:[%s8 + $0x18] sm:$0xf]
      %v1370 = vld [vmem:[%s8 + $0x1c] sm:$0xf]
      %v1371 = vld [vmem:[%s9] sm:$0x1]
      %v1372 = vmax.f32 %v1340, 0.0
      %v1373 = vmax.f32 %v1343, 0.0
      %v1374 = vmax.f32 %v1348, 0.0
      %v1375 = vmax.f32 %v1351, 0.0
      %v1376 = vpack.c.bf16 %v1373, %v1372
      %v1377 = vpack.c.bf16 %v1375, %v1374
      %v1379 = vlaneseq
      %v1380 = vshrl.u32 %v1379, 7
      %v1381 = vsub.s32 0, %v1380
      %v1382 = vrot.slane %v1362, %v1381
      %v1392 = vunpack.c.l.b16 %v1354
      %v1393 = vunpack.c.l.b16 %v1355
      %v1394 = vunpack.c.l.b16 %v1356
      %v1395 = vunpack.c.l.b16 %v1357
      %v1396 = vunpack.c.l.b16 %v1358
      %v1397 = vunpack.c.l.b16 %v1359
      %v1398 = vunpack.c.l.b16 %v1360
      %v1399 = vunpack.c.l.b16 %v1361
      %v1400 = vpack.c.b16 %v1393, %v1392
      %v1401 = vpack.c.b16 %v1395, %v1394
      %v1402 = vpack.c.b16 %v1397, %v1396
      %v1403 = vpack.c.b16 %v1399, %v1398
      %v1409 = vsel %vm603, %v1376, 0
      %v1412 = vsel %vm603, %v1377, 0
      %1414 = vmatprep.subr.bf16.mxu0 0
      %1415 = vmatpush1.bf16.msra.mxu0 0
      %1416 = vmatprep.subr.bf16.mxu0 0
      %1417 = vmatpush1.bf16.msra.mxu0 0
      %1418 = vmatprep.subr.bf16.mxu0 0
      %1419 = vmatpush1.bf16.msra.mxu0 0
      %1420 = vmatprep.subr.bf16.mxu0 0
      %1421 = vmatpush1.bf16.msra.mxu0 0
      %1422 = vmatprep.subr.bf16.mxu0 0
      %1423 = vmatpush1.bf16.msra.mxu0 %v1403
      %1424 = vmatprep.subr.bf16.mxu0 0
      %1425 = vmatpush1.bf16.msra.mxu0 %v1402
      %1426 = vmatprep.subr.bf16.mxu0 0
      %1427 = vmatpush1.bf16.msra.mxu0 %v1401
      %1428 = vmatprep.subr.bf16.mxu0 0
      %1429 = vmatpush1.bf16.msra.mxu0 %v1400
      %1430 = vmatprep.subr.bf16.mxu0 0
      %1431 = vmatpush2.bf16.msra.mxu0 0
      %1432 = vmatprep.subr.bf16.mxu0 0
      %1433 = vmatpush2.bf16.msra.mxu0 0
      %1434 = vmatprep.subr.bf16.mxu0 0
      %1435 = vmatpush2.bf16.msra.mxu0 0
      %1436 = vmatprep.subr.bf16.mxu0 0
      %1437 = vmatpush2.bf16.msra.mxu0 0
      %1438 = vmatprep.subr.bf16.mxu0 0
      %1439 = vmatpush2.bf16.msra.mxu0 0
      %1440 = vmatprep.subr.bf16.mxu0 0
      %1441 = vmatpush2.bf16.msra.mxu0 0
      %1442 = vmatprep.subr.bf16.mxu0 0
      %1443 = vmatpush2.bf16.msra.mxu0 0
      %1444 = vmatprep.subr.bf16.mxu0 0
      %1445 = vmatpush2.bf16.msra.mxu0 0
      %1446 = vmatprep.mubr.bf16.mxu0 0
      %1447 = vmatmul.mubr.bf16.gmra.mxu0 %v1409
      %v1448 = vpop.f32.mrf.mxu0
      %v1449 = vadd.f32 %v1382, %v1448
      %v1450 = vpop.f32.mrf.mxu0
      %v1451 = vpop.f32.mrf.mxu0
      %v1452 = vadd.f32 %v1382, %v1451
      %v1453 = vpop.f32.mrf.mxu0
      %1454 = vmatprep.mubr.bf16.mxu0 0
      %1455 = vmatmul.mubr.bf16.gmra.mxu0 %v1412
      %v1456 = vpop.f32.mrf.mxu0
      %v1457 = vadd.f32 %v1382, %v1456
      %v1458 = vpop.f32.mrf.mxu0
      %v1459 = vpop.f32.mrf.mxu0
      %v1460 = vadd.f32 %v1382, %v1459
      %v1461 = vpop.f32.mrf.mxu0
      %1462 = vdwg.mxu0
      %v1463 = vmax.f32 %v1449, 0.0
      %v1464 = vmax.f32 %v1452, 0.0
      %v1465 = vmax.f32 %v1457, 0.0
      %v1466 = vmax.f32 %v1460, 0.0
      %v1467 = vpack.c.bf16 %v1464, %v1463
      %v1468 = vpack.c.bf16 %v1466, %v1465
      %v1470 = vlaneseq
      %v1471 = vshrl.u32 %v1470, 7
      %v1472 = vsub.s32 0, %v1471
      %v1473 = vrot.slane %v1371, %v1472
      %v1483 = vunpack.c.l.b16 %v1363
      %v1484 = vunpack.c.l.b16 %v1364
      %v1485 = vunpack.c.l.b16 %v1365
      %v1486 = vunpack.c.l.b16 %v1366
      %v1487 = vunpack.c.l.b16 %v1367
      %v1488 = vunpack.c.l.b16 %v1368
      %v1489 = vunpack.c.l.b16 %v1369
      %v1490 = vunpack.c.l.b16 %v1370
      %v1491 = vpack.c.b16 %v1484, %v1483
      %v1492 = vpack.c.b16 %v1486, %v1485
      %v1493 = vpack.c.b16 %v1488, %v1487
      %v1494 = vpack.c.b16 %v1490, %v1489
      %v1500 = vsel %vm603, %v1467, 0
      %v1503 = vsel %vm603, %v1468, 0
      %1505 = vmatprep.subr.bf16.mxu0 0
      %1506 = vmatpush1.bf16.msra.mxu0 0
      %1507 = vmatprep.subr.bf16.mxu0 0
      %1508 = vmatpush1.bf16.msra.mxu0 0
      %1509 = vmatprep.subr.bf16.mxu0 0
      %1510 = vmatpush1.bf16.msra.mxu0 0
      %1511 = vmatprep.subr.bf16.mxu0 0
      %1512 = vmatpush1.bf16.msra.mxu0 0
      %1513 = vmatprep.subr.bf16.mxu0 0
      %1514 = vmatpush1.bf16.msra.mxu0 %v1494
      %1515 = vmatprep.subr.bf16.mxu0 0
      %1516 = vmatpush1.bf16.msra.mxu0 %v1493
      %1517 = vmatprep.subr.bf16.mxu0 0
      %1518 = vmatpush1.bf16.msra.mxu0 %v1492
      %1519 = vmatprep.subr.bf16.mxu0 0
      %1520 = vmatpush1.bf16.msra.mxu0 %v1491
      %1521 = vmatprep.subr.bf16.mxu0 0
      %1522 = vmatpush2.bf16.msra.mxu0 0
      %1523 = vmatprep.subr.bf16.mxu0 0
      %1524 = vmatpush2.bf16.msra.mxu0 0
      %1525 = vmatprep.subr.bf16.mxu0 0
      %1526 = vmatpush2.bf16.msra.mxu0 0
      %1527 = vmatprep.subr.bf16.mxu0 0
      %1528 = vmatpush2.bf16.msra.mxu0 0
      %1529 = vmatprep.subr.bf16.mxu0 0
      %1530 = vmatpush2.bf16.msra.mxu0 0
      %1531 = vmatprep.subr.bf16.mxu0 0
      %1532 = vmatpush2.bf16.msra.mxu0 0
      %1533 = vmatprep.subr.bf16.mxu0 0
      %1534 = vmatpush2.bf16.msra.mxu0 0
      %1535 = vmatprep.subr.bf16.mxu0 0
      %1536 = vmatpush2.bf16.msra.mxu0 0
      %1537 = vmatprep.mubr.bf16.mxu0 0
      %1538 = vmatmul.mubr.bf16.gmra.mxu0 %v1500
      %v1539 = vpop.f32.mrf.mxu0
      %v1540 = vadd.f32 %v1473, %v1539
      %v1541 = vpop.f32.mrf.mxu0
      %v1542 = vpop.f32.mrf.mxu0
      %v1543 = vadd.f32 %v1473, %v1542
      %v1544 = vpop.f32.mrf.mxu0
      %1545 = vmatprep.mubr.bf16.mxu0 0
      %1546 = vmatmul.mubr.bf16.gmra.mxu0 %v1503
      %v1547 = vpop.f32.mrf.mxu0
      %v1548 = vadd.f32 %v1473, %v1547
      %v1549 = vpop.f32.mrf.mxu0
      %v1550 = vpop.f32.mrf.mxu0
      %v1551 = vadd.f32 %v1473, %v1550
      %v1552 = vpop.f32.mrf.mxu0
      %1553 = vdwg.mxu0
      %v1554 = vsel %vm1139, %v1540, 0.0
      %1555 = vadd.xlane.f32.xlu0 %v1554
      %v1556 = vpop.xlane.xlu0 %1555
      %v1557 = vsel %vm1139, %v1543, 0.0
      %1558 = vadd.xlane.f32.xlu0 %v1557
      %v1559 = vpop.xlane.xlu0 %1558
      %v1560 = vsel %vm1139, %v1548, 0.0
      %1561 = vadd.xlane.f32.xlu0 %v1560
      %v1562 = vpop.xlane.xlu0 %1561
      %v1563 = vsel %vm1139, %v1551, 0.0
      %1564 = vadd.xlane.f32.xlu0 %v1563
      %v1565 = vpop.xlane.xlu0 %1564
      %v1566 = vrcp.pop 48.0
      %v1567 = vmul.f32 %v1556, %v1566
      %v1568 = vmul.f32 %v1559, %v1566
      %v1569 = vmul.f32 %v1562, %v1566
      %v1570 = vmul.f32 %v1565, %v1566
      %v1571 = vsub.f32 %v1540, %v1567
      %v1572 = vsub.f32 %v1543, %v1568
      %v1573 = vsub.f32 %v1548, %v1569
      %v1574 = vsub.f32 %v1551, %v1570
      %v1575 = vmul.f32 %v1571, %v1571
      %v1576 = vmul.f32 %v1572, %v1572
      %v1577 = vmul.f32 %v1573, %v1573
      %v1578 = vmul.f32 %v1574, %v1574
      %v1579 = vsel %vm1139, %v1575, 0.0
      %1580 = vadd.xlane.f32.xlu0 %v1579
      %v1581 = vpop.xlane.xlu0 %1580
      %v1582 = vsel %vm1139, %v1576, 0.0
      %1583 = vadd.xlane.f32.xlu0 %v1582
      %v1584 = vpop.xlane.xlu0 %1583
      %v1585 = vsel %vm1139, %v1577, 0.0
      %1586 = vadd.xlane.f32.xlu0 %v1585
      %v1587 = vpop.xlane.xlu0 %1586
      %v1588 = vsel %vm1139, %v1578, 0.0
      %1589 = vadd.xlane.f32.xlu0 %v1588
      %v1590 = vpop.xlane.xlu0 %1589
      %v1591 = vmul.f32 %v1581, %v1566
      %v1592 = vmul.f32 %v1584, %v1566
      %v1593 = vmul.f32 %v1587, %v1566
      %v1594 = vmul.f32 %v1590, %v1566
      %v1595 = vadd.f32 %v1591, 1e-05
      %v1596 = vadd.f32 %v1592, 1e-05
      %v1597 = vadd.f32 %v1593, 1e-05
      %v1598 = vadd.f32 %v1594, 1e-05
      %v1599 = vrsqrt.pop %v1595
      %v1600 = vrsqrt.pop %v1596
      %v1601 = vrsqrt.pop %v1597
      %v1602 = vrsqrt.pop %v1598
      %v1603 = vmul.f32 %v1571, %v1599
      %v1604 = vmul.f32 %v1572, %v1600
      %v1605 = vmul.f32 %v1573, %v1601
      %v1606 = vmul.f32 %v1574, %v1602
      %v1608 = vlaneseq
      %v1609 = vshrl.u32 %v1608, 7
      %v1610 = vsub.s32 0, %v1609
      %v1611 = vrot.slane %v503, %v1610
      %v1613 = vmul.f32 %v1603, %v1611
      %v1614 = vmul.f32 %v1604, %v1611
      %v1615 = vmul.f32 %v1605, %v1611
      %v1616 = vmul.f32 %v1606, %v1611
      %v1618 = vlaneseq
      %v1619 = vshrl.u32 %v1618, 7
      %v1620 = vsub.s32 0, %v1619
      %v1621 = vrot.slane %v504, %v1620
      %v1623 = vadd.f32 %v1613, %v1621
      %v1624 = vadd.f32 %v1614, %v1621
      %v1625 = vadd.f32 %v1615, %v1621
      %v1626 = vadd.f32 %v1616, %v1621
      %v1627 = vpack.c.bf16 %v1624, %v1623
      %v1628 = vpack.c.bf16 %v1626, %v1625
      %v1631 = vunpack.c.l.b16 %v1627
      %v1632 = vunpack.c.h.b16 %v1627
      %v1633 = vunpack.c.l.b16 %v1628
      %v1634 = vunpack.c.h.b16 %v1628
      %v1635 = vpack.c.b16 %v1631, %v1631
      %v1636 = vpack.c.b16 %v1632, %v1632
      %v1637 = vpack.c.b16 %v1633, %v1633
      %v1638 = vpack.c.b16 %v1634, %v1634
      %vm1643 = vcmask 388096
      %1644 = vst.msk [vmem:[%s494] sm:$0xf] %vm1643, %v1635
      %1645 = vst.msk [vmem:[%s494 + $0x4] sm:$0xf] %vm1643, %v1636
      %1646 = vst.msk [vmem:[%s494 + $0x8] sm:$0xf] %vm1643, %v1637
      %1647 = vst.msk [vmem:[%s494 + $0xc] sm:$0xf] %vm1643, %v1638
      %v1648 = vadd.f32 %v505, %v1623
      %v1649 = vadd.f32 %v506, %v1624
      %v1650 = vadd.f32 %v507, %v1625
      %v1651 = vadd.f32 %v508, %v1626
      %1652 = vst.msk [vmem:[%s500] sm:$0xff] %vm1139, %v1648
      %1653 = vst.msk [vmem:[%s500 + $0x8] sm:$0xff] %vm1139, %v1649
      %1654 = vst.msk [vmem:[%s500 + $0x10] sm:$0xff] %vm1139, %v1650
      %1655 = vst.msk [vmem:[%s500 + $0x18] sm:$0xff] %vm1139, %v1651
      %s1656 = smul.u32 4, %s25
      %p1657 = scmp.lt.s32.totalorder %s1656, 7
      %s1658 = scalar_select %p1657, %s1656, 7
      %s1659 = smul.addr %s1658, 4
      %s1660 = scalar_lea.vmem %s12, %s1659
      %s1661 = smul.u32 4, %s25
      %p1662 = scmp.lt.s32.totalorder %s1661, 7
      %s1663 = scalar_select %p1662, %s1661, 7
      %s1664 = smul.addr %s1663, 8
      %s1665 = scalar_lea.vmem %s13, %s1664
      // Predicated region
      $region69: #{interaction_network_forward.4} parent=67 // pred_check
        %p1666 = pneg %p310
      $region70: #{interaction_network_forward.4} parent=67 // pred_check_branch
        %1668 = sbr.rel (%p1666) target = $region72
      $region71: #{interaction_network_forward.4} parent=67 // pred_region
        %s1669 = smul.u32 4, %s25
      $region72: #{interaction_network_forward.4} parent=67 // pred_fallthru
        _
      // Predicated region
      $region73: #{interaction_network_forward.4} parent=67 // pred_check
        %p1670 = pneg %p336
      $region74: #{interaction_network_forward.4} parent=67 // pred_check_branch
        %1672 = sbr.rel (%p1670) target = $region76
      $region75: #{interaction_network_forward.4} parent=67 // pred_region
        %s1673 = smul.u32 4, %s25
      $region76: #{interaction_network_forward.4} parent=67 // pred_fallthru
        _
    $region68: #{interaction_network_forward.4} parent=5 // pred_fallthru
      _
    %p1674 = scmp.le.s32.totalorder 2, %s20
    // Predicated region
    $region77: #{interaction_network_forward.4} parent=5 // pred_check
      %p1675 = pneg %p1674
    $region78: #{interaction_network_forward.4} parent=5 // pred_check_branch
      %1677 = sbr.rel (%p1675) target = $region80
    $region79: #{interaction_network_forward.4} parent=5 // pred_region
      %s1678 = ssub.s32 %s20, 2
      // Predicated region
      $region81: #{interaction_network_forward.4} parent=79 // pred_check
        %p1679 = pneg %p316
      $region82: #{interaction_network_forward.4} parent=79 // pred_check_branch
        %1681 = sbr.rel (%p1679) target = $region84
      $region83: #{interaction_network_forward.4} parent=79 // pred_region
        %s1682 = smul.u32 4, %s26
        %p1683 = scmp.lt.s32.totalorder %s1682, 7
        %s1684 = scalar_select %p1683, %s1682, 7
        %s1685 = smul.addr %s1684, 4
        %s1686 = scalar_lea.vmem %s12, %s1685
      $region84: #{interaction_network_forward.4} parent=79 // pred_fallthru
        _
      // Predicated region
      $region85: #{interaction_network_forward.4} parent=79 // pred_check
        %p1687 = pneg %p342
      $region86: #{interaction_network_forward.4} parent=79 // pred_check_branch
        %1689 = sbr.rel (%p1687) target = $region88
      $region87: #{interaction_network_forward.4} parent=79 // pred_region
        %s1690 = smul.u32 4, %s26
        %p1691 = scmp.lt.s32.totalorder %s1690, 7
        %s1692 = scalar_select %p1691, %s1690, 7
        %s1693 = smul.addr %s1692, 8
        %s1694 = scalar_lea.vmem %s13, %s1693
      $region88: #{interaction_network_forward.4} parent=79 // pred_fallthru
        _
    $region80: #{interaction_network_forward.4} parent=5 // pred_fallthru
      _
  $region6: #{interaction_network_forward.4} parent=0 // loop_footer
    %s24 = sadd.s32 1, %s20
  $region7: #{interaction_network_forward.4} parent=0 // loop_footer_branch
    %19 = sbr.rel target = $region3
  $region8: #{interaction_network_forward.4} parent=0 // loop_exit
    _

// kernel: interaction_network_forward.3
$region0: #{interaction_network_forward.3}
  #allocation0 [shape = 'u32[]', space=smem, size = 0x4, offset = 0x4, fixed_abs, tag = 'smem constant byte address 0x4 - core index']
  #allocation1 [shape = 'u32[144,128]{1,0:T(1,128)}', space=vmem, size = 0x12000, scoped, tag = 'internal scratch']
  %s0 = inlined_call_operand.vmem [shape: s32[3,320,1], index: 0, kind: input, shape index: {}]
  %s1 = inlined_call_operand.vmem [shape: s32[3,320,1], index: 1, kind: input, shape index: {}]
  %s2 = inlined_call_operand.vmem [shape: f32[3,320,32], index: 2, kind: input, shape index: {}]
  %s3 = inlined_call_operand.vmem [shape: bf16[64,32], index: 3, kind: input, shape index: {}]
  %s4 = inlined_call_operand.vmem [shape: bf16[3,96,64], index: 4, kind: input, shape index: {}]
  %s5 = inlined_call_operand.vmem [shape: f32[3,1,64], index: 5, kind: input, shape index: {}]
  %s6 = inlined_call_operand.vmem [shape: bf16[3,64,64], index: 6, kind: input, shape index: {}]
  %s7 = inlined_call_operand.vmem [shape: f32[3,1,64], index: 7, kind: input, shape index: {}]
  %s8 = inlined_call_operand.vmem [shape: bf16[3,64,32], index: 8, kind: input, shape index: {}]
  %s9 = inlined_call_operand.vmem [shape: f32[3,1,32], index: 9, kind: input, shape index: {}]
  %s10 = inlined_call_operand.vmem [shape: f32[3,1,32], index: 10, kind: input, shape index: {}]
  %s11 = inlined_call_operand.vmem [shape: f32[3,1,32], index: 11, kind: input, shape index: {}]
  %s12 = inlined_call_operand.vmem [shape: bf16[3,320,32], index: 12, kind: output, shape index: {0}]
  %s13 = inlined_call_operand.vmem [shape: f32[3,320,32], index: 13, kind: output, shape index: {1}]
  %14 = xla_tuple %s12, %s13
  %s15 = sld [smem:[#allocation0]]
  $region89: #{interaction_network_forward.3} parent=0
    _
  %s17 = ssub.s32 1, %s15
  %s18 = scalar_select 0, %s17, %s15
  loop: start=0, step=1, limit=8
  $region2: #{interaction_network_forward.3} parent=0 // loop_pre_header
    _
  $region3: #{interaction_network_forward.3} parent=0 // loop_header
    %s20 = sphi 0, %s24
    %p21 = scmp.ge.s32.totalorder %s20, 8
    %s27 = sphi 0, %s39
    %s28 = sphi 0, %s35
    %s29 = sphi 0, %s27
    %s30 = sphi 0, %s28
    %s31 = sphi 0, %s29
    %s32 = sphi 0, %s30
    %s44 = sphi 0, %s46
    %s47 = sphi 0, %s44
    %s48 = sphi 0, %s47
    %s64 = sphi 0, %s48
    %s72 = sphi 0, %s74
    %s75 = sphi 0, %s72
    %s76 = sphi 0, %s75
    %s92 = sphi 0, %s76
    %s100 = sphi 0, %s102
    %s103 = sphi 0, %s100
    %s104 = sphi 0, %s103
    %s120 = sphi 0, %s104
    %s124 = sphi 0, %s124
    %s126 = sphi 0, %s124
    %s127 = sphi 0, %s126
    %s141 = sphi 0, %s127
    %s147 = sphi 0, %s149
    %s150 = sphi 0, %s147
    %s151 = sphi 0, %s150
    %s167 = sphi 0, %s151
    %s173 = sphi 0, %s175
    %s176 = sphi 0, %s173
    %s177 = sphi 0, %s176
    %s193 = sphi 0, %s177
    %s199 = sphi 0, %s201
    %s202 = sphi 0, %s199
    %s203 = sphi 0, %s202
    %s219 = sphi 0, %s203
    %s225 = sphi 0, %s227
    %s228 = sphi 0, %s225
    %s229 = sphi 0, %s228
    %s245 = sphi 0, %s229
    %s251 = sphi 0, %s253
    %s254 = sphi 0, %s251
    %s255 = sphi 0, %s254
    %s271 = sphi 0, %s255
    %s277 = sphi 0, %s279
    %s280 = sphi 0, %s277
    %s281 = sphi 0, %s280
    %s297 = sphi 0, %s281
    %s303 = sphi 0, %s305
    %s306 = sphi 0, %s303
    %s307 = sphi 0, %s306
    %s323 = sphi 0, %s307
    %s329 = sphi 0, %s331
    %s332 = sphi 0, %s329
    %s333 = sphi 0, %s332
    %s349 = sphi 0, %s333
    %s357 = sphi 0, %s359
    %s360 = sphi 0, %s357
    %s361 = sphi 0, %s360
    %s377 = sphi 0, %s361
    %s385 = sphi 0, %s387
    %s388 = sphi 0, %s385
    %s389 = sphi 0, %s388
    %s405 = sphi 0, %s389
  $region4: #{interaction_network_forward.3} parent=0 // loop_header_branch
    %23 = sbr.rel (%p21) target = $region8
  $region5: #{interaction_network_forward.3} parent=0 // loop_body
    %s25 = ssub.s32 %s20, 1
    %s26 = ssub.s32 %s20, 2
    %s33 = sadd.s32 1, %s28
    %p34 = scmp.ge.s32.totalorder %s33, 2
    %s35 = scalar_select %p34, 0, %s33
    %s36 = sadd.s32 1, %s27
    %s37 = scalar_select %p34, %s36, %s27
    %p38 = scmp.ge.s32.totalorder %s37, 3
    %s39 = scalar_select %p38, 0, %s37
    %s40 = ssub.s32 %s27, %s39
    %s41 = ssub.s32 %s28, %s35
    %s42 = sor.u32 %s40, %s41
    %p43 = scmp.eq.s32.totalorder %s42, 0
    %s45 = sadd.s32 %s44, 1
    %s46 = scalar_select %p43, %s44, %s45
    %p49 = pneg %p43
    %p50 = scmp.eq.s32.totalorder %s20, 5
    %p51 = por %p49, %p50
    %p52 = scmp.ne.s32.totalorder %s44, %s47
    %p53 = scmp.eq.s32.totalorder %s20, 0
    %p54 = por %p52, %p53
    %p55 = scmp.ne.s32.totalorder %s44, %s47
    %p56 = scmp.eq.s32.totalorder %s25, 5
    %p57 = por %p55, %p56
    %p58 = scmp.ne.s32.totalorder %s47, %s48
    %p59 = scmp.eq.s32.totalorder %s25, 0
    %p60 = por %p58, %p59
    %p61 = scmp.ne.s32.totalorder %s47, %s48
    %p62 = scmp.eq.s32.totalorder %s26, 5
    %p63 = por %p61, %p62
    %p65 = scmp.ne.s32.totalorder %s48, %s64
    %p66 = scmp.eq.s32.totalorder %s26, 0
    %p67 = por %p65, %p66
    %s68 = ssub.s32 %s27, %s39
    %s69 = ssub.s32 %s28, %s35
    %s70 = sor.u32 %s68, %s69
    %p71 = scmp.eq.s32.totalorder %s70, 0
    %s73 = sadd.s32 %s72, 1
    %s74 = scalar_select %p71, %s72, %s73
    %p77 = pneg %p71
    %p78 = scmp.eq.s32.totalorder %s20, 5
    %p79 = por %p77, %p78
    %p80 = scmp.ne.s32.totalorder %s72, %s75
    %p81 = scmp.eq.s32.totalorder %s20, 0
    %p82 = por %p80, %p81
    %p83 = scmp.ne.s32.totalorder %s72, %s75
    %p84 = scmp.eq.s32.totalorder %s25, 5
    %p85 = por %p83, %p84
    %p86 = scmp.ne.s32.totalorder %s75, %s76
    %p87 = scmp.eq.s32.totalorder %s25, 0
    %p88 = por %p86, %p87
    %p89 = scmp.ne.s32.totalorder %s75, %s76
    %p90 = scmp.eq.s32.totalorder %s26, 5
    %p91 = por %p89, %p90
    %p93 = scmp.ne.s32.totalorder %s76, %s92
    %p94 = scmp.eq.s32.totalorder %s26, 0
    %p95 = por %p93, %p94
    %s96 = ssub.s32 %s27, %s39
    %s97 = ssub.s32 %s28, %s35
    %s98 = sor.u32 %s96, %s97
    %p99 = scmp.eq.s32.totalorder %s98, 0
    %s101 = sadd.s32 %s100, 1
    %s102 = scalar_select %p99, %s100, %s101
    %p105 = pneg %p99
    %p106 = scmp.eq.s32.totalorder %s20, 5
    %p107 = por %p105, %p106
    %p108 = scmp.ne.s32.totalorder %s100, %s103
    %p109 = scmp.eq.s32.totalorder %s20, 0
    %p110 = por %p108, %p109
    %p111 = scmp.ne.s32.totalorder %s100, %s103
    %p112 = scmp.eq.s32.totalorder %s25, 5
    %p113 = por %p111, %p112
    %p114 = scmp.ne.s32.totalorder %s103, %s104
    %p115 = scmp.eq.s32.totalorder %s25, 0
    %p116 = por %p114, %p115
    %p117 = scmp.ne.s32.totalorder %s103, %s104
    %p118 = scmp.eq.s32.totalorder %s26, 5
    %p119 = por %p117, %p118
    %p121 = scmp.ne.s32.totalorder %s104, %s120
    %p122 = scmp.eq.s32.totalorder %s26, 0
    %p123 = por %p121, %p122
    %s125 = sadd.s32 %s124, 1
    %p128 = scmp.eq.s32.totalorder %s20, 5
    %p129 = scmp.ne.s32.totalorder %s124, %s126
    %p130 = scmp.eq.s32.totalorder %s20, 0
    %p131 = por %p129, %p130
    %p132 = scmp.ne.s32.totalorder %s124, %s126
    %p133 = scmp.eq.s32.totalorder %s25, 5
    %p134 = por %p132, %p133
    %p135 = scmp.ne.s32.totalorder %s126, %s127
    %p136 = scmp.eq.s32.totalorder %s25, 0
    %p137 = por %p135, %p136
    %p138 = scmp.ne.s32.totalorder %s126, %s127
    %p139 = scmp.eq.s32.totalorder %s26, 5
    %p140 = por %p138, %p139
    %p142 = scmp.ne.s32.totalorder %s127, %s141
    %p143 = scmp.eq.s32.totalorder %s26, 0
    %p144 = por %p142, %p143
    %s145 = ssub.s32 %s27, %s39
    %p146 = scmp.eq.s32.totalorder %s145, 0
    %s148 = sadd.s32 %s147, 1
    %s149 = scalar_select %p146, %s147, %s148
    %p152 = pneg %p146
    %p153 = scmp.eq.s32.totalorder %s20, 5
    %p154 = por %p152, %p153
    %p155 = scmp.ne.s32.totalorder %s147, %s150
    %p156 = scmp.eq.s32.totalorder %s20, 0
    %p157 = por %p155, %p156
    %p158 = scmp.ne.s32.totalorder %s147, %s150
    %p159 = scmp.eq.s32.totalorder %s25, 5
    %p160 = por %p158, %p159
    %p161 = scmp.ne.s32.totalorder %s150, %s151
    %p162 = scmp.eq.s32.totalorder %s25, 0
    %p163 = por %p161, %p162
    %p164 = scmp.ne.s32.totalorder %s150, %s151
    %p165 = scmp.eq.s32.totalorder %s26, 5
    %p166 = por %p164, %p165
    %p168 = scmp.ne.s32.totalorder %s151, %s167
    %p169 = scmp.eq.s32.totalorder %s26, 0
    %p170 = por %p168, %p169
    %s171 = ssub.s32 %s27, %s39
    %p172 = scmp.eq.s32.totalorder %s171, 0
    %s174 = sadd.s32 %s173, 1
    %s175 = scalar_select %p172, %s173, %s174
    %p178 = pneg %p172
    %p179 = scmp.eq.s32.totalorder %s20, 5
    %p180 = por %p178, %p179
    %p181 = scmp.ne.s32.totalorder %s173, %s176
    %p182 = scmp.eq.s32.totalorder %s20, 0
    %p183 = por %p181, %p182
    %p184 = scmp.ne.s32.totalorder %s173, %s176
    %p185 = scmp.eq.s32.totalorder %s25, 5
    %p186 = por %p184, %p185
    %p187 = scmp.ne.s32.totalorder %s176, %s177
    %p188 = scmp.eq.s32.totalorder %s25, 0
    %p189 = por %p187, %p188
    %p190 = scmp.ne.s32.totalorder %s176, %s177
    %p191 = scmp.eq.s32.totalorder %s26, 5
    %p192 = por %p190, %p191
    %p194 = scmp.ne.s32.totalorder %s177, %s193
    %p195 = scmp.eq.s32.totalorder %s26, 0
    %p196 = por %p194, %p195
    %s197 = ssub.s32 %s27, %s39
    %p198 = scmp.eq.s32.totalorder %s197, 0
    %s200 = sadd.s32 %s199, 1
    %s201 = scalar_select %p198, %s199, %s200
    %p204 = pneg %p198
    %p205 = scmp.eq.s32.totalorder %s20, 5
    %p206 = por %p204, %p205
    %p207 = scmp.ne.s32.totalorder %s199, %s202
    %p208 = scmp.eq.s32.totalorder %s20, 0
    %p209 = por %p207, %p208
    %p210 = scmp.ne.s32.totalorder %s199, %s202
    %p211 = scmp.eq.s32.totalorder %s25, 5
    %p212 = por %p210, %p211
    %p213 = scmp.ne.s32.totalorder %s202, %s203
    %p214 = scmp.eq.s32.totalorder %s25, 0
    %p215 = por %p213, %p214
    %p216 = scmp.ne.s32.totalorder %s202, %s203
    %p217 = scmp.eq.s32.totalorder %s26, 5
    %p218 = por %p216, %p217
    %p220 = scmp.ne.s32.totalorder %s203, %s219
    %p221 = scmp.eq.s32.totalorder %s26, 0
    %p222 = por %p220, %p221
    %s223 = ssub.s32 %s27, %s39
    %p224 = scmp.eq.s32.totalorder %s223, 0
    %s226 = sadd.s32 %s225, 1
    %s227 = scalar_select %p224, %s225, %s226
    %p230 = pneg %p224
    %p231 = scmp.eq.s32.totalorder %s20, 5
    %p232 = por %p230, %p231
    %p233 = scmp.ne.s32.totalorder %s225, %s228
    %p234 = scmp.eq.s32.totalorder %s20, 0
    %p235 = por %p233, %p234
    %p236 = scmp.ne.s32.totalorder %s225, %s228
    %p237 = scmp.eq.s32.totalorder %s25, 5
    %p238 = por %p236, %p237
    %p239 = scmp.ne.s32.totalorder %s228, %s229
    %p240 = scmp.eq.s32.totalorder %s25, 0
    %p241 = por %p239, %p240
    %p242 = scmp.ne.s32.totalorder %s228, %s229
    %p243 = scmp.eq.s32.totalorder %s26, 5
    %p244 = por %p242, %p243
    %p246 = scmp.ne.s32.totalorder %s229, %s245
    %p247 = scmp.eq.s32.totalorder %s26, 0
    %p248 = por %p246, %p247
    %s249 = ssub.s32 %s27, %s39
    %p250 = scmp.eq.s32.totalorder %s249, 0
    %s252 = sadd.s32 %s251, 1
    %s253 = scalar_select %p250, %s251, %s252
    %p256 = pneg %p250
    %p257 = scmp.eq.s32.totalorder %s20, 5
    %p258 = por %p256, %p257
    %p259 = scmp.ne.s32.totalorder %s251, %s254
    %p260 = scmp.eq.s32.totalorder %s20, 0
    %p261 = por %p259, %p260
    %p262 = scmp.ne.s32.totalorder %s251, %s254
    %p263 = scmp.eq.s32.totalorder %s25, 5
    %p264 = por %p262, %p263
    %p265 = scmp.ne.s32.totalorder %s254, %s255
    %p266 = scmp.eq.s32.totalorder %s25, 0
    %p267 = por %p265, %p266
    %p268 = scmp.ne.s32.totalorder %s254, %s255
    %p269 = scmp.eq.s32.totalorder %s26, 5
    %p270 = por %p268, %p269
    %p272 = scmp.ne.s32.totalorder %s255, %s271
    %p273 = scmp.eq.s32.totalorder %s26, 0
    %p274 = por %p272, %p273
    %s275 = ssub.s32 %s27, %s39
    %p276 = scmp.eq.s32.totalorder %s275, 0
    %s278 = sadd.s32 %s277, 1
    %s279 = scalar_select %p276, %s277, %s278
    %p282 = pneg %p276
    %p283 = scmp.eq.s32.totalorder %s20, 5
    %p284 = por %p282, %p283
    %p285 = scmp.ne.s32.totalorder %s277, %s280
    %p286 = scmp.eq.s32.totalorder %s20, 0
    %p287 = por %p285, %p286
    %p288 = scmp.ne.s32.totalorder %s277, %s280
    %p289 = scmp.eq.s32.totalorder %s25, 5
    %p290 = por %p288, %p289
    %p291 = scmp.ne.s32.totalorder %s280, %s281
    %p292 = scmp.eq.s32.totalorder %s25, 0
    %p293 = por %p291, %p292
    %p294 = scmp.ne.s32.totalorder %s280, %s281
    %p295 = scmp.eq.s32.totalorder %s26, 5
    %p296 = por %p294, %p295
    %p298 = scmp.ne.s32.totalorder %s281, %s297
    %p299 = scmp.eq.s32.totalorder %s26, 0
    %p300 = por %p298, %p299
    %s301 = ssub.s32 %s27, %s39
    %p302 = scmp.eq.s32.totalorder %s301, 0
    %s304 = sadd.s32 %s303, 1
    %s305 = scalar_select %p302, %s303, %s304
    %p308 = pneg %p302
    %p309 = scmp.eq.s32.totalorder %s20, 5
    %p310 = por %p308, %p309
    %p311 = scmp.ne.s32.totalorder %s303, %s306
    %p312 = scmp.eq.s32.totalorder %s20, 0
    %p313 = por %p311, %p312
    %p314 = scmp.ne.s32.totalorder %s303, %s306
    %p315 = scmp.eq.s32.totalorder %s25, 5
    %p316 = por %p314, %p315
    %p317 = scmp.ne.s32.totalorder %s306, %s307
    %p318 = scmp.eq.s32.totalorder %s25, 0
    %p319 = por %p317, %p318
    %p320 = scmp.ne.s32.totalorder %s306, %s307
    %p321 = scmp.eq.s32.totalorder %s26, 5
    %p322 = por %p320, %p321
    %p324 = scmp.ne.s32.totalorder %s307, %s323
    %p325 = scmp.eq.s32.totalorder %s26, 0
    %p326 = por %p324, %p325
    %s327 = ssub.s32 %s27, %s39
    %p328 = scmp.eq.s32.totalorder %s327, 0
    %s330 = sadd.s32 %s329, 1
    %s331 = scalar_select %p328, %s329, %s330
    %p334 = pneg %p328
    %p335 = scmp.eq.s32.totalorder %s20, 5
    %p336 = por %p334, %p335
    %p337 = scmp.ne.s32.totalorder %s329, %s332
    %p338 = scmp.eq.s32.totalorder %s20, 0
    %p339 = por %p337, %p338
    %p340 = scmp.ne.s32.totalorder %s329, %s332
    %p341 = scmp.eq.s32.totalorder %s25, 5
    %p342 = por %p340, %p341
    %p343 = scmp.ne.s32.totalorder %s332, %s333
    %p344 = scmp.eq.s32.totalorder %s25, 0
    %p345 = por %p343, %p344
    %p346 = scmp.ne.s32.totalorder %s332, %s333
    %p347 = scmp.eq.s32.totalorder %s26, 5
    %p348 = por %p346, %p347
    %p350 = scmp.ne.s32.totalorder %s333, %s349
    %p351 = scmp.eq.s32.totalorder %s26, 0
    %p352 = por %p350, %p351
    %s353 = ssub.s32 %s27, %s39
    %s354 = ssub.s32 %s28, %s35
    %s355 = sor.u32 %s353, %s354
    %p356 = scmp.eq.s32.totalorder %s355, 0
    %s358 = sadd.s32 %s357, 1
    %s359 = scalar_select %p356, %s357, %s358
    %p362 = pneg %p356
    %p363 = scmp.eq.s32.totalorder %s20, 5
    %p364 = por %p362, %p363
    %p365 = scmp.ne.s32.totalorder %s357, %s360
    %p366 = scmp.eq.s32.totalorder %s20, 0
    %p367 = por %p365, %p366
    %p368 = scmp.ne.s32.totalorder %s357, %s360
    %p369 = scmp.eq.s32.totalorder %s25, 5
    %p370 = por %p368, %p369
    %p371 = scmp.ne.s32.totalorder %s360, %s361
    %p372 = scmp.eq.s32.totalorder %s25, 0
    %p373 = por %p371, %p372
    %p374 = scmp.ne.s32.totalorder %s360, %s361
    %p375 = scmp.eq.s32.totalorder %s26, 5
    %p376 = por %p374, %p375
    %p378 = scmp.ne.s32.totalorder %s361, %s377
    %p379 = scmp.eq.s32.totalorder %s26, 0
    %p380 = por %p378, %p379
    %s381 = ssub.s32 %s27, %s39
    %s382 = ssub.s32 %s28, %s35
    %s383 = sor.u32 %s381, %s382
    %p384 = scmp.eq.s32.totalorder %s383, 0
    %s386 = sadd.s32 %s385, 1
    %s387 = scalar_select %p384, %s385, %s386
    %p390 = pneg %p384
    %p391 = scmp.eq.s32.totalorder %s20, 5
    %p392 = por %p390, %p391
    %p393 = scmp.ne.s32.totalorder %s385, %s388
    %p394 = scmp.eq.s32.totalorder %s20, 0
    %p395 = por %p393, %p394
    %p396 = scmp.ne.s32.totalorder %s385, %s388
    %p397 = scmp.eq.s32.totalorder %s25, 5
    %p398 = por %p396, %p397
    %p399 = scmp.ne.s32.totalorder %s388, %s389
    %p400 = scmp.eq.s32.totalorder %s25, 0
    %p401 = por %p399, %p400
    %p402 = scmp.ne.s32.totalorder %s388, %s389
    %p403 = scmp.eq.s32.totalorder %s26, 5
    %p404 = por %p402, %p403
    %p406 = scmp.ne.s32.totalorder %s389, %s405
    %p407 = scmp.eq.s32.totalorder %s26, 0
    %p408 = por %p406, %p407
    %p409 = scmp.le.s32.totalorder 1, %s20
    %p410 = scmp.lt.s32.totalorder %s20, 7
    %p411 = pnand %p409, %p410
    %p412 = pneg %p411
    // Predicated region
    $region9: #{interaction_network_forward.3} parent=5 // pred_check
      _
    $region10: #{interaction_network_forward.3} parent=5 // pred_check_branch
      %414 = sbr.rel (%p411) target = $region12
    $region11: #{interaction_network_forward.3} parent=5 // pred_region
      %s415 = ssub.s32 %s20, 1
      // Predicated region
      $region13: #{interaction_network_forward.3} parent=11 // pred_check
        %p416 = pneg %p137
      $region14: #{interaction_network_forward.3} parent=11 // pred_check_branch
        %418 = sbr.rel (%p416) target = $region16
      $region15: #{interaction_network_forward.3} parent=11 // pred_region
        _
      $region16: #{interaction_network_forward.3} parent=11 // pred_fallthru
        _
    $region12: #{interaction_network_forward.3} parent=5 // pred_fallthru
      _
    %p419 = scmp.lt.s32.totalorder %s20, 6
    // Predicated region
    $region17: #{interaction_network_forward.3} parent=5 // pred_check
      %p420 = pneg %p419
    $region18: #{interaction_network_forward.3} parent=5 // pred_check_branch
      %422 = sbr.rel (%p420) target = $region20
    $region19: #{interaction_network_forward.3} parent=5 // pred_region
      // Predicated region
      $region21: #{interaction_network_forward.3} parent=19 // pred_check
        %p423 = pneg %p54
      $region22: #{interaction_network_forward.3} parent=19 // pred_check_branch
        %425 = sbr.rel (%p423) target = $region24
      $region23: #{interaction_network_forward.3} parent=19 // pred_region
        %s426 = smul.u32 20, %s28
        %p427 = scmp.lt.s32.totalorder %s27, 2
        %s428 = scalar_select %p427, %s27, 2
        %p429 = scmp.lt.s32.totalorder %s426, 39
        %s430 = scalar_select %p429, %s426, 39
        %s431 = smul.addr %s428, 40
        %s432 = sadd.s32 %s430, %s431
        %s433 = smul.addr %s432, 8
        %s434 = scalar_lea.vmem %s0, %s433
        %s435 = smul.u32 20, %s28
      $region24: #{interaction_network_forward.3} parent=19 // pred_fallthru
        _
      // Predicated region
      $region25: #{interaction_network_forward.3} parent=19 // pred_check
        %p436 = pneg %p82
      $region26: #{interaction_network_forward.3} parent=19 // pred_check_branch
        %438 = sbr.rel (%p436) target = $region28
      $region27: #{interaction_network_forward.3} parent=19 // pred_region
        %s439 = smul.u32 20, %s28
        %p440 = scmp.lt.s32.totalorder %s27, 2
        %s441 = scalar_select %p440, %s27, 2
        %p442 = scmp.lt.s32.totalorder %s439, 39
        %s443 = scalar_select %p442, %s439, 39
        %s444 = smul.addr %s441, 40
        %s445 = sadd.s32 %s443, %s444
        %s446 = smul.addr %s445, 8
        %s447 = scalar_lea.vmem %s1, %s446
        %s448 = smul.u32 20, %s28
      $region28: #{interaction_network_forward.3} parent=19 // pred_fallthru
        _
      // Predicated region
      $region29: #{interaction_network_forward.3} parent=19 // pred_check
        %p449 = pneg %p110
      $region30: #{interaction_network_forward.3} parent=19 // pred_check_branch
        %451 = sbr.rel (%p449) target = $region32
      $region31: #{interaction_network_forward.3} parent=19 // pred_region
        %s452 = smul.u32 20, %s28
        %p453 = scmp.lt.s32.totalorder %s27, 2
        %s454 = scalar_select %p453, %s27, 2
        %p455 = scmp.lt.s32.totalorder %s452, 39
        %s456 = scalar_select %p455, %s452, 39
        %s457 = smul.addr %s454, 40
        %s458 = sadd.s32 %s456, %s457
        %s459 = smul.addr %s458, 8
        %s460 = scalar_lea.vmem %s2, %s459
        %s461 = smul.u32 20, %s28
      $region32: #{interaction_network_forward.3} parent=19 // pred_fallthru
        _
      // Predicated region
      $region33: #{interaction_network_forward.3} parent=19 // pred_check
        %p462 = pneg %p157
      $region34: #{interaction_network_forward.3} parent=19 // pred_check_branch
        %464 = sbr.rel (%p462) target = $region36
      $region35: #{interaction_network_forward.3} parent=19 // pred_region
        %p465 = scmp.lt.s32.totalorder %s27, 2
        %s466 = scalar_select %p465, %s27, 2
        %s467 = smul.addr %s466, 12
        %s468 = smul.addr %s467, 4
        %s469 = scalar_lea.vmem %s4, %s468
      $region36: #{interaction_network_forward.3} parent=19 // pred_fallthru
        _
      // Predicated region
      $region37: #{interaction_network_forward.3} parent=19 // pred_check
        %p470 = pneg %p183
      $region38: #{interaction_network_forward.3} parent=19 // pred_check_branch
        %472 = sbr.rel (%p470) target = $region40
      $region39: #{interaction_network_forward.3} parent=19 // pred_region
        %p473 = scmp.lt.s32.totalorder %s27, 2
        %s474 = scalar_select %p473, %s27, 2
        %s475 = scalar_lea.vmem %s5, %s474
      $region40: #{interaction_network_forward.3} parent=19 // pred_fallthru
        _
      // Predicated region
      $region41: #{interaction_network_forward.3} parent=19 // pred_check
        %p476 = pneg %p209
      $region42: #{interaction_network_forward.3} parent=19 // pred_check_branch
        %478 = sbr.rel (%p476) target = $region44
      $region43: #{interaction_network_forward.3} parent=19 // pred_region
        %p479 = scmp.lt.s32.totalorder %s27, 2
        %s480 = scalar_select %p479, %s27, 2
        %s481 = smul.addr %s480, 8
        %s482 = smul.addr %s481, 4
        %s483 = scalar_lea.vmem %s6, %s482
      $region44: #{interaction_network_forward.3} parent=19 // pred_fallthru
        _
      // Predicated region
      $region45: #{interaction_network_forward.3} parent=19 // pred_check
        %p484 = pneg %p235
      $region46: #{interaction_network_forward.3} parent=19 // pred_check_branch
        %486 = sbr.rel (%p484) target = $region48
      $region47: #{interaction_network_forward.3} parent=19 // pred_region
        %p487 = scmp.lt.s32.totalorder %s27, 2
        %s488 = scalar_select %p487, %s27, 2
        %s489 = scalar_lea.vmem %s7, %s488
      $region48: #{interaction_network_forward.3} parent=19 // pred_fallthru
        _
      // Predicated region
      $region49: #{interaction_network_forward.3} parent=19 // pred_check
        %p490 = pneg %p261
      $region50: #{interaction_network_forward.3} parent=19 // pred_check_branch
        %492 = sbr.rel (%p490) target = $region52
      $region51: #{interaction_network_forward.3} parent=19 // pred_region
        %p493 = scmp.lt.s32.totalorder %s27, 2
        %s494 = scalar_select %p493, %s27, 2
        %s495 = smul.addr %s494, 8
        %s496 = smul.addr %s495, 4
        %s497 = scalar_lea.vmem %s8, %s496
      $region52: #{interaction_network_forward.3} parent=19 // pred_fallthru
        _
      // Predicated region
      $region53: #{interaction_network_forward.3} parent=19 // pred_check
        %p498 = pneg %p287
      $region54: #{interaction_network_forward.3} parent=19 // pred_check_branch
        %500 = sbr.rel (%p498) target = $region56
      $region55: #{interaction_network_forward.3} parent=19 // pred_region
        %p501 = scmp.lt.s32.totalorder %s27, 2
        %s502 = scalar_select %p501, %s27, 2
        %s503 = scalar_lea.vmem %s9, %s502
      $region56: #{interaction_network_forward.3} parent=19 // pred_fallthru
        _
      // Predicated region
      $region57: #{interaction_network_forward.3} parent=19 // pred_check
        %p504 = pneg %p313
      $region58: #{interaction_network_forward.3} parent=19 // pred_check_branch
        %506 = sbr.rel (%p504) target = $region60
      $region59: #{interaction_network_forward.3} parent=19 // pred_region
        %p507 = scmp.lt.s32.totalorder %s27, 2
        %s508 = scalar_select %p507, %s27, 2
        %s509 = scalar_lea.vmem %s10, %s508
      $region60: #{interaction_network_forward.3} parent=19 // pred_fallthru
        _
      // Predicated region
      $region61: #{interaction_network_forward.3} parent=19 // pred_check
        %p510 = pneg %p339
      $region62: #{interaction_network_forward.3} parent=19 // pred_check_branch
        %512 = sbr.rel (%p510) target = $region64
      $region63: #{interaction_network_forward.3} parent=19 // pred_region
        %p513 = scmp.lt.s32.totalorder %s27, 2
        %s514 = scalar_select %p513, %s27, 2
        %s515 = scalar_lea.vmem %s11, %s514
      $region64: #{interaction_network_forward.3} parent=19 // pred_fallthru
        _
    $region20: #{interaction_network_forward.3} parent=5 // pred_fallthru
      _
    %p516 = scmp.le.s32.totalorder 1, %s20
    %p517 = scmp.lt.s32.totalorder %s20, 7
    %p518 = pnand %p516, %p517
    %p519 = pneg %p518
    // Predicated region
    $region65: #{interaction_network_forward.3} parent=5 // pred_check
      _
    $region66: #{interaction_network_forward.3} parent=5 // pred_check_branch
      %521 = sbr.rel (%p518) target = $region68
    $region67: #{interaction_network_forward.3} parent=5 // pred_region
      %s522 = ssub.s32 %s20, 1
      %s523 = smul.u32 20, %s30
      %p524 = scmp.lt.s32.totalorder %s29, 2
      %s525 = scalar_select %p524, %s29, 2
      %p526 = scmp.lt.s32.totalorder %s523, 39
      %s527 = scalar_select %p526, %s523, 39
      %s528 = smul.addr %s525, 40
      %s529 = sadd.s32 %s527, %s528
      %s530 = smul.addr %s529, 8
      %s531 = scalar_lea.vmem %s0, %s530
      %p532 = pneg %p60
      %p533 = pneg %p57
      %s534 = smul.u32 20, %s30
      %p535 = scmp.lt.s32.totalorder %s29, 2
      %s536 = scalar_select %p535, %s29, 2
      %p537 = scmp.lt.s32.totalorder %s534, 39
      %s538 = scalar_select %p537, %s534, 39
      %s539 = smul.addr %s536, 40
      %s540 = sadd.s32 %s538, %s539
      %s541 = smul.addr %s540, 8
      %s542 = scalar_lea.vmem %s1, %s541
      %p543 = pneg %p88
      %p544 = pneg %p85
      %s545 = smul.u32 20, %s30
      %p546 = scmp.lt.s32.totalorder %s29, 2
      %s547 = scalar_select %p546, %s29, 2
      %p548 = scmp.lt.s32.totalorder %s545, 39
      %s549 = scalar_select %p548, %s545, 39
      %s550 = smul.addr %s547, 40
      %s551 = sadd.s32 %s549, %s550
      %s552 = smul.addr %s551, 8
      %s553 = scalar_lea.vmem %s2, %s552
      %p554 = pneg %p116
      %p555 = pneg %p113
      %p556 = pneg %p137
      %p557 = pneg %p134
      %p558 = scmp.lt.s32.totalorder %s29, 2
      %s559 = scalar_select %p558, %s29, 2
      %s560 = smul.addr %s559, 12
      %s561 = smul.addr %s560, 4
      %s562 = scalar_lea.vmem %s4, %s561
      %p563 = pneg %p163
      %p564 = pneg %p160
      %p565 = scmp.lt.s32.totalorder %s29, 2
      %s566 = scalar_select %p565, %s29, 2
      %s567 = scalar_lea.vmem %s5, %s566
      %p568 = pneg %p189
      %p569 = pneg %p186
      %p570 = scmp.lt.s32.totalorder %s29, 2
      %s571 = scalar_select %p570, %s29, 2
      %s572 = smul.addr %s571, 8
      %s573 = smul.addr %s572, 4
      %s574 = scalar_lea.vmem %s6, %s573
      %p575 = pneg %p215
      %p576 = pneg %p212
      %p577 = scmp.lt.s32.totalorder %s29, 2
      %s578 = scalar_select %p577, %s29, 2
      %s579 = scalar_lea.vmem %s7, %s578
      %p580 = pneg %p241
      %p581 = pneg %p238
      %p582 = scmp.lt.s32.totalorder %s29, 2
      %s583 = scalar_select %p582, %s29, 2
      %s584 = smul.addr %s583, 8
      %s585 = smul.addr %s584, 4
      %s586 = scalar_lea.vmem %s8, %s585
      %p587 = pneg %p267
      %p588 = pneg %p264
      %p589 = scmp.lt.s32.totalorder %s29, 2
      %s590 = scalar_select %p589, %s29, 2
      %s591 = scalar_lea.vmem %s9, %s590
      %p592 = pneg %p293
      %p593 = pneg %p290
      %p594 = scmp.lt.s32.totalorder %s29, 2
      %s595 = scalar_select %p594, %s29, 2
      %s596 = scalar_lea.vmem %s10, %s595
      %p597 = pneg %p319
      %p598 = pneg %p316
      %p599 = scmp.lt.s32.totalorder %s29, 2
      %s600 = scalar_select %p599, %s29, 2
      %s601 = scalar_lea.vmem %s11, %s600
      %p602 = pneg %p345
      %p603 = pneg %p342
      %p604 = pneg %p373
      %p605 = pneg %p370
      %s606 = smul.u32 20, %s30
      %p607 = scmp.lt.s32.totalorder %s29, 2
      %s608 = scalar_select %p607, %s29, 2
      %p609 = scmp.lt.s32.totalorder %s606, 39
      %s610 = scalar_select %p609, %s606, 39
      %s611 = smul.addr %s608, 40
      %s612 = sadd.s32 %s610, %s611
      %s613 = smul.addr %s612, 4
      %s614 = scalar_lea.vmem %s12, %s613
      %p615 = pneg %p401
      %p616 = pneg %p398
      %s617 = smul.u32 20, %s30
      %p618 = scmp.lt.s32.totalorder %s29, 2
      %s619 = scalar_select %p618, %s29, 2
      %p620 = scmp.lt.s32.totalorder %s617, 39
      %s621 = scalar_select %p620, %s617, 39
      %s622 = smul.addr %s619, 40
      %s623 = sadd.s32 %s621, %s622
      %s624 = smul.addr %s623, 8
      %s625 = scalar_lea.vmem %s13, %s624
      %s626 = smul.u32 20, %s30
      %p627 = scmp.lt.s32.totalorder %s29, 2
      %s628 = scalar_select %p627, %s29, 2
      %p629 = scmp.lt.s32.totalorder %s626, 39
      %s630 = scalar_select %p629, %s626, 39
      %s631 = smul.addr %s628, 40
      %s632 = sadd.s32 %s630, %s631
      %s633 = smul.addr %s632, 8
      %s634 = scalar_lea.vmem %s0, %s633
      %s635 = smul.u32 20, %s30
      %s636 = smul.u32 20, %s30
      %p637 = scmp.lt.s32.totalorder %s29, 2
      %s638 = scalar_select %p637, %s29, 2
      %p639 = scmp.lt.s32.totalorder %s636, 39
      %s640 = scalar_select %p639, %s636, 39
      %s641 = smul.addr %s638, 40
      %s642 = sadd.s32 %s640, %s641
      %s643 = smul.addr %s642, 8
      %s644 = scalar_lea.vmem %s1, %s643
      %s645 = smul.u32 20, %s30
      %s646 = smul.u32 20, %s30
      %p647 = scmp.lt.s32.totalorder %s29, 2
      %s648 = scalar_select %p647, %s29, 2
      %p649 = scmp.lt.s32.totalorder %s646, 39
      %s650 = scalar_select %p649, %s646, 39
      %s651 = smul.addr %s648, 40
      %s652 = sadd.s32 %s650, %s651
      %s653 = smul.addr %s652, 8
      %s654 = scalar_lea.vmem %s2, %s653
      %s655 = smul.u32 20, %s30
      %p656 = scmp.lt.s32.totalorder %s29, 2
      %s657 = scalar_select %p656, %s29, 2
      %s658 = smul.addr %s657, 12
      %s659 = smul.addr %s658, 4
      %s660 = scalar_lea.vmem %s4, %s659
      %p661 = scmp.lt.s32.totalorder %s29, 2
      %s662 = scalar_select %p661, %s29, 2
      %s663 = scalar_lea.vmem %s5, %s662
      %p664 = scmp.lt.s32.totalorder %s29, 2
      %s665 = scalar_select %p664, %s29, 2
      %s666 = smul.addr %s665, 8
      %s667 = smul.addr %s666, 4
      %s668 = scalar_lea.vmem %s6, %s667
      %p669 = scmp.lt.s32.totalorder %s29, 2
      %s670 = scalar_select %p669, %s29, 2
      %s671 = scalar_lea.vmem %s7, %s670
      %p672 = scmp.lt.s32.totalorder %s29, 2
      %s673 = scalar_select %p672, %s29, 2
      %s674 = smul.addr %s673, 8
      %s675 = smul.addr %s674, 4
      %s676 = scalar_lea.vmem %s8, %s675
      %p677 = scmp.lt.s32.totalorder %s29, 2
      %s678 = scalar_select %p677, %s29, 2
      %s679 = scalar_lea.vmem %s9, %s678
      %p680 = scmp.lt.s32.totalorder %s29, 2
      %s681 = scalar_select %p680, %s29, 2
      %s682 = scalar_lea.vmem %s10, %s681
      %p683 = scmp.lt.s32.totalorder %s29, 2
      %s684 = scalar_select %p683, %s29, 2
      %s685 = scalar_lea.vmem %s11, %s684
      %s686 = smul.u32 20, %s30
      %p687 = scmp.lt.s32.totalorder %s29, 2
      %s688 = scalar_select %p687, %s29, 2
      %p689 = scmp.lt.s32.totalorder %s686, 39
      %s690 = scalar_select %p689, %s686, 39
      %s691 = smul.addr %s688, 40
      %s692 = sadd.s32 %s690, %s691
      %s693 = smul.addr %s692, 4
      %s694 = scalar_lea.vmem %s12, %s693
      %s695 = smul.u32 20, %s30
      %s696 = smul.u32 20, %s30
      %p697 = scmp.lt.s32.totalorder %s29, 2
      %s698 = scalar_select %p697, %s29, 2
      %p699 = scmp.lt.s32.totalorder %s696, 39
      %s700 = scalar_select %p699, %s696, 39
      %s701 = smul.addr %s698, 40
      %s702 = sadd.s32 %s700, %s701
      %s703 = smul.addr %s702, 8
      %s704 = scalar_lea.vmem %s13, %s703
      %s705 = smul.u32 20, %s30
      %v707 = vld [vmem:[%s682] sm:$0x1]
      %v708 = vld [vmem:[%s685] sm:$0x1]
      %v709 = vld [vmem:[%s654] sm:$0xff]
      %v710 = vld [vmem:[%s654 + $0x8] sm:$0xff]
      %v711 = vld [vmem:[%s654 + $0x10] sm:$0xff]
      %v712 = vld [vmem:[%s654 + $0x18] sm:$0xff]
      %v713 = vld [vmem:[%s654 + $0x20] sm:$0xff]
      %v714 = vld [vmem:[%s654 + $0x28] sm:$0xff]
      %v715 = vld [vmem:[%s654 + $0x30] sm:$0xff]
      %v716 = vld [vmem:[%s654 + $0x38] sm:$0xff]
      %v717 = vld [vmem:[%s654 + $0x40] sm:$0xff]
      %v718 = vld [vmem:[%s654 + $0x48] sm:$0xff]
      %v719 = vld [vmem:[%s654 + $0x50] sm:$0xff]
      %v720 = vld [vmem:[%s654 + $0x58] sm:$0xff]
      %v721 = vld [vmem:[%s654 + $0x60] sm:$0xff]
      %v722 = vld [vmem:[%s654 + $0x68] sm:$0xff]
      %v723 = vld [vmem:[%s654 + $0x70] sm:$0xff]
      %v724 = vld [vmem:[%s654 + $0x78] sm:$0xff]
      %v725 = vld [vmem:[%s654 + $0x80] sm:$0xff]
      %v726 = vld [vmem:[%s654 + $0x88] sm:$0xff]
      %v727 = vld [vmem:[%s654 + $0x90] sm:$0xff]
      %v728 = vld [vmem:[%s654 + $0x98] sm:$0xff]
      %v729 = vld [vmem:[%s3] sm:$0xf]
      %v730 = vld [vmem:[%s3 + $0x4] sm:$0xf]
      %v731 = vld [vmem:[%s3 + $0x8] sm:$0xf]
      %v732 = vld [vmem:[%s3 + $0xc] sm:$0xf]
      %v733 = vld [vmem:[%s3 + $0x10] sm:$0xf]
      %v734 = vld [vmem:[%s3 + $0x14] sm:$0xf]
      %v735 = vld [vmem:[%s3 + $0x18] sm:$0xf]
      %v736 = vld [vmem:[%s3 + $0x1c] sm:$0xf]
      %v737 = vlaneseq
      %v738 = vand.u32 %v737, 127
      %v739 = vld [vmem:[%s634] sm:$0xff]
      %v740 = vld [vmem:[%s634 + $0x8] sm:$0xff]
      %v741 = vld [vmem:[%s634 + $0x10] sm:$0xff]
      %v742 = vld [vmem:[%s634 + $0x18] sm:$0xff]
      %v743 = vld [vmem:[%s634 + $0x20] sm:$0xff]
      %v744 = vld [vmem:[%s634 + $0x28] sm:$0xff]
      %v745 = vld [vmem:[%s634 + $0x30] sm:$0xff]
      %v746 = vld [vmem:[%s634 + $0x38] sm:$0xff]
      %v747 = vld [vmem:[%s634 + $0x40] sm:$0xff]
      %v748 = vld [vmem:[%s634 + $0x48] sm:$0xff]
      %v749 = vld [vmem:[%s634 + $0x50] sm:$0xff]
      %v750 = vld [vmem:[%s634 + $0x58] sm:$0xff]
      %v751 = vld [vmem:[%s634 + $0x60] sm:$0xff]
      %v752 = vld [vmem:[%s634 + $0x68] sm:$0xff]
      %v753 = vld [vmem:[%s634 + $0x70] sm:$0xff]
      %v754 = vld [vmem:[%s634 + $0x78] sm:$0xff]
      %v755 = vld [vmem:[%s634 + $0x80] sm:$0xff]
      %v756 = vld [vmem:[%s634 + $0x88] sm:$0xff]
      %v757 = vld [vmem:[%s634 + $0x90] sm:$0xff]
      %v758 = vld [vmem:[%s634 + $0x98] sm:$0xff]
      %759 = vset.pattern.permute.xlu0 0
      %760 = vperm.xlu0 %759, %v739
      %v761 = vpop.permute.xlu0 %760
      %762 = vset.pattern.permute.xlu0 0
      %763 = vperm.xlu0 %762, %v740
      %v764 = vpop.permute.xlu0 %763
      %765 = vset.pattern.permute.xlu0 0
      %766 = vperm.xlu0 %765, %v741
      %v767 = vpop.permute.xlu0 %766
      %768 = vset.pattern.permute.xlu0 0
      %769 = vperm.xlu0 %768, %v742
      %v770 = vpop.permute.xlu0 %769
      %771 = vset.pattern.permute.xlu0 0
      %772 = vperm.xlu0 %771, %v743
      %v773 = vpop.permute.xlu0 %772
      %774 = vset.pattern.permute.xlu0 0
      %775 = vperm.xlu0 %774, %v744
      %v776 = vpop.permute.xlu0 %775
      %777 = vset.pattern.permute.xlu0 0
      %778 = vperm.xlu0 %777, %v745
      %v779 = vpop.permute.xlu0 %778
      %780 = vset.pattern.permute.xlu0 0
      %781 = vperm.xlu0 %780, %v746
      %v782 = vpop.permute.xlu0 %781
      %783 = vset.pattern.permute.xlu0 0
      %784 = vperm.xlu0 %783, %v747
      %v785 = vpop.permute.xlu0 %784
      %786 = vset.pattern.permute.xlu0 0
      %787 = vperm.xlu0 %786, %v748
      %v788 = vpop.permute.xlu0 %787
      %789 = vset.pattern.permute.xlu0 0
      %790 = vperm.xlu0 %789, %v749
      %v791 = vpop.permute.xlu0 %790
      %792 = vset.pattern.permute.xlu0 0
      %793 = vperm.xlu0 %792, %v750
      %v794 = vpop.permute.xlu0 %793
      %795 = vset.pattern.permute.xlu0 0
      %796 = vperm.xlu0 %795, %v751
      %v797 = vpop.permute.xlu0 %796
      %798 = vset.pattern.permute.xlu0 0
      %799 = vperm.xlu0 %798, %v752
      %v800 = vpop.permute.xlu0 %799
      %801 = vset.pattern.permute.xlu0 0
      %802 = vperm.xlu0 %801, %v753
      %v803 = vpop.permute.xlu0 %802
      %804 = vset.pattern.permute.xlu0 0
      %805 = vperm.xlu0 %804, %v754
      %v806 = vpop.permute.xlu0 %805
      %807 = vset.pattern.permute.xlu0 0
      %808 = vperm.xlu0 %807, %v755
      %v809 = vpop.permute.xlu0 %808
      %810 = vset.pattern.permute.xlu0 0
      %811 = vperm.xlu0 %810, %v756
      %v812 = vpop.permute.xlu0 %811
      %813 = vset.pattern.permute.xlu0 0
      %814 = vperm.xlu0 %813, %v757
      %v815 = vpop.permute.xlu0 %814
      %816 = vset.pattern.permute.xlu0 0
      %817 = vperm.xlu0 %816, %v758
      %v818 = vpop.permute.xlu0 %817
      %vm819 = vcmp.eq.s32.totalorder %v761, %v738
      %vm820 = vcmp.eq.s32.totalorder %v764, %v738
      %vm821 = vcmp.eq.s32.totalorder %v767, %v738
      %vm822 = vcmp.eq.s32.totalorder %v770, %v738
      %vm823 = vcmp.eq.s32.totalorder %v773, %v738
      %vm824 = vcmp.eq.s32.totalorder %v776, %v738
      %vm825 = vcmp.eq.s32.totalorder %v779, %v738
      %vm826 = vcmp.eq.s32.totalorder %v782, %v738
      %vm827 = vcmp.eq.s32.totalorder %v785, %v738
      %vm828 = vcmp.eq.s32.totalorder %v788, %v738
      %vm829 = vcmp.eq.s32.totalorder %v791, %v738
      %vm830 = vcmp.eq.s32.totalorder %v794, %v738
      %vm831 = vcmp.eq.s32.totalorder %v797, %v738
      %vm832 = vcmp.eq.s32.totalorder %v800, %v738
      %vm833 = vcmp.eq.s32.totalorder %v803, %v738
      %vm834 = vcmp.eq.s32.totalorder %v806, %v738
      %vm835 = vcmp.eq.s32.totalorder %v809, %v738
      %vm836 = vcmp.eq.s32.totalorder %v812, %v738
      %vm837 = vcmp.eq.s32.totalorder %v815, %v738
      %vm838 = vcmp.eq.s32.totalorder %v818, %v738
      %v839 = vsel %vm819, 1, 0
      %v840 = vsel %vm820, 1, 0
      %v841 = vsel %vm821, 1, 0
      %v842 = vsel %vm822, 1, 0
      %v843 = vsel %vm823, 1, 0
      %v844 = vsel %vm824, 1, 0
      %v845 = vsel %vm825, 1, 0
      %v846 = vsel %vm826, 1, 0
      %v847 = vsel %vm827, 1, 0
      %v848 = vsel %vm828, 1, 0
      %v849 = vsel %vm829, 1, 0
      %v850 = vsel %vm830, 1, 0
      %v851 = vsel %vm831, 1, 0
      %v852 = vsel %vm832, 1, 0
      %v853 = vsel %vm833, 1, 0
      %v854 = vsel %vm834, 1, 0
      %v855 = vsel %vm835, 1, 0
      %v856 = vsel %vm836, 1, 0
      %v857 = vsel %vm837, 1, 0
      %v858 = vsel %vm838, 1, 0
      %v859 = vcvt.s32.f32 %v839
      %v860 = vcvt.s32.f32 %v840
      %v861 = vcvt.s32.f32 %v841
      %v862 = vcvt.s32.f32 %v842
      %v863 = vcvt.s32.f32 %v843
      %v864 = vcvt.s32.f32 %v844
      %v865 = vcvt.s32.f32 %v845
      %v866 = vcvt.s32.f32 %v846
      %v867 = vcvt.s32.f32 %v847
      %v868 = vcvt.s32.f32 %v848
      %v869 = vcvt.s32.f32 %v849
      %v870 = vcvt.s32.f32 %v850
      %v871 = vcvt.s32.f32 %v851
      %v872 = vcvt.s32.f32 %v852
      %v873 = vcvt.s32.f32 %v853
      %v874 = vcvt.s32.f32 %v854
      %v875 = vcvt.s32.f32 %v855
      %v876 = vcvt.s32.f32 %v856
      %v877 = vcvt.s32.f32 %v857
      %v878 = vcvt.s32.f32 %v858
      %v879 = vpack.c.bf16 %v860, %v859
      %v880 = vpack.c.bf16 %v862, %v861
      %v881 = vpack.c.bf16 %v864, %v863
      %v882 = vpack.c.bf16 %v866, %v865
      %v883 = vpack.c.bf16 %v868, %v867
      %v884 = vpack.c.bf16 %v870, %v869
      %v885 = vpack.c.bf16 %v872, %v871
      %v886 = vpack.c.bf16 %v874, %v873
      %v887 = vpack.c.bf16 %v876, %v875
      %v888 = vpack.c.bf16 %v878, %v877
      %v889 = vld [vmem:[%s644] sm:$0xff]
      %v890 = vld [vmem:[%s644 + $0x8] sm:$0xff]
      %v891 = vld [vmem:[%s644 + $0x10] sm:$0xff]
      %v892 = vld [vmem:[%s644 + $0x18] sm:$0xff]
      %v893 = vld [vmem:[%s644 + $0x20] sm:$0xff]
      %v894 = vld [vmem:[%s644 + $0x28] sm:$0xff]
      %v895 = vld [vmem:[%s644 + $0x30] sm:$0xff]
      %v896 = vld [vmem:[%s644 + $0x38] sm:$0xff]
      %v897 = vld [vmem:[%s644 + $0x40] sm:$0xff]
      %v898 = vld [vmem:[%s644 + $0x48] sm:$0xff]
      %v899 = vld [vmem:[%s644 + $0x50] sm:$0xff]
      %v900 = vld [vmem:[%s644 + $0x58] sm:$0xff]
      %v901 = vld [vmem:[%s644 + $0x60] sm:$0xff]
      %v902 = vld [vmem:[%s644 + $0x68] sm:$0xff]
      %v903 = vld [vmem:[%s644 + $0x70] sm:$0xff]
      %v904 = vld [vmem:[%s644 + $0x78] sm:$0xff]
      %v905 = vld [vmem:[%s644 + $0x80] sm:$0xff]
      %v906 = vld [vmem:[%s644 + $0x88] sm:$0xff]
      %v907 = vld [vmem:[%s644 + $0x90] sm:$0xff]
      %v908 = vld [vmem:[%s644 + $0x98] sm:$0xff]
      %909 = vset.pattern.permute.xlu0 0
      %910 = vperm.xlu0 %909, %v889
      %v911 = vpop.permute.xlu0 %910
      %912 = vset.pattern.permute.xlu0 0
      %913 = vperm.xlu0 %912, %v890
      %v914 = vpop.permute.xlu0 %913
      %915 = vset.pattern.permute.xlu0 0
      %916 = vperm.xlu0 %915, %v891
      %v917 = vpop.permute.xlu0 %916
      %918 = vset.pattern.permute.xlu0 0
      %919 = vperm.xlu0 %918, %v892
      %v920 = vpop.permute.xlu0 %919
      %921 = vset.pattern.permute.xlu0 0
      %922 = vperm.xlu0 %921, %v893
      %v923 = vpop.permute.xlu0 %922
      %924 = vset.pattern.permute.xlu0 0
      %925 = vperm.xlu0 %924, %v894
      %v926 = vpop.permute.xlu0 %925
      %927 = vset.pattern.permute.xlu0 0
      %928 = vperm.xlu0 %927, %v895
      %v929 = vpop.permute.xlu0 %928
      %930 = vset.pattern.permute.xlu0 0
      %931 = vperm.xlu0 %930, %v896
      %v932 = vpop.permute.xlu0 %931
      %933 = vset.pattern.permute.xlu0 0
      %934 = vperm.xlu0 %933, %v897
      %v935 = vpop.permute.xlu0 %934
      %936 = vset.pattern.permute.xlu0 0
      %937 = vperm.xlu0 %936, %v898
      %v938 = vpop.permute.xlu0 %937
      %939 = vset.pattern.permute.xlu0 0
      %940 = vperm.xlu0 %939, %v899
      %v941 = vpop.permute.xlu0 %940
      %942 = vset.pattern.permute.xlu0 0
      %943 = vperm.xlu0 %942, %v900
      %v944 = vpop.permute.xlu0 %943
      %945 = vset.pattern.permute.xlu0 0
      %946 = vperm.xlu0 %945, %v901
      %v947 = vpop.permute.xlu0 %946
      %948 = vset.pattern.permute.xlu0 0
      %949 = vperm.xlu0 %948, %v902
      %v950 = vpop.permute.xlu0 %949
      %951 = vset.pattern.permute.xlu0 0
      %952 = vperm.xlu0 %951, %v903
      %v953 = vpop.permute.xlu0 %952
      %954 = vset.pattern.permute.xlu0 0
      %955 = vperm.xlu0 %954, %v904
      %v956 = vpop.permute.xlu0 %955
      %957 = vset.pattern.permute.xlu0 0
      %958 = vperm.xlu0 %957, %v905
      %v959 = vpop.permute.xlu0 %958
      %960 = vset.pattern.permute.xlu0 0
      %961 = vperm.xlu0 %960, %v906
      %v962 = vpop.permute.xlu0 %961
      %963 = vset.pattern.permute.xlu0 0
      %964 = vperm.xlu0 %963, %v907
      %v965 = vpop.permute.xlu0 %964
      %966 = vset.pattern.permute.xlu0 0
      %967 = vperm.xlu0 %966, %v908
      %v968 = vpop.permute.xlu0 %967
      %vm969 = vcmp.eq.s32.totalorder %v911, %v738
      %vm970 = vcmp.eq.s32.totalorder %v914, %v738
      %vm971 = vcmp.eq.s32.totalorder %v917, %v738
      %vm972 = vcmp.eq.s32.totalorder %v920, %v738
      %vm973 = vcmp.eq.s32.totalorder %v923, %v738
      %vm974 = vcmp.eq.s32.totalorder %v926, %v738
      %vm975 = vcmp.eq.s32.totalorder %v929, %v738
      %vm976 = vcmp.eq.s32.totalorder %v932, %v738
      %vm977 = vcmp.eq.s32.totalorder %v935, %v738
      %vm978 = vcmp.eq.s32.totalorder %v938, %v738
      %vm979 = vcmp.eq.s32.totalorder %v941, %v738
      %vm980 = vcmp.eq.s32.totalorder %v944, %v738
      %vm981 = vcmp.eq.s32.totalorder %v947, %v738
      %vm982 = vcmp.eq.s32.totalorder %v950, %v738
      %vm983 = vcmp.eq.s32.totalorder %v953, %v738
      %vm984 = vcmp.eq.s32.totalorder %v956, %v738
      %vm985 = vcmp.eq.s32.totalorder %v959, %v738
      %vm986 = vcmp.eq.s32.totalorder %v962, %v738
      %vm987 = vcmp.eq.s32.totalorder %v965, %v738
      %vm988 = vcmp.eq.s32.totalorder %v968, %v738
      %v989 = vsel %vm969, 1, 0
      %v990 = vsel %vm970, 1, 0
      %v991 = vsel %vm971, 1, 0
      %v992 = vsel %vm972, 1, 0
      %v993 = vsel %vm973, 1, 0
      %v994 = vsel %vm974, 1, 0
      %v995 = vsel %vm975, 1, 0
      %v996 = vsel %vm976, 1, 0
      %v997 = vsel %vm977, 1, 0
      %v998 = vsel %vm978, 1, 0
      %v999 = vsel %vm979, 1, 0
      %v1000 = vsel %vm980, 1, 0
      %v1001 = vsel %vm981, 1, 0
      %v1002 = vsel %vm982, 1, 0
      %v1003 = vsel %vm983, 1, 0
      %v1004 = vsel %vm984, 1, 0
      %v1005 = vsel %vm985, 1, 0
      %v1006 = vsel %vm986, 1, 0
      %v1007 = vsel %vm987, 1, 0
      %v1008 = vsel %vm988, 1, 0
      %v1009 = vcvt.s32.f32 %v989
      %v1010 = vcvt.s32.f32 %v990
      %v1011 = vcvt.s32.f32 %v991
      %v1012 = vcvt.s32.f32 %v992
      %v1013 = vcvt.s32.f32 %v993
      %v1014 = vcvt.s32.f32 %v994
      %v1015 = vcvt.s32.f32 %v995
      %v1016 = vcvt.s32.f32 %v996
      %v1017 = vcvt.s32.f32 %v997
      %v1018 = vcvt.s32.f32 %v998
      %v1019 = vcvt.s32.f32 %v999
      %v1020 = vcvt.s32.f32 %v1000
      %v1021 = vcvt.s32.f32 %v1001
      %v1022 = vcvt.s32.f32 %v1002
      %v1023 = vcvt.s32.f32 %v1003
      %v1024 = vcvt.s32.f32 %v1004
      %v1025 = vcvt.s32.f32 %v1005
      %v1026 = vcvt.s32.f32 %v1006
      %v1027 = vcvt.s32.f32 %v1007
      %v1028 = vcvt.s32.f32 %v1008
      %v1029 = vpack.c.bf16 %v1010, %v1009
      %v1030 = vpack.c.bf16 %v1012, %v1011
      %v1031 = vpack.c.bf16 %v1014, %v1013
      %v1032 = vpack.c.bf16 %v1016, %v1015
      %v1033 = vpack.c.bf16 %v1018, %v1017
      %v1034 = vpack.c.bf16 %v1020, %v1019
      %v1035 = vpack.c.bf16 %v1022, %v1021
      %v1036 = vpack.c.bf16 %v1024, %v1023
      %v1037 = vpack.c.bf16 %v1026, %v1025
      %v1038 = vpack.c.bf16 %v1028, %v1027
      %v1047 = vunpack.c.l.b16 %v729
      %v1048 = vunpack.c.l.b16 %v730
      %v1049 = vunpack.c.l.b16 %v731
      %v1050 = vunpack.c.l.b16 %v732
      %v1051 = vunpack.c.l.b16 %v733
      %v1052 = vunpack.c.l.b16 %v734
      %v1053 = vunpack.c.l.b16 %v735
      %v1054 = vunpack.c.l.b16 %v736
      %v1055 = vpack.c.b16 %v1048, %v1047
      %v1056 = vpack.c.b16 %v1050, %v1049
      %v1057 = vpack.c.b16 %v1052, %v1051
      %v1058 = vpack.c.b16 %v1054, %v1053
      %vm1063 = vcmask 523264
      %v1065 = vsel %vm1063, %v879, 0
      %v1068 = vsel %vm1063, %v880, 0
      %v1071 = vsel %vm1063, %v881, 0
      %v1074 = vsel %vm1063, %v882, 0
      %v1077 = vsel %vm1063, %v883, 0
      %v1080 = vsel %vm1063, %v884, 0
      %v1083 = vsel %vm1063, %v885, 0
      %v1086 = vsel %vm1063, %v886, 0
      %v1089 = vsel %vm1063, %v887, 0
      %v1092 = vsel %vm1063, %v888, 0
      %1094 = vmatprep.subr.bf16.mxu0 0
      %1095 = vmatpush1.bf16.msra.mxu0 0
      %1096 = vmatprep.subr.bf16.mxu0 0
      %1097 = vmatpush1.bf16.msra.mxu0 0
      %1098 = vmatprep.subr.bf16.mxu0 0
      %1099 = vmatpush1.bf16.msra.mxu0 0
      %1100 = vmatprep.subr.bf16.mxu0 0
      %1101 = vmatpush1.bf16.msra.mxu0 0
      %1102 = vmatprep.subr.bf16.mxu0 0
      %1103 = vmatpush1.bf16.msra.mxu0 %v1058
      %1104 = vmatprep.subr.bf16.mxu0 0
      %1105 = vmatpush1.bf16.msra.mxu0 %v1057
      %1106 = vmatprep.subr.bf16.mxu0 0
      %1107 = vmatpush1.bf16.msra.mxu0 %v1056
      %1108 = vmatprep.subr.bf16.mxu0 0
      %1109 = vmatpush1.bf16.msra.mxu0 %v1055
      %1110 = vmatprep.subr.bf16.mxu0 0
      %1111 = vmatpush2.bf16.msra.mxu0 0
      %1112 = vmatprep.subr.bf16.mxu0 0
      %1113 = vmatpush2.bf16.msra.mxu0 0
      %1114 = vmatprep.subr.bf16.mxu0 0
      %1115 = vmatpush2.bf16.msra.mxu0 0
      %1116 = vmatprep.subr.bf16.mxu0 0
      %1117 = vmatpush2.bf16.msra.mxu0 0
      %1118 = vmatprep.subr.bf16.mxu0 0
      %1119 = vmatpush2.bf16.msra.mxu0 0
      %1120 = vmatprep.subr.bf16.mxu0 0
      %1121 = vmatpush2.bf16.msra.mxu0 0
      %1122 = vmatprep.subr.bf16.mxu0 0
      %1123 = vmatpush2.bf16.msra.mxu0 0
      %1124 = vmatprep.subr.bf16.mxu0 0
      %1125 = vmatpush2.bf16.msra.mxu0 0
      %1126 = vmatprep.mubr.bf16.mxu0 0
      %1127 = vmatmul.mubr.bf16.gmra.mxu0 %v1065
      %v1128 = vpop.f32.mrf.mxu0
      %v1129 = vadd.f32 0.0, %v1128
      %v1130 = vpop.f32.mrf.mxu0
      %v1131 = vpop.f32.mrf.mxu0
      %v1132 = vadd.f32 0.0, %v1131
      %v1133 = vpop.f32.mrf.mxu0
      %1134 = vmatprep.mubr.bf16.mxu0 0
      %1135 = vmatmul.mubr.bf16.gmra.mxu0 %v1068
      %v1136 = vpop.f32.mrf.mxu0
      %v1137 = vadd.f32 0.0, %v1136
      %v1138 = vpop.f32.mrf.mxu0
      %v1139 = vpop.f32.mrf.mxu0
      %v1140 = vadd.f32 0.0, %v1139
      %v1141 = vpop.f32.mrf.mxu0
      %1142 = vmatprep.mubr.bf16.mxu0 0
      %1143 = vmatmul.mubr.bf16.gmra.mxu0 %v1071
      %v1144 = vpop.f32.mrf.mxu0
      %v1145 = vadd.f32 0.0, %v1144
      %v1146 = vpop.f32.mrf.mxu0
      %v1147 = vpop.f32.mrf.mxu0
      %v1148 = vadd.f32 0.0, %v1147
      %v1149 = vpop.f32.mrf.mxu0
      %1150 = vmatprep.mubr.bf16.mxu0 0
      %1151 = vmatmul.mubr.bf16.gmra.mxu0 %v1074
      %v1152 = vpop.f32.mrf.mxu0
      %v1153 = vadd.f32 0.0, %v1152
      %v1154 = vpop.f32.mrf.mxu0
      %v1155 = vpop.f32.mrf.mxu0
      %v1156 = vadd.f32 0.0, %v1155
      %v1157 = vpop.f32.mrf.mxu0
      %1158 = vmatprep.mubr.bf16.mxu0 0
      %1159 = vmatmul.mubr.bf16.gmra.mxu0 %v1077
      %v1160 = vpop.f32.mrf.mxu0
      %v1161 = vadd.f32 0.0, %v1160
      %v1162 = vpop.f32.mrf.mxu0
      %v1163 = vpop.f32.mrf.mxu0
      %v1164 = vadd.f32 0.0, %v1163
      %v1165 = vpop.f32.mrf.mxu0
      %1166 = vmatprep.mubr.bf16.mxu0 0
      %1167 = vmatmul.mubr.bf16.gmra.mxu0 %v1080
      %v1168 = vpop.f32.mrf.mxu0
      %v1169 = vadd.f32 0.0, %v1168
      %v1170 = vpop.f32.mrf.mxu0
      %v1171 = vpop.f32.mrf.mxu0
      %v1172 = vadd.f32 0.0, %v1171
      %v1173 = vpop.f32.mrf.mxu0
      %1174 = vmatprep.mubr.bf16.mxu0 0
      %1175 = vmatmul.mubr.bf16.gmra.mxu0 %v1083
      %v1176 = vpop.f32.mrf.mxu0
      %v1177 = vadd.f32 0.0, %v1176
      %v1178 = vpop.f32.mrf.mxu0
      %v1179 = vpop.f32.mrf.mxu0
      %v1180 = vadd.f32 0.0, %v1179
      %v1181 = vpop.f32.mrf.mxu0
      %1182 = vmatprep.mubr.bf16.mxu0 0
      %1183 = vmatmul.mubr.bf16.gmra.mxu0 %v1086
      %v1184 = vpop.f32.mrf.mxu0
      %v1185 = vadd.f32 0.0, %v1184
      %v1186 = vpop.f32.mrf.mxu0
      %v1187 = vpop.f32.mrf.mxu0
      %v1188 = vadd.f32 0.0, %v1187
      %v1189 = vpop.f32.mrf.mxu0
      %1190 = vmatprep.mubr.bf16.mxu0 0
      %1191 = vmatmul.mubr.bf16.gmra.mxu0 %v1089
      %v1192 = vpop.f32.mrf.mxu0
      %v1193 = vadd.f32 0.0, %v1192
      %v1194 = vpop.f32.mrf.mxu0
      %v1195 = vpop.f32.mrf.mxu0
      %v1196 = vadd.f32 0.0, %v1195
      %v1197 = vpop.f32.mrf.mxu0
      %1198 = vmatprep.mubr.bf16.mxu0 0
      %1199 = vmatmul.mubr.bf16.gmra.mxu0 %v1092
      %v1200 = vpop.f32.mrf.mxu0
      %v1201 = vadd.f32 0.0, %v1200
      %v1202 = vpop.f32.mrf.mxu0
      %v1203 = vpop.f32.mrf.mxu0
      %v1204 = vadd.f32 0.0, %v1203
      %v1205 = vpop.f32.mrf.mxu0
      %1206 = vdwg.mxu0
      %v1208 = vsel %vm1063, %v1029, 0
      %v1211 = vsel %vm1063, %v1030, 0
      %v1214 = vsel %vm1063, %v1031, 0
      %v1217 = vsel %vm1063, %v1032, 0
      %v1220 = vsel %vm1063, %v1033, 0
      %v1223 = vsel %vm1063, %v1034, 0
      %v1226 = vsel %vm1063, %v1035, 0
      %v1229 = vsel %vm1063, %v1036, 0
      %v1232 = vsel %vm1063, %v1037, 0
      %v1235 = vsel %vm1063, %v1038, 0
      %1237 = vmatprep.subr.bf16.mxu0 0
      %1238 = vmatpush1.bf16.msra.mxu0 0
      %1239 = vmatprep.subr.bf16.mxu0 0
      %1240 = vmatpush1.bf16.msra.mxu0 0
      %1241 = vmatprep.subr.bf16.mxu0 0
      %1242 = vmatpush1.bf16.msra.mxu0 0
      %1243 = vmatprep.subr.bf16.mxu0 0
      %1244 = vmatpush1.bf16.msra.mxu0 0
      %1245 = vmatprep.subr.bf16.mxu0 0
      %1246 = vmatpush1.bf16.msra.mxu0 %v1058
      %1247 = vmatprep.subr.bf16.mxu0 0
      %1248 = vmatpush1.bf16.msra.mxu0 %v1057
      %1249 = vmatprep.subr.bf16.mxu0 0
      %1250 = vmatpush1.bf16.msra.mxu0 %v1056
      %1251 = vmatprep.subr.bf16.mxu0 0
      %1252 = vmatpush1.bf16.msra.mxu0 %v1055
      %1253 = vmatprep.subr.bf16.mxu0 0
      %1254 = vmatpush2.bf16.msra.mxu0 0
      %1255 = vmatprep.subr.bf16.mxu0 0
      %1256 = vmatpush2.bf16.msra.mxu0 0
      %1257 = vmatprep.subr.bf16.mxu0 0
      %1258 = vmatpush2.bf16.msra.mxu0 0
      %1259 = vmatprep.subr.bf16.mxu0 0
      %1260 = vmatpush2.bf16.msra.mxu0 0
      %1261 = vmatprep.subr.bf16.mxu0 0
      %1262 = vmatpush2.bf16.msra.mxu0 0
      %1263 = vmatprep.subr.bf16.mxu0 0
      %1264 = vmatpush2.bf16.msra.mxu0 0
      %1265 = vmatprep.subr.bf16.mxu0 0
      %1266 = vmatpush2.bf16.msra.mxu0 0
      %1267 = vmatprep.subr.bf16.mxu0 0
      %1268 = vmatpush2.bf16.msra.mxu0 0
      %1269 = vmatprep.mubr.bf16.mxu0 0
      %1270 = vmatmul.mubr.bf16.gmra.mxu0 %v1208
      %v1271 = vpop.f32.mrf.mxu0
      %v1272 = vadd.f32 0.0, %v1271
      %v1273 = vpop.f32.mrf.mxu0
      %v1274 = vpop.f32.mrf.mxu0
      %v1275 = vadd.f32 0.0, %v1274
      %v1276 = vpop.f32.mrf.mxu0
      %1277 = vmatprep.mubr.bf16.mxu0 0
      %1278 = vmatmul.mubr.bf16.gmra.mxu0 %v1211
      %v1279 = vpop.f32.mrf.mxu0
      %v1280 = vadd.f32 0.0, %v1279
      %v1281 = vpop.f32.mrf.mxu0
      %v1282 = vpop.f32.mrf.mxu0
      %v1283 = vadd.f32 0.0, %v1282
      %v1284 = vpop.f32.mrf.mxu0
      %1285 = vmatprep.mubr.bf16.mxu0 0
      %1286 = vmatmul.mubr.bf16.gmra.mxu0 %v1214
      %v1287 = vpop.f32.mrf.mxu0
      %v1288 = vadd.f32 0.0, %v1287
      %v1289 = vpop.f32.mrf.mxu0
      %v1290 = vpop.f32.mrf.mxu0
      %v1291 = vadd.f32 0.0, %v1290
      %v1292 = vpop.f32.mrf.mxu0
      %1293 = vmatprep.mubr.bf16.mxu0 0
      %1294 = vmatmul.mubr.bf16.gmra.mxu0 %v1217
      %v1295 = vpop.f32.mrf.mxu0
      %v1296 = vadd.f32 0.0, %v1295
      %v1297 = vpop.f32.mrf.mxu0
      %v1298 = vpop.f32.mrf.mxu0
      %v1299 = vadd.f32 0.0, %v1298
      %v1300 = vpop.f32.mrf.mxu0
      %1301 = vmatprep.mubr.bf16.mxu0 0
      %1302 = vmatmul.mubr.bf16.gmra.mxu0 %v1220
      %v1303 = vpop.f32.mrf.mxu0
      %v1304 = vadd.f32 0.0, %v1303
      %v1305 = vpop.f32.mrf.mxu0
      %v1306 = vpop.f32.mrf.mxu0
      %v1307 = vadd.f32 0.0, %v1306
      %v1308 = vpop.f32.mrf.mxu0
      %1309 = vmatprep.mubr.bf16.mxu0 0
      %1310 = vmatmul.mubr.bf16.gmra.mxu0 %v1223
      %v1311 = vpop.f32.mrf.mxu0
      %v1312 = vadd.f32 0.0, %v1311
      %v1313 = vpop.f32.mrf.mxu0
      %v1314 = vpop.f32.mrf.mxu0
      %v1315 = vadd.f32 0.0, %v1314
      %v1316 = vpop.f32.mrf.mxu0
      %1317 = vmatprep.mubr.bf16.mxu0 0
      %1318 = vmatmul.mubr.bf16.gmra.mxu0 %v1226
      %v1319 = vpop.f32.mrf.mxu0
      %v1320 = vadd.f32 0.0, %v1319
      %v1321 = vpop.f32.mrf.mxu0
      %v1322 = vpop.f32.mrf.mxu0
      %v1323 = vadd.f32 0.0, %v1322
      %v1324 = vpop.f32.mrf.mxu0
      %1325 = vmatprep.mubr.bf16.mxu0 0
      %1326 = vmatmul.mubr.bf16.gmra.mxu0 %v1229
      %v1327 = vpop.f32.mrf.mxu0
      %v1328 = vadd.f32 0.0, %v1327
      %v1329 = vpop.f32.mrf.mxu0
      %v1330 = vpop.f32.mrf.mxu0
      %v1331 = vadd.f32 0.0, %v1330
      %v1332 = vpop.f32.mrf.mxu0
      %1333 = vmatprep.mubr.bf16.mxu0 0
      %1334 = vmatmul.mubr.bf16.gmra.mxu0 %v1232
      %v1335 = vpop.f32.mrf.mxu0
      %v1336 = vadd.f32 0.0, %v1335
      %v1337 = vpop.f32.mrf.mxu0
      %v1338 = vpop.f32.mrf.mxu0
      %v1339 = vadd.f32 0.0, %v1338
      %v1340 = vpop.f32.mrf.mxu0
      %1341 = vmatprep.mubr.bf16.mxu0 0
      %1342 = vmatmul.mubr.bf16.gmra.mxu0 %v1235
      %v1343 = vpop.f32.mrf.mxu0
      %v1344 = vadd.f32 0.0, %v1343
      %v1345 = vpop.f32.mrf.mxu0
      %v1346 = vpop.f32.mrf.mxu0
      %v1347 = vadd.f32 0.0, %v1346
      %v1348 = vpop.f32.mrf.mxu0
      %1349 = vdwg.mxu0
      %1370 = vrot.lane.b32.xlu0 %v1129, 32
      %v1371 = vpop.permute.xlu0 %1370
      %1372 = vrot.lane.b32.xlu0 %v1132, 32
      %v1373 = vpop.permute.xlu0 %1372
      %1374 = vrot.lane.b32.xlu0 %v1137, 32
      %v1375 = vpop.permute.xlu0 %1374
      %1376 = vrot.lane.b32.xlu0 %v1140, 32
      %v1377 = vpop.permute.xlu0 %1376
      %1378 = vrot.lane.b32.xlu0 %v1145, 32
      %v1379 = vpop.permute.xlu0 %1378
      %1380 = vrot.lane.b32.xlu0 %v1148, 32
      %v1381 = vpop.permute.xlu0 %1380
      %1382 = vrot.lane.b32.xlu0 %v1153, 32
      %v1383 = vpop.permute.xlu0 %1382
      %1384 = vrot.lane.b32.xlu0 %v1156, 32
      %v1385 = vpop.permute.xlu0 %1384
      %1386 = vrot.lane.b32.xlu0 %v1161, 32
      %v1387 = vpop.permute.xlu0 %1386
      %1388 = vrot.lane.b32.xlu0 %v1164, 32
      %v1389 = vpop.permute.xlu0 %1388
      %1390 = vrot.lane.b32.xlu0 %v1169, 32
      %v1391 = vpop.permute.xlu0 %1390
      %1392 = vrot.lane.b32.xlu0 %v1172, 32
      %v1393 = vpop.permute.xlu0 %1392
      %1394 = vrot.lane.b32.xlu0 %v1177, 32
      %v1395 = vpop.permute.xlu0 %1394
      %1396 = vrot.lane.b32.xlu0 %v1180, 32
      %v1397 = vpop.permute.xlu0 %1396
      %1398 = vrot.lane.b32.xlu0 %v1185, 32
      %v1399 = vpop.permute.xlu0 %1398
      %1400 = vrot.lane.b32.xlu0 %v1188, 32
      %v1401 = vpop.permute.xlu0 %1400
      %1402 = vrot.lane.b32.xlu0 %v1193, 32
      %v1403 = vpop.permute.xlu0 %1402
      %1404 = vrot.lane.b32.xlu0 %v1196, 32
      %v1405 = vpop.permute.xlu0 %1404
      %1406 = vrot.lane.b32.xlu0 %v1201, 32
      %v1407 = vpop.permute.xlu0 %1406
      %1408 = vrot.lane.b32.xlu0 %v1204, 32
      %v1409 = vpop.permute.xlu0 %1408
      %1450 = vrot.lane.b32.xlu0 %v1272, 64
      %v1451 = vpop.permute.xlu0 %1450
      %1452 = vrot.lane.b32.xlu0 %v1275, 64
      %v1453 = vpop.permute.xlu0 %1452
      %1454 = vrot.lane.b32.xlu0 %v1280, 64
      %v1455 = vpop.permute.xlu0 %1454
      %1456 = vrot.lane.b32.xlu0 %v1283, 64
      %v1457 = vpop.permute.xlu0 %1456
      %1458 = vrot.lane.b32.xlu0 %v1288, 64
      %v1459 = vpop.permute.xlu0 %1458
      %1460 = vrot.lane.b32.xlu0 %v1291, 64
      %v1461 = vpop.permute.xlu0 %1460
      %1462 = vrot.lane.b32.xlu0 %v1296, 64
      %v1463 = vpop.permute.xlu0 %1462
      %1464 = vrot.lane.b32.xlu0 %v1299, 64
      %v1465 = vpop.permute.xlu0 %1464
      %1466 = vrot.lane.b32.xlu0 %v1304, 64
      %v1467 = vpop.permute.xlu0 %1466
      %1468 = vrot.lane.b32.xlu0 %v1307, 64
      %v1469 = vpop.permute.xlu0 %1468
      %1470 = vrot.lane.b32.xlu0 %v1312, 64
      %v1471 = vpop.permute.xlu0 %1470
      %1472 = vrot.lane.b32.xlu0 %v1315, 64
      %v1473 = vpop.permute.xlu0 %1472
      %1474 = vrot.lane.b32.xlu0 %v1320, 64
      %v1475 = vpop.permute.xlu0 %1474
      %1476 = vrot.lane.b32.xlu0 %v1323, 64
      %v1477 = vpop.permute.xlu0 %1476
      %1478 = vrot.lane.b32.xlu0 %v1328, 64
      %v1479 = vpop.permute.xlu0 %1478
      %1480 = vrot.lane.b32.xlu0 %v1331, 64
      %v1481 = vpop.permute.xlu0 %1480
      %1482 = vrot.lane.b32.xlu0 %v1336, 64
      %v1483 = vpop.permute.xlu0 %1482
      %1484 = vrot.lane.b32.xlu0 %v1339, 64
      %v1485 = vpop.permute.xlu0 %1484
      %1486 = vrot.lane.b32.xlu0 %v1344, 64
      %v1487 = vpop.permute.xlu0 %1486
      %1488 = vrot.lane.b32.xlu0 %v1347, 64
      %v1489 = vpop.permute.xlu0 %1488
      %vm1510 = vcmask 261120
      %v1511 = vsel %vm1510, %v709, %v1371
      %v1512 = vsel %vm1510, %v710, %v1373
      %v1513 = vsel %vm1510, %v711, %v1375
      %v1514 = vsel %vm1510, %v712, %v1377
      %v1515 = vsel %vm1510, %v713, %v1379
      %v1516 = vsel %vm1510, %v714, %v1381
      %v1517 = vsel %vm1510, %v715, %v1383
      %v1518 = vsel %vm1510, %v716, %v1385
      %v1519 = vsel %vm1510, %v717, %v1387
      %v1520 = vsel %vm1510, %v718, %v1389
      %v1521 = vsel %vm1510, %v719, %v1391
      %v1522 = vsel %vm1510, %v720, %v1393
      %v1523 = vsel %vm1510, %v721, %v1395
      %v1524 = vsel %vm1510, %v722, %v1397
      %v1525 = vsel %vm1510, %v723, %v1399
      %v1526 = vsel %vm1510, %v724, %v1401
      %v1527 = vsel %vm1510, %v725, %v1403
      %v1528 = vsel %vm1510, %v726, %v1405
      %v1529 = vsel %vm1510, %v727, %v1407
      %v1530 = vsel %vm1510, %v728, %v1409
      %v1531 = vsel %vm1063, %v1511, %v1451
      %v1532 = vsel %vm1063, %v1512, %v1453
      %v1533 = vsel %vm1063, %v1513, %v1455
      %v1534 = vsel %vm1063, %v1514, %v1457
      %v1535 = vsel %vm1063, %v1515, %v1459
      %v1536 = vsel %vm1063, %v1516, %v1461
      %v1537 = vsel %vm1063, %v1517, %v1463
      %v1538 = vsel %vm1063, %v1518, %v1465
      %v1539 = vsel %vm1063, %v1519, %v1467
      %v1540 = vsel %vm1063, %v1520, %v1469
      %v1541 = vsel %vm1063, %v1521, %v1471
      %v1542 = vsel %vm1063, %v1522, %v1473
      %v1543 = vsel %vm1063, %v1523, %v1475
      %v1544 = vsel %vm1063, %v1524, %v1477
      %v1545 = vsel %vm1063, %v1525, %v1479
      %v1546 = vsel %vm1063, %v1526, %v1481
      %v1547 = vsel %vm1063, %v1527, %v1483
      %v1548 = vsel %vm1063, %v1528, %v1485
      %v1549 = vsel %vm1063, %v1529, %v1487
      %v1550 = vsel %vm1063, %v1530, %v1489
      %v1551 = vpack.c.bf16 %v1532, %v1531
      %v1552 = vpack.c.bf16 %v1534, %v1533
      %v1553 = vpack.c.bf16 %v1536, %v1535
      %v1554 = vpack.c.bf16 %v1538, %v1537
      %v1555 = vpack.c.bf16 %v1540, %v1539
      %v1556 = vpack.c.bf16 %v1542, %v1541
      %v1557 = vpack.c.bf16 %v1544, %v1543
      %v1558 = vpack.c.bf16 %v1546, %v1545
      %v1559 = vpack.c.bf16 %v1548, %v1547
      %v1560 = vpack.c.bf16 %v1550, %v1549
      %v1561 = vld [vmem:[%s660] sm:$0xf]
      %v1562 = vld [vmem:[%s660 + $0x4] sm:$0xf]
      %v1563 = vld [vmem:[%s660 + $0x8] sm:$0xf]
      %v1564 = vld [vmem:[%s660 + $0xc] sm:$0xf]
      %v1565 = vld [vmem:[%s660 + $0x10] sm:$0xf]
      %v1566 = vld [vmem:[%s660 + $0x14] sm:$0xf]
      %v1567 = vld [vmem:[%s660 + $0x18] sm:$0xf]
      %v1568 = vld [vmem:[%s660 + $0x1c] sm:$0xf]
      %v1569 = vld [vmem:[%s660 + $0x20] sm:$0xf]
      %v1570 = vld [vmem:[%s660 + $0x24] sm:$0xf]
      %v1571 = vld [vmem:[%s660 + $0x28] sm:$0xf]
      %v1572 = vld [vmem:[%s660 + $0x2c] sm:$0xf]
      %v1573 = vld [vmem:[%s663] sm:$0x1]
      %v1575 = vlaneseq
      %v1576 = vshrl.u32 %v1575, 7
      %v1577 = vsub.s32 0, %v1576
      %v1578 = vrot.slane %v1573, %v1577
      %v1592 = vunpack.c.l.b16 %v1561
      %v1593 = vunpack.c.l.b16 %v1562
      %v1594 = vunpack.c.l.b16 %v1563
      %v1595 = vunpack.c.l.b16 %v1564
      %v1596 = vunpack.c.l.b16 %v1565
      %v1597 = vunpack.c.l.b16 %v1566
      %v1598 = vunpack.c.l.b16 %v1567
      %v1599 = vunpack.c.l.b16 %v1568
      %v1600 = vunpack.c.l.b16 %v1569
      %v1601 = vunpack.c.l.b16 %v1570
      %v1602 = vunpack.c.l.b16 %v1571
      %v1603 = vunpack.c.l.b16 %v1572
      %v1604 = vpack.c.b16 %v1593, %v1592
      %v1605 = vpack.c.b16 %v1595, %v1594
      %v1606 = vpack.c.b16 %v1597, %v1596
      %v1607 = vpack.c.b16 %v1599, %v1598
      %v1608 = vpack.c.b16 %v1601, %v1600
      %v1609 = vpack.c.b16 %v1603, %v1602
      %vm1616 = vcmask 785408
      %v1618 = vsel %vm1616, %v1551, 0
      %v1621 = vsel %vm1616, %v1552, 0
      %v1624 = vsel %vm1616, %v1553, 0
      %v1627 = vsel %vm1616, %v1554, 0
      %v1630 = vsel %vm1616, %v1555, 0
      %v1633 = vsel %vm1616, %v1556, 0
      %v1636 = vsel %vm1616, %v1557, 0
      %v1639 = vsel %vm1616, %v1558, 0
      %v1642 = vsel %vm1616, %v1559, 0
      %v1645 = vsel %vm1616, %v1560, 0
      %1647 = vmatprep.subr.bf16.mxu0 0
      %1648 = vmatpush1.bf16.msra.mxu0 0
      %1649 = vmatprep.subr.bf16.mxu0 0
      %1650 = vmatpush1.bf16.msra.mxu0 0
      %1651 = vmatprep.subr.bf16.mxu0 0
      %1652 = vmatpush1.bf16.msra.mxu0 %v1609
      %1653 = vmatprep.subr.bf16.mxu0 0
      %1654 = vmatpush1.bf16.msra.mxu0 %v1608
      %1655 = vmatprep.subr.bf16.mxu0 0
      %1656 = vmatpush1.bf16.msra.mxu0 %v1607
      %1657 = vmatprep.subr.bf16.mxu0 0
      %1658 = vmatpush1.bf16.msra.mxu0 %v1606
      %1659 = vmatprep.subr.bf16.mxu0 0
      %1660 = vmatpush1.bf16.msra.mxu0 %v1605
      %1661 = vmatprep.subr.bf16.mxu0 0
      %1662 = vmatpush1.bf16.msra.mxu0 %v1604
      %1663 = vmatprep.subr.bf16.mxu0 0
      %1664 = vmatpush2.bf16.msra.mxu0 0
      %1665 = vmatprep.subr.bf16.mxu0 0
      %1666 = vmatpush2.bf16.msra.mxu0 0
      %1667 = vmatprep.subr.bf16.mxu0 0
      %1668 = vmatpush2.bf16.msra.mxu0 0
      %1669 = vmatprep.subr.bf16.mxu0 0
      %1670 = vmatpush2.bf16.msra.mxu0 0
      %1671 = vmatprep.subr.bf16.mxu0 0
      %1672 = vmatpush2.bf16.msra.mxu0 0
      %1673 = vmatprep.subr.bf16.mxu0 0
      %1674 = vmatpush2.bf16.msra.mxu0 0
      %1675 = vmatprep.subr.bf16.mxu0 0
      %1676 = vmatpush2.bf16.msra.mxu0 0
      %1677 = vmatprep.subr.bf16.mxu0 0
      %1678 = vmatpush2.bf16.msra.mxu0 0
      %1679 = vmatprep.mubr.bf16.mxu0 0
      %1680 = vmatmul.mubr.bf16.gmra.mxu0 %v1618
      %v1681 = vpop.f32.mrf.mxu0
      %v1682 = vadd.f32 %v1578, %v1681
      %v1683 = vpop.f32.mrf.mxu0
      %v1684 = vpop.f32.mrf.mxu0
      %v1685 = vadd.f32 %v1578, %v1684
      %v1686 = vpop.f32.mrf.mxu0
      %1687 = vmatprep.mubr.bf16.mxu0 0
      %1688 = vmatmul.mubr.bf16.gmra.mxu0 %v1621
      %v1689 = vpop.f32.mrf.mxu0
      %v1690 = vadd.f32 %v1578, %v1689
      %v1691 = vpop.f32.mrf.mxu0
      %v1692 = vpop.f32.mrf.mxu0
      %v1693 = vadd.f32 %v1578, %v1692
      %v1694 = vpop.f32.mrf.mxu0
      %1695 = vmatprep.mubr.bf16.mxu0 0
      %1696 = vmatmul.mubr.bf16.gmra.mxu0 %v1624
      %v1697 = vpop.f32.mrf.mxu0
      %v1698 = vadd.f32 %v1578, %v1697
      %v1699 = vpop.f32.mrf.mxu0
      %v1700 = vpop.f32.mrf.mxu0
      %v1701 = vadd.f32 %v1578, %v1700
      %v1702 = vpop.f32.mrf.mxu0
      %1703 = vmatprep.mubr.bf16.mxu0 0
      %1704 = vmatmul.mubr.bf16.gmra.mxu0 %v1627
      %v1705 = vpop.f32.mrf.mxu0
      %v1706 = vadd.f32 %v1578, %v1705
      %v1707 = vpop.f32.mrf.mxu0
      %v1708 = vpop.f32.mrf.mxu0
      %v1709 = vadd.f32 %v1578, %v1708
      %v1710 = vpop.f32.mrf.mxu0
      %1711 = vmatprep.mubr.bf16.mxu0 0
      %1712 = vmatmul.mubr.bf16.gmra.mxu0 %v1630
      %v1713 = vpop.f32.mrf.mxu0
      %v1714 = vadd.f32 %v1578, %v1713
      %v1715 = vpop.f32.mrf.mxu0
      %v1716 = vpop.f32.mrf.mxu0
      %v1717 = vadd.f32 %v1578, %v1716
      %v1718 = vpop.f32.mrf.mxu0
      %1719 = vmatprep.mubr.bf16.mxu0 0
      %1720 = vmatmul.mubr.bf16.gmra.mxu0 %v1633
      %v1721 = vpop.f32.mrf.mxu0
      %v1722 = vadd.f32 %v1578, %v1721
      %v1723 = vpop.f32.mrf.mxu0
      %v1724 = vpop.f32.mrf.mxu0
      %v1725 = vadd.f32 %v1578, %v1724
      %v1726 = vpop.f32.mrf.mxu0
      %1727 = vmatprep.mubr.bf16.mxu0 0
      %1728 = vmatmul.mubr.bf16.gmra.mxu0 %v1636
      %v1729 = vpop.f32.mrf.mxu0
      %v1730 = vadd.f32 %v1578, %v1729
      %v1731 = vpop.f32.mrf.mxu0
      %v1732 = vpop.f32.mrf.mxu0
      %v1733 = vadd.f32 %v1578, %v1732
      %v1734 = vpop.f32.mrf.mxu0
      %1735 = vmatprep.mubr.bf16.mxu0 0
      %1736 = vmatmul.mubr.bf16.gmra.mxu0 %v1639
      %v1737 = vpop.f32.mrf.mxu0
      %v1738 = vadd.f32 %v1578, %v1737
      %v1739 = vpop.f32.mrf.mxu0
      %v1740 = vpop.f32.mrf.mxu0
      %v1741 = vadd.f32 %v1578, %v1740
      %v1742 = vpop.f32.mrf.mxu0
      %1743 = vmatprep.mubr.bf16.mxu0 0
      %1744 = vmatmul.mubr.bf16.gmra.mxu0 %v1642
      %v1745 = vpop.f32.mrf.mxu0
      %v1746 = vadd.f32 %v1578, %v1745
      %v1747 = vpop.f32.mrf.mxu0
      %v1748 = vpop.f32.mrf.mxu0
      %v1749 = vadd.f32 %v1578, %v1748
      %v1750 = vpop.f32.mrf.mxu0
      %1751 = vmatprep.mubr.bf16.mxu0 0
      %1752 = vmatmul.mubr.bf16.gmra.mxu0 %v1645
      %v1753 = vpop.f32.mrf.mxu0
      %v1754 = vadd.f32 %v1578, %v1753
      %v1755 = vpop.f32.mrf.mxu0
      %v1756 = vpop.f32.mrf.mxu0
      %v1757 = vadd.f32 %v1578, %v1756
      %v1758 = vpop.f32.mrf.mxu0
      %1759 = vdwg.mxu0
      %v1760 = vld [vmem:[%s668] sm:$0xf]
      %v1761 = vld [vmem:[%s668 + $0x4] sm:$0xf]
      %v1762 = vld [vmem:[%s668 + $0x8] sm:$0xf]
      %v1763 = vld [vmem:[%s668 + $0xc] sm:$0xf]
      %v1764 = vld [vmem:[%s668 + $0x10] sm:$0xf]
      %v1765 = vld [vmem:[%s668 + $0x14] sm:$0xf]
      %v1766 = vld [vmem:[%s668 + $0x18] sm:$0xf]
      %v1767 = vld [vmem:[%s668 + $0x1c] sm:$0xf]
      %v1768 = vld [vmem:[%s671] sm:$0x1]
      %v1769 = vld [vmem:[%s676] sm:$0xf]
      %v1770 = vld [vmem:[%s676 + $0x4] sm:$0xf]
      %v1771 = vld [vmem:[%s676 + $0x8] sm:$0xf]
      %v1772 = vld [vmem:[%s676 + $0xc] sm:$0xf]
      %v1773 = vld [vmem:[%s676 + $0x10] sm:$0xf]
      %v1774 = vld [vmem:[%s676 + $0x14] sm:$0xf]
      %v1775 = vld [vmem:[%s676 + $0x18] sm:$0xf]
      %v1776 = vld [vmem:[%s676 + $0x1c] sm:$0xf]
      %v1777 = vld [vmem:[%s679] sm:$0x1]
      %v1778 = vmax.f32 %v1682, 0.0
      %v1779 = vmax.f32 %v1685, 0.0
      %v1780 = vmax.f32 %v1690, 0.0
      %v1781 = vmax.f32 %v1693, 0.0
      %v1782 = vmax.f32 %v1698, 0.0
      %v1783 = vmax.f32 %v1701, 0.0
      %v1784 = vmax.f32 %v1706, 0.0
      %v1785 = vmax.f32 %v1709, 0.0
      %v1786 = vmax.f32 %v1714, 0.0
      %v1787 = vmax.f32 %v1717, 0.0
      %v1788 = vmax.f32 %v1722, 0.0
      %v1789 = vmax.f32 %v1725, 0.0
      %v1790 = vmax.f32 %v1730, 0.0
      %v1791 = vmax.f32 %v1733, 0.0
      %v1792 = vmax.f32 %v1738, 0.0
      %v1793 = vmax.f32 %v1741, 0.0
      %v1794 = vmax.f32 %v1746, 0.0
      %v1795 = vmax.f32 %v1749, 0.0
      %v1796 = vmax.f32 %v1754, 0.0
      %v1797 = vmax.f32 %v1757, 0.0
      %v1798 = vpack.c.bf16 %v1779, %v1778
      %v1799 = vpack.c.bf16 %v1781, %v1780
      %v1800 = vpack.c.bf16 %v1783, %v1782
      %v1801 = vpack.c.bf16 %v1785, %v1784
      %v1802 = vpack.c.bf16 %v1787, %v1786
      %v1803 = vpack.c.bf16 %v1789, %v1788
      %v1804 = vpack.c.bf16 %v1791, %v1790
      %v1805 = vpack.c.bf16 %v1793, %v1792
      %v1806 = vpack.c.bf16 %v1795, %v1794
      %v1807 = vpack.c.bf16 %v1797, %v1796
      %v1809 = vlaneseq
      %v1810 = vshrl.u32 %v1809, 7
      %v1811 = vsub.s32 0, %v1810
      %v1812 = vrot.slane %v1768, %v1811
      %v1822 = vunpack.c.l.b16 %v1760
      %v1823 = vunpack.c.l.b16 %v1761
      %v1824 = vunpack.c.l.b16 %v1762
      %v1825 = vunpack.c.l.b16 %v1763
      %v1826 = vunpack.c.l.b16 %v1764
      %v1827 = vunpack.c.l.b16 %v1765
      %v1828 = vunpack.c.l.b16 %v1766
      %v1829 = vunpack.c.l.b16 %v1767
      %v1830 = vpack.c.b16 %v1823, %v1822
      %v1831 = vpack.c.b16 %v1825, %v1824
      %v1832 = vpack.c.b16 %v1827, %v1826
      %v1833 = vpack.c.b16 %v1829, %v1828
      %v1839 = vsel %vm1063, %v1798, 0
      %v1842 = vsel %vm1063, %v1799, 0
      %v1845 = vsel %vm1063, %v1800, 0
      %v1848 = vsel %vm1063, %v1801, 0
      %v1851 = vsel %vm1063, %v1802, 0
      %v1854 = vsel %vm1063, %v1803, 0
      %v1857 = vsel %vm1063, %v1804, 0
      %v1860 = vsel %vm1063, %v1805, 0
      %v1863 = vsel %vm1063, %v1806, 0
      %v1866 = vsel %vm1063, %v1807, 0
      %1868 = vmatprep.subr.bf16.mxu0 0
      %1869 = vmatpush1.bf16.msra.mxu0 0
      %1870 = vmatprep.subr.bf16.mxu0 0
      %1871 = vmatpush1.bf16.msra.mxu0 0
      %1872 = vmatprep.subr.bf16.mxu0 0
      %1873 = vmatpush1.bf16.msra.mxu0 0
      %1874 = vmatprep.subr.bf16.mxu0 0
      %1875 = vmatpush1.bf16.msra.mxu0 0
      %1876 = vmatprep.subr.bf16.mxu0 0
      %1877 = vmatpush1.bf16.msra.mxu0 %v1833
      %1878 = vmatprep.subr.bf16.mxu0 0
      %1879 = vmatpush1.bf16.msra.mxu0 %v1832
      %1880 = vmatprep.subr.bf16.mxu0 0
      %1881 = vmatpush1.bf16.msra.mxu0 %v1831
      %1882 = vmatprep.subr.bf16.mxu0 0
      %1883 = vmatpush1.bf16.msra.mxu0 %v1830
      %1884 = vmatprep.subr.bf16.mxu0 0
      %1885 = vmatpush2.bf16.msra.mxu0 0
      %1886 = vmatprep.subr.bf16.mxu0 0
      %1887 = vmatpush2.bf16.msra.mxu0 0
      %1888 = vmatprep.subr.bf16.mxu0 0
      %1889 = vmatpush2.bf16.msra.mxu0 0
      %1890 = vmatprep.subr.bf16.mxu0 0
      %1891 = vmatpush2.bf16.msra.mxu0 0
      %1892 = vmatprep.subr.bf16.mxu0 0
      %1893 = vmatpush2.bf16.msra.mxu0 0
      %1894 = vmatprep.subr.bf16.mxu0 0
      %1895 = vmatpush2.bf16.msra.mxu0 0
      %1896 = vmatprep.subr.bf16.mxu0 0
      %1897 = vmatpush2.bf16.msra.mxu0 0
      %1898 = vmatprep.subr.bf16.mxu0 0
      %1899 = vmatpush2.bf16.msra.mxu0 0
      %1900 = vmatprep.mubr.bf16.mxu0 0
      %1901 = vmatmul.mubr.bf16.gmra.mxu0 %v1839
      %v1902 = vpop.f32.mrf.mxu0
      %v1903 = vadd.f32 %v1812, %v1902
      %v1904 = vpop.f32.mrf.mxu0
      %v1905 = vpop.f32.mrf.mxu0
      %v1906 = vadd.f32 %v1812, %v1905
      %v1907 = vpop.f32.mrf.mxu0
      %1908 = vmatprep.mubr.bf16.mxu0 0
      %1909 = vmatmul.mubr.bf16.gmra.mxu0 %v1842
      %v1910 = vpop.f32.mrf.mxu0
      %v1911 = vadd.f32 %v1812, %v1910
      %v1912 = vpop.f32.mrf.mxu0
      %v1913 = vpop.f32.mrf.mxu0
      %v1914 = vadd.f32 %v1812, %v1913
      %v1915 = vpop.f32.mrf.mxu0
      %1916 = vmatprep.mubr.bf16.mxu0 0
      %1917 = vmatmul.mubr.bf16.gmra.mxu0 %v1845
      %v1918 = vpop.f32.mrf.mxu0
      %v1919 = vadd.f32 %v1812, %v1918
      %v1920 = vpop.f32.mrf.mxu0
      %v1921 = vpop.f32.mrf.mxu0
      %v1922 = vadd.f32 %v1812, %v1921
      %v1923 = vpop.f32.mrf.mxu0
      %1924 = vmatprep.mubr.bf16.mxu0 0
      %1925 = vmatmul.mubr.bf16.gmra.mxu0 %v1848
      %v1926 = vpop.f32.mrf.mxu0
      %v1927 = vadd.f32 %v1812, %v1926
      %v1928 = vpop.f32.mrf.mxu0
      %v1929 = vpop.f32.mrf.mxu0
      %v1930 = vadd.f32 %v1812, %v1929
      %v1931 = vpop.f32.mrf.mxu0
      %1932 = vmatprep.mubr.bf16.mxu0 0
      %1933 = vmatmul.mubr.bf16.gmra.mxu0 %v1851
      %v1934 = vpop.f32.mrf.mxu0
      %v1935 = vadd.f32 %v1812, %v1934
      %v1936 = vpop.f32.mrf.mxu0
      %v1937 = vpop.f32.mrf.mxu0
      %v1938 = vadd.f32 %v1812, %v1937
      %v1939 = vpop.f32.mrf.mxu0
      %1940 = vmatprep.mubr.bf16.mxu0 0
      %1941 = vmatmul.mubr.bf16.gmra.mxu0 %v1854
      %v1942 = vpop.f32.mrf.mxu0
      %v1943 = vadd.f32 %v1812, %v1942
      %v1944 = vpop.f32.mrf.mxu0
      %v1945 = vpop.f32.mrf.mxu0
      %v1946 = vadd.f32 %v1812, %v1945
      %v1947 = vpop.f32.mrf.mxu0
      %1948 = vmatprep.mubr.bf16.mxu0 0
      %1949 = vmatmul.mubr.bf16.gmra.mxu0 %v1857
      %v1950 = vpop.f32.mrf.mxu0
      %v1951 = vadd.f32 %v1812, %v1950
      %v1952 = vpop.f32.mrf.mxu0
      %v1953 = vpop.f32.mrf.mxu0
      %v1954 = vadd.f32 %v1812, %v1953
      %v1955 = vpop.f32.mrf.mxu0
      %1956 = vmatprep.mubr.bf16.mxu0 0
      %1957 = vmatmul.mubr.bf16.gmra.mxu0 %v1860
      %v1958 = vpop.f32.mrf.mxu0
      %v1959 = vadd.f32 %v1812, %v1958
      %v1960 = vpop.f32.mrf.mxu0
      %v1961 = vpop.f32.mrf.mxu0
      %v1962 = vadd.f32 %v1812, %v1961
      %v1963 = vpop.f32.mrf.mxu0
      %1964 = vmatprep.mubr.bf16.mxu0 0
      %1965 = vmatmul.mubr.bf16.gmra.mxu0 %v1863
      %v1966 = vpop.f32.mrf.mxu0
      %v1967 = vadd.f32 %v1812, %v1966
      %v1968 = vpop.f32.mrf.mxu0
      %v1969 = vpop.f32.mrf.mxu0
      %v1970 = vadd.f32 %v1812, %v1969
      %v1971 = vpop.f32.mrf.mxu0
      %1972 = vmatprep.mubr.bf16.mxu0 0
      %1973 = vmatmul.mubr.bf16.gmra.mxu0 %v1866
      %v1974 = vpop.f32.mrf.mxu0
      %v1975 = vadd.f32 %v1812, %v1974
      %v1976 = vpop.f32.mrf.mxu0
      %v1977 = vpop.f32.mrf.mxu0
      %v1978 = vadd.f32 %v1812, %v1977
      %v1979 = vpop.f32.mrf.mxu0
      %1980 = vdwg.mxu0
      %v1981 = vmax.f32 %v1903, 0.0
      %v1982 = vmax.f32 %v1906, 0.0
      %v1983 = vmax.f32 %v1911, 0.0
      %v1984 = vmax.f32 %v1914, 0.0
      %v1985 = vmax.f32 %v1919, 0.0
      %v1986 = vmax.f32 %v1922, 0.0
      %v1987 = vmax.f32 %v1927, 0.0
      %v1988 = vmax.f32 %v1930, 0.0
      %v1989 = vmax.f32 %v1935, 0.0
      %v1990 = vmax.f32 %v1938, 0.0
      %v1991 = vmax.f32 %v1943, 0.0
      %v1992 = vmax.f32 %v1946, 0.0
      %v1993 = vmax.f32 %v1951, 0.0
      %v1994 = vmax.f32 %v1954, 0.0
      %v1995 = vmax.f32 %v1959, 0.0
      %v1996 = vmax.f32 %v1962, 0.0
      %v1997 = vmax.f32 %v1967, 0.0
      %v1998 = vmax.f32 %v1970, 0.0
      %v1999 = vmax.f32 %v1975, 0.0
      %v2000 = vmax.f32 %v1978, 0.0
      %v2001 = vpack.c.bf16 %v1982, %v1981
      %v2002 = vpack.c.bf16 %v1984, %v1983
      %v2003 = vpack.c.bf16 %v1986, %v1985
      %v2004 = vpack.c.bf16 %v1988, %v1987
      %v2005 = vpack.c.bf16 %v1990, %v1989
      %v2006 = vpack.c.bf16 %v1992, %v1991
      %v2007 = vpack.c.bf16 %v1994, %v1993
      %v2008 = vpack.c.bf16 %v1996, %v1995
      %v2009 = vpack.c.bf16 %v1998, %v1997
      %v2010 = vpack.c.bf16 %v2000, %v1999
      %v2012 = vlaneseq
      %v2013 = vshrl.u32 %v2012, 7
      %v2014 = vsub.s32 0, %v2013
      %v2015 = vrot.slane %v1777, %v2014
      %v2025 = vunpack.c.l.b16 %v1769
      %v2026 = vunpack.c.l.b16 %v1770
      %v2027 = vunpack.c.l.b16 %v1771
      %v2028 = vunpack.c.l.b16 %v1772
      %v2029 = vunpack.c.l.b16 %v1773
      %v2030 = vunpack.c.l.b16 %v1774
      %v2031 = vunpack.c.l.b16 %v1775
      %v2032 = vunpack.c.l.b16 %v1776
      %v2033 = vpack.c.b16 %v2026, %v2025
      %v2034 = vpack.c.b16 %v2028, %v2027
      %v2035 = vpack.c.b16 %v2030, %v2029
      %v2036 = vpack.c.b16 %v2032, %v2031
      %v2042 = vsel %vm1063, %v2001, 0
      %v2045 = vsel %vm1063, %v2002, 0
      %v2048 = vsel %vm1063, %v2003, 0
      %v2051 = vsel %vm1063, %v2004, 0
      %v2054 = vsel %vm1063, %v2005, 0
      %v2057 = vsel %vm1063, %v2006, 0
      %v2060 = vsel %vm1063, %v2007, 0
      %v2063 = vsel %vm1063, %v2008, 0
      %v2066 = vsel %vm1063, %v2009, 0
      %v2069 = vsel %vm1063, %v2010, 0
      %2071 = vmatprep.subr.bf16.mxu0 0
      %2072 = vmatpush1.bf16.msra.mxu0 0
      %2073 = vmatprep.subr.bf16.mxu0 0
      %2074 = vmatpush1.bf16.msra.mxu0 0
      %2075 = vmatprep.subr.bf16.mxu0 0
      %2076 = vmatpush1.bf16.msra.mxu0 0
      %2077 = vmatprep.subr.bf16.mxu0 0
      %2078 = vmatpush1.bf16.msra.mxu0 0
      %2079 = vmatprep.subr.bf16.mxu0 0
      %2080 = vmatpush1.bf16.msra.mxu0 %v2036
      %2081 = vmatprep.subr.bf16.mxu0 0
      %2082 = vmatpush1.bf16.msra.mxu0 %v2035
      %2083 = vmatprep.subr.bf16.mxu0 0
      %2084 = vmatpush1.bf16.msra.mxu0 %v2034
      %2085 = vmatprep.subr.bf16.mxu0 0
      %2086 = vmatpush1.bf16.msra.mxu0 %v2033
      %2087 = vmatprep.subr.bf16.mxu0 0
      %2088 = vmatpush2.bf16.msra.mxu0 0
      %2089 = vmatprep.subr.bf16.mxu0 0
      %2090 = vmatpush2.bf16.msra.mxu0 0
      %2091 = vmatprep.subr.bf16.mxu0 0
      %2092 = vmatpush2.bf16.msra.mxu0 0
      %2093 = vmatprep.subr.bf16.mxu0 0
      %2094 = vmatpush2.bf16.msra.mxu0 0
      %2095 = vmatprep.subr.bf16.mxu0 0
      %2096 = vmatpush2.bf16.msra.mxu0 0
      %2097 = vmatprep.subr.bf16.mxu0 0
      %2098 = vmatpush2.bf16.msra.mxu0 0
      %2099 = vmatprep.subr.bf16.mxu0 0
      %2100 = vmatpush2.bf16.msra.mxu0 0
      %2101 = vmatprep.subr.bf16.mxu0 0
      %2102 = vmatpush2.bf16.msra.mxu0 0
      %2103 = vmatprep.mubr.bf16.mxu0 0
      %2104 = vmatmul.mubr.bf16.gmra.mxu0 %v2042
      %v2105 = vpop.f32.mrf.mxu0
      %v2106 = vadd.f32 %v2015, %v2105
      %v2107 = vpop.f32.mrf.mxu0
      %v2108 = vpop.f32.mrf.mxu0
      %v2109 = vadd.f32 %v2015, %v2108
      %v2110 = vpop.f32.mrf.mxu0
      %2111 = vmatprep.mubr.bf16.mxu0 0
      %2112 = vmatmul.mubr.bf16.gmra.mxu0 %v2045
      %v2113 = vpop.f32.mrf.mxu0
      %v2114 = vadd.f32 %v2015, %v2113
      %v2115 = vpop.f32.mrf.mxu0
      %v2116 = vpop.f32.mrf.mxu0
      %v2117 = vadd.f32 %v2015, %v2116
      %v2118 = vpop.f32.mrf.mxu0
      %2119 = vmatprep.mubr.bf16.mxu0 0
      %2120 = vmatmul.mubr.bf16.gmra.mxu0 %v2048
      %v2121 = vpop.f32.mrf.mxu0
      %v2122 = vadd.f32 %v2015, %v2121
      %v2123 = vpop.f32.mrf.mxu0
      %v2124 = vpop.f32.mrf.mxu0
      %v2125 = vadd.f32 %v2015, %v2124
      %v2126 = vpop.f32.mrf.mxu0
      %2127 = vmatprep.mubr.bf16.mxu0 0
      %2128 = vmatmul.mubr.bf16.gmra.mxu0 %v2051
      %v2129 = vpop.f32.mrf.mxu0
      %v2130 = vadd.f32 %v2015, %v2129
      %v2131 = vpop.f32.mrf.mxu0
      %v2132 = vpop.f32.mrf.mxu0
      %v2133 = vadd.f32 %v2015, %v2132
      %v2134 = vpop.f32.mrf.mxu0
      %2135 = vmatprep.mubr.bf16.mxu0 0
      %2136 = vmatmul.mubr.bf16.gmra.mxu0 %v2054
      %v2137 = vpop.f32.mrf.mxu0
      %v2138 = vadd.f32 %v2015, %v2137
      %v2139 = vpop.f32.mrf.mxu0
      %v2140 = vpop.f32.mrf.mxu0
      %v2141 = vadd.f32 %v2015, %v2140
      %v2142 = vpop.f32.mrf.mxu0
      %2143 = vmatprep.mubr.bf16.mxu0 0
      %2144 = vmatmul.mubr.bf16.gmra.mxu0 %v2057
      %v2145 = vpop.f32.mrf.mxu0
      %v2146 = vadd.f32 %v2015, %v2145
      %v2147 = vpop.f32.mrf.mxu0
      %v2148 = vpop.f32.mrf.mxu0
      %v2149 = vadd.f32 %v2015, %v2148
      %v2150 = vpop.f32.mrf.mxu0
      %2151 = vmatprep.mubr.bf16.mxu0 0
      %2152 = vmatmul.mubr.bf16.gmra.mxu0 %v2060
      %v2153 = vpop.f32.mrf.mxu0
      %v2154 = vadd.f32 %v2015, %v2153
      %v2155 = vpop.f32.mrf.mxu0
      %v2156 = vpop.f32.mrf.mxu0
      %v2157 = vadd.f32 %v2015, %v2156
      %v2158 = vpop.f32.mrf.mxu0
      %2159 = vmatprep.mubr.bf16.mxu0 0
      %2160 = vmatmul.mubr.bf16.gmra.mxu0 %v2063
      %v2161 = vpop.f32.mrf.mxu0
      %v2162 = vadd.f32 %v2015, %v2161
      %v2163 = vpop.f32.mrf.mxu0
      %v2164 = vpop.f32.mrf.mxu0
      %v2165 = vadd.f32 %v2015, %v2164
      %v2166 = vpop.f32.mrf.mxu0
      %2167 = vmatprep.mubr.bf16.mxu0 0
      %2168 = vmatmul.mubr.bf16.gmra.mxu0 %v2066
      %v2169 = vpop.f32.mrf.mxu0
      %v2170 = vadd.f32 %v2015, %v2169
      %v2171 = vpop.f32.mrf.mxu0
      %v2172 = vpop.f32.mrf.mxu0
      %v2173 = vadd.f32 %v2015, %v2172
      %v2174 = vpop.f32.mrf.mxu0
      %2175 = vmatprep.mubr.bf16.mxu0 0
      %2176 = vmatmul.mubr.bf16.gmra.mxu0 %v2069
      %v2177 = vpop.f32.mrf.mxu0
      %v2178 = vadd.f32 %v2015, %v2177
      %v2179 = vpop.f32.mrf.mxu0
      %v2180 = vpop.f32.mrf.mxu0
      %v2181 = vadd.f32 %v2015, %v2180
      %v2182 = vpop.f32.mrf.mxu0
      %2183 = vdwg.mxu0
      %v2184 = vsel %vm1510, %v2106, 0.0
      %2185 = vadd.xlane.f32.xlu0 %v2184
      %v2186 = vpop.xlane.xlu0 %2185
      %v2187 = vsel %vm1510, %v2109, 0.0
      %2188 = vadd.xlane.f32.xlu0 %v2187
      %v2189 = vpop.xlane.xlu0 %2188
      %v2190 = vsel %vm1510, %v2114, 0.0
      %2191 = vadd.xlane.f32.xlu0 %v2190
      %v2192 = vpop.xlane.xlu0 %2191
      %v2193 = vsel %vm1510, %v2117, 0.0
      %2194 = vadd.xlane.f32.xlu0 %v2193
      %v2195 = vpop.xlane.xlu0 %2194
      %v2196 = vsel %vm1510, %v2122, 0.0
      %2197 = vadd.xlane.f32.xlu0 %v2196
      %v2198 = vpop.xlane.xlu0 %2197
      %v2199 = vsel %vm1510, %v2125, 0.0
      %2200 = vadd.xlane.f32.xlu0 %v2199
      %v2201 = vpop.xlane.xlu0 %2200
      %v2202 = vsel %vm1510, %v2130, 0.0
      %2203 = vadd.xlane.f32.xlu0 %v2202
      %v2204 = vpop.xlane.xlu0 %2203
      %v2205 = vsel %vm1510, %v2133, 0.0
      %2206 = vadd.xlane.f32.xlu0 %v2205
      %v2207 = vpop.xlane.xlu0 %2206
      %v2208 = vsel %vm1510, %v2138, 0.0
      %2209 = vadd.xlane.f32.xlu0 %v2208
      %v2210 = vpop.xlane.xlu0 %2209
      %v2211 = vsel %vm1510, %v2141, 0.0
      %2212 = vadd.xlane.f32.xlu0 %v2211
      %v2213 = vpop.xlane.xlu0 %2212
      %v2214 = vsel %vm1510, %v2146, 0.0
      %2215 = vadd.xlane.f32.xlu0 %v2214
      %v2216 = vpop.xlane.xlu0 %2215
      %v2217 = vsel %vm1510, %v2149, 0.0
      %2218 = vadd.xlane.f32.xlu0 %v2217
      %v2219 = vpop.xlane.xlu0 %2218
      %v2220 = vsel %vm1510, %v2154, 0.0
      %2221 = vadd.xlane.f32.xlu0 %v2220
      %v2222 = vpop.xlane.xlu0 %2221
      %v2223 = vsel %vm1510, %v2157, 0.0
      %2224 = vadd.xlane.f32.xlu0 %v2223
      %v2225 = vpop.xlane.xlu0 %2224
      %v2226 = vsel %vm1510, %v2162, 0.0
      %2227 = vadd.xlane.f32.xlu0 %v2226
      %v2228 = vpop.xlane.xlu0 %2227
      %v2229 = vsel %vm1510, %v2165, 0.0
      %2230 = vadd.xlane.f32.xlu0 %v2229
      %v2231 = vpop.xlane.xlu0 %2230
      %v2232 = vsel %vm1510, %v2170, 0.0
      %2233 = vadd.xlane.f32.xlu0 %v2232
      %v2234 = vpop.xlane.xlu0 %2233
      %v2235 = vsel %vm1510, %v2173, 0.0
      %2236 = vadd.xlane.f32.xlu0 %v2235
      %v2237 = vpop.xlane.xlu0 %2236
      %v2238 = vsel %vm1510, %v2178, 0.0
      %2239 = vadd.xlane.f32.xlu0 %v2238
      %v2240 = vpop.xlane.xlu0 %2239
      %v2241 = vsel %vm1510, %v2181, 0.0
      %2242 = vadd.xlane.f32.xlu0 %v2241
      %v2243 = vpop.xlane.xlu0 %2242
      %v2244 = vrcp.pop 32.0
      %v2245 = vmul.f32 %v2186, %v2244
      %v2246 = vmul.f32 %v2189, %v2244
      %v2247 = vmul.f32 %v2192, %v2244
      %v2248 = vmul.f32 %v2195, %v2244
      %v2249 = vmul.f32 %v2198, %v2244
      %v2250 = vmul.f32 %v2201, %v2244
      %v2251 = vmul.f32 %v2204, %v2244
      %v2252 = vmul.f32 %v2207, %v2244
      %v2253 = vmul.f32 %v2210, %v2244
      %v2254 = vmul.f32 %v2213, %v2244
      %v2255 = vmul.f32 %v2216, %v2244
      %v2256 = vmul.f32 %v2219, %v2244
      %v2257 = vmul.f32 %v2222, %v2244
      %v2258 = vmul.f32 %v2225, %v2244
      %v2259 = vmul.f32 %v2228, %v2244
      %v2260 = vmul.f32 %v2231, %v2244
      %v2261 = vmul.f32 %v2234, %v2244
      %v2262 = vmul.f32 %v2237, %v2244
      %v2263 = vmul.f32 %v2240, %v2244
      %v2264 = vmul.f32 %v2243, %v2244
      %v2265 = vsub.f32 %v2106, %v2245
      %v2266 = vsub.f32 %v2109, %v2246
      %v2267 = vsub.f32 %v2114, %v2247
      %v2268 = vsub.f32 %v2117, %v2248
      %v2269 = vsub.f32 %v2122, %v2249
      %v2270 = vsub.f32 %v2125, %v2250
      %v2271 = vsub.f32 %v2130, %v2251
      %v2272 = vsub.f32 %v2133, %v2252
      %v2273 = vsub.f32 %v2138, %v2253
      %v2274 = vsub.f32 %v2141, %v2254
      %v2275 = vsub.f32 %v2146, %v2255
      %v2276 = vsub.f32 %v2149, %v2256
      %v2277 = vsub.f32 %v2154, %v2257
      %v2278 = vsub.f32 %v2157, %v2258
      %v2279 = vsub.f32 %v2162, %v2259
      %v2280 = vsub.f32 %v2165, %v2260
      %v2281 = vsub.f32 %v2170, %v2261
      %v2282 = vsub.f32 %v2173, %v2262
      %v2283 = vsub.f32 %v2178, %v2263
      %v2284 = vsub.f32 %v2181, %v2264
      %v2285 = vmul.f32 %v2265, %v2265
      %v2286 = vmul.f32 %v2266, %v2266
      %v2287 = vmul.f32 %v2267, %v2267
      %v2288 = vmul.f32 %v2268, %v2268
      %v2289 = vmul.f32 %v2269, %v2269
      %v2290 = vmul.f32 %v2270, %v2270
      %v2291 = vmul.f32 %v2271, %v2271
      %v2292 = vmul.f32 %v2272, %v2272
      %v2293 = vmul.f32 %v2273, %v2273
      %v2294 = vmul.f32 %v2274, %v2274
      %v2295 = vmul.f32 %v2275, %v2275
      %v2296 = vmul.f32 %v2276, %v2276
      %v2297 = vmul.f32 %v2277, %v2277
      %v2298 = vmul.f32 %v2278, %v2278
      %v2299 = vmul.f32 %v2279, %v2279
      %v2300 = vmul.f32 %v2280, %v2280
      %v2301 = vmul.f32 %v2281, %v2281
      %v2302 = vmul.f32 %v2282, %v2282
      %v2303 = vmul.f32 %v2283, %v2283
      %v2304 = vmul.f32 %v2284, %v2284
      %v2305 = vsel %vm1510, %v2285, 0.0
      %2306 = vadd.xlane.f32.xlu0 %v2305
      %v2307 = vpop.xlane.xlu0 %2306
      %v2308 = vsel %vm1510, %v2286, 0.0
      %2309 = vadd.xlane.f32.xlu0 %v2308
      %v2310 = vpop.xlane.xlu0 %2309
      %v2311 = vsel %vm1510, %v2287, 0.0
      %2312 = vadd.xlane.f32.xlu0 %v2311
      %v2313 = vpop.xlane.xlu0 %2312
      %v2314 = vsel %vm1510, %v2288, 0.0
      %2315 = vadd.xlane.f32.xlu0 %v2314
      %v2316 = vpop.xlane.xlu0 %2315
      %v2317 = vsel %vm1510, %v2289, 0.0
      %2318 = vadd.xlane.f32.xlu0 %v2317
      %v2319 = vpop.xlane.xlu0 %2318
      %v2320 = vsel %vm1510, %v2290, 0.0
      %2321 = vadd.xlane.f32.xlu0 %v2320
      %v2322 = vpop.xlane.xlu0 %2321
      %v2323 = vsel %vm1510, %v2291, 0.0
      %2324 = vadd.xlane.f32.xlu0 %v2323
      %v2325 = vpop.xlane.xlu0 %2324
      %v2326 = vsel %vm1510, %v2292, 0.0
      %2327 = vadd.xlane.f32.xlu0 %v2326
      %v2328 = vpop.xlane.xlu0 %2327
      %v2329 = vsel %vm1510, %v2293, 0.0
      %2330 = vadd.xlane.f32.xlu0 %v2329
      %v2331 = vpop.xlane.xlu0 %2330
      %v2332 = vsel %vm1510, %v2294, 0.0
      %2333 = vadd.xlane.f32.xlu0 %v2332
      %v2334 = vpop.xlane.xlu0 %2333
      %v2335 = vsel %vm1510, %v2295, 0.0
      %2336 = vadd.xlane.f32.xlu0 %v2335
      %v2337 = vpop.xlane.xlu0 %2336
      %v2338 = vsel %vm1510, %v2296, 0.0
      %2339 = vadd.xlane.f32.xlu0 %v2338
      %v2340 = vpop.xlane.xlu0 %2339
      %v2341 = vsel %vm1510, %v2297, 0.0
      %2342 = vadd.xlane.f32.xlu0 %v2341
      %v2343 = vpop.xlane.xlu0 %2342
      %v2344 = vsel %vm1510, %v2298, 0.0
      %2345 = vadd.xlane.f32.xlu0 %v2344
      %v2346 = vpop.xlane.xlu0 %2345
      %v2347 = vsel %vm1510, %v2299, 0.0
      %2348 = vadd.xlane.f32.xlu0 %v2347
      %v2349 = vpop.xlane.xlu0 %2348
      %v2350 = vsel %vm1510, %v2300, 0.0
      %2351 = vadd.xlane.f32.xlu0 %v2350
      %v2352 = vpop.xlane.xlu0 %2351
      %v2353 = vsel %vm1510, %v2301, 0.0
      %2354 = vadd.xlane.f32.xlu0 %v2353
      %v2355 = vpop.xlane.xlu0 %2354
      %v2356 = vsel %vm1510, %v2302, 0.0
      %2357 = vadd.xlane.f32.xlu0 %v2356
      %v2358 = vpop.xlane.xlu0 %2357
      %v2359 = vsel %vm1510, %v2303, 0.0
      %2360 = vadd.xlane.f32.xlu0 %v2359
      %v2361 = vpop.xlane.xlu0 %2360
      %v2362 = vsel %vm1510, %v2304, 0.0
      %2363 = vadd.xlane.f32.xlu0 %v2362
      %v2364 = vpop.xlane.xlu0 %2363
      %v2365 = vmul.f32 %v2307, %v2244
      %v2366 = vmul.f32 %v2310, %v2244
      %v2367 = vmul.f32 %v2313, %v2244
      %v2368 = vmul.f32 %v2316, %v2244
      %v2369 = vmul.f32 %v2319, %v2244
      %v2370 = vmul.f32 %v2322, %v2244
      %v2371 = vmul.f32 %v2325, %v2244
      %v2372 = vmul.f32 %v2328, %v2244
      %v2373 = vmul.f32 %v2331, %v2244
      %v2374 = vmul.f32 %v2334, %v2244
      %v2375 = vmul.f32 %v2337, %v2244
      %v2376 = vmul.f32 %v2340, %v2244
      %v2377 = vmul.f32 %v2343, %v2244
      %v2378 = vmul.f32 %v2346, %v2244
      %v2379 = vmul.f32 %v2349, %v2244
      %v2380 = vmul.f32 %v2352, %v2244
      %v2381 = vmul.f32 %v2355, %v2244
      %v2382 = vmul.f32 %v2358, %v2244
      %v2383 = vmul.f32 %v2361, %v2244
      %v2384 = vmul.f32 %v2364, %v2244
      %v2385 = vadd.f32 %v2365, 1e-05
      %v2386 = vadd.f32 %v2366, 1e-05
      %v2387 = vadd.f32 %v2367, 1e-05
      %v2388 = vadd.f32 %v2368, 1e-05
      %v2389 = vadd.f32 %v2369, 1e-05
      %v2390 = vadd.f32 %v2370, 1e-05
      %v2391 = vadd.f32 %v2371, 1e-05
      %v2392 = vadd.f32 %v2372, 1e-05
      %v2393 = vadd.f32 %v2373, 1e-05
      %v2394 = vadd.f32 %v2374, 1e-05
      %v2395 = vadd.f32 %v2375, 1e-05
      %v2396 = vadd.f32 %v2376, 1e-05
      %v2397 = vadd.f32 %v2377, 1e-05
      %v2398 = vadd.f32 %v2378, 1e-05
      %v2399 = vadd.f32 %v2379, 1e-05
      %v2400 = vadd.f32 %v2380, 1e-05
      %v2401 = vadd.f32 %v2381, 1e-05
      %v2402 = vadd.f32 %v2382, 1e-05
      %v2403 = vadd.f32 %v2383, 1e-05
      %v2404 = vadd.f32 %v2384, 1e-05
      %v2405 = vrsqrt.pop %v2385
      %v2406 = vrsqrt.pop %v2386
      %v2407 = vrsqrt.pop %v2387
      %v2408 = vrsqrt.pop %v2388
      %v2409 = vrsqrt.pop %v2389
      %v2410 = vrsqrt.pop %v2390
      %v2411 = vrsqrt.pop %v2391
      %v2412 = vrsqrt.pop %v2392
      %v2413 = vrsqrt.pop %v2393
      %v2414 = vrsqrt.pop %v2394
      %v2415 = vrsqrt.pop %v2395
      %v2416 = vrsqrt.pop %v2396
      %v2417 = vrsqrt.pop %v2397
      %v2418 = vrsqrt.pop %v2398
      %v2419 = vrsqrt.pop %v2399
      %v2420 = vrsqrt.pop %v2400
      %v2421 = vrsqrt.pop %v2401
      %v2422 = vrsqrt.pop %v2402
      %v2423 = vrsqrt.pop %v2403
      %v2424 = vrsqrt.pop %v2404
      %v2425 = vmul.f32 %v2265, %v2405
      %v2426 = vmul.f32 %v2266, %v2406
      %v2427 = vmul.f32 %v2267, %v2407
      %v2428 = vmul.f32 %v2268, %v2408
      %v2429 = vmul.f32 %v2269, %v2409
      %v2430 = vmul.f32 %v2270, %v2410
      %v2431 = vmul.f32 %v2271, %v2411
      %v2432 = vmul.f32 %v2272, %v2412
      %v2433 = vmul.f32 %v2273, %v2413
      %v2434 = vmul.f32 %v2274, %v2414
      %v2435 = vmul.f32 %v2275, %v2415
      %v2436 = vmul.f32 %v2276, %v2416
      %v2437 = vmul.f32 %v2277, %v2417
      %v2438 = vmul.f32 %v2278, %v2418
      %v2439 = vmul.f32 %v2279, %v2419
      %v2440 = vmul.f32 %v2280, %v2420
      %v2441 = vmul.f32 %v2281, %v2421
      %v2442 = vmul.f32 %v2282, %v2422
      %v2443 = vmul.f32 %v2283, %v2423
      %v2444 = vmul.f32 %v2284, %v2424
      %v2446 = vlaneseq
      %v2447 = vshrl.u32 %v2446, 7
      %v2448 = vsub.s32 0, %v2447
      %v2449 = vrot.slane %v707, %v2448
      %v2451 = vmul.f32 %v2425, %v2449
      %v2452 = vmul.f32 %v2426, %v2449
      %v2453 = vmul.f32 %v2427, %v2449
      %v2454 = vmul.f32 %v2428, %v2449
      %v2455 = vmul.f32 %v2429, %v2449
      %v2456 = vmul.f32 %v2430, %v2449
      %v2457 = vmul.f32 %v2431, %v2449
      %v2458 = vmul.f32 %v2432, %v2449
      %v2459 = vmul.f32 %v2433, %v2449
      %v2460 = vmul.f32 %v2434, %v2449
      %v2461 = vmul.f32 %v2435, %v2449
      %v2462 = vmul.f32 %v2436, %v2449
      %v2463 = vmul.f32 %v2437, %v2449
      %v2464 = vmul.f32 %v2438, %v2449
      %v2465 = vmul.f32 %v2439, %v2449
      %v2466 = vmul.f32 %v2440, %v2449
      %v2467 = vmul.f32 %v2441, %v2449
      %v2468 = vmul.f32 %v2442, %v2449
      %v2469 = vmul.f32 %v2443, %v2449
      %v2470 = vmul.f32 %v2444, %v2449
      %v2472 = vlaneseq
      %v2473 = vshrl.u32 %v2472, 7
      %v2474 = vsub.s32 0, %v2473
      %v2475 = vrot.slane %v708, %v2474
      %v2477 = vadd.f32 %v2451, %v2475
      %v2478 = vadd.f32 %v2452, %v2475
      %v2479 = vadd.f32 %v2453, %v2475
      %v2480 = vadd.f32 %v2454, %v2475
      %v2481 = vadd.f32 %v2455, %v2475
      %v2482 = vadd.f32 %v2456, %v2475
      %v2483 = vadd.f32 %v2457, %v2475
      %v2484 = vadd.f32 %v2458, %v2475
      %v2485 = vadd.f32 %v2459, %v2475
      %v2486 = vadd.f32 %v2460, %v2475
      %v2487 = vadd.f32 %v2461, %v2475
      %v2488 = vadd.f32 %v2462, %v2475
      %v2489 = vadd.f32 %v2463, %v2475
      %v2490 = vadd.f32 %v2464, %v2475
      %v2491 = vadd.f32 %v2465, %v2475
      %v2492 = vadd.f32 %v2466, %v2475
      %v2493 = vadd.f32 %v2467, %v2475
      %v2494 = vadd.f32 %v2468, %v2475
      %v2495 = vadd.f32 %v2469, %v2475
      %v2496 = vadd.f32 %v2470, %v2475
      %v2497 = vpack.c.bf16 %v2478, %v2477
      %v2498 = vpack.c.bf16 %v2480, %v2479
      %v2499 = vpack.c.bf16 %v2482, %v2481
      %v2500 = vpack.c.bf16 %v2484, %v2483
      %v2501 = vpack.c.bf16 %v2486, %v2485
      %v2502 = vpack.c.bf16 %v2488, %v2487
      %v2503 = vpack.c.bf16 %v2490, %v2489
      %v2504 = vpack.c.bf16 %v2492, %v2491
      %v2505 = vpack.c.bf16 %v2494, %v2493
      %v2506 = vpack.c.bf16 %v2496, %v2495
      %v2517 = vunpack.c.l.b16 %v2497
      %v2518 = vunpack.c.h.b16 %v2497
      %v2519 = vunpack.c.l.b16 %v2498
      %v2520 = vunpack.c.h.b16 %v2498
      %v2521 = vunpack.c.l.b16 %v2499
      %v2522 = vunpack.c.h.b16 %v2499
      %v2523 = vunpack.c.l.b16 %v2500
      %v2524 = vunpack.c.h.b16 %v2500
      %v2525 = vunpack.c.l.b16 %v2501
      %v2526 = vunpack.c.h.b16 %v2501
      %v2527 = vunpack.c.l.b16 %v2502
      %v2528 = vunpack.c.h.b16 %v2502
      %v2529 = vunpack.c.l.b16 %v2503
      %v2530 = vunpack.c.h.b16 %v2503
      %v2531 = vunpack.c.l.b16 %v2504
      %v2532 = vunpack.c.h.b16 %v2504
      %v2533 = vunpack.c.l.b16 %v2505
      %v2534 = vunpack.c.h.b16 %v2505
      %v2535 = vunpack.c.l.b16 %v2506
      %v2536 = vunpack.c.h.b16 %v2506
      %v2537 = vpack.c.b16 %v2517, %v2517
      %v2538 = vpack.c.b16 %v2518, %v2518
      %v2539 = vpack.c.b16 %v2519, %v2519
      %v2540 = vpack.c.b16 %v2520, %v2520
      %v2541 = vpack.c.b16 %v2521, %v2521
      %v2542 = vpack.c.b16 %v2522, %v2522
      %v2543 = vpack.c.b16 %v2523, %v2523
      %v2544 = vpack.c.b16 %v2524, %v2524
      %v2545 = vpack.c.b16 %v2525, %v2525
      %v2546 = vpack.c.b16 %v2526, %v2526
      %v2547 = vpack.c.b16 %v2527, %v2527
      %v2548 = vpack.c.b16 %v2528, %v2528
      %v2549 = vpack.c.b16 %v2529, %v2529
      %v2550 = vpack.c.b16 %v2530, %v2530
      %v2551 = vpack.c.b16 %v2531, %v2531
      %v2552 = vpack.c.b16 %v2532, %v2532
      %v2553 = vpack.c.b16 %v2533, %v2533
      %v2554 = vpack.c.b16 %v2534, %v2534
      %v2555 = vpack.c.b16 %v2535, %v2535
      %v2556 = vpack.c.b16 %v2536, %v2536
      %vm2577 = vcmask 257024
      %2578 = vst.msk [vmem:[%s694] sm:$0xf] %vm2577, %v2537
      %2579 = vst.msk [vmem:[%s694 + $0x4] sm:$0xf] %vm2577, %v2538
      %2580 = vst.msk [vmem:[%s694 + $0x8] sm:$0xf] %vm2577, %v2539
      %2581 = vst.msk [vmem:[%s694 + $0xc] sm:$0xf] %vm2577, %v2540
      %2582 = vst.msk [vmem:[%s694 + $0x10] sm:$0xf] %vm2577, %v2541
      %2583 = vst.msk [vmem:[%s694 + $0x14] sm:$0xf] %vm2577, %v2542
      %2584 = vst.msk [vmem:[%s694 + $0x18] sm:$0xf] %vm2577, %v2543
      %2585 = vst.msk [vmem:[%s694 + $0x1c] sm:$0xf] %vm2577, %v2544
      %2586 = vst.msk [vmem:[%s694 + $0x20] sm:$0xf] %vm2577, %v2545
      %2587 = vst.msk [vmem:[%s694 + $0x24] sm:$0xf] %vm2577, %v2546
      %2588 = vst.msk [vmem:[%s694 + $0x28] sm:$0xf] %vm2577, %v2547
      %2589 = vst.msk [vmem:[%s694 + $0x2c] sm:$0xf] %vm2577, %v2548
      %2590 = vst.msk [vmem:[%s694 + $0x30] sm:$0xf] %vm2577, %v2549
      %2591 = vst.msk [vmem:[%s694 + $0x34] sm:$0xf] %vm2577, %v2550
      %2592 = vst.msk [vmem:[%s694 + $0x38] sm:$0xf] %vm2577, %v2551
      %2593 = vst.msk [vmem:[%s694 + $0x3c] sm:$0xf] %vm2577, %v2552
      %2594 = vst.msk [vmem:[%s694 + $0x40] sm:$0xf] %vm2577, %v2553
      %2595 = vst.msk [vmem:[%s694 + $0x44] sm:$0xf] %vm2577, %v2554
      %2596 = vst.msk [vmem:[%s694 + $0x48] sm:$0xf] %vm2577, %v2555
      %2597 = vst.msk [vmem:[%s694 + $0x4c] sm:$0xf] %vm2577, %v2556
      %v2598 = vadd.f32 %v709, %v2477
      %v2599 = vadd.f32 %v710, %v2478
      %v2600 = vadd.f32 %v711, %v2479
      %v2601 = vadd.f32 %v712, %v2480
      %v2602 = vadd.f32 %v713, %v2481
      %v2603 = vadd.f32 %v714, %v2482
      %v2604 = vadd.f32 %v715, %v2483
      %v2605 = vadd.f32 %v716, %v2484
      %v2606 = vadd.f32 %v717, %v2485
      %v2607 = vadd.f32 %v718, %v2486
      %v2608 = vadd.f32 %v719, %v2487
      %v2609 = vadd.f32 %v720, %v2488
      %v2610 = vadd.f32 %v721, %v2489
      %v2611 = vadd.f32 %v722, %v2490
      %v2612 = vadd.f32 %v723, %v2491
      %v2613 = vadd.f32 %v724, %v2492
      %v2614 = vadd.f32 %v725, %v2493
      %v2615 = vadd.f32 %v726, %v2494
      %v2616 = vadd.f32 %v727, %v2495
      %v2617 = vadd.f32 %v728, %v2496
      %2618 = vst.msk [vmem:[%s704] sm:$0xff] %vm1510, %v2598
      %2619 = vst.msk [vmem:[%s704 + $0x8] sm:$0xff] %vm1510, %v2599
      %2620 = vst.msk [vmem:[%s704 + $0x10] sm:$0xff] %vm1510, %v2600
      %2621 = vst.msk [vmem:[%s704 + $0x18] sm:$0xff] %vm1510, %v2601
      %2622 = vst.msk [vmem:[%s704 + $0x20] sm:$0xff] %vm1510, %v2602
      %2623 = vst.msk [vmem:[%s704 + $0x28] sm:$0xff] %vm1510, %v2603
      %2624 = vst.msk [vmem:[%s704 + $0x30] sm:$0xff] %vm1510, %v2604
      %2625 = vst.msk [vmem:[%s704 + $0x38] sm:$0xff] %vm1510, %v2605
      %2626 = vst.msk [vmem:[%s704 + $0x40] sm:$0xff] %vm1510, %v2606
      %2627 = vst.msk [vmem:[%s704 + $0x48] sm:$0xff] %vm1510, %v2607
      %2628 = vst.msk [vmem:[%s704 + $0x50] sm:$0xff] %vm1510, %v2608
      %2629 = vst.msk [vmem:[%s704 + $0x58] sm:$0xff] %vm1510, %v2609
      %2630 = vst.msk [vmem:[%s704 + $0x60] sm:$0xff] %vm1510, %v2610
      %2631 = vst.msk [vmem:[%s704 + $0x68] sm:$0xff] %vm1510, %v2611
      %2632 = vst.msk [vmem:[%s704 + $0x70] sm:$0xff] %vm1510, %v2612
      %2633 = vst.msk [vmem:[%s704 + $0x78] sm:$0xff] %vm1510, %v2613
      %2634 = vst.msk [vmem:[%s704 + $0x80] sm:$0xff] %vm1510, %v2614
      %2635 = vst.msk [vmem:[%s704 + $0x88] sm:$0xff] %vm1510, %v2615
      %2636 = vst.msk [vmem:[%s704 + $0x90] sm:$0xff] %vm1510, %v2616
      %2637 = vst.msk [vmem:[%s704 + $0x98] sm:$0xff] %vm1510, %v2617
      %s2638 = smul.u32 20, %s30
      %p2639 = scmp.lt.s32.totalorder %s29, 2
      %s2640 = scalar_select %p2639, %s29, 2
      %p2641 = scmp.lt.s32.totalorder %s2638, 39
      %s2642 = scalar_select %p2641, %s2638, 39
      %s2643 = smul.addr %s2640, 40
      %s2644 = sadd.s32 %s2642, %s2643
      %s2645 = smul.addr %s2644, 4
      %s2646 = scalar_lea.vmem %s12, %s2645
      %s2647 = smul.u32 20, %s30
      %p2648 = scmp.lt.s32.totalorder %s29, 2
      %s2649 = scalar_select %p2648, %s29, 2
      %p2650 = scmp.lt.s32.totalorder %s2647, 39
      %s2651 = scalar_select %p2650, %s2647, 39
      %s2652 = smul.addr %s2649, 40
      %s2653 = sadd.s32 %s2651, %s2652
      %s2654 = smul.addr %s2653, 8
      %s2655 = scalar_lea.vmem %s13, %s2654
      // Predicated region
      $region69: #{interaction_network_forward.3} parent=67 // pred_check
        %p2656 = pneg %p370
      $region70: #{interaction_network_forward.3} parent=67 // pred_check_branch
        %2658 = sbr.rel (%p2656) target = $region72
      $region71: #{interaction_network_forward.3} parent=67 // pred_region
        %s2659 = smul.u32 20, %s30
      $region72: #{interaction_network_forward.3} parent=67 // pred_fallthru
        _
      // Predicated region
      $region73: #{interaction_network_forward.3} parent=67 // pred_check
        %p2660 = pneg %p398
      $region74: #{interaction_network_forward.3} parent=67 // pred_check_branch
        %2662 = sbr.rel (%p2660) target = $region76
      $region75: #{interaction_network_forward.3} parent=67 // pred_region
        %s2663 = smul.u32 20, %s30
      $region76: #{interaction_network_forward.3} parent=67 // pred_fallthru
        _
    $region68: #{interaction_network_forward.3} parent=5 // pred_fallthru
      _
    %p2664 = scmp.le.s32.totalorder 2, %s20
    // Predicated region
    $region77: #{interaction_network_forward.3} parent=5 // pred_check
      %p2665 = pneg %p2664
    $region78: #{interaction_network_forward.3} parent=5 // pred_check_branch
      %2667 = sbr.rel (%p2665) target = $region80
    $region79: #{interaction_network_forward.3} parent=5 // pred_region
      %s2668 = ssub.s32 %s20, 2
      // Predicated region
      $region81: #{interaction_network_forward.3} parent=79 // pred_check
        %p2669 = pneg %p376
      $region82: #{interaction_network_forward.3} parent=79 // pred_check_branch
        %2671 = sbr.rel (%p2669) target = $region84
      $region83: #{interaction_network_forward.3} parent=79 // pred_region
        %s2672 = smul.u32 20, %s32
        %p2673 = scmp.lt.s32.totalorder %s31, 2
        %s2674 = scalar_select %p2673, %s31, 2
        %p2675 = scmp.lt.s32.totalorder %s2672, 39
        %s2676 = scalar_select %p2675, %s2672, 39
        %s2677 = smul.addr %s2674, 40
        %s2678 = sadd.s32 %s2676, %s2677
        %s2679 = smul.addr %s2678, 4
        %s2680 = scalar_lea.vmem %s12, %s2679
      $region84: #{interaction_network_forward.3} parent=79 // pred_fallthru
        _
      // Predicated region
      $region85: #{interaction_network_forward.3} parent=79 // pred_check
        %p2681 = pneg %p404
      $region86: #{interaction_network_forward.3} parent=79 // pred_check_branch
        %2683 = sbr.rel (%p2681) target = $region88
      $region87: #{interaction_network_forward.3} parent=79 // pred_region
        %s2684 = smul.u32 20, %s32
        %p2685 = scmp.lt.s32.totalorder %s31, 2
        %s2686 = scalar_select %p2685, %s31, 2
        %p2687 = scmp.lt.s32.totalorder %s2684, 39
        %s2688 = scalar_select %p2687, %s2684, 39
        %s2689 = smul.addr %s2686, 40
        %s2690 = sadd.s32 %s2688, %s2689
        %s2691 = smul.addr %s2690, 8
        %s2692 = scalar_lea.vmem %s13, %s2691
      $region88: #{interaction_network_forward.3} parent=79 // pred_fallthru
        _
    $region80: #{interaction_network_forward.3} parent=5 // pred_fallthru
      _
  $region6: #{interaction_network_forward.3} parent=0 // loop_footer
    %s24 = sadd.s32 1, %s20
  $region7: #{interaction_network_forward.3} parent=0 // loop_footer_branch
    %19 = sbr.rel target = $region3
  $region8: #{interaction_network_forward.3} parent=0 // loop_exit
    _

// kernel: interaction_network_forward.5
$region0: #{interaction_network_forward.5}
  #allocation0 [shape = 'u32[]', space=smem, size = 0x4, offset = 0x4, fixed_abs, tag = 'smem constant byte address 0x4 - core index']
  #allocation1 [shape = 'u32[144,128]{1,0:T(1,128)}', space=vmem, size = 0x12000, scoped, tag = 'internal scratch']
  #allocation2 [shape = 'f32[32,32]{1,0:T(8,128)}', space=vmem, size = 0x4000, scoped, tag = 'scratch operand']
  #allocation3 [shape = 'f32[32,32]{1,0:T(8,128)}', space=vmem, size = 0x4000, scoped, tag = 'scratch operand']
  #allocation4 [shape = 'f32[32,16]{1,0:T(8,128)}', space=vmem, size = 0x4000, scoped, tag = 'scratch operand']
  %s0 = inlined_call_operand.vmem [shape: f32[64,32], index: 0, kind: input, shape index: {}]
  %s1 = inlined_call_operand.vmem [shape: bf16[3,320,32], index: 1, kind: input, shape index: {}]
  %s2 = inlined_call_operand.vmem [shape: s32[2,3,160], index: 2, kind: input, shape index: {}]
  %s3 = inlined_call_operand.vmem [shape: bf16[64,48], index: 3, kind: input, shape index: {}]
  %s4 = inlined_call_operand.vmem [shape: s32[2,3,32], index: 4, kind: input, shape index: {}]
  %s5 = inlined_call_operand.vmem [shape: bf16[112,64], index: 5, kind: input, shape index: {}]
  %s6 = inlined_call_operand.vmem [shape: f32[1,64], index: 6, kind: input, shape index: {}]
  %s7 = inlined_call_operand.vmem [shape: bf16[64,64], index: 7, kind: input, shape index: {}]
  %s8 = inlined_call_operand.vmem [shape: f32[1,64], index: 8, kind: input, shape index: {}]
  %s9 = inlined_call_operand.vmem [shape: bf16[64,32], index: 9, kind: input, shape index: {}]
  %s10 = inlined_call_operand.vmem [shape: f32[1,32], index: 10, kind: input, shape index: {}]
  %s11 = inlined_call_operand.vmem [shape: f32[1,32], index: 11, kind: input, shape index: {}, may-alias: {11,19}]
  %s12 = inlined_call_operand.vmem [shape: f32[1,32], index: 12, kind: input, shape index: {}, may-alias: {12,20}]
  %s13 = inlined_call_operand.vmem [shape: bf16[64,64], index: 13, kind: input, shape index: {}]
  %s14 = inlined_call_operand.vmem [shape: f32[1,64], index: 14, kind: input, shape index: {}]
  %s15 = inlined_call_operand.vmem [shape: bf16[64,64], index: 15, kind: input, shape index: {}]
  %s16 = inlined_call_operand.vmem [shape: f32[1,64], index: 16, kind: input, shape index: {}]
  %s17 = inlined_call_operand.vmem [shape: bf16[64,32], index: 17, kind: input, shape index: {}]
  %s18 = inlined_call_operand.vmem [shape: f32[1,32], index: 18, kind: input, shape index: {}]
  %s19 = inlined_call_operand.vmem [shape: f32[1,32], index: 19, kind: input, shape index: {}, may-alias: {11,19}]
  %s20 = inlined_call_operand.vmem [shape: f32[1,32], index: 20, kind: input, shape index: {}, may-alias: {12,20}]
  %s21 = inlined_call_operand.vmem [shape: f32[64,32], index: 21, kind: output, shape index: {}]
  %s22 = sld [smem:[#allocation0]]
  $region178: #{interaction_network_forward.5} parent=0
    _
  %s24 = ssub.s32 1, %s22
  %s25 = scalar_select 0, %s24, %s22
  $region1: #{interaction_network_forward.5} parent=0
    #allocation5 [shape = 'u8[245760]{0}', space=vmem, size = 0x3c000, scoped, tag = 'input window, operand 1']
    loop: start=0, step=1, limit=6
    $region2: #{interaction_network_forward.5} parent=1 // loop_pre_header
      _
    $region3: #{interaction_network_forward.5} parent=1 // loop_header
      %s27 = sphi 0, %s31
      %p28 = scmp.ge.s32.totalorder %s27, 6
      %s34 = sphi 0, %s46
      %s35 = sphi 0, %s42
      %s36 = sphi 0, %s34
      %s37 = sphi 0, %s35
      %s38 = sphi 0, %s36
      %s39 = sphi 0, %s37
      %s49 = sphi 0, %s51
      %s52 = sphi 0, %s49
      %s53 = sphi 0, %s52
      %s69 = sphi 0, %s53
      %s75 = sphi 0, %s77
      %s78 = sphi 0, %s75
      %s79 = sphi 0, %s78
      %s95 = sphi 0, %s79
      %s101 = sphi 0, %s103
      %s104 = sphi 0, %s101
      %s105 = sphi 0, %s104
      %s121 = sphi 0, %s105
      %s127 = sphi 0, %s129
      %s130 = sphi 0, %s127
      %s131 = sphi 0, %s130
      %s147 = sphi 0, %s131
      %s153 = sphi 0, %s155
      %s156 = sphi 0, %s153
      %s157 = sphi 0, %s156
      %s173 = sphi 0, %s157
      %s177 = sphi 0, %s177
      %s179 = sphi 0, %s177
      %s180 = sphi 0, %s179
      %s194 = sphi 0, %s180
      %s198 = sphi 0, %s198
      %s200 = sphi 0, %s198
      %s201 = sphi 0, %s200
      %s215 = sphi 0, %s201
      %s219 = sphi 0, %s219
      %s221 = sphi 0, %s219
      %s222 = sphi 0, %s221
      %s236 = sphi 0, %s222
      %s240 = sphi 0, %s240
      %s242 = sphi 0, %s240
      %s243 = sphi 0, %s242
      %s257 = sphi 0, %s243
      %s261 = sphi 0, %s261
      %s263 = sphi 0, %s261
      %s264 = sphi 0, %s263
      %s278 = sphi 0, %s264
      %s282 = sphi 0, %s282
      %s284 = sphi 0, %s282
      %s285 = sphi 0, %s284
      %s299 = sphi 0, %s285
      %s303 = sphi 0, %s303
      %s305 = sphi 0, %s303
      %s306 = sphi 0, %s305
      %s320 = sphi 0, %s306
      %s324 = sphi 0, %s324
      %s326 = sphi 0, %s324
      %s327 = sphi 0, %s326
      %s341 = sphi 0, %s327
      %s345 = sphi 0, %s345
      %s347 = sphi 0, %s345
      %s348 = sphi 0, %s347
      %s362 = sphi 0, %s348
      %s366 = sphi 0, %s366
      %s368 = sphi 0, %s366
      %s369 = sphi 0, %s368
      %s383 = sphi 0, %s369
      %s387 = sphi 0, %s387
      %s389 = sphi 0, %s387
      %s390 = sphi 0, %s389
      %s404 = sphi 0, %s390
      %s408 = sphi 0, %s408
      %s410 = sphi 0, %s408
      %s411 = sphi 0, %s410
      %s425 = sphi 0, %s411
      %s429 = sphi 0, %s429
      %s431 = sphi 0, %s429
      %s432 = sphi 0, %s431
      %s446 = sphi 0, %s432
      %s450 = sphi 0, %s450
      %s452 = sphi 0, %s450
      %s453 = sphi 0, %s452
      %s467 = sphi 0, %s453
      %s471 = sphi 0, %s471
      %s473 = sphi 0, %s471
      %s474 = sphi 0, %s473
      %s488 = sphi 0, %s474
      %s492 = sphi 0, %s492
      %s494 = sphi 0, %s492
      %s495 = sphi 0, %s494
      %s509 = sphi 0, %s495
      %s515 = sphi 0, %s517
      %s518 = sphi 0, %s515
      %s519 = sphi 0, %s518
      %s535 = sphi 0, %s519
    $region4: #{interaction_network_forward.5} parent=1 // loop_header_branch
      %30 = sbr.rel (%p28) target = $region8
    $region5: #{interaction_network_forward.5} parent=1 // loop_body
      %s32 = ssub.s32 %s27, 1
      %s33 = ssub.s32 %s27, 2
      %s40 = sadd.s32 1, %s35
      %p41 = scmp.ge.s32.totalorder %s40, 2
      %s42 = scalar_select %p41, 0, %s40
      %s43 = sadd.s32 1, %s34
      %s44 = scalar_select %p41, %s43, %s34
      %p45 = scmp.ge.s32.totalorder %s44, 2
      %s46 = scalar_select %p45, 0, %s44
      %s47 = ssub.s32 %s34, %s46
      %p48 = scmp.eq.s32.totalorder %s47, 0
      %s50 = sadd.s32 %s49, 1
      %s51 = scalar_select %p48, %s49, %s50
      %p54 = pneg %p48
      %p55 = scmp.eq.s32.totalorder %s27, 3
      %p56 = por %p54, %p55
      %p57 = scmp.ne.s32.totalorder %s49, %s52
      %p58 = scmp.eq.s32.totalorder %s27, 0
      %p59 = por %p57, %p58
      %p60 = scmp.ne.s32.totalorder %s49, %s52
      %p61 = scmp.eq.s32.totalorder %s32, 3
      %p62 = por %p60, %p61
      %p63 = scmp.ne.s32.totalorder %s52, %s53
      %p64 = scmp.eq.s32.totalorder %s32, 0
      %p65 = por %p63, %p64
      %p66 = scmp.ne.s32.totalorder %s52, %s53
      %p67 = scmp.eq.s32.totalorder %s33, 3
      %p68 = por %p66, %p67
      %p70 = scmp.ne.s32.totalorder %s53, %s69
      %p71 = scmp.eq.s32.totalorder %s33, 0
      %p72 = por %p70, %p71
      %s73 = ssub.s32 %s35, %s42
      %p74 = scmp.eq.s32.totalorder %s73, 0
      %s76 = sadd.s32 %s75, 1
      %s77 = scalar_select %p74, %s75, %s76
      %p80 = pneg %p74
      %p81 = scmp.eq.s32.totalorder %s27, 3
      %p82 = por %p80, %p81
      %p83 = scmp.ne.s32.totalorder %s75, %s78
      %p84 = scmp.eq.s32.totalorder %s27, 0
      %p85 = por %p83, %p84
      %p86 = scmp.ne.s32.totalorder %s75, %s78
      %p87 = scmp.eq.s32.totalorder %s32, 3
      %p88 = por %p86, %p87
      %p89 = scmp.ne.s32.totalorder %s78, %s79
      %p90 = scmp.eq.s32.totalorder %s32, 0
      %p91 = por %p89, %p90
      %p92 = scmp.ne.s32.totalorder %s78, %s79
      %p93 = scmp.eq.s32.totalorder %s33, 3
      %p94 = por %p92, %p93
      %p96 = scmp.ne.s32.totalorder %s79, %s95
      %p97 = scmp.eq.s32.totalorder %s33, 0
      %p98 = por %p96, %p97
      %s99 = ssub.s32 %s35, %s42
      %p100 = scmp.eq.s32.totalorder %s99, 0
      %s102 = sadd.s32 %s101, 1
      %s103 = scalar_select %p100, %s101, %s102
      %p106 = pneg %p100
      %p107 = scmp.eq.s32.totalorder %s27, 3
      %p108 = por %p106, %p107
      %p109 = scmp.ne.s32.totalorder %s101, %s104
      %p110 = scmp.eq.s32.totalorder %s27, 0
      %p111 = por %p109, %p110
      %p112 = scmp.ne.s32.totalorder %s101, %s104
      %p113 = scmp.eq.s32.totalorder %s32, 3
      %p114 = por %p112, %p113
      %p115 = scmp.ne.s32.totalorder %s104, %s105
      %p116 = scmp.eq.s32.totalorder %s32, 0
      %p117 = por %p115, %p116
      %p118 = scmp.ne.s32.totalorder %s104, %s105
      %p119 = scmp.eq.s32.totalorder %s33, 3
      %p120 = por %p118, %p119
      %p122 = scmp.ne.s32.totalorder %s105, %s121
      %p123 = scmp.eq.s32.totalorder %s33, 0
      %p124 = por %p122, %p123
      %s125 = ssub.s32 %s35, %s42
      %p126 = scmp.eq.s32.totalorder %s125, 0
      %s128 = sadd.s32 %s127, 1
      %s129 = scalar_select %p126, %s127, %s128
      %p132 = pneg %p126
      %p133 = scmp.eq.s32.totalorder %s27, 3
      %p134 = por %p132, %p133
      %p135 = scmp.ne.s32.totalorder %s127, %s130
      %p136 = scmp.eq.s32.totalorder %s27, 0
      %p137 = por %p135, %p136
      %p138 = scmp.ne.s32.totalorder %s127, %s130
      %p139 = scmp.eq.s32.totalorder %s32, 3
      %p140 = por %p138, %p139
      %p141 = scmp.ne.s32.totalorder %s130, %s131
      %p142 = scmp.eq.s32.totalorder %s32, 0
      %p143 = por %p141, %p142
      %p144 = scmp.ne.s32.totalorder %s130, %s131
      %p145 = scmp.eq.s32.totalorder %s33, 3
      %p146 = por %p144, %p145
      %p148 = scmp.ne.s32.totalorder %s131, %s147
      %p149 = scmp.eq.s32.totalorder %s33, 0
      %p150 = por %p148, %p149
      %s151 = ssub.s32 %s35, %s42
      %p152 = scmp.eq.s32.totalorder %s151, 0
      %s154 = sadd.s32 %s153, 1
      %s155 = scalar_select %p152, %s153, %s154
      %p158 = pneg %p152
      %p159 = scmp.eq.s32.totalorder %s27, 3
      %p160 = por %p158, %p159
      %p161 = scmp.ne.s32.totalorder %s153, %s156
      %p162 = scmp.eq.s32.totalorder %s27, 0
      %p163 = por %p161, %p162
      %p164 = scmp.ne.s32.totalorder %s153, %s156
      %p165 = scmp.eq.s32.totalorder %s32, 3
      %p166 = por %p164, %p165
      %p167 = scmp.ne.s32.totalorder %s156, %s157
      %p168 = scmp.eq.s32.totalorder %s32, 0
      %p169 = por %p167, %p168
      %p170 = scmp.ne.s32.totalorder %s156, %s157
      %p171 = scmp.eq.s32.totalorder %s33, 3
      %p172 = por %p170, %p171
      %p174 = scmp.ne.s32.totalorder %s157, %s173
      %p175 = scmp.eq.s32.totalorder %s33, 0
      %p176 = por %p174, %p175
      %s178 = sadd.s32 %s177, 1
      %p181 = scmp.eq.s32.totalorder %s27, 3
      %p182 = scmp.ne.s32.totalorder %s177, %s179
      %p183 = scmp.eq.s32.totalorder %s27, 0
      %p184 = por %p182, %p183
      %p185 = scmp.ne.s32.totalorder %s177, %s179
      %p186 = scmp.eq.s32.totalorder %s32, 3
      %p187 = por %p185, %p186
      %p188 = scmp.ne.s32.totalorder %s179, %s180
      %p189 = scmp.eq.s32.totalorder %s32, 0
      %p190 = por %p188, %p189
      %p191 = scmp.ne.s32.totalorder %s179, %s180
      %p192 = scmp.eq.s32.totalorder %s33, 3
      %p193 = por %p191, %p192
      %p195 = scmp.ne.s32.totalorder %s180, %s194
      %p196 = scmp.eq.s32.totalorder %s33, 0
      %p197 = por %p195, %p196
      %s199 = sadd.s32 %s198, 1
      %p202 = scmp.eq.s32.totalorder %s27, 3
      %p203 = scmp.ne.s32.totalorder %s198, %s200
      %p204 = scmp.eq.s32.totalorder %s27, 0
      %p205 = por %p203, %p204
      %p206 = scmp.ne.s32.totalorder %s198, %s200
      %p207 = scmp.eq.s32.totalorder %s32, 3
      %p208 = por %p206, %p207
      %p209 = scmp.ne.s32.totalorder %s200, %s201
      %p210 = scmp.eq.s32.totalorder %s32, 0
      %p211 = por %p209, %p210
      %p212 = scmp.ne.s32.totalorder %s200, %s201
      %p213 = scmp.eq.s32.totalorder %s33, 3
      %p214 = por %p212, %p213
      %p216 = scmp.ne.s32.totalorder %s201, %s215
      %p217 = scmp.eq.s32.totalorder %s33, 0
      %p218 = por %p216, %p217
      %s220 = sadd.s32 %s219, 1
      %p223 = scmp.eq.s32.totalorder %s27, 3
      %p224 = scmp.ne.s32.totalorder %s219, %s221
      %p225 = scmp.eq.s32.totalorder %s27, 0
      %p226 = por %p224, %p225
      %p227 = scmp.ne.s32.totalorder %s219, %s221
      %p228 = scmp.eq.s32.totalorder %s32, 3
      %p229 = por %p227, %p228
      %p230 = scmp.ne.s32.totalorder %s221, %s222
      %p231 = scmp.eq.s32.totalorder %s32, 0
      %p232 = por %p230, %p231
      %p233 = scmp.ne.s32.totalorder %s221, %s222
      %p234 = scmp.eq.s32.totalorder %s33, 3
      %p235 = por %p233, %p234
      %p237 = scmp.ne.s32.totalorder %s222, %s236
      %p238 = scmp.eq.s32.totalorder %s33, 0
      %p239 = por %p237, %p238
      %s241 = sadd.s32 %s240, 1
      %p244 = scmp.eq.s32.totalorder %s27, 3
      %p245 = scmp.ne.s32.totalorder %s240, %s242
      %p246 = scmp.eq.s32.totalorder %s27, 0
      %p247 = por %p245, %p246
      %p248 = scmp.ne.s32.totalorder %s240, %s242
      %p249 = scmp.eq.s32.totalorder %s32, 3
      %p250 = por %p248, %p249
      %p251 = scmp.ne.s32.totalorder %s242, %s243
      %p252 = scmp.eq.s32.totalorder %s32, 0
      %p253 = por %p251, %p252
      %p254 = scmp.ne.s32.totalorder %s242, %s243
      %p255 = scmp.eq.s32.totalorder %s33, 3
      %p256 = por %p254, %p255
      %p258 = scmp.ne.s32.totalorder %s243, %s257
      %p259 = scmp.eq.s32.totalorder %s33, 0
      %p260 = por %p258, %p259
      %s262 = sadd.s32 %s261, 1
      %p265 = scmp.eq.s32.totalorder %s27, 3
      %p266 = scmp.ne.s32.totalorder %s261, %s263
      %p267 = scmp.eq.s32.totalorder %s27, 0
      %p268 = por %p266, %p267
      %p269 = scmp.ne.s32.totalorder %s261, %s263
      %p270 = scmp.eq.s32.totalorder %s32, 3
      %p271 = por %p269, %p270
      %p272 = scmp.ne.s32.totalorder %s263, %s264
      %p273 = scmp.eq.s32.totalorder %s32, 0
      %p274 = por %p272, %p273
      %p275 = scmp.ne.s32.totalorder %s263, %s264
      %p276 = scmp.eq.s32.totalorder %s33, 3
      %p277 = por %p275, %p276
      %p279 = scmp.ne.s32.totalorder %s264, %s278
      %p280 = scmp.eq.s32.totalorder %s33, 0
      %p281 = por %p279, %p280
      %s283 = sadd.s32 %s282, 1
      %p286 = scmp.eq.s32.totalorder %s27, 3
      %p287 = scmp.ne.s32.totalorder %s282, %s284
      %p288 = scmp.eq.s32.totalorder %s27, 0
      %p289 = por %p287, %p288
      %p290 = scmp.ne.s32.totalorder %s282, %s284
      %p291 = scmp.eq.s32.totalorder %s32, 3
      %p292 = por %p290, %p291
      %p293 = scmp.ne.s32.totalorder %s284, %s285
      %p294 = scmp.eq.s32.totalorder %s32, 0
      %p295 = por %p293, %p294
      %p296 = scmp.ne.s32.totalorder %s284, %s285
      %p297 = scmp.eq.s32.totalorder %s33, 3
      %p298 = por %p296, %p297
      %p300 = scmp.ne.s32.totalorder %s285, %s299
      %p301 = scmp.eq.s32.totalorder %s33, 0
      %p302 = por %p300, %p301
      %s304 = sadd.s32 %s303, 1
      %p307 = scmp.eq.s32.totalorder %s27, 3
      %p308 = scmp.ne.s32.totalorder %s303, %s305
      %p309 = scmp.eq.s32.totalorder %s27, 0
      %p310 = por %p308, %p309
      %p311 = scmp.ne.s32.totalorder %s303, %s305
      %p312 = scmp.eq.s32.totalorder %s32, 3
      %p313 = por %p311, %p312
      %p314 = scmp.ne.s32.totalorder %s305, %s306
      %p315 = scmp.eq.s32.totalorder %s32, 0
      %p316 = por %p314, %p315
      %p317 = scmp.ne.s32.totalorder %s305, %s306
      %p318 = scmp.eq.s32.totalorder %s33, 3
      %p319 = por %p317, %p318
      %p321 = scmp.ne.s32.totalorder %s306, %s320
      %p322 = scmp.eq.s32.totalorder %s33, 0
      %p323 = por %p321, %p322
      %s325 = sadd.s32 %s324, 1
      %p328 = scmp.eq.s32.totalorder %s27, 3
      %p329 = scmp.ne.s32.totalorder %s324, %s326
      %p330 = scmp.eq.s32.totalorder %s27, 0
      %p331 = por %p329, %p330
      %p332 = scmp.ne.s32.totalorder %s324, %s326
      %p333 = scmp.eq.s32.totalorder %s32, 3
      %p334 = por %p332, %p333
      %p335 = scmp.ne.s32.totalorder %s326, %s327
      %p336 = scmp.eq.s32.totalorder %s32, 0
      %p337 = por %p335, %p336
      %p338 = scmp.ne.s32.totalorder %s326, %s327
      %p339 = scmp.eq.s32.totalorder %s33, 3
      %p340 = por %p338, %p339
      %p342 = scmp.ne.s32.totalorder %s327, %s341
      %p343 = scmp.eq.s32.totalorder %s33, 0
      %p344 = por %p342, %p343
      %s346 = sadd.s32 %s345, 1
      %p349 = scmp.eq.s32.totalorder %s27, 3
      %p350 = scmp.ne.s32.totalorder %s345, %s347
      %p351 = scmp.eq.s32.totalorder %s27, 0
      %p352 = por %p350, %p351
      %p353 = scmp.ne.s32.totalorder %s345, %s347
      %p354 = scmp.eq.s32.totalorder %s32, 3
      %p355 = por %p353, %p354
      %p356 = scmp.ne.s32.totalorder %s347, %s348
      %p357 = scmp.eq.s32.totalorder %s32, 0
      %p358 = por %p356, %p357
      %p359 = scmp.ne.s32.totalorder %s347, %s348
      %p360 = scmp.eq.s32.totalorder %s33, 3
      %p361 = por %p359, %p360
      %p363 = scmp.ne.s32.totalorder %s348, %s362
      %p364 = scmp.eq.s32.totalorder %s33, 0
      %p365 = por %p363, %p364
      %s367 = sadd.s32 %s366, 1
      %p370 = scmp.eq.s32.totalorder %s27, 3
      %p371 = scmp.ne.s32.totalorder %s366, %s368
      %p372 = scmp.eq.s32.totalorder %s27, 0
      %p373 = por %p371, %p372
      %p374 = scmp.ne.s32.totalorder %s366, %s368
      %p375 = scmp.eq.s32.totalorder %s32, 3
      %p376 = por %p374, %p375
      %p377 = scmp.ne.s32.totalorder %s368, %s369
      %p378 = scmp.eq.s32.totalorder %s32, 0
      %p379 = por %p377, %p378
      %p380 = scmp.ne.s32.totalorder %s368, %s369
      %p381 = scmp.eq.s32.totalorder %s33, 3
      %p382 = por %p380, %p381
      %p384 = scmp.ne.s32.totalorder %s369, %s383
      %p385 = scmp.eq.s32.totalorder %s33, 0
      %p386 = por %p384, %p385
      %s388 = sadd.s32 %s387, 1
      %p391 = scmp.eq.s32.totalorder %s27, 3
      %p392 = scmp.ne.s32.totalorder %s387, %s389
      %p393 = scmp.eq.s32.totalorder %s27, 0
      %p394 = por %p392, %p393
      %p395 = scmp.ne.s32.totalorder %s387, %s389
      %p396 = scmp.eq.s32.totalorder %s32, 3
      %p397 = por %p395, %p396
      %p398 = scmp.ne.s32.totalorder %s389, %s390
      %p399 = scmp.eq.s32.totalorder %s32, 0
      %p400 = por %p398, %p399
      %p401 = scmp.ne.s32.totalorder %s389, %s390
      %p402 = scmp.eq.s32.totalorder %s33, 3
      %p403 = por %p401, %p402
      %p405 = scmp.ne.s32.totalorder %s390, %s404
      %p406 = scmp.eq.s32.totalorder %s33, 0
      %p407 = por %p405, %p406
      %s409 = sadd.s32 %s408, 1
      %p412 = scmp.eq.s32.totalorder %s27, 3
      %p413 = scmp.ne.s32.totalorder %s408, %s410
      %p414 = scmp.eq.s32.totalorder %s27, 0
      %p415 = por %p413, %p414
      %p416 = scmp.ne.s32.totalorder %s408, %s410
      %p417 = scmp.eq.s32.totalorder %s32, 3
      %p418 = por %p416, %p417
      %p419 = scmp.ne.s32.totalorder %s410, %s411
      %p420 = scmp.eq.s32.totalorder %s32, 0
      %p421 = por %p419, %p420
      %p422 = scmp.ne.s32.totalorder %s410, %s411
      %p423 = scmp.eq.s32.totalorder %s33, 3
      %p424 = por %p422, %p423
      %p426 = scmp.ne.s32.totalorder %s411, %s425
      %p427 = scmp.eq.s32.totalorder %s33, 0
      %p428 = por %p426, %p427
      %s430 = sadd.s32 %s429, 1
      %p433 = scmp.eq.s32.totalorder %s27, 3
      %p434 = scmp.ne.s32.totalorder %s429, %s431
      %p435 = scmp.eq.s32.totalorder %s27, 0
      %p436 = por %p434, %p435
      %p437 = scmp.ne.s32.totalorder %s429, %s431
      %p438 = scmp.eq.s32.totalorder %s32, 3
      %p439 = por %p437, %p438
      %p440 = scmp.ne.s32.totalorder %s431, %s432
      %p441 = scmp.eq.s32.totalorder %s32, 0
      %p442 = por %p440, %p441
      %p443 = scmp.ne.s32.totalorder %s431, %s432
      %p444 = scmp.eq.s32.totalorder %s33, 3
      %p445 = por %p443, %p444
      %p447 = scmp.ne.s32.totalorder %s432, %s446
      %p448 = scmp.eq.s32.totalorder %s33, 0
      %p449 = por %p447, %p448
      %s451 = sadd.s32 %s450, 1
      %p454 = scmp.eq.s32.totalorder %s27, 3
      %p455 = scmp.ne.s32.totalorder %s450, %s452
      %p456 = scmp.eq.s32.totalorder %s27, 0
      %p457 = por %p455, %p456
      %p458 = scmp.ne.s32.totalorder %s450, %s452
      %p459 = scmp.eq.s32.totalorder %s32, 3
      %p460 = por %p458, %p459
      %p461 = scmp.ne.s32.totalorder %s452, %s453
      %p462 = scmp.eq.s32.totalorder %s32, 0
      %p463 = por %p461, %p462
      %p464 = scmp.ne.s32.totalorder %s452, %s453
      %p465 = scmp.eq.s32.totalorder %s33, 3
      %p466 = por %p464, %p465
      %p468 = scmp.ne.s32.totalorder %s453, %s467
      %p469 = scmp.eq.s32.totalorder %s33, 0
      %p470 = por %p468, %p469
      %s472 = sadd.s32 %s471, 1
      %p475 = scmp.eq.s32.totalorder %s27, 3
      %p476 = scmp.ne.s32.totalorder %s471, %s473
      %p477 = scmp.eq.s32.totalorder %s27, 0
      %p478 = por %p476, %p477
      %p479 = scmp.ne.s32.totalorder %s471, %s473
      %p480 = scmp.eq.s32.totalorder %s32, 3
      %p481 = por %p479, %p480
      %p482 = scmp.ne.s32.totalorder %s473, %s474
      %p483 = scmp.eq.s32.totalorder %s32, 0
      %p484 = por %p482, %p483
      %p485 = scmp.ne.s32.totalorder %s473, %s474
      %p486 = scmp.eq.s32.totalorder %s33, 3
      %p487 = por %p485, %p486
      %p489 = scmp.ne.s32.totalorder %s474, %s488
      %p490 = scmp.eq.s32.totalorder %s33, 0
      %p491 = por %p489, %p490
      %s493 = sadd.s32 %s492, 1
      %p496 = scmp.eq.s32.totalorder %s27, 3
      %p497 = scmp.ne.s32.totalorder %s492, %s494
      %p498 = scmp.eq.s32.totalorder %s27, 0
      %p499 = por %p497, %p498
      %p500 = scmp.ne.s32.totalorder %s492, %s494
      %p501 = scmp.eq.s32.totalorder %s32, 3
      %p502 = por %p500, %p501
      %p503 = scmp.ne.s32.totalorder %s494, %s495
      %p504 = scmp.eq.s32.totalorder %s32, 0
      %p505 = por %p503, %p504
      %p506 = scmp.ne.s32.totalorder %s494, %s495
      %p507 = scmp.eq.s32.totalorder %s33, 3
      %p508 = por %p506, %p507
      %p510 = scmp.ne.s32.totalorder %s495, %s509
      %p511 = scmp.eq.s32.totalorder %s33, 0
      %p512 = por %p510, %p511
      %s513 = ssub.s32 %s34, %s46
      %p514 = scmp.eq.s32.totalorder %s513, 0
      %s516 = sadd.s32 %s515, 1
      %s517 = scalar_select %p514, %s515, %s516
      %p520 = pneg %p514
      %p521 = scmp.eq.s32.totalorder %s27, 3
      %p522 = por %p520, %p521
      %p523 = scmp.ne.s32.totalorder %s515, %s518
      %p524 = scmp.eq.s32.totalorder %s27, 0
      %p525 = por %p523, %p524
      %p526 = scmp.ne.s32.totalorder %s515, %s518
      %p527 = scmp.eq.s32.totalorder %s32, 3
      %p528 = por %p526, %p527
      %p529 = scmp.ne.s32.totalorder %s518, %s519
      %p530 = scmp.eq.s32.totalorder %s32, 0
      %p531 = por %p529, %p530
      %p532 = scmp.ne.s32.totalorder %s518, %s519
      %p533 = scmp.eq.s32.totalorder %s33, 3
      %p534 = por %p532, %p533
      %p536 = scmp.ne.s32.totalorder %s519, %s535
      %p537 = scmp.eq.s32.totalorder %s33, 0
      %p538 = por %p536, %p537
      %p539 = scmp.le.s32.totalorder 1, %s27
      %p540 = scmp.lt.s32.totalorder %s27, 5
      %p541 = pnand %p539, %p540
      %p542 = pneg %p541
      // Predicated region
      $region9: #{interaction_network_forward.5} parent=5 // pred_check
        _
      $region10: #{interaction_network_forward.5} parent=5 // pred_check_branch
        %544 = sbr.rel (%p541) target = $region12
      $region11: #{interaction_network_forward.5} parent=5 // pred_region
        %s545 = ssub.s32 %s27, 1
        // Predicated region
        $region13: #{interaction_network_forward.5} parent=11 // pred_check
          %p546 = pneg %p190
        $region14: #{interaction_network_forward.5} parent=11 // pred_check_branch
          %548 = sbr.rel (%p546) target = $region16
        $region15: #{interaction_network_forward.5} parent=11 // pred_region
          _
        $region16: #{interaction_network_forward.5} parent=11 // pred_fallthru
          _
        // Predicated region
        $region17: #{interaction_network_forward.5} parent=11 // pred_check
          %p549 = pneg %p211
        $region18: #{interaction_network_forward.5} parent=11 // pred_check_branch
          %551 = sbr.rel (%p549) target = $region20
        $region19: #{interaction_network_forward.5} parent=11 // pred_region
          _
        $region20: #{interaction_network_forward.5} parent=11 // pred_fallthru
          _
        // Predicated region
        $region21: #{interaction_network_forward.5} parent=11 // pred_check
          %p552 = pneg %p232
        $region22: #{interaction_network_forward.5} parent=11 // pred_check_branch
          %554 = sbr.rel (%p552) target = $region24
        $region23: #{interaction_network_forward.5} parent=11 // pred_region
          _
        $region24: #{interaction_network_forward.5} parent=11 // pred_fallthru
          _
        // Predicated region
        $region25: #{interaction_network_forward.5} parent=11 // pred_check
          %p555 = pneg %p253
        $region26: #{interaction_network_forward.5} parent=11 // pred_check_branch
          %557 = sbr.rel (%p555) target = $region28
        $region27: #{interaction_network_forward.5} parent=11 // pred_region
          _
        $region28: #{interaction_network_forward.5} parent=11 // pred_fallthru
          _
        // Predicated region
        $region29: #{interaction_network_forward.5} parent=11 // pred_check
          %p558 = pneg %p274
        $region30: #{interaction_network_forward.5} parent=11 // pred_check_branch
          %560 = sbr.rel (%p558) target = $region32
        $region31: #{interaction_network_forward.5} parent=11 // pred_region
          _
        $region32: #{interaction_network_forward.5} parent=11 // pred_fallthru
          _
        // Predicated region
        $region33: #{interaction_network_forward.5} parent=11 // pred_check
          %p561 = pneg %p295
        $region34: #{interaction_network_forward.5} parent=11 // pred_check_branch
          %563 = sbr.rel (%p561) target = $region36
        $region35: #{interaction_network_forward.5} parent=11 // pred_region
          _
        $region36: #{interaction_network_forward.5} parent=11 // pred_fallthru
          _
        // Predicated region
        $region37: #{interaction_network_forward.5} parent=11 // pred_check
          %p564 = pneg %p316
        $region38: #{interaction_network_forward.5} parent=11 // pred_check_branch
          %566 = sbr.rel (%p564) target = $region40
        $region39: #{interaction_network_forward.5} parent=11 // pred_region
          _
        $region40: #{interaction_network_forward.5} parent=11 // pred_fallthru
          _
        // Predicated region
        $region41: #{interaction_network_forward.5} parent=11 // pred_check
          %p567 = pneg %p337
        $region42: #{interaction_network_forward.5} parent=11 // pred_check_branch
          %569 = sbr.rel (%p567) target = $region44
        $region43: #{interaction_network_forward.5} parent=11 // pred_region
          _
        $region44: #{interaction_network_forward.5} parent=11 // pred_fallthru
          _
        // Predicated region
        $region45: #{interaction_network_forward.5} parent=11 // pred_check
          %p570 = pneg %p358
        $region46: #{interaction_network_forward.5} parent=11 // pred_check_branch
          %572 = sbr.rel (%p570) target = $region48
        $region47: #{interaction_network_forward.5} parent=11 // pred_region
          _
        $region48: #{interaction_network_forward.5} parent=11 // pred_fallthru
          _
        // Predicated region
        $region49: #{interaction_network_forward.5} parent=11 // pred_check
          %p573 = pneg %p379
        $region50: #{interaction_network_forward.5} parent=11 // pred_check_branch
          %575 = sbr.rel (%p573) target = $region52
        $region51: #{interaction_network_forward.5} parent=11 // pred_region
          _
        $region52: #{interaction_network_forward.5} parent=11 // pred_fallthru
          _
        // Predicated region
        $region53: #{interaction_network_forward.5} parent=11 // pred_check
          %p576 = pneg %p400
        $region54: #{interaction_network_forward.5} parent=11 // pred_check_branch
          %578 = sbr.rel (%p576) target = $region56
        $region55: #{interaction_network_forward.5} parent=11 // pred_region
          _
        $region56: #{interaction_network_forward.5} parent=11 // pred_fallthru
          _
        // Predicated region
        $region57: #{interaction_network_forward.5} parent=11 // pred_check
          %p579 = pneg %p421
        $region58: #{interaction_network_forward.5} parent=11 // pred_check_branch
          %581 = sbr.rel (%p579) target = $region60
        $region59: #{interaction_network_forward.5} parent=11 // pred_region
          _
        $region60: #{interaction_network_forward.5} parent=11 // pred_fallthru
          _
        // Predicated region
        $region61: #{interaction_network_forward.5} parent=11 // pred_check
          %p582 = pneg %p442
        $region62: #{interaction_network_forward.5} parent=11 // pred_check_branch
          %584 = sbr.rel (%p582) target = $region64
        $region63: #{interaction_network_forward.5} parent=11 // pred_region
          _
        $region64: #{interaction_network_forward.5} parent=11 // pred_fallthru
          _
        // Predicated region
        $region65: #{interaction_network_forward.5} parent=11 // pred_check
          %p585 = pneg %p463
        $region66: #{interaction_network_forward.5} parent=11 // pred_check_branch
          %587 = sbr.rel (%p585) target = $region68
        $region67: #{interaction_network_forward.5} parent=11 // pred_region
          _
        $region68: #{interaction_network_forward.5} parent=11 // pred_fallthru
          _
        // Predicated region
        $region69: #{interaction_network_forward.5} parent=11 // pred_check
          %p588 = pneg %p484
        $region70: #{interaction_network_forward.5} parent=11 // pred_check_branch
          %590 = sbr.rel (%p588) target = $region72
        $region71: #{interaction_network_forward.5} parent=11 // pred_region
          _
        $region72: #{interaction_network_forward.5} parent=11 // pred_fallthru
          _
        // Predicated region
        $region73: #{interaction_network_forward.5} parent=11 // pred_check
          %p591 = pneg %p505
        $region74: #{interaction_network_forward.5} parent=11 // pred_check_branch
          %593 = sbr.rel (%p591) target = $region76
        $region75: #{interaction_network_forward.5} parent=11 // pred_region
          _
        $region76: #{interaction_network_forward.5} parent=11 // pred_fallthru
          _
      $region12: #{interaction_network_forward.5} parent=5 // pred_fallthru
        _
      %p594 = scmp.lt.s32.totalorder %s27, 4
      // Predicated region
      $region77: #{interaction_network_forward.5} parent=5 // pred_check
        %p595 = pneg %p594
      $region78: #{interaction_network_forward.5} parent=5 // pred_check_branch
        %597 = sbr.rel (%p595) target = $region80
      $region79: #{interaction_network_forward.5} parent=5 // pred_region
        // Predicated region
        $region81: #{interaction_network_forward.5} parent=79 // pred_check
          %p598 = pneg %p59
        $region82: #{interaction_network_forward.5} parent=79 // pred_check_branch
          %600 = sbr.rel (%p598) target = $region84
        $region83: #{interaction_network_forward.5} parent=79 // pred_region
          %s601 = smul.u32 4, %s34
          %p602 = scmp.lt.s32.totalorder %s601, 7
          %s603 = scalar_select %p602, %s601, 7
          %s604 = smul.addr %s603, 8
          %s605 = scalar_lea.vmem %s0, %s604
          %s606 = smul.u32 4, %s34
        $region84: #{interaction_network_forward.5} parent=79 // pred_fallthru
          _
        // Predicated region
        $region85: #{interaction_network_forward.5} parent=79 // pred_check
          %p607 = pneg %p85
        $region86: #{interaction_network_forward.5} parent=79 // pred_check_branch
          %609 = sbr.rel (%p607) target = $region88
        $region87: #{interaction_network_forward.5} parent=79 // pred_region
          %s610 = sand.u32 %s75, 1
          %s611 = sand.u32 %s75, 1
          %s612 = smul.addr %s611, 240
          %s613 = scalar_lea.vmem [#allocation5], %s612
          %s614 = smul.u32 20, %s35
          %s615 = smul.addr %s614, 4
          %s616 = scalar_lea.vmem %s1, %s615
          // Predicated region
          $region89: #{interaction_network_forward.5} parent=87 // pred_check
            _
          $region90: #{interaction_network_forward.5} parent=87 // pred_check_branch
            %618 = sbr.rel (0) target = $region92
          $region91: #{interaction_network_forward.5} parent=87 // pred_region
            // Predicated region
            $region93: #{interaction_network_forward.5} parent=91 // pred_check
              _
            $region94: #{interaction_network_forward.5} parent=91 // pred_check_branch
              %620 = sbr.rel target = $region96
            $region95: #{interaction_network_forward.5} parent=91 // pred_region
              // Predicated region
              $region108: #{interaction_network_forward.5} parent=95 // pred_check
                _
              $region109: #{interaction_network_forward.5} parent=95 // pred_check_branch
                %754 = sbr.rel (0) target = $region111
              $region110: #{interaction_network_forward.5} parent=95 // pred_region
                loop: start=0, step=1, limit=1
                $region112: #{interaction_network_forward.5} parent=110 // loop_pre_header
                  _
                $region113: #{interaction_network_forward.5} parent=110 // loop_header
                  %s756 = sphi 0, %s760
                  %p757 = scmp.ge.s32.totalorder %s756, 1
                  %s761 = sphi %s616, %s616
                  %s762 = sphi %s613, %s613
                $region114: #{interaction_network_forward.5} parent=110 // loop_header_branch
                  %759 = sbr.rel (%p757) target = $region118
                $region115: #{interaction_network_forward.5} parent=110 // loop_body
                  _
                $region116: #{interaction_network_forward.5} parent=110 // loop_footer
                  %s760 = sadd.s32 1, %s756
                $region117: #{interaction_network_forward.5} parent=110 // loop_footer_branch
                  %755 = sbr.rel target = $region113
                $region118: #{interaction_network_forward.5} parent=110 // loop_exit
                  _
                %s764 = ssub.s32 16, 1
                loop: start=0, step=1, limit=1
                $region119: #{interaction_network_forward.5} parent=110 // loop_pre_header
                  _
                $region120: #{interaction_network_forward.5} parent=110 // loop_header
                  %s766 = sphi 0, %s770
                  %p767 = scmp.ge.s32.totalorder %s766, 1
                  %s771 = sphi %s616, %s616
                  %s772 = sphi %s613, %s613
                $region121: #{interaction_network_forward.5} parent=110 // loop_header_branch
                  %769 = sbr.rel (%p767) target = $region125
                $region122: #{interaction_network_forward.5} parent=110 // loop_body
                  %v773 = vld [vmem:[%s771] sm:%s764]
                  %774 = vst [vmem:[%s772] sm:%s764] %v773
                  %v775 = vld [vmem:[%s771 + $0x4] sm:%s764]
                  %776 = vst [vmem:[%s772 + $0x4] sm:%s764] %v775
                  %v777 = vld [vmem:[%s771 + $0x8] sm:%s764]
                  %778 = vst [vmem:[%s772 + $0x8] sm:%s764] %v777
                  %v779 = vld [vmem:[%s771 + $0xc] sm:%s764]
                  %780 = vst [vmem:[%s772 + $0xc] sm:%s764] %v779
                  %v781 = vld [vmem:[%s771 + $0x10] sm:%s764]
                  %782 = vst [vmem:[%s772 + $0x10] sm:%s764] %v781
                  %v783 = vld [vmem:[%s771 + $0x14] sm:%s764]
                  %784 = vst [vmem:[%s772 + $0x14] sm:%s764] %v783
                  %v785 = vld [vmem:[%s771 + $0x18] sm:%s764]
                  %786 = vst [vmem:[%s772 + $0x18] sm:%s764] %v785
                  %v787 = vld [vmem:[%s771 + $0x1c] sm:%s764]
                  %788 = vst [vmem:[%s772 + $0x1c] sm:%s764] %v787
                  %v789 = vld [vmem:[%s771 + $0x20] sm:%s764]
                  %790 = vst [vmem:[%s772 + $0x20] sm:%s764] %v789
                  %v791 = vld [vmem:[%s771 + $0x24] sm:%s764]
                  %792 = vst [vmem:[%s772 + $0x24] sm:%s764] %v791
                  %v793 = vld [vmem:[%s771 + $0x28] sm:%s764]
                  %794 = vst [vmem:[%s772 + $0x28] sm:%s764] %v793
                  %v795 = vld [vmem:[%s771 + $0x2c] sm:%s764]
                  %796 = vst [vmem:[%s772 + $0x2c] sm:%s764] %v795
                  %v797 = vld [vmem:[%s771 + $0x30] sm:%s764]
                  %798 = vst [vmem:[%s772 + $0x30] sm:%s764] %v797
                  %v799 = vld [vmem:[%s771 + $0x34] sm:%s764]
                  %800 = vst [vmem:[%s772 + $0x34] sm:%s764] %v799
                  %v801 = vld [vmem:[%s771 + $0x38] sm:%s764]
                  %802 = vst [vmem:[%s772 + $0x38] sm:%s764] %v801
                  %v803 = vld [vmem:[%s771 + $0x3c] sm:%s764]
                  %804 = vst [vmem:[%s772 + $0x3c] sm:%s764] %v803
                  %v805 = vld [vmem:[%s771 + $0x40] sm:%s764]
                  %806 = vst [vmem:[%s772 + $0x40] sm:%s764] %v805
                  %v807 = vld [vmem:[%s771 + $0x44] sm:%s764]
                  %808 = vst [vmem:[%s772 + $0x44] sm:%s764] %v807
                  %v809 = vld [vmem:[%s771 + $0x48] sm:%s764]
                  %810 = vst [vmem:[%s772 + $0x48] sm:%s764] %v809
                  %v811 = vld [vmem:[%s771 + $0x4c] sm:%s764]
                  %812 = vst [vmem:[%s772 + $0x4c] sm:%s764] %v811
                  %v813 = vld [vmem:[%s771 + $0xa0] sm:%s764]
                  %814 = vst [vmem:[%s772 + $0x50] sm:%s764] %v813
                  %v815 = vld [vmem:[%s771 + $0xa4] sm:%s764]
                  %816 = vst [vmem:[%s772 + $0x54] sm:%s764] %v815
                  %v817 = vld [vmem:[%s771 + $0xa8] sm:%s764]
                  %818 = vst [vmem:[%s772 + $0x58] sm:%s764] %v817
                  %v819 = vld [vmem:[%s771 + $0xac] sm:%s764]
                  %820 = vst [vmem:[%s772 + $0x5c] sm:%s764] %v819
                  %v821 = vld [vmem:[%s771 + $0xb0] sm:%s764]
                  %822 = vst [vmem:[%s772 + $0x60] sm:%s764] %v821
                  %v823 = vld [vmem:[%s771 + $0xb4] sm:%s764]
                  %824 = vst [vmem:[%s772 + $0x64] sm:%s764] %v823
                  %v825 = vld [vmem:[%s771 + $0xb8] sm:%s764]
                  %826 = vst [vmem:[%s772 + $0x68] sm:%s764] %v825
                  %v827 = vld [vmem:[%s771 + $0xbc] sm:%s764]
                  %828 = vst [vmem:[%s772 + $0x6c] sm:%s764] %v827
                  %v829 = vld [vmem:[%s771 + $0xc0] sm:%s764]
                  %830 = vst [vmem:[%s772 + $0x70] sm:%s764] %v829
                  %v831 = vld [vmem:[%s771 + $0xc4] sm:%s764]
                  %832 = vst [vmem:[%s772 + $0x74] sm:%s764] %v831
                  %v833 = vld [vmem:[%s771 + $0xc8] sm:%s764]
                  %834 = vst [vmem:[%s772 + $0x78] sm:%s764] %v833
                  %v835 = vld [vmem:[%s771 + $0xcc] sm:%s764]
                  %836 = vst [vmem:[%s772 + $0x7c] sm:%s764] %v835
                  %v837 = vld [vmem:[%s771 + $0xd0] sm:%s764]
                  %838 = vst [vmem:[%s772 + $0x80] sm:%s764] %v837
                  %v839 = vld [vmem:[%s771 + $0xd4] sm:%s764]
                  %840 = vst [vmem:[%s772 + $0x84] sm:%s764] %v839
                  %v841 = vld [vmem:[%s771 + $0xd8] sm:%s764]
                  %842 = vst [vmem:[%s772 + $0x88] sm:%s764] %v841
                  %v843 = vld [vmem:[%s771 + $0xdc] sm:%s764]
                  %844 = vst [vmem:[%s772 + $0x8c] sm:%s764] %v843
                  %v845 = vld [vmem:[%s771 + $0xe0] sm:%s764]
                  %846 = vst [vmem:[%s772 + $0x90] sm:%s764] %v845
                  %v847 = vld [vmem:[%s771 + $0xe4] sm:%s764]
                  %848 = vst [vmem:[%s772 + $0x94] sm:%s764] %v847
                  %v849 = vld [vmem:[%s771 + $0xe8] sm:%s764]
                  %850 = vst [vmem:[%s772 + $0x98] sm:%s764] %v849
                  %v851 = vld [vmem:[%s771 + $0xec] sm:%s764]
                  %852 = vst [vmem:[%s772 + $0x9c] sm:%s764] %v851
                  %v853 = vld [vmem:[%s771 + $0x140] sm:%s764]
                  %854 = vst [vmem:[%s772 + $0xa0] sm:%s764] %v853
                  %v855 = vld [vmem:[%s771 + $0x144] sm:%s764]
                  %856 = vst [vmem:[%s772 + $0xa4] sm:%s764] %v855
                  %v857 = vld [vmem:[%s771 + $0x148] sm:%s764]
                  %858 = vst [vmem:[%s772 + $0xa8] sm:%s764] %v857
                  %v859 = vld [vmem:[%s771 + $0x14c] sm:%s764]
                  %860 = vst [vmem:[%s772 + $0xac] sm:%s764] %v859
                  %v861 = vld [vmem:[%s771 + $0x150] sm:%s764]
                  %862 = vst [vmem:[%s772 + $0xb0] sm:%s764] %v861
                  %v863 = vld [vmem:[%s771 + $0x154] sm:%s764]
                  %864 = vst [vmem:[%s772 + $0xb4] sm:%s764] %v863
                  %v865 = vld [vmem:[%s771 + $0x158] sm:%s764]
                  %866 = vst [vmem:[%s772 + $0xb8] sm:%s764] %v865
                  %v867 = vld [vmem:[%s771 + $0x15c] sm:%s764]
                  %868 = vst [vmem:[%s772 + $0xbc] sm:%s764] %v867
                  %v869 = vld [vmem:[%s771 + $0x160] sm:%s764]
                  %870 = vst [vmem:[%s772 + $0xc0] sm:%s764] %v869
                  %v871 = vld [vmem:[%s771 + $0x164] sm:%s764]
                  %872 = vst [vmem:[%s772 + $0xc4] sm:%s764] %v871
                  %v873 = vld [vmem:[%s771 + $0x168] sm:%s764]
                  %874 = vst [vmem:[%s772 + $0xc8] sm:%s764] %v873
                  %v875 = vld [vmem:[%s771 + $0x16c] sm:%s764]
                  %876 = vst [vmem:[%s772 + $0xcc] sm:%s764] %v875
                  %v877 = vld [vmem:[%s771 + $0x170] sm:%s764]
                  %878 = vst [vmem:[%s772 + $0xd0] sm:%s764] %v877
                  %v879 = vld [vmem:[%s771 + $0x174] sm:%s764]
                  %880 = vst [vmem:[%s772 + $0xd4] sm:%s764] %v879
                  %v881 = vld [vmem:[%s771 + $0x178] sm:%s764]
                  %882 = vst [vmem:[%s772 + $0xd8] sm:%s764] %v881
                  %v883 = vld [vmem:[%s771 + $0x17c] sm:%s764]
                  %884 = vst [vmem:[%s772 + $0xdc] sm:%s764] %v883
                  %v885 = vld [vmem:[%s771 + $0x180] sm:%s764]
                  %886 = vst [vmem:[%s772 + $0xe0] sm:%s764] %v885
                  %v887 = vld [vmem:[%s771 + $0x184] sm:%s764]
                  %888 = vst [vmem:[%s772 + $0xe4] sm:%s764] %v887
                  %v889 = vld [vmem:[%s771 + $0x188] sm:%s764]
                  %890 = vst [vmem:[%s772 + $0xe8] sm:%s764] %v889
                  %v891 = vld [vmem:[%s771 + $0x18c] sm:%s764]
                  %892 = vst [vmem:[%s772 + $0xec] sm:%s764] %v891
                $region123: #{interaction_network_forward.5} parent=110 // loop_footer
                  %s770 = sadd.s32 1, %s766
                $region124: #{interaction_network_forward.5} parent=110 // loop_footer_branch
                  %765 = sbr.rel target = $region120
                $region125: #{interaction_network_forward.5} parent=110 // loop_exit
                  _
              $region111: #{interaction_network_forward.5} parent=95 // pred_fallthru
                _
            $region96: #{interaction_network_forward.5} parent=91 // pred_fallthru
              _
            // Predicated region
            $region97: #{interaction_network_forward.5} parent=91 // pred_check
              _
            $region98: #{interaction_network_forward.5} parent=91 // pred_check_branch
              %622 = sbr.rel (0) target = $region100
            $region99: #{interaction_network_forward.5} parent=91 // pred_region
              %s624 = ssub.s32 16, 1
              loop: start=0, step=1, limit=1
              $region101: #{interaction_network_forward.5} parent=99 // loop_pre_header
                _
              $region102: #{interaction_network_forward.5} parent=99 // loop_header
                %s626 = sphi 0, %s630
                %p627 = scmp.ge.s32.totalorder %s626, 1
                %s631 = sphi %s616, %s616
                %s632 = sphi %s613, %s613
              $region103: #{interaction_network_forward.5} parent=99 // loop_header_branch
                %629 = sbr.rel (%p627) target = $region107
              $region104: #{interaction_network_forward.5} parent=99 // loop_body
                %v633 = vld [vmem:[%s631] sm:%s624]
                %634 = vst [vmem:[%s632] sm:%s624] %v633
                %v635 = vld [vmem:[%s631 + $0x4] sm:%s624]
                %636 = vst [vmem:[%s632 + $0x4] sm:%s624] %v635
                %v637 = vld [vmem:[%s631 + $0x8] sm:%s624]
                %638 = vst [vmem:[%s632 + $0x8] sm:%s624] %v637
                %v639 = vld [vmem:[%s631 + $0xc] sm:%s624]
                %640 = vst [vmem:[%s632 + $0xc] sm:%s624] %v639
                %v641 = vld [vmem:[%s631 + $0x10] sm:%s624]
                %642 = vst [vmem:[%s632 + $0x10] sm:%s624] %v641
                %v643 = vld [vmem:[%s631 + $0x14] sm:%s624]
                %644 = vst [vmem:[%s632 + $0x14] sm:%s624] %v643
                %v645 = vld [vmem:[%s631 + $0x18] sm:%s624]
                %646 = vst [vmem:[%s632 + $0x18] sm:%s624] %v645
                %v647 = vld [vmem:[%s631 + $0x1c] sm:%s624]
                %648 = vst [vmem:[%s632 + $0x1c] sm:%s624] %v647
                %v649 = vld [vmem:[%s631 + $0x20] sm:%s624]
                %650 = vst [vmem:[%s632 + $0x20] sm:%s624] %v649
                %v651 = vld [vmem:[%s631 + $0x24] sm:%s624]
                %652 = vst [vmem:[%s632 + $0x24] sm:%s624] %v651
                %v653 = vld [vmem:[%s631 + $0x28] sm:%s624]
                %654 = vst [vmem:[%s632 + $0x28] sm:%s624] %v653
                %v655 = vld [vmem:[%s631 + $0x2c] sm:%s624]
                %656 = vst [vmem:[%s632 + $0x2c] sm:%s624] %v655
                %v657 = vld [vmem:[%s631 + $0x30] sm:%s624]
                %658 = vst [vmem:[%s632 + $0x30] sm:%s624] %v657
                %v659 = vld [vmem:[%s631 + $0x34] sm:%s624]
                %660 = vst [vmem:[%s632 + $0x34] sm:%s624] %v659
                %v661 = vld [vmem:[%s631 + $0x38] sm:%s624]
                %662 = vst [vmem:[%s632 + $0x38] sm:%s624] %v661
                %v663 = vld [vmem:[%s631 + $0x3c] sm:%s624]
                %664 = vst [vmem:[%s632 + $0x3c] sm:%s624] %v663
                %v665 = vld [vmem:[%s631 + $0x40] sm:%s624]
                %666 = vst [vmem:[%s632 + $0x40] sm:%s624] %v665
                %v667 = vld [vmem:[%s631 + $0x44] sm:%s624]
                %668 = vst [vmem:[%s632 + $0x44] sm:%s624] %v667
                %v669 = vld [vmem:[%s631 + $0x48] sm:%s624]
                %670 = vst [vmem:[%s632 + $0x48] sm:%s624] %v669
                %v671 = vld [vmem:[%s631 + $0x4c] sm:%s624]
                %672 = vst [vmem:[%s632 + $0x4c] sm:%s624] %v671
                %v673 = vld [vmem:[%s631 + $0xa0] sm:%s624]
                %674 = vst [vmem:[%s632 + $0x50] sm:%s624] %v673
                %v675 = vld [vmem:[%s631 + $0xa4] sm:%s624]
                %676 = vst [vmem:[%s632 + $0x54] sm:%s624] %v675
                %v677 = vld [vmem:[%s631 + $0xa8] sm:%s624]
                %678 = vst [vmem:[%s632 + $0x58] sm:%s624] %v677
                %v679 = vld [vmem:[%s631 + $0xac] sm:%s624]
                %680 = vst [vmem:[%s632 + $0x5c] sm:%s624] %v679
                %v681 = vld [vmem:[%s631 + $0xb0] sm:%s624]
                %682 = vst [vmem:[%s632 + $0x60] sm:%s624] %v681
                %v683 = vld [vmem:[%s631 + $0xb4] sm:%s624]
                %684 = vst [vmem:[%s632 + $0x64] sm:%s624] %v683
                %v685 = vld [vmem:[%s631 + $0xb8] sm:%s624]
                %686 = vst [vmem:[%s632 + $0x68] sm:%s624] %v685
                %v687 = vld [vmem:[%s631 + $0xbc] sm:%s624]
                %688 = vst [vmem:[%s632 + $0x6c] sm:%s624] %v687
                %v689 = vld [vmem:[%s631 + $0xc0] sm:%s624]
                %690 = vst [vmem:[%s632 + $0x70] sm:%s624] %v689
                %v691 = vld [vmem:[%s631 + $0xc4] sm:%s624]
                %692 = vst [vmem:[%s632 + $0x74] sm:%s624] %v691
                %v693 = vld [vmem:[%s631 + $0xc8] sm:%s624]
                %694 = vst [vmem:[%s632 + $0x78] sm:%s624] %v693
                %v695 = vld [vmem:[%s631 + $0xcc] sm:%s624]
                %696 = vst [vmem:[%s632 + $0x7c] sm:%s624] %v695
                %v697 = vld [vmem:[%s631 + $0xd0] sm:%s624]
                %698 = vst [vmem:[%s632 + $0x80] sm:%s624] %v697
                %v699 = vld [vmem:[%s631 + $0xd4] sm:%s624]
                %700 = vst [vmem:[%s632 + $0x84] sm:%s624] %v699
                %v701 = vld [vmem:[%s631 + $0xd8] sm:%s624]
                %702 = vst [vmem:[%s632 + $0x88] sm:%s624] %v701
                %v703 = vld [vmem:[%s631 + $0xdc] sm:%s624]
                %704 = vst [vmem:[%s632 + $0x8c] sm:%s624] %v703
                %v705 = vld [vmem:[%s631 + $0xe0] sm:%s624]
                %706 = vst [vmem:[%s632 + $0x90] sm:%s624] %v705
                %v707 = vld [vmem:[%s631 + $0xe4] sm:%s624]
                %708 = vst [vmem:[%s632 + $0x94] sm:%s624] %v707
                %v709 = vld [vmem:[%s631 + $0xe8] sm:%s624]
                %710 = vst [vmem:[%s632 + $0x98] sm:%s624] %v709
                %v711 = vld [vmem:[%s631 + $0xec] sm:%s624]
                %712 = vst [vmem:[%s632 + $0x9c] sm:%s624] %v711
                %v713 = vld [vmem:[%s631 + $0x140] sm:%s624]
                %714 = vst [vmem:[%s632 + $0xa0] sm:%s624] %v713
                %v715 = vld [vmem:[%s631 + $0x144] sm:%s624]
                %716 = vst [vmem:[%s632 + $0xa4] sm:%s624] %v715
                %v717 = vld [vmem:[%s631 + $0x148] sm:%s624]
                %718 = vst [vmem:[%s632 + $0xa8] sm:%s624] %v717
                %v719 = vld [vmem:[%s631 + $0x14c] sm:%s624]
                %720 = vst [vmem:[%s632 + $0xac] sm:%s624] %v719
                %v721 = vld [vmem:[%s631 + $0x150] sm:%s624]
                %722 = vst [vmem:[%s632 + $0xb0] sm:%s624] %v721
                %v723 = vld [vmem:[%s631 + $0x154] sm:%s624]
                %724 = vst [vmem:[%s632 + $0xb4] sm:%s624] %v723
                %v725 = vld [vmem:[%s631 + $0x158] sm:%s624]
                %726 = vst [vmem:[%s632 + $0xb8] sm:%s624] %v725
                %v727 = vld [vmem:[%s631 + $0x15c] sm:%s624]
                %728 = vst [vmem:[%s632 + $0xbc] sm:%s624] %v727
                %v729 = vld [vmem:[%s631 + $0x160] sm:%s624]
                %730 = vst [vmem:[%s632 + $0xc0] sm:%s624] %v729
                %v731 = vld [vmem:[%s631 + $0x164] sm:%s624]
                %732 = vst [vmem:[%s632 + $0xc4] sm:%s624] %v731
                %v733 = vld [vmem:[%s631 + $0x168] sm:%s624]
                %734 = vst [vmem:[%s632 + $0xc8] sm:%s624] %v733
                %v735 = vld [vmem:[%s631 + $0x16c] sm:%s624]
                %736 = vst [vmem:[%s632 + $0xcc] sm:%s624] %v735
                %v737 = vld [vmem:[%s631 + $0x170] sm:%s624]
                %738 = vst [vmem:[%s632 + $0xd0] sm:%s624] %v737
                %v739 = vld [vmem:[%s631 + $0x174] sm:%s624]
                %740 = vst [vmem:[%s632 + $0xd4] sm:%s624] %v739
                %v741 = vld [vmem:[%s631 + $0x178] sm:%s624]
                %742 = vst [vmem:[%s632 + $0xd8] sm:%s624] %v741
                %v743 = vld [vmem:[%s631 + $0x17c] sm:%s624]
                %744 = vst [vmem:[%s632 + $0xdc] sm:%s624] %v743
                %v745 = vld [vmem:[%s631 + $0x180] sm:%s624]
                %746 = vst [vmem:[%s632 + $0xe0] sm:%s624] %v745
                %v747 = vld [vmem:[%s631 + $0x184] sm:%s624]
                %748 = vst [vmem:[%s632 + $0xe4] sm:%s624] %v747
                %v749 = vld [vmem:[%s631 + $0x188] sm:%s624]
                %750 = vst [vmem:[%s632 + $0xe8] sm:%s624] %v749
                %v751 = vld [vmem:[%s631 + $0x18c] sm:%s624]
                %752 = vst [vmem:[%s632 + $0xec] sm:%s624] %v751
              $region105: #{interaction_network_forward.5} parent=99 // loop_footer
                %s630 = sadd.s32 1, %s626
              $region106: #{interaction_network_forward.5} parent=99 // loop_footer_branch
                %625 = sbr.rel target = $region102
              $region107: #{interaction_network_forward.5} parent=99 // loop_exit
                _
            $region100: #{interaction_network_forward.5} parent=91 // pred_fallthru
              _
          $region92: #{interaction_network_forward.5} parent=87 // pred_fallthru
            _
          %893 = vnop
        $region88: #{interaction_network_forward.5} parent=79 // pred_fallthru
          _
        // Predicated region
        $region126: #{interaction_network_forward.5} parent=79 // pred_check
          %p894 = pneg %p111
        $region127: #{interaction_network_forward.5} parent=79 // pred_check_branch
          %896 = sbr.rel (%p894) target = $region129
        $region128: #{interaction_network_forward.5} parent=79 // pred_region
          %p897 = scmp.lt.s32.totalorder %s35, 1
          %s898 = scalar_select %p897, %s35, 1
          %s899 = smul.addr %s898, 2
          %s900 = smul.addr %s899, 4
          %s901 = scalar_lea.vmem %s2, %s900
        $region129: #{interaction_network_forward.5} parent=79 // pred_fallthru
          _
        // Predicated region
        $region130: #{interaction_network_forward.5} parent=79 // pred_check
          %p902 = pneg %p137
        $region131: #{interaction_network_forward.5} parent=79 // pred_check_branch
          %904 = sbr.rel (%p902) target = $region133
        $region132: #{interaction_network_forward.5} parent=79 // pred_region
          %s905 = smul.u32 4, %s35
          %p906 = scmp.lt.s32.totalorder %s905, 7
          %s907 = scalar_select %p906, %s905, 7
          %s908 = smul.addr %s907, 4
          %s909 = scalar_lea.vmem %s3, %s908
          %s910 = smul.u32 4, %s35
        $region133: #{interaction_network_forward.5} parent=79 // pred_fallthru
          _
        // Predicated region
        $region134: #{interaction_network_forward.5} parent=79 // pred_check
          %p911 = pneg %p163
        $region135: #{interaction_network_forward.5} parent=79 // pred_check_branch
          %913 = sbr.rel (%p911) target = $region137
        $region136: #{interaction_network_forward.5} parent=79 // pred_region
          %p914 = scmp.lt.s32.totalorder %s35, 1
          %s915 = scalar_select %p914, %s35, 1
          %s916 = smul.addr %s915, 4
          %s917 = scalar_lea.vmem %s4, %s916
        $region137: #{interaction_network_forward.5} parent=79 // pred_fallthru
          _
      $region80: #{interaction_network_forward.5} parent=5 // pred_fallthru
        _
      %p918 = scmp.le.s32.totalorder 1, %s27
      %p919 = scmp.lt.s32.totalorder %s27, 5
      %p920 = pnand %p918, %p919
      %p921 = pneg %p920
      // Predicated region
      $region138: #{interaction_network_forward.5} parent=5 // pred_check
        _
      $region139: #{interaction_network_forward.5} parent=5 // pred_check_branch
        %923 = sbr.rel (%p920) target = $region141
      $region140: #{interaction_network_forward.5} parent=5 // pred_region
        %s924 = ssub.s32 %s27, 1
        %s925 = sand.u32 %s78, 1
        %s926 = sand.u32 %s78, 1
        %s927 = smul.addr %s926, 240
        %s928 = scalar_lea.vmem [#allocation5], %s927
        // Predicated region
        $region142: #{interaction_network_forward.5} parent=140 // pred_check
          %p929 = pneg %p91
        $region143: #{interaction_network_forward.5} parent=140 // pred_check_branch
          %931 = sbr.rel (%p929) target = $region145
        $region144: #{interaction_network_forward.5} parent=140 // pred_region
          _
        $region145: #{interaction_network_forward.5} parent=140 // pred_fallthru
          _
        %s932 = smul.u32 4, %s36
        %p933 = scmp.lt.s32.totalorder %s932, 7
        %s934 = scalar_select %p933, %s932, 7
        %s935 = smul.addr %s934, 8
        %s936 = scalar_lea.vmem %s0, %s935
        %p937 = pneg %p65
        %p938 = pneg %p62
        %s939 = sand.u32 %s78, 1
        %s940 = sand.u32 %s78, 1
        %s941 = smul.addr %s940, 240
        %s942 = scalar_lea.vmem [#allocation5], %s941
        %p943 = pneg %p91
        %p944 = pneg %p88
        %p945 = scmp.lt.s32.totalorder %s37, 1
        %s946 = scalar_select %p945, %s37, 1
        %s947 = smul.addr %s946, 2
        %s948 = smul.addr %s947, 4
        %s949 = scalar_lea.vmem %s2, %s948
        %p950 = pneg %p117
        %p951 = pneg %p114
        %s952 = smul.u32 4, %s37
        %p953 = scmp.lt.s32.totalorder %s952, 7
        %s954 = scalar_select %p953, %s952, 7
        %s955 = smul.addr %s954, 4
        %s956 = scalar_lea.vmem %s3, %s955
        %p957 = pneg %p143
        %p958 = pneg %p140
        %p959 = scmp.lt.s32.totalorder %s37, 1
        %s960 = scalar_select %p959, %s37, 1
        %s961 = smul.addr %s960, 4
        %s962 = scalar_lea.vmem %s4, %s961
        %p963 = pneg %p169
        %p964 = pneg %p166
        %p965 = pneg %p190
        %p966 = pneg %p187
        %p967 = pneg %p211
        %p968 = pneg %p208
        %p969 = pneg %p232
        %p970 = pneg %p229
        %p971 = pneg %p253
        %p972 = pneg %p250
        %p973 = pneg %p274
        %p974 = pneg %p271
        %p975 = pneg %p295
        %p976 = pneg %p292
        %p977 = pneg %p316
        %p978 = pneg %p313
        %p979 = pneg %p337
        %p980 = pneg %p334
        %p981 = pneg %p358
        %p982 = pneg %p355
        %p983 = pneg %p379
        %p984 = pneg %p376
        %p985 = pneg %p400
        %p986 = pneg %p397
        %p987 = pneg %p421
        %p988 = pneg %p418
        %p989 = pneg %p442
        %p990 = pneg %p439
        %p991 = pneg %p463
        %p992 = pneg %p460
        %p993 = pneg %p484
        %p994 = pneg %p481
        %p995 = pneg %p505
        %p996 = pneg %p502
        %p997 = pneg %p531
        %p998 = pneg %p528
        %s999 = smul.u32 4, %s36
        %p1000 = scmp.lt.s32.totalorder %s999, 7
        %s1001 = scalar_select %p1000, %s999, 7
        %s1002 = smul.addr %s1001, 8
        %s1003 = scalar_lea.vmem %s21, %s1002
        %s1004 = smul.u32 4, %s36
        %p1005 = scmp.lt.s32.totalorder %s1004, 7
        %s1006 = scalar_select %p1005, %s1004, 7
        %s1007 = smul.addr %s1006, 8
        %s1008 = scalar_lea.vmem %s0, %s1007
        %s1009 = smul.u32 4, %s36
        %s1010 = smul.u32 20, %s37
        %p1011 = scmp.lt.s32.totalorder %s37, 1
        %s1012 = scalar_select %p1011, %s37, 1
        %s1013 = smul.addr %s1012, 2
        %s1014 = smul.addr %s1013, 4
        %s1015 = scalar_lea.vmem %s2, %s1014
        %s1016 = smul.u32 4, %s37
        %p1017 = scmp.lt.s32.totalorder %s1016, 7
        %s1018 = scalar_select %p1017, %s1016, 7
        %s1019 = smul.addr %s1018, 4
        %s1020 = scalar_lea.vmem %s3, %s1019
        %s1021 = smul.u32 4, %s37
        %p1022 = scmp.lt.s32.totalorder %s37, 1
        %s1023 = scalar_select %p1022, %s37, 1
        %s1024 = smul.addr %s1023, 4
        %s1025 = scalar_lea.vmem %s4, %s1024
        %s1026 = smul.u32 4, %s36
        %p1027 = scmp.lt.s32.totalorder %s1026, 7
        %s1028 = scalar_select %p1027, %s1026, 7
        %s1029 = smul.addr %s1028, 8
        %s1030 = scalar_lea.vmem %s21, %s1029
        %s1031 = smul.u32 4, %s36
        %p1033 = scmp.lt.s32.totalorder %s36, 1
        %p1034 = scmp.ge.s32.totalorder %s36, 1
        %p1035 = scmp.eq.s32.totalorder %s37, 1
        %s1036 = smul.u32 %s36, 32
        %p1037 = scmp.eq.s32.totalorder %s37, 0
        // Predicated region
        $region146: #{interaction_network_forward.5} parent=140 // pred_check
          %p1038 = pneg %p1037
        $region147: #{interaction_network_forward.5} parent=140 // pred_check_branch
          %1040 = sbr.rel (%p1038) target = $region149
        $region148: #{interaction_network_forward.5} parent=140 // pred_region
          %vm1041 = vcmask 261120
          %1042 = vst.msk [vmem:[#allocation2] sm:$0xff] %vm1041, 0.0
          %1043 = vst.msk [vmem:[#allocation2 + $0x8] sm:$0xff] %vm1041, 0.0
          %1044 = vst.msk [vmem:[#allocation2 + $0x10] sm:$0xff] %vm1041, 0.0
          %1045 = vst.msk [vmem:[#allocation2 + $0x18] sm:$0xff] %vm1041, 0.0
          %1046 = vst.msk [vmem:[#allocation3] sm:$0xff] %vm1041, 0.0
          %1047 = vst.msk [vmem:[#allocation3 + $0x8] sm:$0xff] %vm1041, 0.0
          %1048 = vst.msk [vmem:[#allocation3 + $0x10] sm:$0xff] %vm1041, 0.0
          %1049 = vst.msk [vmem:[#allocation3 + $0x18] sm:$0xff] %vm1041, 0.0
          %vm1050 = vcmask 130048
          %1051 = vst.msk [vmem:[#allocation4] sm:$0xff] %vm1050, 0.0
          %1052 = vst.msk [vmem:[#allocation4 + $0x8] sm:$0xff] %vm1050, 0.0
          %1053 = vst.msk [vmem:[#allocation4 + $0x10] sm:$0xff] %vm1050, 0.0
          %1054 = vst.msk [vmem:[#allocation4 + $0x18] sm:$0xff] %vm1050, 0.0
        $region149: #{interaction_network_forward.5} parent=140 // pred_fallthru
          _
        %v1055 = vlaneseq
        %v1056 = vshrl.u32 %v1055, 7
        %v1057 = vadd.s32 %v1056, 8
        %v1058 = vadd.s32 %v1056, 16
        %v1059 = vadd.s32 %v1056, 24
        %v1060 = vstv %s1036
        %v1061 = vadd.s32 %v1060, %v1056
        %v1062 = vadd.s32 %v1060, %v1057
        %v1063 = vadd.s32 %v1060, %v1058
        %v1064 = vadd.s32 %v1060, %v1059
        %v1065 = vld [vmem:[%s1015] sm:$0x77]
        // Predicated region
        $region150: #{interaction_network_forward.5} parent=140 // pred_check
          %p1066 = pneg %p1033
        $region151: #{interaction_network_forward.5} parent=140 // pred_check_branch
          %1068 = sbr.rel (%p1066) target = $region153
        $region152: #{interaction_network_forward.5} parent=140 // pred_region
          %v1069 = vlaneseq
          %v1070 = vshrl.u32 %v1069, 7
          %v1071 = vsub.s32 0, %v1070
          %v1072 = vrot.slane %v1065, %v1071
          %v1073 = vlaneseq
          %v1074 = vshrl.u32 %v1073, 7
          %v1075 = vsub.s32 4, %v1074
          %v1076 = vrot.slane %v1065, %v1075
          %v1077 = vlaneseq
          %v1078 = vshrl.u32 %v1077, 7
          %v1079 = vsub.s32 0, %v1078
          %v1080 = vrot.slane %v1072, %v1079
          %v1081 = vlaneseq
          %v1082 = vshrl.u32 %v1081, 7
          %v1083 = vsub.s32 0, %v1082
          %v1084 = vrot.slane %v1076, %v1083
          %vm1085 = vcmp.eq.s32.totalorder %v1061, %v1080
          %vm1086 = vcmp.eq.s32.totalorder %v1061, %v1084
          %vm1087 = vcmp.eq.s32.totalorder %v1062, %v1080
          %vm1088 = vcmp.eq.s32.totalorder %v1062, %v1084
          %vm1089 = vcmp.eq.s32.totalorder %v1063, %v1080
          %vm1090 = vcmp.eq.s32.totalorder %v1063, %v1084
          %vm1091 = vcmp.eq.s32.totalorder %v1064, %v1080
          %vm1092 = vcmp.eq.s32.totalorder %v1064, %v1084
          %v1093 = vsel %vm1085, 1, 0
          %v1094 = vsel %vm1086, 1, 0
          %v1095 = vsel %vm1087, 1, 0
          %v1096 = vsel %vm1088, 1, 0
          %v1097 = vsel %vm1089, 1, 0
          %v1098 = vsel %vm1090, 1, 0
          %v1099 = vsel %vm1091, 1, 0
          %v1100 = vsel %vm1092, 1, 0
          %v1101 = vcvt.s32.f32 %v1093
          %v1102 = vcvt.s32.f32 %v1094
          %v1103 = vcvt.s32.f32 %v1095
          %v1104 = vcvt.s32.f32 %v1096
          %v1105 = vcvt.s32.f32 %v1097
          %v1106 = vcvt.s32.f32 %v1098
          %v1107 = vcvt.s32.f32 %v1099
          %v1108 = vcvt.s32.f32 %v1100
          %v1109 = vpack.c.bf16 %v1103, %v1101
          %v1110 = vpack.c.bf16 %v1104, %v1102
          %v1111 = vpack.c.bf16 %v1107, %v1105
          %v1112 = vpack.c.bf16 %v1108, %v1106
          %v1113 = vlaneseq
          %v1114 = vshrl.u32 %v1113, 7
          %v1115 = vsub.s32 2, %v1114
          %v1116 = vrot.slane %v1065, %v1115
          %v1117 = vlaneseq
          %v1118 = vshrl.u32 %v1117, 7
          %v1119 = vsub.s32 6, %v1118
          %v1120 = vrot.slane %v1065, %v1119
          %v1121 = vlaneseq
          %v1122 = vshrl.u32 %v1121, 7
          %v1123 = vsub.s32 2, %v1122
          %v1124 = vrot.slane %v1116, %v1123
          %v1125 = vlaneseq
          %v1126 = vshrl.u32 %v1125, 7
          %v1127 = vsub.s32 2, %v1126
          %v1128 = vrot.slane %v1120, %v1127
          %vm1129 = vcmp.eq.s32.totalorder %v1061, %v1124
          %vm1130 = vcmp.eq.s32.totalorder %v1061, %v1128
          %vm1131 = vcmp.eq.s32.totalorder %v1062, %v1124
          %vm1132 = vcmp.eq.s32.totalorder %v1062, %v1128
          %vm1133 = vcmp.eq.s32.totalorder %v1063, %v1124
          %vm1134 = vcmp.eq.s32.totalorder %v1063, %v1128
          %vm1135 = vcmp.eq.s32.totalorder %v1064, %v1124
          %vm1136 = vcmp.eq.s32.totalorder %v1064, %v1128
          %v1137 = vsel %vm1129, 1, 0
          %v1138 = vsel %vm1130, 1, 0
          %v1139 = vsel %vm1131, 1, 0
          %v1140 = vsel %vm1132, 1, 0
          %v1141 = vsel %vm1133, 1, 0
          %v1142 = vsel %vm1134, 1, 0
          %v1143 = vsel %vm1135, 1, 0
          %v1144 = vsel %vm1136, 1, 0
          %v1145 = vcvt.s32.f32 %v1137
          %v1146 = vcvt.s32.f32 %v1138
          %v1147 = vcvt.s32.f32 %v1139
          %v1148 = vcvt.s32.f32 %v1140
          %v1149 = vcvt.s32.f32 %v1141
          %v1150 = vcvt.s32.f32 %v1142
          %v1151 = vcvt.s32.f32 %v1143
          %v1152 = vcvt.s32.f32 %v1144
          %v1153 = vpack.c.bf16 %v1147, %v1145
          %v1154 = vpack.c.bf16 %v1148, %v1146
          %v1155 = vpack.c.bf16 %v1151, %v1149
          %v1156 = vpack.c.bf16 %v1152, %v1150
          %v1157 = vld [vmem:[#allocation2] sm:$0xff]
          %v1158 = vld [vmem:[#allocation2 + $0x8] sm:$0xff]
          %v1159 = vld [vmem:[#allocation2 + $0x10] sm:$0xff]
          %v1160 = vld [vmem:[#allocation2 + $0x18] sm:$0xff]
          %v1161 = vld [vmem:[%s928] sm:$0xf]
          %v1162 = vld [vmem:[%s928 + $0x4] sm:$0xf]
          %v1163 = vld [vmem:[%s928 + $0x8] sm:$0xf]
          %v1164 = vld [vmem:[%s928 + $0xc] sm:$0xf]
          %v1165 = vld [vmem:[%s928 + $0x10] sm:$0xf]
          %v1166 = vld [vmem:[%s928 + $0x14] sm:$0xf]
          %v1167 = vld [vmem:[%s928 + $0x18] sm:$0xf]
          %v1168 = vld [vmem:[%s928 + $0x1c] sm:$0xf]
          %v1169 = vld [vmem:[%s928 + $0x20] sm:$0xf]
          %v1170 = vld [vmem:[%s928 + $0x24] sm:$0xf]
          %v1171 = vld [vmem:[%s928 + $0x28] sm:$0xf]
          %v1172 = vld [vmem:[%s928 + $0x2c] sm:$0xf]
          %v1173 = vld [vmem:[%s928 + $0x30] sm:$0xf]
          %v1174 = vld [vmem:[%s928 + $0x34] sm:$0xf]
          %v1175 = vld [vmem:[%s928 + $0x38] sm:$0xf]
          %v1176 = vld [vmem:[%s928 + $0x3c] sm:$0xf]
          %v1177 = vld [vmem:[%s928 + $0x40] sm:$0xf]
          %v1178 = vld [vmem:[%s928 + $0x44] sm:$0xf]
          %v1179 = vld [vmem:[%s928 + $0x48] sm:$0xf]
          %v1180 = vld [vmem:[%s928 + $0x4c] sm:$0xf]
          %v1201 = vunpack.c.l.b16 %v1161
          %v1202 = vunpack.c.l.b16 %v1162
          %v1203 = vunpack.c.l.b16 %v1163
          %v1204 = vunpack.c.l.b16 %v1164
          %v1205 = vunpack.c.l.b16 %v1165
          %v1206 = vunpack.c.l.b16 %v1166
          %v1207 = vunpack.c.l.b16 %v1167
          %v1208 = vunpack.c.l.b16 %v1168
          %v1209 = vunpack.c.l.b16 %v1169
          %v1210 = vunpack.c.l.b16 %v1170
          %v1211 = vunpack.c.l.b16 %v1171
          %v1212 = vunpack.c.l.b16 %v1172
          %v1213 = vunpack.c.l.b16 %v1173
          %v1214 = vunpack.c.l.b16 %v1174
          %v1215 = vunpack.c.l.b16 %v1175
          %v1216 = vunpack.c.l.b16 %v1176
          %v1217 = vunpack.c.l.b16 %v1177
          %v1218 = vunpack.c.l.b16 %v1178
          %v1219 = vunpack.c.l.b16 %v1179
          %v1220 = vunpack.c.l.b16 %v1180
          %v1221 = vpack.c.b16 %v1202, %v1201
          %v1222 = vpack.c.b16 %v1204, %v1203
          %v1223 = vpack.c.b16 %v1206, %v1205
          %v1224 = vpack.c.b16 %v1208, %v1207
          %v1225 = vpack.c.b16 %v1210, %v1209
          %v1226 = vpack.c.b16 %v1212, %v1211
          %v1227 = vpack.c.b16 %v1214, %v1213
          %v1228 = vpack.c.b16 %v1216, %v1215
          %v1229 = vpack.c.b16 %v1218, %v1217
          %v1230 = vpack.c.b16 %v1220, %v1219
          %vm1241 = vcmask 261120
          %v1243 = vsel %vm1241, %v1110, 0
          %v1246 = vsel %vm1241, %v1112, 0
          %1248 = vmatprep.subr.bf16.mxu0 0
          %1249 = vmatpush1.bf16.msra.mxu0 %v1228
          %1250 = vmatprep.subr.bf16.mxu0 0
          %1251 = vmatpush1.bf16.msra.mxu0 %v1227
          %1252 = vmatprep.subr.bf16.mxu0 0
          %1253 = vmatpush1.bf16.msra.mxu0 %v1226
          %1254 = vmatprep.subr.bf16.mxu0 0
          %1255 = vmatpush1.bf16.msra.mxu0 %v1225
          %1256 = vmatprep.subr.bf16.mxu0 0
          %1257 = vmatpush1.bf16.msra.mxu0 %v1224
          %1258 = vmatprep.subr.bf16.mxu0 0
          %1259 = vmatpush1.bf16.msra.mxu0 %v1223
          %1260 = vmatprep.subr.bf16.mxu0 0
          %1261 = vmatpush1.bf16.msra.mxu0 %v1222
          %1262 = vmatprep.subr.bf16.mxu0 0
          %1263 = vmatpush1.bf16.msra.mxu0 %v1221
          %1264 = vmatprep.subr.bf16.mxu0 0
          %1265 = vmatpush2.bf16.msra.mxu0 0
          %1266 = vmatprep.subr.bf16.mxu0 0
          %1267 = vmatpush2.bf16.msra.mxu0 0
          %1268 = vmatprep.subr.bf16.mxu0 0
          %1269 = vmatpush2.bf16.msra.mxu0 0
          %1270 = vmatprep.subr.bf16.mxu0 0
          %1271 = vmatpush2.bf16.msra.mxu0 0
          %1272 = vmatprep.subr.bf16.mxu0 0
          %1273 = vmatpush2.bf16.msra.mxu0 0
          %1274 = vmatprep.subr.bf16.mxu0 0
          %1275 = vmatpush2.bf16.msra.mxu0 0
          %1276 = vmatprep.subr.bf16.mxu0 0
          %1277 = vmatpush2.bf16.msra.mxu0 %v1230
          %1278 = vmatprep.subr.bf16.mxu0 0
          %1279 = vmatpush2.bf16.msra.mxu0 %v1229
          %1280 = vmatprep.mubr.bf16.mxu0 %v1243
          %1281 = vmatmul.mubr.bf16.gmra.mxu0 %v1109
          %v1282 = vpop.f32.mrf.mxu0
          %v1283 = vadd.f32 0.0, %v1282
          %v1284 = vpop.f32.mrf.mxu0
          %v1285 = vpop.f32.mrf.mxu0
          %v1286 = vadd.f32 0.0, %v1285
          %v1287 = vpop.f32.mrf.mxu0
          %1288 = vmatprep.mubr.bf16.mxu0 %v1246
          %1289 = vmatmul.mubr.bf16.gmra.mxu0 %v1111
          %v1290 = vpop.f32.mrf.mxu0
          %v1291 = vadd.f32 0.0, %v1290
          %v1292 = vpop.f32.mrf.mxu0
          %v1293 = vpop.f32.mrf.mxu0
          %v1294 = vadd.f32 0.0, %v1293
          %v1295 = vpop.f32.mrf.mxu0
          %1296 = vdwg.mxu0
          %v1297 = vadd.f32 %v1157, %v1283
          %v1298 = vadd.f32 %v1158, %v1286
          %v1299 = vadd.f32 %v1159, %v1291
          %v1300 = vadd.f32 %v1160, %v1294
          %1301 = vst.msk [vmem:[#allocation2] sm:$0xff] %vm1241, %v1297
          %1302 = vst.msk [vmem:[#allocation2 + $0x8] sm:$0xff] %vm1241, %v1298
          %1303 = vst.msk [vmem:[#allocation2 + $0x10] sm:$0xff] %vm1241, %v1299
          %1304 = vst.msk [vmem:[#allocation2 + $0x18] sm:$0xff] %vm1241, %v1300
          %v1305 = vld [vmem:[#allocation3] sm:$0xff]
          %v1306 = vld [vmem:[#allocation3 + $0x8] sm:$0xff]
          %v1307 = vld [vmem:[#allocation3 + $0x10] sm:$0xff]
          %v1308 = vld [vmem:[#allocation3 + $0x18] sm:$0xff]
          %s1309 = scalar_lea.vmem %s928, 160 [#allocation5]
          %v1310 = vld [vmem:[%s1309] sm:$0xf]
          %v1311 = vld [vmem:[%s1309 + $0x4] sm:$0xf]
          %v1312 = vld [vmem:[%s1309 + $0x8] sm:$0xf]
          %v1313 = vld [vmem:[%s1309 + $0xc] sm:$0xf]
          %v1314 = vld [vmem:[%s1309 + $0x10] sm:$0xf]
          %v1315 = vld [vmem:[%s1309 + $0x14] sm:$0xf]
          %v1316 = vld [vmem:[%s1309 + $0x18] sm:$0xf]
          %v1317 = vld [vmem:[%s1309 + $0x1c] sm:$0xf]
          %v1318 = vld [vmem:[%s1309 + $0x20] sm:$0xf]
          %v1319 = vld [vmem:[%s1309 + $0x24] sm:$0xf]
          %v1320 = vld [vmem:[%s1309 + $0x28] sm:$0xf]
          %v1321 = vld [vmem:[%s1309 + $0x2c] sm:$0xf]
          %v1322 = vld [vmem:[%s1309 + $0x30] sm:$0xf]
          %v1323 = vld [vmem:[%s1309 + $0x34] sm:$0xf]
          %v1324 = vld [vmem:[%s1309 + $0x38] sm:$0xf]
          %v1325 = vld [vmem:[%s1309 + $0x3c] sm:$0xf]
          %v1326 = vld [vmem:[%s1309 + $0x40] sm:$0xf]
          %v1327 = vld [vmem:[%s1309 + $0x44] sm:$0xf]
          %v1328 = vld [vmem:[%s1309 + $0x48] sm:$0xf]
          %v1329 = vld [vmem:[%s1309 + $0x4c] sm:$0xf]
          %v1350 = vunpack.c.l.b16 %v1310
          %v1351 = vunpack.c.l.b16 %v1311
          %v1352 = vunpack.c.l.b16 %v1312
          %v1353 = vunpack.c.l.b16 %v1313
          %v1354 = vunpack.c.l.b16 %v1314
          %v1355 = vunpack.c.l.b16 %v1315
          %v1356 = vunpack.c.l.b16 %v1316
          %v1357 = vunpack.c.l.b16 %v1317
          %v1358 = vunpack.c.l.b16 %v1318
          %v1359 = vunpack.c.l.b16 %v1319
          %v1360 = vunpack.c.l.b16 %v1320
          %v1361 = vunpack.c.l.b16 %v1321
          %v1362 = vunpack.c.l.b16 %v1322
          %v1363 = vunpack.c.l.b16 %v1323
          %v1364 = vunpack.c.l.b16 %v1324
          %v1365 = vunpack.c.l.b16 %v1325
          %v1366 = vunpack.c.l.b16 %v1326
          %v1367 = vunpack.c.l.b16 %v1327
          %v1368 = vunpack.c.l.b16 %v1328
          %v1369 = vunpack.c.l.b16 %v1329
          %v1370 = vpack.c.b16 %v1351, %v1350
          %v1371 = vpack.c.b16 %v1353, %v1352
          %v1372 = vpack.c.b16 %v1355, %v1354
          %v1373 = vpack.c.b16 %v1357, %v1356
          %v1374 = vpack.c.b16 %v1359, %v1358
          %v1375 = vpack.c.b16 %v1361, %v1360
          %v1376 = vpack.c.b16 %v1363, %v1362
          %v1377 = vpack.c.b16 %v1365, %v1364
          %v1378 = vpack.c.b16 %v1367, %v1366
          %v1379 = vpack.c.b16 %v1369, %v1368
          %v1391 = vsel %vm1241, %v1154, 0
          %v1394 = vsel %vm1241, %v1156, 0
          %1396 = vmatprep.subr.bf16.mxu0 0
          %1397 = vmatpush1.bf16.msra.mxu0 %v1377
          %1398 = vmatprep.subr.bf16.mxu0 0
          %1399 = vmatpush1.bf16.msra.mxu0 %v1376
          %1400 = vmatprep.subr.bf16.mxu0 0
          %1401 = vmatpush1.bf16.msra.mxu0 %v1375
          %1402 = vmatprep.subr.bf16.mxu0 0
          %1403 = vmatpush1.bf16.msra.mxu0 %v1374
          %1404 = vmatprep.subr.bf16.mxu0 0
          %1405 = vmatpush1.bf16.msra.mxu0 %v1373
          %1406 = vmatprep.subr.bf16.mxu0 0
          %1407 = vmatpush1.bf16.msra.mxu0 %v1372
          %1408 = vmatprep.subr.bf16.mxu0 0
          %1409 = vmatpush1.bf16.msra.mxu0 %v1371
          %1410 = vmatprep.subr.bf16.mxu0 0
          %1411 = vmatpush1.bf16.msra.mxu0 %v1370
          %1412 = vmatprep.subr.bf16.mxu0 0
          %1413 = vmatpush2.bf16.msra.mxu0 0
          %1414 = vmatprep.subr.bf16.mxu0 0
          %1415 = vmatpush2.bf16.msra.mxu0 0
          %1416 = vmatprep.subr.bf16.mxu0 0
          %1417 = vmatpush2.bf16.msra.mxu0 0
          %1418 = vmatprep.subr.bf16.mxu0 0
          %1419 = vmatpush2.bf16.msra.mxu0 0
          %1420 = vmatprep.subr.bf16.mxu0 0
          %1421 = vmatpush2.bf16.msra.mxu0 0
          %1422 = vmatprep.subr.bf16.mxu0 0
          %1423 = vmatpush2.bf16.msra.mxu0 0
          %1424 = vmatprep.subr.bf16.mxu0 0
          %1425 = vmatpush2.bf16.msra.mxu0 %v1379
          %1426 = vmatprep.subr.bf16.mxu0 0
          %1427 = vmatpush2.bf16.msra.mxu0 %v1378
          %1428 = vmatprep.mubr.bf16.mxu0 %v1391
          %1429 = vmatmul.mubr.bf16.gmra.mxu0 %v1153
          %v1430 = vpop.f32.mrf.mxu0
          %v1431 = vadd.f32 0.0, %v1430
          %v1432 = vpop.f32.mrf.mxu0
          %v1433 = vpop.f32.mrf.mxu0
          %v1434 = vadd.f32 0.0, %v1433
          %v1435 = vpop.f32.mrf.mxu0
          %1436 = vmatprep.mubr.bf16.mxu0 %v1394
          %1437 = vmatmul.mubr.bf16.gmra.mxu0 %v1155
          %v1438 = vpop.f32.mrf.mxu0
          %v1439 = vadd.f32 0.0, %v1438
          %v1440 = vpop.f32.mrf.mxu0
          %v1441 = vpop.f32.mrf.mxu0
          %v1442 = vadd.f32 0.0, %v1441
          %v1443 = vpop.f32.mrf.mxu0
          %1444 = vdwg.mxu0
          %v1445 = vadd.f32 %v1305, %v1431
          %v1446 = vadd.f32 %v1306, %v1434
          %v1447 = vadd.f32 %v1307, %v1439
          %v1448 = vadd.f32 %v1308, %v1442
          %1449 = vst.msk [vmem:[#allocation3] sm:$0xff] %vm1241, %v1445
          %1450 = vst.msk [vmem:[#allocation3 + $0x8] sm:$0xff] %vm1241, %v1446
          %1451 = vst.msk [vmem:[#allocation3 + $0x10] sm:$0xff] %vm1241, %v1447
          %1452 = vst.msk [vmem:[#allocation3 + $0x18] sm:$0xff] %vm1241, %v1448
          %v1453 = vld [vmem:[%s1025] sm:$0x7]
          %v1454 = vld [vmem:[%s1020] sm:$0xf]
          %v1455 = vld [vmem:[%s1020 + $0x4] sm:$0xf]
          %v1456 = vld [vmem:[%s1020 + $0x8] sm:$0xf]
          %v1457 = vld [vmem:[%s1020 + $0xc] sm:$0xf]
          %v1458 = vlaneseq
          %v1459 = vshrl.u32 %v1458, 7
          %v1460 = vsub.s32 0, %v1459
          %v1461 = vrot.slane %v1453, %v1460
          %vm1462 = vcmp.eq.s32.totalorder %v1061, %v1461
          %vm1463 = vcmp.eq.s32.totalorder %v1062, %v1461
          %vm1464 = vcmp.eq.s32.totalorder %v1063, %v1461
          %vm1465 = vcmp.eq.s32.totalorder %v1064, %v1461
          %v1466 = vsel %vm1462, 1, 0
          %v1467 = vsel %vm1463, 1, 0
          %v1468 = vsel %vm1464, 1, 0
          %v1469 = vsel %vm1465, 1, 0
          %v1470 = vcvt.s32.f32 %v1466
          %v1471 = vcvt.s32.f32 %v1467
          %v1472 = vcvt.s32.f32 %v1468
          %v1473 = vcvt.s32.f32 %v1469
          %v1474 = vpack.c.bf16 %v1471, %v1470
          %v1475 = vpack.c.bf16 %v1473, %v1472
          %v1476 = vlaneseq
          %v1477 = vshrl.u32 %v1476, 7
          %v1478 = vsub.s32 1, %v1477
          %v1479 = vrot.slane %v1453, %v1478
          %vm1480 = vcmp.eq.s32.totalorder %v1061, %v1479
          %vm1481 = vcmp.eq.s32.totalorder %v1062, %v1479
          %vm1482 = vcmp.eq.s32.totalorder %v1063, %v1479
          %vm1483 = vcmp.eq.s32.totalorder %v1064, %v1479
          %v1484 = vsel %vm1480, 1, 0
          %v1485 = vsel %vm1481, 1, 0
          %v1486 = vsel %vm1482, 1, 0
          %v1487 = vsel %vm1483, 1, 0
          %v1488 = vcvt.s32.f32 %v1484
          %v1489 = vcvt.s32.f32 %v1485
          %v1490 = vcvt.s32.f32 %v1486
          %v1491 = vcvt.s32.f32 %v1487
          %v1492 = vpack.c.bf16 %v1489, %v1488
          %v1493 = vpack.c.bf16 %v1491, %v1490
          %v1498 = vunpack.c.l.b16 %v1454
          %v1499 = vunpack.c.l.b16 %v1455
          %v1500 = vunpack.c.l.b16 %v1456
          %v1501 = vunpack.c.l.b16 %v1457
          %v1502 = vpack.c.b16 %v1499, %v1498
          %v1503 = vpack.c.b16 %v1501, %v1500
          %1504 = vrot.lane.b32.xlu0 %v1502, 112
          %v1505 = vpop.permute.xlu0 %1504
          %1506 = vrot.lane.b32.xlu0 %v1503, 112
          %v1507 = vpop.permute.xlu0 %1506
          %v1511 = vsel %vm1241, %v1492, 0
          %v1514 = vsel %vm1241, %v1493, 0
          %1516 = vmatprep.subr.bf16.mxu0 0
          %1517 = vmatpush1.bf16.msra.mxu0 0
          %1518 = vmatprep.subr.bf16.mxu0 0
          %1519 = vmatpush1.bf16.msra.mxu0 0
          %1520 = vmatprep.subr.bf16.mxu0 0
          %1521 = vmatpush1.bf16.msra.mxu0 0
          %1522 = vmatprep.subr.bf16.mxu0 0
          %1523 = vmatpush1.bf16.msra.mxu0 0
          %1524 = vmatprep.subr.bf16.mxu0 0
          %1525 = vmatpush1.bf16.msra.mxu0 0
          %1526 = vmatprep.subr.bf16.mxu0 0
          %1527 = vmatpush1.bf16.msra.mxu0 0
          %1528 = vmatprep.subr.bf16.mxu0 0
          %1529 = vmatpush1.bf16.msra.mxu0 %v1507
          %1530 = vmatprep.subr.bf16.mxu0 0
          %1531 = vmatpush1.bf16.msra.mxu0 %v1505
          %1532 = vmatprep.subr.bf16.mxu0 0
          %1533 = vmatpush2.bf16.msra.mxu0 0
          %1534 = vmatprep.subr.bf16.mxu0 0
          %1535 = vmatpush2.bf16.msra.mxu0 0
          %1536 = vmatprep.subr.bf16.mxu0 0
          %1537 = vmatpush2.bf16.msra.mxu0 0
          %1538 = vmatprep.subr.bf16.mxu0 0
          %1539 = vmatpush2.bf16.msra.mxu0 0
          %1540 = vmatprep.subr.bf16.mxu0 0
          %1541 = vmatpush2.bf16.msra.mxu0 0
          %1542 = vmatprep.subr.bf16.mxu0 0
          %1543 = vmatpush2.bf16.msra.mxu0 0
          %1544 = vmatprep.subr.bf16.mxu0 0
          %1545 = vmatpush2.bf16.msra.mxu0 0
          %1546 = vmatprep.subr.bf16.mxu0 0
          %1547 = vmatpush2.bf16.msra.mxu0 0
          %1548 = vmatprep.mubr.bf16.mxu0 0
          %1549 = vmatmul.mubr.bf16.gmra.mxu0 %v1511
          %v1550 = vpop.f32.mrf.mxu0
          %v1551 = vadd.f32 0.0, %v1550
          %v1552 = vpop.f32.mrf.mxu0
          %v1553 = vpop.f32.mrf.mxu0
          %v1554 = vadd.f32 0.0, %v1553
          %v1555 = vpop.f32.mrf.mxu0
          %1556 = vmatprep.mubr.bf16.mxu0 0
          %1557 = vmatmul.mubr.bf16.gmra.mxu0 %v1514
          %v1558 = vpop.f32.mrf.mxu0
          %v1559 = vadd.f32 0.0, %v1558
          %v1560 = vpop.f32.mrf.mxu0
          %v1561 = vpop.f32.mrf.mxu0
          %v1562 = vadd.f32 0.0, %v1561
          %v1563 = vpop.f32.mrf.mxu0
          %1564 = vdwg.mxu0
          %v1568 = vsel %vm1241, %v1474, 0
          %v1571 = vsel %vm1241, %v1475, 0
          %1573 = vmatprep.subr.bf16.mxu0 0
          %1574 = vmatpush1.bf16.msra.mxu0 0
          %1575 = vmatprep.subr.bf16.mxu0 0
          %1576 = vmatpush1.bf16.msra.mxu0 0
          %1577 = vmatprep.subr.bf16.mxu0 0
          %1578 = vmatpush1.bf16.msra.mxu0 0
          %1579 = vmatprep.subr.bf16.mxu0 0
          %1580 = vmatpush1.bf16.msra.mxu0 0
          %1581 = vmatprep.subr.bf16.mxu0 0
          %1582 = vmatpush1.bf16.msra.mxu0 0
          %1583 = vmatprep.subr.bf16.mxu0 0
          %1584 = vmatpush1.bf16.msra.mxu0 0
          %1585 = vmatprep.subr.bf16.mxu0 0
          %1586 = vmatpush1.bf16.msra.mxu0 %v1503
          %1587 = vmatprep.subr.bf16.mxu0 0
          %1588 = vmatpush1.bf16.msra.mxu0 %v1502
          %1589 = vmatprep.subr.bf16.mxu0 0
          %1590 = vmatpush2.bf16.msra.mxu0 0
          %1591 = vmatprep.subr.bf16.mxu0 0
          %1592 = vmatpush2.bf16.msra.mxu0 0
          %1593 = vmatprep.subr.bf16.mxu0 0
          %1594 = vmatpush2.bf16.msra.mxu0 0
          %1595 = vmatprep.subr.bf16.mxu0 0
          %1596 = vmatpush2.bf16.msra.mxu0 0
          %1597 = vmatprep.subr.bf16.mxu0 0
          %1598 = vmatpush2.bf16.msra.mxu0 0
          %1599 = vmatprep.subr.bf16.mxu0 0
          %1600 = vmatpush2.bf16.msra.mxu0 0
          %1601 = vmatprep.subr.bf16.mxu0 0
          %1602 = vmatpush2.bf16.msra.mxu0 0
          %1603 = vmatprep.subr.bf16.mxu0 0
          %1604 = vmatpush2.bf16.msra.mxu0 0
          %1605 = vmatprep.mubr.bf16.mxu0 0
          %1606 = vmatmul.mubr.bf16.gmra.mxu0 %v1568
          %v1607 = vpop.f32.mrf.mxu0
          %v1608 = vadd.f32 %v1551, %v1607
          %v1609 = vpop.f32.mrf.mxu0
          %v1610 = vpop.f32.mrf.mxu0
          %v1611 = vadd.f32 %v1554, %v1610
          %v1612 = vpop.f32.mrf.mxu0
          %1613 = vmatprep.mubr.bf16.mxu0 0
          %1614 = vmatmul.mubr.bf16.gmra.mxu0 %v1571
          %v1615 = vpop.f32.mrf.mxu0
          %v1616 = vadd.f32 %v1559, %v1615
          %v1617 = vpop.f32.mrf.mxu0
          %v1618 = vpop.f32.mrf.mxu0
          %v1619 = vadd.f32 %v1562, %v1618
          %v1620 = vpop.f32.mrf.mxu0
          %1621 = vdwg.mxu0
          %v1622 = vlaneseq
          %v1623 = vshrl.u32 %v1622, 7
          %v1624 = vsub.s32 2, %v1623
          %v1625 = vrot.slane %v1453, %v1624
          %vm1626 = vcmp.eq.s32.totalorder %v1061, %v1625
          %vm1627 = vcmp.eq.s32.totalorder %v1062, %v1625
          %vm1628 = vcmp.eq.s32.totalorder %v1063, %v1625
          %vm1629 = vcmp.eq.s32.totalorder %v1064, %v1625
          %v1630 = vsel %vm1626, 1, 0
          %v1631 = vsel %vm1627, 1, 0
          %v1632 = vsel %vm1628, 1, 0
          %v1633 = vsel %vm1629, 1, 0
          %v1634 = vcvt.s32.f32 %v1630
          %v1635 = vcvt.s32.f32 %v1631
          %v1636 = vcvt.s32.f32 %v1632
          %v1637 = vcvt.s32.f32 %v1633
          %v1638 = vpack.c.bf16 %v1635, %v1634
          %v1639 = vpack.c.bf16 %v1637, %v1636
          %1640 = vrot.lane.b32.xlu0 %v1502, 96
          %v1641 = vpop.permute.xlu0 %1640
          %1642 = vrot.lane.b32.xlu0 %v1503, 96
          %v1643 = vpop.permute.xlu0 %1642
          %v1647 = vsel %vm1241, %v1638, 0
          %v1650 = vsel %vm1241, %v1639, 0
          %1652 = vmatprep.subr.bf16.mxu0 0
          %1653 = vmatpush1.bf16.msra.mxu0 0
          %1654 = vmatprep.subr.bf16.mxu0 0
          %1655 = vmatpush1.bf16.msra.mxu0 0
          %1656 = vmatprep.subr.bf16.mxu0 0
          %1657 = vmatpush1.bf16.msra.mxu0 0
          %1658 = vmatprep.subr.bf16.mxu0 0
          %1659 = vmatpush1.bf16.msra.mxu0 0
          %1660 = vmatprep.subr.bf16.mxu0 0
          %1661 = vmatpush1.bf16.msra.mxu0 0
          %1662 = vmatprep.subr.bf16.mxu0 0
          %1663 = vmatpush1.bf16.msra.mxu0 0
          %1664 = vmatprep.subr.bf16.mxu0 0
          %1665 = vmatpush1.bf16.msra.mxu0 %v1643
          %1666 = vmatprep.subr.bf16.mxu0 0
          %1667 = vmatpush1.bf16.msra.mxu0 %v1641
          %1668 = vmatprep.subr.bf16.mxu0 0
          %1669 = vmatpush2.bf16.msra.mxu0 0
          %1670 = vmatprep.subr.bf16.mxu0 0
          %1671 = vmatpush2.bf16.msra.mxu0 0
          %1672 = vmatprep.subr.bf16.mxu0 0
          %1673 = vmatpush2.bf16.msra.mxu0 0
          %1674 = vmatprep.subr.bf16.mxu0 0
          %1675 = vmatpush2.bf16.msra.mxu0 0
          %1676 = vmatprep.subr.bf16.mxu0 0
          %1677 = vmatpush2.bf16.msra.mxu0 0
          %1678 = vmatprep.subr.bf16.mxu0 0
          %1679 = vmatpush2.bf16.msra.mxu0 0
          %1680 = vmatprep.subr.bf16.mxu0 0
          %1681 = vmatpush2.bf16.msra.mxu0 0
          %1682 = vmatprep.subr.bf16.mxu0 0
          %1683 = vmatpush2.bf16.msra.mxu0 0
          %1684 = vmatprep.mubr.bf16.mxu0 0
          %1685 = vmatmul.mubr.bf16.gmra.mxu0 %v1647
          %v1686 = vpop.f32.mrf.mxu0
          %v1687 = vadd.f32 0.0, %v1686
          %v1688 = vpop.f32.mrf.mxu0
          %v1689 = vpop.f32.mrf.mxu0
          %v1690 = vadd.f32 0.0, %v1689
          %v1691 = vpop.f32.mrf.mxu0
          %1692 = vmatprep.mubr.bf16.mxu0 0
          %1693 = vmatmul.mubr.bf16.gmra.mxu0 %v1650
          %v1694 = vpop.f32.mrf.mxu0
          %v1695 = vadd.f32 0.0, %v1694
          %v1696 = vpop.f32.mrf.mxu0
          %v1697 = vpop.f32.mrf.mxu0
          %v1698 = vadd.f32 0.0, %v1697
          %v1699 = vpop.f32.mrf.mxu0
          %1700 = vdwg.mxu0
          %v1701 = vadd.f32 %v1608, %v1687
          %v1702 = vadd.f32 %v1611, %v1690
          %v1703 = vadd.f32 %v1616, %v1695
          %v1704 = vadd.f32 %v1619, %v1698
          %v1705 = vld [vmem:[#allocation4] sm:$0xff]
          %v1706 = vld [vmem:[#allocation4 + $0x8] sm:$0xff]
          %v1707 = vld [vmem:[#allocation4 + $0x10] sm:$0xff]
          %v1708 = vld [vmem:[#allocation4 + $0x18] sm:$0xff]
          %v1709 = vadd.f32 %v1705, %v1701
          %v1710 = vadd.f32 %v1706, %v1702
          %v1711 = vadd.f32 %v1707, %v1703
          %v1712 = vadd.f32 %v1708, %v1704
          %vm1713 = vcmask 130048
          %1714 = vst.msk [vmem:[#allocation4] sm:$0xff] %vm1713, %v1709
          %1715 = vst.msk [vmem:[#allocation4 + $0x8] sm:$0xff] %vm1713, %v1710
          %1716 = vst.msk [vmem:[#allocation4 + $0x10] sm:$0xff] %vm1713, %v1711
          %1717 = vst.msk [vmem:[#allocation4 + $0x18] sm:$0xff] %vm1713, %v1712
        $region153: #{interaction_network_forward.5} parent=140 // pred_fallthru
          _
        // Predicated region
        $region154: #{interaction_network_forward.5} parent=140 // pred_check
          %p1718 = pneg %p1034
        $region155: #{interaction_network_forward.5} parent=140 // pred_check_branch
          %1720 = sbr.rel (%p1718) target = $region157
        $region156: #{interaction_network_forward.5} parent=140 // pred_region
          %v1721 = vlaneseq
          %v1722 = vshrl.u32 %v1721, 7
          %v1723 = vsub.s32 1, %v1722
          %v1724 = vrot.slane %v1065, %v1723
          %v1725 = vlaneseq
          %v1726 = vshrl.u32 %v1725, 7
          %v1727 = vsub.s32 5, %v1726
          %v1728 = vrot.slane %v1065, %v1727
          %v1729 = vlaneseq
          %v1730 = vshrl.u32 %v1729, 7
          %v1731 = vsub.s32 1, %v1730
          %v1732 = vrot.slane %v1724, %v1731
          %v1733 = vlaneseq
          %v1734 = vshrl.u32 %v1733, 7
          %v1735 = vsub.s32 1, %v1734
          %v1736 = vrot.slane %v1728, %v1735
          %vm1737 = vcmp.eq.s32.totalorder %v1061, %v1732
          %vm1738 = vcmp.eq.s32.totalorder %v1061, %v1736
          %vm1739 = vcmp.eq.s32.totalorder %v1062, %v1732
          %vm1740 = vcmp.eq.s32.totalorder %v1062, %v1736
          %vm1741 = vcmp.eq.s32.totalorder %v1063, %v1732
          %vm1742 = vcmp.eq.s32.totalorder %v1063, %v1736
          %vm1743 = vcmp.eq.s32.totalorder %v1064, %v1732
          %vm1744 = vcmp.eq.s32.totalorder %v1064, %v1736
          %v1745 = vsel %vm1737, 1, 0
          %v1746 = vsel %vm1738, 1, 0
          %v1747 = vsel %vm1739, 1, 0
          %v1748 = vsel %vm1740, 1, 0
          %v1749 = vsel %vm1741, 1, 0
          %v1750 = vsel %vm1742, 1, 0
          %v1751 = vsel %vm1743, 1, 0
          %v1752 = vsel %vm1744, 1, 0
          %v1753 = vcvt.s32.f32 %v1745
          %v1754 = vcvt.s32.f32 %v1746
          %v1755 = vcvt.s32.f32 %v1747
          %v1756 = vcvt.s32.f32 %v1748
          %v1757 = vcvt.s32.f32 %v1749
          %v1758 = vcvt.s32.f32 %v1750
          %v1759 = vcvt.s32.f32 %v1751
          %v1760 = vcvt.s32.f32 %v1752
          %v1761 = vpack.c.bf16 %v1755, %v1753
          %v1762 = vpack.c.bf16 %v1756, %v1754
          %v1763 = vpack.c.bf16 %v1759, %v1757
          %v1764 = vpack.c.bf16 %v1760, %v1758
          %v1765 = vld [vmem:[#allocation2] sm:$0xff]
          %v1766 = vld [vmem:[#allocation2 + $0x8] sm:$0xff]
          %v1767 = vld [vmem:[#allocation2 + $0x10] sm:$0xff]
          %v1768 = vld [vmem:[#allocation2 + $0x18] sm:$0xff]
          %s1769 = scalar_lea.vmem %s928, 80 [#allocation5]
          %v1770 = vld [vmem:[%s1769] sm:$0xf]
          %v1771 = vld [vmem:[%s1769 + $0x4] sm:$0xf]
          %v1772 = vld [vmem:[%s1769 + $0x8] sm:$0xf]
          %v1773 = vld [vmem:[%s1769 + $0xc] sm:$0xf]
          %v1774 = vld [vmem:[%s1769 + $0x10] sm:$0xf]
          %v1775 = vld [vmem:[%s1769 + $0x14] sm:$0xf]
          %v1776 = vld [vmem:[%s1769 + $0x18] sm:$0xf]
          %v1777 = vld [vmem:[%s1769 + $0x1c] sm:$0xf]
          %v1778 = vld [vmem:[%s1769 + $0x20] sm:$0xf]
          %v1779 = vld [vmem:[%s1769 + $0x24] sm:$0xf]
          %v1780 = vld [vmem:[%s1769 + $0x28] sm:$0xf]
          %v1781 = vld [vmem:[%s1769 + $0x2c] sm:$0xf]
          %v1782 = vld [vmem:[%s1769 + $0x30] sm:$0xf]
          %v1783 = vld [vmem:[%s1769 + $0x34] sm:$0xf]
          %v1784 = vld [vmem:[%s1769 + $0x38] sm:$0xf]
          %v1785 = vld [vmem:[%s1769 + $0x3c] sm:$0xf]
          %v1786 = vld [vmem:[%s1769 + $0x40] sm:$0xf]
          %v1787 = vld [vmem:[%s1769 + $0x44] sm:$0xf]
          %v1788 = vld [vmem:[%s1769 + $0x48] sm:$0xf]
          %v1789 = vld [vmem:[%s1769 + $0x4c] sm:$0xf]
          %v1810 = vunpack.c.l.b16 %v1770
          %v1811 = vunpack.c.l.b16 %v1771
          %v1812 = vunpack.c.l.b16 %v1772
          %v1813 = vunpack.c.l.b16 %v1773
          %v1814 = vunpack.c.l.b16 %v1774
          %v1815 = vunpack.c.l.b16 %v1775
          %v1816 = vunpack.c.l.b16 %v1776
          %v1817 = vunpack.c.l.b16 %v1777
          %v1818 = vunpack.c.l.b16 %v1778
          %v1819 = vunpack.c.l.b16 %v1779
          %v1820 = vunpack.c.l.b16 %v1780
          %v1821 = vunpack.c.l.b16 %v1781
          %v1822 = vunpack.c.l.b16 %v1782
          %v1823 = vunpack.c.l.b16 %v1783
          %v1824 = vunpack.c.l.b16 %v1784
          %v1825 = vunpack.c.l.b16 %v1785
          %v1826 = vunpack.c.l.b16 %v1786
          %v1827 = vunpack.c.l.b16 %v1787
          %v1828 = vunpack.c.l.b16 %v1788
          %v1829 = vunpack.c.l.b16 %v1789
          %v1830 = vpack.c.b16 %v1811, %v1810
          %v1831 = vpack.c.b16 %v1813, %v1812
          %v1832 = vpack.c.b16 %v1815, %v1814
          %v1833 = vpack.c.b16 %v1817, %v1816
          %v1834 = vpack.c.b16 %v1819, %v1818
          %v1835 = vpack.c.b16 %v1821, %v1820
          %v1836 = vpack.c.b16 %v1823, %v1822
          %v1837 = vpack.c.b16 %v1825, %v1824
          %v1838 = vpack.c.b16 %v1827, %v1826
          %v1839 = vpack.c.b16 %v1829, %v1828
          %vm1850 = vcmask 261120
          %v1852 = vsel %vm1850, %v1762, 0
          %v1855 = vsel %vm1850, %v1764, 0
          %1857 = vmatprep.subr.bf16.mxu0 0
          %1858 = vmatpush1.bf16.msra.mxu0 %v1837
          %1859 = vmatprep.subr.bf16.mxu0 0
          %1860 = vmatpush1.bf16.msra.mxu0 %v1836
          %1861 = vmatprep.subr.bf16.mxu0 0
          %1862 = vmatpush1.bf16.msra.mxu0 %v1835
          %1863 = vmatprep.subr.bf16.mxu0 0
          %1864 = vmatpush1.bf16.msra.mxu0 %v1834
          %1865 = vmatprep.subr.bf16.mxu0 0
          %1866 = vmatpush1.bf16.msra.mxu0 %v1833
          %1867 = vmatprep.subr.bf16.mxu0 0
          %1868 = vmatpush1.bf16.msra.mxu0 %v1832
          %1869 = vmatprep.subr.bf16.mxu0 0
          %1870 = vmatpush1.bf16.msra.mxu0 %v1831
          %1871 = vmatprep.subr.bf16.mxu0 0
          %1872 = vmatpush1.bf16.msra.mxu0 %v1830
          %1873 = vmatprep.subr.bf16.mxu0 0
          %1874 = vmatpush2.bf16.msra.mxu0 0
          %1875 = vmatprep.subr.bf16.mxu0 0
          %1876 = vmatpush2.bf16.msra.mxu0 0
          %1877 = vmatprep.subr.bf16.mxu0 0
          %1878 = vmatpush2.bf16.msra.mxu0 0
          %1879 = vmatprep.subr.bf16.mxu0 0
          %1880 = vmatpush2.bf16.msra.mxu0 0
          %1881 = vmatprep.subr.bf16.mxu0 0
          %1882 = vmatpush2.bf16.msra.mxu0 0
          %1883 = vmatprep.subr.bf16.mxu0 0
          %1884 = vmatpush2.bf16.msra.mxu0 0
          %1885 = vmatprep.subr.bf16.mxu0 0
          %1886 = vmatpush2.bf16.msra.mxu0 %v1839
          %1887 = vmatprep.subr.bf16.mxu0 0
          %1888 = vmatpush2.bf16.msra.mxu0 %v1838
          %1889 = vmatprep.mubr.bf16.mxu0 %v1852
          %1890 = vmatmul.mubr.bf16.gmra.mxu0 %v1761
          %v1891 = vpop.f32.mrf.mxu0
          %v1892 = vadd.f32 0.0, %v1891
          %v1893 = vpop.f32.mrf.mxu0
          %v1894 = vpop.f32.mrf.mxu0
          %v1895 = vadd.f32 0.0, %v1894
          %v1896 = vpop.f32.mrf.mxu0
          %1897 = vmatprep.mubr.bf16.mxu0 %v1855
          %1898 = vmatmul.mubr.bf16.gmra.mxu0 %v1763
          %v1899 = vpop.f32.mrf.mxu0
          %v1900 = vadd.f32 0.0, %v1899
          %v1901 = vpop.f32.mrf.mxu0
          %v1902 = vpop.f32.mrf.mxu0
          %v1903 = vadd.f32 0.0, %v1902
          %v1904 = vpop.f32.mrf.mxu0
          %1905 = vdwg.mxu0
          %v1906 = vadd.f32 %v1765, %v1892
          %v1907 = vadd.f32 %v1766, %v1895
          %v1908 = vadd.f32 %v1767, %v1900
          %v1909 = vadd.f32 %v1768, %v1903
          %1910 = vst.msk [vmem:[#allocation2] sm:$0xff] %vm1850, %v1906
          %1911 = vst.msk [vmem:[#allocation2 + $0x8] sm:$0xff] %vm1850, %v1907
          %1912 = vst.msk [vmem:[#allocation2 + $0x10] sm:$0xff] %vm1850, %v1908
          %1913 = vst.msk [vmem:[#allocation2 + $0x18] sm:$0xff] %vm1850, %v1909
        $region157: #{interaction_network_forward.5} parent=140 // pred_fallthru
          _
        %p1914 = pnand %p1035, %p1033
        %p1915 = pneg %p1914
        // Predicated region
        $region158: #{interaction_network_forward.5} parent=140 // pred_check
          _
        $region159: #{interaction_network_forward.5} parent=140 // pred_check_branch
          %1917 = sbr.rel (%p1914) target = $region161
        $region160: #{interaction_network_forward.5} parent=140 // pred_region
          %v1918 = vld [vmem:[%s1008] sm:$0xff]
          %v1919 = vld [vmem:[%s1008 + $0x8] sm:$0xff]
          %v1920 = vld [vmem:[%s1008 + $0x10] sm:$0xff]
          %v1921 = vld [vmem:[%s1008 + $0x18] sm:$0xff]
          %v1922 = vld [vmem:[#allocation3] sm:$0xff]
          %v1923 = vld [vmem:[#allocation3 + $0x8] sm:$0xff]
          %v1924 = vld [vmem:[#allocation3 + $0x10] sm:$0xff]
          %v1925 = vld [vmem:[#allocation3 + $0x18] sm:$0xff]
          %v1926 = vld [vmem:[#allocation2] sm:$0xff]
          %v1927 = vld [vmem:[#allocation2 + $0x8] sm:$0xff]
          %v1928 = vld [vmem:[#allocation2 + $0x10] sm:$0xff]
          %v1929 = vld [vmem:[#allocation2 + $0x18] sm:$0xff]
          %v1930 = vld [vmem:[#allocation4] sm:$0xff]
          %v1931 = vld [vmem:[#allocation4 + $0x8] sm:$0xff]
          %v1932 = vld [vmem:[#allocation4 + $0x10] sm:$0xff]
          %v1933 = vld [vmem:[#allocation4 + $0x18] sm:$0xff]
          %1938 = vrot.lane.b32.xlu0 %v1922, 32
          %v1939 = vpop.permute.xlu0 %1938
          %1940 = vrot.lane.b32.xlu0 %v1923, 32
          %v1941 = vpop.permute.xlu0 %1940
          %1942 = vrot.lane.b32.xlu0 %v1924, 32
          %v1943 = vpop.permute.xlu0 %1942
          %1944 = vrot.lane.b32.xlu0 %v1925, 32
          %v1945 = vpop.permute.xlu0 %1944
          %1954 = vrot.lane.b32.xlu0 %v1926, 64
          %v1955 = vpop.permute.xlu0 %1954
          %1956 = vrot.lane.b32.xlu0 %v1927, 64
          %v1957 = vpop.permute.xlu0 %1956
          %1958 = vrot.lane.b32.xlu0 %v1928, 64
          %v1959 = vpop.permute.xlu0 %1958
          %1960 = vrot.lane.b32.xlu0 %v1929, 64
          %v1961 = vpop.permute.xlu0 %1960
          %1970 = vrot.lane.b32.xlu0 %v1930, 96
          %v1971 = vpop.permute.xlu0 %1970
          %1972 = vrot.lane.b32.xlu0 %v1931, 96
          %v1973 = vpop.permute.xlu0 %1972
          %1974 = vrot.lane.b32.xlu0 %v1932, 96
          %v1975 = vpop.permute.xlu0 %1974
          %1976 = vrot.lane.b32.xlu0 %v1933, 96
          %v1977 = vpop.permute.xlu0 %1976
          %vm1982 = vcmask 261120
          %v1983 = vsel %vm1982, %v1918, %v1939
          %v1984 = vsel %vm1982, %v1919, %v1941
          %v1985 = vsel %vm1982, %v1920, %v1943
          %v1986 = vsel %vm1982, %v1921, %v1945
          %vm1987 = vcmask 523264
          %v1988 = vsel %vm1987, %v1983, %v1955
          %v1989 = vsel %vm1987, %v1984, %v1957
          %v1990 = vsel %vm1987, %v1985, %v1959
          %v1991 = vsel %vm1987, %v1986, %v1961
          %vm1992 = vcmask 785408
          %v1993 = vsel %vm1992, %v1988, %v1971
          %v1994 = vsel %vm1992, %v1989, %v1973
          %v1995 = vsel %vm1992, %v1990, %v1975
          %v1996 = vsel %vm1992, %v1991, %v1977
          %v1997 = vpack.c.bf16 %v1994, %v1993
          %v1998 = vpack.c.bf16 %v1996, %v1995
          %v1999 = vld [vmem:[%s5] sm:$0xf]
          %v2000 = vld [vmem:[%s5 + $0x4] sm:$0xf]
          %v2001 = vld [vmem:[%s5 + $0x8] sm:$0xf]
          %v2002 = vld [vmem:[%s5 + $0xc] sm:$0xf]
          %v2003 = vld [vmem:[%s5 + $0x10] sm:$0xf]
          %v2004 = vld [vmem:[%s5 + $0x14] sm:$0xf]
          %v2005 = vld [vmem:[%s5 + $0x18] sm:$0xf]
          %v2006 = vld [vmem:[%s5 + $0x1c] sm:$0xf]
          %v2007 = vld [vmem:[%s5 + $0x20] sm:$0xf]
          %v2008 = vld [vmem:[%s5 + $0x24] sm:$0xf]
          %v2009 = vld [vmem:[%s5 + $0x28] sm:$0xf]
          %v2010 = vld [vmem:[%s5 + $0x2c] sm:$0xf]
          %v2011 = vld [vmem:[%s5 + $0x30] sm:$0xf]
          %v2012 = vld [vmem:[%s5 + $0x34] sm:$0xf]
          %v2013 = vld [vmem:[%s6] sm:$0x1]
          %v2015 = vlaneseq
          %v2016 = vshrl.u32 %v2015, 7
          %v2017 = vsub.s32 0, %v2016
          %v2018 = vrot.slane %v2013, %v2017
          %v2034 = vunpack.c.l.b16 %v1999
          %v2035 = vunpack.c.l.b16 %v2000
          %v2036 = vunpack.c.l.b16 %v2001
          %v2037 = vunpack.c.l.b16 %v2002
          %v2038 = vunpack.c.l.b16 %v2003
          %v2039 = vunpack.c.l.b16 %v2004
          %v2040 = vunpack.c.l.b16 %v2005
          %v2041 = vunpack.c.l.b16 %v2006
          %v2042 = vunpack.c.l.b16 %v2007
          %v2043 = vunpack.c.l.b16 %v2008
          %v2044 = vunpack.c.l.b16 %v2009
          %v2045 = vunpack.c.l.b16 %v2010
          %v2046 = vunpack.c.l.b16 %v2011
          %v2047 = vunpack.c.l.b16 %v2012
          %v2048 = vpack.c.b16 %v2035, %v2034
          %v2049 = vpack.c.b16 %v2037, %v2036
          %v2050 = vpack.c.b16 %v2039, %v2038
          %v2051 = vpack.c.b16 %v2041, %v2040
          %v2052 = vpack.c.b16 %v2043, %v2042
          %v2053 = vpack.c.b16 %v2045, %v2044
          %v2054 = vpack.c.b16 %v2047, %v2046
          %vm2062 = vcmask 916480
          %v2064 = vsel %vm2062, %v1997, 0
          %v2067 = vsel %vm2062, %v1998, 0
          %2069 = vmatprep.subr.bf16.mxu0 0
          %2070 = vmatpush1.bf16.msra.mxu0 0
          %2071 = vmatprep.subr.bf16.mxu0 0
          %2072 = vmatpush1.bf16.msra.mxu0 %v2054
          %2073 = vmatprep.subr.bf16.mxu0 0
          %2074 = vmatpush1.bf16.msra.mxu0 %v2053
          %2075 = vmatprep.subr.bf16.mxu0 0
          %2076 = vmatpush1.bf16.msra.mxu0 %v2052
          %2077 = vmatprep.subr.bf16.mxu0 0
          %2078 = vmatpush1.bf16.msra.mxu0 %v2051
          %2079 = vmatprep.subr.bf16.mxu0 0
          %2080 = vmatpush1.bf16.msra.mxu0 %v2050
          %2081 = vmatprep.subr.bf16.mxu0 0
          %2082 = vmatpush1.bf16.msra.mxu0 %v2049
          %2083 = vmatprep.subr.bf16.mxu0 0
          %2084 = vmatpush1.bf16.msra.mxu0 %v2048
          %2085 = vmatprep.subr.bf16.mxu0 0
          %2086 = vmatpush2.bf16.msra.mxu0 0
          %2087 = vmatprep.subr.bf16.mxu0 0
          %2088 = vmatpush2.bf16.msra.mxu0 0
          %2089 = vmatprep.subr.bf16.mxu0 0
          %2090 = vmatpush2.bf16.msra.mxu0 0
          %2091 = vmatprep.subr.bf16.mxu0 0
          %2092 = vmatpush2.bf16.msra.mxu0 0
          %2093 = vmatprep.subr.bf16.mxu0 0
          %2094 = vmatpush2.bf16.msra.mxu0 0
          %2095 = vmatprep.subr.bf16.mxu0 0
          %2096 = vmatpush2.bf16.msra.mxu0 0
          %2097 = vmatprep.subr.bf16.mxu0 0
          %2098 = vmatpush2.bf16.msra.mxu0 0
          %2099 = vmatprep.subr.bf16.mxu0 0
          %2100 = vmatpush2.bf16.msra.mxu0 0
          %2101 = vmatprep.mubr.bf16.mxu0 0
          %2102 = vmatmul.mubr.bf16.gmra.mxu0 %v2064
          %v2103 = vpop.f32.mrf.mxu0
          %v2104 = vadd.f32 %v2018, %v2103
          %v2105 = vpop.f32.mrf.mxu0
          %v2106 = vpop.f32.mrf.mxu0
          %v2107 = vadd.f32 %v2018, %v2106
          %v2108 = vpop.f32.mrf.mxu0
          %2109 = vmatprep.mubr.bf16.mxu0 0
          %2110 = vmatmul.mubr.bf16.gmra.mxu0 %v2067
          %v2111 = vpop.f32.mrf.mxu0
          %v2112 = vadd.f32 %v2018, %v2111
          %v2113 = vpop.f32.mrf.mxu0
          %v2114 = vpop.f32.mrf.mxu0
          %v2115 = vadd.f32 %v2018, %v2114
          %v2116 = vpop.f32.mrf.mxu0
          %2117 = vdwg.mxu0
          %v2118 = vld [vmem:[%s7] sm:$0xf]
          %v2119 = vld [vmem:[%s7 + $0x4] sm:$0xf]
          %v2120 = vld [vmem:[%s7 + $0x8] sm:$0xf]
          %v2121 = vld [vmem:[%s7 + $0xc] sm:$0xf]
          %v2122 = vld [vmem:[%s7 + $0x10] sm:$0xf]
          %v2123 = vld [vmem:[%s7 + $0x14] sm:$0xf]
          %v2124 = vld [vmem:[%s7 + $0x18] sm:$0xf]
          %v2125 = vld [vmem:[%s7 + $0x1c] sm:$0xf]
          %v2126 = vld [vmem:[%s8] sm:$0x1]
          %v2127 = vld [vmem:[%s9] sm:$0xf]
          %v2128 = vld [vmem:[%s9 + $0x4] sm:$0xf]
          %v2129 = vld [vmem:[%s9 + $0x8] sm:$0xf]
          %v2130 = vld [vmem:[%s9 + $0xc] sm:$0xf]
          %v2131 = vld [vmem:[%s9 + $0x10] sm:$0xf]
          %v2132 = vld [vmem:[%s9 + $0x14] sm:$0xf]
          %v2133 = vld [vmem:[%s9 + $0x18] sm:$0xf]
          %v2134 = vld [vmem:[%s9 + $0x1c] sm:$0xf]
          %v2135 = vld [vmem:[%s10] sm:$0x1]
          %v2136 = vld [vmem:[%s11] sm:$0x1]
          %v2137 = vld [vmem:[%s12] sm:$0x1]
          %v2138 = vmax.f32 %v2104, 0.0
          %v2139 = vmax.f32 %v2107, 0.0
          %v2140 = vmax.f32 %v2112, 0.0
          %v2141 = vmax.f32 %v2115, 0.0
          %v2142 = vpack.c.bf16 %v2139, %v2138
          %v2143 = vpack.c.bf16 %v2141, %v2140
          %v2145 = vlaneseq
          %v2146 = vshrl.u32 %v2145, 7
          %v2147 = vsub.s32 0, %v2146
          %v2148 = vrot.slane %v2126, %v2147
          %v2158 = vunpack.c.l.b16 %v2118
          %v2159 = vunpack.c.l.b16 %v2119
          %v2160 = vunpack.c.l.b16 %v2120
          %v2161 = vunpack.c.l.b16 %v2121
          %v2162 = vunpack.c.l.b16 %v2122
          %v2163 = vunpack.c.l.b16 %v2123
          %v2164 = vunpack.c.l.b16 %v2124
          %v2165 = vunpack.c.l.b16 %v2125
          %v2166 = vpack.c.b16 %v2159, %v2158
          %v2167 = vpack.c.b16 %v2161, %v2160
          %v2168 = vpack.c.b16 %v2163, %v2162
          %v2169 = vpack.c.b16 %v2165, %v2164
          %v2175 = vsel %vm1987, %v2142, 0
          %v2178 = vsel %vm1987, %v2143, 0
          %2180 = vmatprep.subr.bf16.mxu0 0
          %2181 = vmatpush1.bf16.msra.mxu0 0
          %2182 = vmatprep.subr.bf16.mxu0 0
          %2183 = vmatpush1.bf16.msra.mxu0 0
          %2184 = vmatprep.subr.bf16.mxu0 0
          %2185 = vmatpush1.bf16.msra.mxu0 0
          %2186 = vmatprep.subr.bf16.mxu0 0
          %2187 = vmatpush1.bf16.msra.mxu0 0
          %2188 = vmatprep.subr.bf16.mxu0 0
          %2189 = vmatpush1.bf16.msra.mxu0 %v2169
          %2190 = vmatprep.subr.bf16.mxu0 0
          %2191 = vmatpush1.bf16.msra.mxu0 %v2168
          %2192 = vmatprep.subr.bf16.mxu0 0
          %2193 = vmatpush1.bf16.msra.mxu0 %v2167
          %2194 = vmatprep.subr.bf16.mxu0 0
          %2195 = vmatpush1.bf16.msra.mxu0 %v2166
          %2196 = vmatprep.subr.bf16.mxu0 0
          %2197 = vmatpush2.bf16.msra.mxu0 0
          %2198 = vmatprep.subr.bf16.mxu0 0
          %2199 = vmatpush2.bf16.msra.mxu0 0
          %2200 = vmatprep.subr.bf16.mxu0 0
          %2201 = vmatpush2.bf16.msra.mxu0 0
          %2202 = vmatprep.subr.bf16.mxu0 0
          %2203 = vmatpush2.bf16.msra.mxu0 0
          %2204 = vmatprep.subr.bf16.mxu0 0
          %2205 = vmatpush2.bf16.msra.mxu0 0
          %2206 = vmatprep.subr.bf16.mxu0 0
          %2207 = vmatpush2.bf16.msra.mxu0 0
          %2208 = vmatprep.subr.bf16.mxu0 0
          %2209 = vmatpush2.bf16.msra.mxu0 0
          %2210 = vmatprep.subr.bf16.mxu0 0
          %2211 = vmatpush2.bf16.msra.mxu0 0
          %2212 = vmatprep.mubr.bf16.mxu0 0
          %2213 = vmatmul.mubr.bf16.gmra.mxu0 %v2175
          %v2214 = vpop.f32.mrf.mxu0
          %v2215 = vadd.f32 %v2148, %v2214
          %v2216 = vpop.f32.mrf.mxu0
          %v2217 = vpop.f32.mrf.mxu0
          %v2218 = vadd.f32 %v2148, %v2217
          %v2219 = vpop.f32.mrf.mxu0
          %2220 = vmatprep.mubr.bf16.mxu0 0
          %2221 = vmatmul.mubr.bf16.gmra.mxu0 %v2178
          %v2222 = vpop.f32.mrf.mxu0
          %v2223 = vadd.f32 %v2148, %v2222
          %v2224 = vpop.f32.mrf.mxu0
          %v2225 = vpop.f32.mrf.mxu0
          %v2226 = vadd.f32 %v2148, %v2225
          %v2227 = vpop.f32.mrf.mxu0
          %2228 = vdwg.mxu0
          %v2229 = vmax.f32 %v2215, 0.0
          %v2230 = vmax.f32 %v2218, 0.0
          %v2231 = vmax.f32 %v2223, 0.0
          %v2232 = vmax.f32 %v2226, 0.0
          %v2233 = vpack.c.bf16 %v2230, %v2229
          %v2234 = vpack.c.bf16 %v2232, %v2231
          %v2236 = vlaneseq
          %v2237 = vshrl.u32 %v2236, 7
          %v2238 = vsub.s32 0, %v2237
          %v2239 = vrot.slane %v2135, %v2238
          %v2249 = vunpack.c.l.b16 %v2127
          %v2250 = vunpack.c.l.b16 %v2128
          %v2251 = vunpack.c.l.b16 %v2129
          %v2252 = vunpack.c.l.b16 %v2130
          %v2253 = vunpack.c.l.b16 %v2131
          %v2254 = vunpack.c.l.b16 %v2132
          %v2255 = vunpack.c.l.b16 %v2133
          %v2256 = vunpack.c.l.b16 %v2134
          %v2257 = vpack.c.b16 %v2250, %v2249
          %v2258 = vpack.c.b16 %v2252, %v2251
          %v2259 = vpack.c.b16 %v2254, %v2253
          %v2260 = vpack.c.b16 %v2256, %v2255
          %v2266 = vsel %vm1987, %v2233, 0
          %v2269 = vsel %vm1987, %v2234, 0
          %2271 = vmatprep.subr.bf16.mxu0 0
          %2272 = vmatpush1.bf16.msra.mxu0 0
          %2273 = vmatprep.subr.bf16.mxu0 0
          %2274 = vmatpush1.bf16.msra.mxu0 0
          %2275 = vmatprep.subr.bf16.mxu0 0
          %2276 = vmatpush1.bf16.msra.mxu0 0
          %2277 = vmatprep.subr.bf16.mxu0 0
          %2278 = vmatpush1.bf16.msra.mxu0 0
          %2279 = vmatprep.subr.bf16.mxu0 0
          %2280 = vmatpush1.bf16.msra.mxu0 %v2260
          %2281 = vmatprep.subr.bf16.mxu0 0
          %2282 = vmatpush1.bf16.msra.mxu0 %v2259
          %2283 = vmatprep.subr.bf16.mxu0 0
          %2284 = vmatpush1.bf16.msra.mxu0 %v2258
          %2285 = vmatprep.subr.bf16.mxu0 0
          %2286 = vmatpush1.bf16.msra.mxu0 %v2257
          %2287 = vmatprep.subr.bf16.mxu0 0
          %2288 = vmatpush2.bf16.msra.mxu0 0
          %2289 = vmatprep.subr.bf16.mxu0 0
          %2290 = vmatpush2.bf16.msra.mxu0 0
          %2291 = vmatprep.subr.bf16.mxu0 0
          %2292 = vmatpush2.bf16.msra.mxu0 0
          %2293 = vmatprep.subr.bf16.mxu0 0
          %2294 = vmatpush2.bf16.msra.mxu0 0
          %2295 = vmatprep.subr.bf16.mxu0 0
          %2296 = vmatpush2.bf16.msra.mxu0 0
          %2297 = vmatprep.subr.bf16.mxu0 0
          %2298 = vmatpush2.bf16.msra.mxu0 0
          %2299 = vmatprep.subr.bf16.mxu0 0
          %2300 = vmatpush2.bf16.msra.mxu0 0
          %2301 = vmatprep.subr.bf16.mxu0 0
          %2302 = vmatpush2.bf16.msra.mxu0 0
          %2303 = vmatprep.mubr.bf16.mxu0 0
          %2304 = vmatmul.mubr.bf16.gmra.mxu0 %v2266
          %v2305 = vpop.f32.mrf.mxu0
          %v2306 = vadd.f32 %v2239, %v2305
          %v2307 = vpop.f32.mrf.mxu0
          %v2308 = vpop.f32.mrf.mxu0
          %v2309 = vadd.f32 %v2239, %v2308
          %v2310 = vpop.f32.mrf.mxu0
          %2311 = vmatprep.mubr.bf16.mxu0 0
          %2312 = vmatmul.mubr.bf16.gmra.mxu0 %v2269
          %v2313 = vpop.f32.mrf.mxu0
          %v2314 = vadd.f32 %v2239, %v2313
          %v2315 = vpop.f32.mrf.mxu0
          %v2316 = vpop.f32.mrf.mxu0
          %v2317 = vadd.f32 %v2239, %v2316
          %v2318 = vpop.f32.mrf.mxu0
          %2319 = vdwg.mxu0
          %v2320 = vsel %vm1982, %v2306, 0.0
          %2321 = vadd.xlane.f32.xlu0 %v2320
          %v2322 = vpop.xlane.xlu0 %2321
          %v2323 = vsel %vm1982, %v2309, 0.0
          %2324 = vadd.xlane.f32.xlu0 %v2323
          %v2325 = vpop.xlane.xlu0 %2324
          %v2326 = vsel %vm1982, %v2314, 0.0
          %2327 = vadd.xlane.f32.xlu0 %v2326
          %v2328 = vpop.xlane.xlu0 %2327
          %v2329 = vsel %vm1982, %v2317, 0.0
          %2330 = vadd.xlane.f32.xlu0 %v2329
          %v2331 = vpop.xlane.xlu0 %2330
          %v2332 = vrcp.pop 32.0
          %v2333 = vmul.f32 %v2322, %v2332
          %v2334 = vmul.f32 %v2325, %v2332
          %v2335 = vmul.f32 %v2328, %v2332
          %v2336 = vmul.f32 %v2331, %v2332
          %v2337 = vsub.f32 %v2306, %v2333
          %v2338 = vsub.f32 %v2309, %v2334
          %v2339 = vsub.f32 %v2314, %v2335
          %v2340 = vsub.f32 %v2317, %v2336
          %v2341 = vmul.f32 %v2337, %v2337
          %v2342 = vmul.f32 %v2338, %v2338
          %v2343 = vmul.f32 %v2339, %v2339
          %v2344 = vmul.f32 %v2340, %v2340
          %v2345 = vsel %vm1982, %v2341, 0.0
          %2346 = vadd.xlane.f32.xlu0 %v2345
          %v2347 = vpop.xlane.xlu0 %2346
          %v2348 = vsel %vm1982, %v2342, 0.0
          %2349 = vadd.xlane.f32.xlu0 %v2348
          %v2350 = vpop.xlane.xlu0 %2349
          %v2351 = vsel %vm1982, %v2343, 0.0
          %2352 = vadd.xlane.f32.xlu0 %v2351
          %v2353 = vpop.xlane.xlu0 %2352
          %v2354 = vsel %vm1982, %v2344, 0.0
          %2355 = vadd.xlane.f32.xlu0 %v2354
          %v2356 = vpop.xlane.xlu0 %2355
          %v2357 = vmul.f32 %v2347, %v2332
          %v2358 = vmul.f32 %v2350, %v2332
          %v2359 = vmul.f32 %v2353, %v2332
          %v2360 = vmul.f32 %v2356, %v2332
          %v2361 = vadd.f32 %v2357, 1e-05
          %v2362 = vadd.f32 %v2358, 1e-05
          %v2363 = vadd.f32 %v2359, 1e-05
          %v2364 = vadd.f32 %v2360, 1e-05
          %v2365 = vrsqrt.pop %v2361
          %v2366 = vrsqrt.pop %v2362
          %v2367 = vrsqrt.pop %v2363
          %v2368 = vrsqrt.pop %v2364
          %v2369 = vmul.f32 %v2337, %v2365
          %v2370 = vmul.f32 %v2338, %v2366
          %v2371 = vmul.f32 %v2339, %v2367
          %v2372 = vmul.f32 %v2340, %v2368
          %v2374 = vlaneseq
          %v2375 = vshrl.u32 %v2374, 7
          %v2376 = vsub.s32 0, %v2375
          %v2377 = vrot.slane %v2136, %v2376
          %v2379 = vmul.f32 %v2369, %v2377
          %v2380 = vmul.f32 %v2370, %v2377
          %v2381 = vmul.f32 %v2371, %v2377
          %v2382 = vmul.f32 %v2372, %v2377
          %v2384 = vlaneseq
          %v2385 = vshrl.u32 %v2384, 7
          %v2386 = vsub.s32 0, %v2385
          %v2387 = vrot.slane %v2137, %v2386
          %v2389 = vadd.f32 %v2379, %v2387
          %v2390 = vadd.f32 %v2380, %v2387
          %v2391 = vadd.f32 %v2381, %v2387
          %v2392 = vadd.f32 %v2382, %v2387
          %v2393 = vadd.f32 %v1918, %v2389
          %v2394 = vadd.f32 %v1919, %v2390
          %v2395 = vadd.f32 %v1920, %v2391
          %v2396 = vadd.f32 %v1921, %v2392
          %2397 = vst.msk [vmem:[%s1030] sm:$0xff] %vm1982, %v2393
          %2398 = vst.msk [vmem:[%s1030 + $0x8] sm:$0xff] %vm1982, %v2394
          %2399 = vst.msk [vmem:[%s1030 + $0x10] sm:$0xff] %vm1982, %v2395
          %2400 = vst.msk [vmem:[%s1030 + $0x18] sm:$0xff] %vm1982, %v2396
        $region161: #{interaction_network_forward.5} parent=140 // pred_fallthru
          _
        %p2401 = pnand %p1035, %p1034
        %p2402 = pneg %p2401
        // Predicated region
        $region162: #{interaction_network_forward.5} parent=140 // pred_check
          _
        $region163: #{interaction_network_forward.5} parent=140 // pred_check_branch
          %2404 = sbr.rel (%p2401) target = $region165
        $region164: #{interaction_network_forward.5} parent=140 // pred_region
          %v2405 = vld [vmem:[%s1008] sm:$0xff]
          %v2406 = vld [vmem:[%s1008 + $0x8] sm:$0xff]
          %v2407 = vld [vmem:[%s1008 + $0x10] sm:$0xff]
          %v2408 = vld [vmem:[%s1008 + $0x18] sm:$0xff]
          %v2409 = vld [vmem:[#allocation2] sm:$0xff]
          %v2410 = vld [vmem:[#allocation2 + $0x8] sm:$0xff]
          %v2411 = vld [vmem:[#allocation2 + $0x10] sm:$0xff]
          %v2412 = vld [vmem:[#allocation2 + $0x18] sm:$0xff]
          %2417 = vrot.lane.b32.xlu0 %v2409, 32
          %v2418 = vpop.permute.xlu0 %2417
          %2419 = vrot.lane.b32.xlu0 %v2410, 32
          %v2420 = vpop.permute.xlu0 %2419
          %2421 = vrot.lane.b32.xlu0 %v2411, 32
          %v2422 = vpop.permute.xlu0 %2421
          %2423 = vrot.lane.b32.xlu0 %v2412, 32
          %v2424 = vpop.permute.xlu0 %2423
          %vm2429 = vcmask 261120
          %v2430 = vsel %vm2429, %v2405, %v2418
          %v2431 = vsel %vm2429, %v2406, %v2420
          %v2432 = vsel %vm2429, %v2407, %v2422
          %v2433 = vsel %vm2429, %v2408, %v2424
          %v2434 = vpack.c.bf16 %v2431, %v2430
          %v2435 = vpack.c.bf16 %v2433, %v2432
          %v2436 = vld [vmem:[%s13] sm:$0xf]
          %v2437 = vld [vmem:[%s13 + $0x4] sm:$0xf]
          %v2438 = vld [vmem:[%s13 + $0x8] sm:$0xf]
          %v2439 = vld [vmem:[%s13 + $0xc] sm:$0xf]
          %v2440 = vld [vmem:[%s13 + $0x10] sm:$0xf]
          %v2441 = vld [vmem:[%s13 + $0x14] sm:$0xf]
          %v2442 = vld [vmem:[%s13 + $0x18] sm:$0xf]
          %v2443 = vld [vmem:[%s13 + $0x1c] sm:$0xf]
          %v2444 = vld [vmem:[%s14] sm:$0x1]
          %v2446 = vlaneseq
          %v2447 = vshrl.u32 %v2446, 7
          %v2448 = vsub.s32 0, %v2447
          %v2449 = vrot.slane %v2444, %v2448
          %v2459 = vunpack.c.l.b16 %v2436
          %v2460 = vunpack.c.l.b16 %v2437
          %v2461 = vunpack.c.l.b16 %v2438
          %v2462 = vunpack.c.l.b16 %v2439
          %v2463 = vunpack.c.l.b16 %v2440
          %v2464 = vunpack.c.l.b16 %v2441
          %v2465 = vunpack.c.l.b16 %v2442
          %v2466 = vunpack.c.l.b16 %v2443
          %v2467 = vpack.c.b16 %v2460, %v2459
          %v2468 = vpack.c.b16 %v2462, %v2461
          %v2469 = vpack.c.b16 %v2464, %v2463
          %v2470 = vpack.c.b16 %v2466, %v2465
          %vm2475 = vcmask 523264
          %v2477 = vsel %vm2475, %v2434, 0
          %v2480 = vsel %vm2475, %v2435, 0
          %2482 = vmatprep.subr.bf16.mxu0 0
          %2483 = vmatpush1.bf16.msra.mxu0 0
          %2484 = vmatprep.subr.bf16.mxu0 0
          %2485 = vmatpush1.bf16.msra.mxu0 0
          %2486 = vmatprep.subr.bf16.mxu0 0
          %2487 = vmatpush1.bf16.msra.mxu0 0
          %2488 = vmatprep.subr.bf16.mxu0 0
          %2489 = vmatpush1.bf16.msra.mxu0 0
          %2490 = vmatprep.subr.bf16.mxu0 0
          %2491 = vmatpush1.bf16.msra.mxu0 %v2470
          %2492 = vmatprep.subr.bf16.mxu0 0
          %2493 = vmatpush1.bf16.msra.mxu0 %v2469
          %2494 = vmatprep.subr.bf16.mxu0 0
          %2495 = vmatpush1.bf16.msra.mxu0 %v2468
          %2496 = vmatprep.subr.bf16.mxu0 0
          %2497 = vmatpush1.bf16.msra.mxu0 %v2467
          %2498 = vmatprep.subr.bf16.mxu0 0
          %2499 = vmatpush2.bf16.msra.mxu0 0
          %2500 = vmatprep.subr.bf16.mxu0 0
          %2501 = vmatpush2.bf16.msra.mxu0 0
          %2502 = vmatprep.subr.bf16.mxu0 0
          %2503 = vmatpush2.bf16.msra.mxu0 0
          %2504 = vmatprep.subr.bf16.mxu0 0
          %2505 = vmatpush2.bf16.msra.mxu0 0
          %2506 = vmatprep.subr.bf16.mxu0 0
          %2507 = vmatpush2.bf16.msra.mxu0 0
          %2508 = vmatprep.subr.bf16.mxu0 0
          %2509 = vmatpush2.bf16.msra.mxu0 0
          %2510 = vmatprep.subr.bf16.mxu0 0
          %2511 = vmatpush2.bf16.msra.mxu0 0
          %2512 = vmatprep.subr.bf16.mxu0 0
          %2513 = vmatpush2.bf16.msra.mxu0 0
          %2514 = vmatprep.mubr.bf16.mxu0 0
          %2515 = vmatmul.mubr.bf16.gmra.mxu0 %v2477
          %v2516 = vpop.f32.mrf.mxu0
          %v2517 = vadd.f32 %v2449, %v2516
          %v2518 = vpop.f32.mrf.mxu0
          %v2519 = vpop.f32.mrf.mxu0
          %v2520 = vadd.f32 %v2449, %v2519
          %v2521 = vpop.f32.mrf.mxu0
          %2522 = vmatprep.mubr.bf16.mxu0 0
          %2523 = vmatmul.mubr.bf16.gmra.mxu0 %v2480
          %v2524 = vpop.f32.mrf.mxu0
          %v2525 = vadd.f32 %v2449, %v2524
          %v2526 = vpop.f32.mrf.mxu0
          %v2527 = vpop.f32.mrf.mxu0
          %v2528 = vadd.f32 %v2449, %v2527
          %v2529 = vpop.f32.mrf.mxu0
          %2530 = vdwg.mxu0
          %v2531 = vld [vmem:[%s15] sm:$0xf]
          %v2532 = vld [vmem:[%s15 + $0x4] sm:$0xf]
          %v2533 = vld [vmem:[%s15 + $0x8] sm:$0xf]
          %v2534 = vld [vmem:[%s15 + $0xc] sm:$0xf]
          %v2535 = vld [vmem:[%s15 + $0x10] sm:$0xf]
          %v2536 = vld [vmem:[%s15 + $0x14] sm:$0xf]
          %v2537 = vld [vmem:[%s15 + $0x18] sm:$0xf]
          %v2538 = vld [vmem:[%s15 + $0x1c] sm:$0xf]
          %v2539 = vld [vmem:[%s16] sm:$0x1]
          %v2540 = vld [vmem:[%s17] sm:$0xf]
          %v2541 = vld [vmem:[%s17 + $0x4] sm:$0xf]
          %v2542 = vld [vmem:[%s17 + $0x8] sm:$0xf]
          %v2543 = vld [vmem:[%s17 + $0xc] sm:$0xf]
          %v2544 = vld [vmem:[%s17 + $0x10] sm:$0xf]
          %v2545 = vld [vmem:[%s17 + $0x14] sm:$0xf]
          %v2546 = vld [vmem:[%s17 + $0x18] sm:$0xf]
          %v2547 = vld [vmem:[%s17 + $0x1c] sm:$0xf]
          %v2548 = vld [vmem:[%s18] sm:$0x1]
          %v2549 = vld [vmem:[%s19] sm:$0x1]
          %v2550 = vld [vmem:[%s20] sm:$0x1]
          %v2551 = vmax.f32 %v2517, 0.0
          %v2552 = vmax.f32 %v2520, 0.0
          %v2553 = vmax.f32 %v2525, 0.0
          %v2554 = vmax.f32 %v2528, 0.0
          %v2555 = vpack.c.bf16 %v2552, %v2551
          %v2556 = vpack.c.bf16 %v2554, %v2553
          %v2558 = vlaneseq
          %v2559 = vshrl.u32 %v2558, 7
          %v2560 = vsub.s32 0, %v2559
          %v2561 = vrot.slane %v2539, %v2560
          %v2571 = vunpack.c.l.b16 %v2531
          %v2572 = vunpack.c.l.b16 %v2532
          %v2573 = vunpack.c.l.b16 %v2533
          %v2574 = vunpack.c.l.b16 %v2534
          %v2575 = vunpack.c.l.b16 %v2535
          %v2576 = vunpack.c.l.b16 %v2536
          %v2577 = vunpack.c.l.b16 %v2537
          %v2578 = vunpack.c.l.b16 %v2538
          %v2579 = vpack.c.b16 %v2572, %v2571
          %v2580 = vpack.c.b16 %v2574, %v2573
          %v2581 = vpack.c.b16 %v2576, %v2575
          %v2582 = vpack.c.b16 %v2578, %v2577
          %v2588 = vsel %vm2475, %v2555, 0
          %v2591 = vsel %vm2475, %v2556, 0
          %2593 = vmatprep.subr.bf16.mxu0 0
          %2594 = vmatpush1.bf16.msra.mxu0 0
          %2595 = vmatprep.subr.bf16.mxu0 0
          %2596 = vmatpush1.bf16.msra.mxu0 0
          %2597 = vmatprep.subr.bf16.mxu0 0
          %2598 = vmatpush1.bf16.msra.mxu0 0
          %2599 = vmatprep.subr.bf16.mxu0 0
          %2600 = vmatpush1.bf16.msra.mxu0 0
          %2601 = vmatprep.subr.bf16.mxu0 0
          %2602 = vmatpush1.bf16.msra.mxu0 %v2582
          %2603 = vmatprep.subr.bf16.mxu0 0
          %2604 = vmatpush1.bf16.msra.mxu0 %v2581
          %2605 = vmatprep.subr.bf16.mxu0 0
          %2606 = vmatpush1.bf16.msra.mxu0 %v2580
          %2607 = vmatprep.subr.bf16.mxu0 0
          %2608 = vmatpush1.bf16.msra.mxu0 %v2579
          %2609 = vmatprep.subr.bf16.mxu0 0
          %2610 = vmatpush2.bf16.msra.mxu0 0
          %2611 = vmatprep.subr.bf16.mxu0 0
          %2612 = vmatpush2.bf16.msra.mxu0 0
          %2613 = vmatprep.subr.bf16.mxu0 0
          %2614 = vmatpush2.bf16.msra.mxu0 0
          %2615 = vmatprep.subr.bf16.mxu0 0
          %2616 = vmatpush2.bf16.msra.mxu0 0
          %2617 = vmatprep.subr.bf16.mxu0 0
          %2618 = vmatpush2.bf16.msra.mxu0 0
          %2619 = vmatprep.subr.bf16.mxu0 0
          %2620 = vmatpush2.bf16.msra.mxu0 0
          %2621 = vmatprep.subr.bf16.mxu0 0
          %2622 = vmatpush2.bf16.msra.mxu0 0
          %2623 = vmatprep.subr.bf16.mxu0 0
          %2624 = vmatpush2.bf16.msra.mxu0 0
          %2625 = vmatprep.mubr.bf16.mxu0 0
          %2626 = vmatmul.mubr.bf16.gmra.mxu0 %v2588
          %v2627 = vpop.f32.mrf.mxu0
          %v2628 = vadd.f32 %v2561, %v2627
          %v2629 = vpop.f32.mrf.mxu0
          %v2630 = vpop.f32.mrf.mxu0
          %v2631 = vadd.f32 %v2561, %v2630
          %v2632 = vpop.f32.mrf.mxu0
          %2633 = vmatprep.mubr.bf16.mxu0 0
          %2634 = vmatmul.mubr.bf16.gmra.mxu0 %v2591
          %v2635 = vpop.f32.mrf.mxu0
          %v2636 = vadd.f32 %v2561, %v2635
          %v2637 = vpop.f32.mrf.mxu0
          %v2638 = vpop.f32.mrf.mxu0
          %v2639 = vadd.f32 %v2561, %v2638
          %v2640 = vpop.f32.mrf.mxu0
          %2641 = vdwg.mxu0
          %v2642 = vmax.f32 %v2628, 0.0
          %v2643 = vmax.f32 %v2631, 0.0
          %v2644 = vmax.f32 %v2636, 0.0
          %v2645 = vmax.f32 %v2639, 0.0
          %v2646 = vpack.c.bf16 %v2643, %v2642
          %v2647 = vpack.c.bf16 %v2645, %v2644
          %v2649 = vlaneseq
          %v2650 = vshrl.u32 %v2649, 7
          %v2651 = vsub.s32 0, %v2650
          %v2652 = vrot.slane %v2548, %v2651
          %v2662 = vunpack.c.l.b16 %v2540
          %v2663 = vunpack.c.l.b16 %v2541
          %v2664 = vunpack.c.l.b16 %v2542
          %v2665 = vunpack.c.l.b16 %v2543
          %v2666 = vunpack.c.l.b16 %v2544
          %v2667 = vunpack.c.l.b16 %v2545
          %v2668 = vunpack.c.l.b16 %v2546
          %v2669 = vunpack.c.l.b16 %v2547
          %v2670 = vpack.c.b16 %v2663, %v2662
          %v2671 = vpack.c.b16 %v2665, %v2664
          %v2672 = vpack.c.b16 %v2667, %v2666
          %v2673 = vpack.c.b16 %v2669, %v2668
          %v2679 = vsel %vm2475, %v2646, 0
          %v2682 = vsel %vm2475, %v2647, 0
          %2684 = vmatprep.subr.bf16.mxu0 0
          %2685 = vmatpush1.bf16.msra.mxu0 0
          %2686 = vmatprep.subr.bf16.mxu0 0
          %2687 = vmatpush1.bf16.msra.mxu0 0
          %2688 = vmatprep.subr.bf16.mxu0 0
          %2689 = vmatpush1.bf16.msra.mxu0 0
          %2690 = vmatprep.subr.bf16.mxu0 0
          %2691 = vmatpush1.bf16.msra.mxu0 0
          %2692 = vmatprep.subr.bf16.mxu0 0
          %2693 = vmatpush1.bf16.msra.mxu0 %v2673
          %2694 = vmatprep.subr.bf16.mxu0 0
          %2695 = vmatpush1.bf16.msra.mxu0 %v2672
          %2696 = vmatprep.subr.bf16.mxu0 0
          %2697 = vmatpush1.bf16.msra.mxu0 %v2671
          %2698 = vmatprep.subr.bf16.mxu0 0
          %2699 = vmatpush1.bf16.msra.mxu0 %v2670
          %2700 = vmatprep.subr.bf16.mxu0 0
          %2701 = vmatpush2.bf16.msra.mxu0 0
          %2702 = vmatprep.subr.bf16.mxu0 0
          %2703 = vmatpush2.bf16.msra.mxu0 0
          %2704 = vmatprep.subr.bf16.mxu0 0
          %2705 = vmatpush2.bf16.msra.mxu0 0
          %2706 = vmatprep.subr.bf16.mxu0 0
          %2707 = vmatpush2.bf16.msra.mxu0 0
          %2708 = vmatprep.subr.bf16.mxu0 0
          %2709 = vmatpush2.bf16.msra.mxu0 0
          %2710 = vmatprep.subr.bf16.mxu0 0
          %2711 = vmatpush2.bf16.msra.mxu0 0
          %2712 = vmatprep.subr.bf16.mxu0 0
          %2713 = vmatpush2.bf16.msra.mxu0 0
          %2714 = vmatprep.subr.bf16.mxu0 0
          %2715 = vmatpush2.bf16.msra.mxu0 0
          %2716 = vmatprep.mubr.bf16.mxu0 0
          %2717 = vmatmul.mubr.bf16.gmra.mxu0 %v2679
          %v2718 = vpop.f32.mrf.mxu0
          %v2719 = vadd.f32 %v2652, %v2718
          %v2720 = vpop.f32.mrf.mxu0
          %v2721 = vpop.f32.mrf.mxu0
          %v2722 = vadd.f32 %v2652, %v2721
          %v2723 = vpop.f32.mrf.mxu0
          %2724 = vmatprep.mubr.bf16.mxu0 0
          %2725 = vmatmul.mubr.bf16.gmra.mxu0 %v2682
          %v2726 = vpop.f32.mrf.mxu0
          %v2727 = vadd.f32 %v2652, %v2726
          %v2728 = vpop.f32.mrf.mxu0
          %v2729 = vpop.f32.mrf.mxu0
          %v2730 = vadd.f32 %v2652, %v2729
          %v2731 = vpop.f32.mrf.mxu0
          %2732 = vdwg.mxu0
          %v2733 = vsel %vm2429, %v2719, 0.0
          %2734 = vadd.xlane.f32.xlu0 %v2733
          %v2735 = vpop.xlane.xlu0 %2734
          %v2736 = vsel %vm2429, %v2722, 0.0
          %2737 = vadd.xlane.f32.xlu0 %v2736
          %v2738 = vpop.xlane.xlu0 %2737
          %v2739 = vsel %vm2429, %v2727, 0.0
          %2740 = vadd.xlane.f32.xlu0 %v2739
          %v2741 = vpop.xlane.xlu0 %2740
          %v2742 = vsel %vm2429, %v2730, 0.0
          %2743 = vadd.xlane.f32.xlu0 %v2742
          %v2744 = vpop.xlane.xlu0 %2743
          %v2745 = vrcp.pop 32.0
          %v2746 = vmul.f32 %v2735, %v2745
          %v2747 = vmul.f32 %v2738, %v2745
          %v2748 = vmul.f32 %v2741, %v2745
          %v2749 = vmul.f32 %v2744, %v2745
          %v2750 = vsub.f32 %v2719, %v2746
          %v2751 = vsub.f32 %v2722, %v2747
          %v2752 = vsub.f32 %v2727, %v2748
          %v2753 = vsub.f32 %v2730, %v2749
          %v2754 = vmul.f32 %v2750, %v2750
          %v2755 = vmul.f32 %v2751, %v2751
          %v2756 = vmul.f32 %v2752, %v2752
          %v2757 = vmul.f32 %v2753, %v2753
          %v2758 = vsel %vm2429, %v2754, 0.0
          %2759 = vadd.xlane.f32.xlu0 %v2758
          %v2760 = vpop.xlane.xlu0 %2759
          %v2761 = vsel %vm2429, %v2755, 0.0
          %2762 = vadd.xlane.f32.xlu0 %v2761
          %v2763 = vpop.xlane.xlu0 %2762
          %v2764 = vsel %vm2429, %v2756, 0.0
          %2765 = vadd.xlane.f32.xlu0 %v2764
          %v2766 = vpop.xlane.xlu0 %2765
          %v2767 = vsel %vm2429, %v2757, 0.0
          %2768 = vadd.xlane.f32.xlu0 %v2767
          %v2769 = vpop.xlane.xlu0 %2768
          %v2770 = vmul.f32 %v2760, %v2745
          %v2771 = vmul.f32 %v2763, %v2745
          %v2772 = vmul.f32 %v2766, %v2745
          %v2773 = vmul.f32 %v2769, %v2745
          %v2774 = vadd.f32 %v2770, 1e-05
          %v2775 = vadd.f32 %v2771, 1e-05
          %v2776 = vadd.f32 %v2772, 1e-05
          %v2777 = vadd.f32 %v2773, 1e-05
          %v2778 = vrsqrt.pop %v2774
          %v2779 = vrsqrt.pop %v2775
          %v2780 = vrsqrt.pop %v2776
          %v2781 = vrsqrt.pop %v2777
          %v2782 = vmul.f32 %v2750, %v2778
          %v2783 = vmul.f32 %v2751, %v2779
          %v2784 = vmul.f32 %v2752, %v2780
          %v2785 = vmul.f32 %v2753, %v2781
          %v2787 = vlaneseq
          %v2788 = vshrl.u32 %v2787, 7
          %v2789 = vsub.s32 0, %v2788
          %v2790 = vrot.slane %v2549, %v2789
          %v2792 = vmul.f32 %v2782, %v2790
          %v2793 = vmul.f32 %v2783, %v2790
          %v2794 = vmul.f32 %v2784, %v2790
          %v2795 = vmul.f32 %v2785, %v2790
          %v2797 = vlaneseq
          %v2798 = vshrl.u32 %v2797, 7
          %v2799 = vsub.s32 0, %v2798
          %v2800 = vrot.slane %v2550, %v2799
          %v2802 = vadd.f32 %v2792, %v2800
          %v2803 = vadd.f32 %v2793, %v2800
          %v2804 = vadd.f32 %v2794, %v2800
          %v2805 = vadd.f32 %v2795, %v2800
          %v2806 = vadd.f32 %v2405, %v2802
          %v2807 = vadd.f32 %v2406, %v2803
          %v2808 = vadd.f32 %v2407, %v2804
          %v2809 = vadd.f32 %v2408, %v2805
          %2810 = vst.msk [vmem:[%s1030] sm:$0xff] %vm2429, %v2806
          %2811 = vst.msk [vmem:[%s1030 + $0x8] sm:$0xff] %vm2429, %v2807
          %2812 = vst.msk [vmem:[%s1030 + $0x10] sm:$0xff] %vm2429, %v2808
          %2813 = vst.msk [vmem:[%s1030 + $0x18] sm:$0xff] %vm2429, %v2809
        $region165: #{interaction_network_forward.5} parent=140 // pred_fallthru
          _
        %s2814 = smul.u32 4, %s36
        %p2815 = scmp.lt.s32.totalorder %s2814, 7
        %s2816 = scalar_select %p2815, %s2814, 7
        %s2817 = smul.addr %s2816, 8
        %s2818 = scalar_lea.vmem %s21, %s2817
        // Predicated region
        $region166: #{interaction_network_forward.5} parent=140 // pred_check
          %p2819 = pneg %p528
        $region167: #{interaction_network_forward.5} parent=140 // pred_check_branch
          %2821 = sbr.rel (%p2819) target = $region169
        $region168: #{interaction_network_forward.5} parent=140 // pred_region
          %s2822 = smul.u32 4, %s36
        $region169: #{interaction_network_forward.5} parent=140 // pred_fallthru
          _
      $region141: #{interaction_network_forward.5} parent=5 // pred_fallthru
        _
      %p2823 = scmp.le.s32.totalorder 2, %s27
      // Predicated region
      $region170: #{interaction_network_forward.5} parent=5 // pred_check
        %p2824 = pneg %p2823
      $region171: #{interaction_network_forward.5} parent=5 // pred_check_branch
        %2826 = sbr.rel (%p2824) target = $region173
      $region172: #{interaction_network_forward.5} parent=5 // pred_region
        %s2827 = ssub.s32 %s27, 2
        // Predicated region
        $region174: #{interaction_network_forward.5} parent=172 // pred_check
          %p2828 = pneg %p534
        $region175: #{interaction_network_forward.5} parent=172 // pred_check_branch
          %2830 = sbr.rel (%p2828) target = $region177
        $region176: #{interaction_network_forward.5} parent=172 // pred_region
          %s2831 = smul.u32 4, %s38
          %p2832 = scmp.lt.s32.totalorder %s2831, 7
          %s2833 = scalar_select %p2832, %s2831, 7
          %s2834 = smul.addr %s2833, 8
          %s2835 = scalar_lea.vmem %s21, %s2834
        $region177: #{interaction_network_forward.5} parent=172 // pred_fallthru
          _
      $region173: #{interaction_network_forward.5} parent=5 // pred_fallthru
        _
    $region6: #{interaction_network_forward.5} parent=1 // loop_footer
      %s31 = sadd.s32 1, %s27
    $region7: #{interaction_network_forward.5} parent=1 // loop_footer_branch
      %26 = sbr.rel target = $region3
    $region8: #{interaction_network_forward.5} parent=1 // loop_exit
      _

</llo_original>
